<compile_context>
chip_gen: v6e
topology: v6e:2x2x1
jax: 0.10.0
libtpu: 0.0.40
codegen_flags: <defaults>
</compile_context>

<pallas_src>
import functools

import jax
import jax.numpy as jnp
from jax.experimental import pallas as pl
from jax.experimental.pallas import tpu as pltpu

NUM_GENE = 2500
SEQ_LEN = 1000
BN_EPS = 1e-5


def _round_up(x, m):
    return ((x + m - 1) // m) * m


@functools.lru_cache(maxsize=1)
def _tiles():
    """(tm_max, tn): 256-wide tiles for 256x256 MXUs (v6e/v7x), 128 for v5e and older."""
    try:
        kind = jax.devices()[0].device_kind.lower()
    except Exception:
        kind = ""
    if any(t in kind for t in ("v2", "v3", "v4", "v5")):
        return 128, 128
    return 256, 256


# ----------------------------- Pallas kernels -----------------------------
def _mm_bias_kernel(x_ref, w_ref, b_ref, o_ref, *, relu):
    # Full-K block: one MXU pass per (i, j) output tile, bias + ReLU fused in epilogue.
    acc = jnp.dot(x_ref[...], w_ref[...], preferred_element_type=jnp.float32)
    acc = acc + b_ref[...]
    if relu:
        acc = jnp.maximum(acc, 0.0)
    o_ref[...] = acc.astype(o_ref.dtype)


def matmul_bias(x, w_p, b_p, n_out, *, relu=False, out_dtype=jnp.float32):
    """y = x @ w + b (optionally ReLU).

    x: (M, K) float; w_p: (Kp, Np) bf16 pre-folded/pre-padded; b_p: (1, Np) f32 pre-padded.
    Returns (M, n_out) in out_dtype.  K is kept as a single full block (no k grid axis,
    no accumulator scratch) -- all layers here fit comfortably in VMEM.
    """
    M, K = x.shape
    Kp, Np = w_p.shape
    tm_max, tn = _tiles()
    tm = min(tm_max, _round_up(M, 16))
    Mp = _round_up(M, tm)

    xb = x.astype(jnp.bfloat16)
    if Mp != M or Kp != K:
        xb = jnp.pad(xb, ((0, Mp - M), (0, Kp - K)))

    out = pl.pallas_call(
        functools.partial(_mm_bias_kernel, relu=relu),
        out_shape=jax.ShapeDtypeStruct((Mp, Np), out_dtype),
        grid_spec=pltpu.PrefetchScalarGridSpec(
            num_scalar_prefetch=0,
            grid=(Mp // tm, Np // tn),
            in_specs=[
                pl.BlockSpec((tm, Kp), lambda i, j: (i, 0)),
                pl.BlockSpec((Kp, tn), lambda i, j: (0, j)),
                pl.BlockSpec((1, tn), lambda i, j: (0, j)),
            ],
            out_specs=pl.BlockSpec((tm, tn), lambda i, j: (i, j)),
        ),
        compiler_params=pltpu.CompilerParams(
            dimension_semantics=("parallel", "parallel")
        ),
    )(xb, w_p, b_p)
    return out[:M, :n_out]


def _fc34_kernel(x_ref, w3_ref, b3_ref, w4_ref, b4_ref, o_ref):
    # fc3 (+folded BN4) + ReLU, dropout2 = identity (inference), fc4 + ReLU: one launch.
    h = jnp.dot(x_ref[...], w3_ref[...], preferred_element_type=jnp.float32) + b3_ref[...]
    h = jnp.maximum(h, 0.0)
    o = jnp.dot(h.astype(jnp.bfloat16), w4_ref[...], preferred_element_type=jnp.float32)
    o = o + b4_ref[...]
    o_ref[...] = jnp.maximum(o, 0.0).astype(o_ref.dtype)


def fc34_fused(cat, w3_p, b3_p, w4_p, b4_p):
    """Fused fc3(+BN4)+ReLU -> fc4+ReLU.  cat: (B, 512).  Returns (B, 1) f32."""
    B, K = cat.shape
    Bp = _round_up(B, 16)
    xb = cat.astype(jnp.bfloat16)
    if Bp != B:
        xb = jnp.pad(xb, ((0, Bp - B), (0, 0)))
    N3 = w3_p.shape[1]
    N4 = w4_p.shape[1]
    out = pl.pallas_call(
        _fc34_kernel,
        out_shape=jax.ShapeDtypeStruct((Bp, N4), jnp.float32),
        grid_spec=pltpu.PrefetchScalarGridSpec(
            num_scalar_prefetch=0,
            grid=(1,),
            in_specs=[
                pl.BlockSpec((Bp, K), lambda i: (0, 0)),
                pl.BlockSpec((K, N3), lambda i: (0, 0)),
                pl.BlockSpec((1, N3), lambda i: (0, 0)),
                pl.BlockSpec((N3, N4), lambda i: (0, 0)),
                pl.BlockSpec((1, N4), lambda i: (0, 0)),
            ],
            out_specs=pl.BlockSpec((Bp, N4), lambda i: (0, 0)),
        ),
        compiler_params=pltpu.CompilerParams(dimension_semantics=("arbitrary",)),
    )(xb, w3_p, b3_p, w4_p, b4_p)
    return out[:B, :1]


# ----------------------------- glue (im2col / pooling / BN fold) -----------------------------
def im2col_seq(x, kw):
    """x: (B, 4, W) -> patches (B*Wout, 4*kw) in torch's (h, kw) flatten order."""
    B, C, W = x.shape
    Wout = W - kw + 1
    cols = jnp.stack([x[:, :, i:i + Wout] for i in range(kw)], axis=-1)  # (B, 4, Wout, kw)
    cols = jnp.transpose(cols, (0, 2, 1, 3))                             # (B, Wout, 4, kw)
    return cols.reshape(B * Wout, C * kw), Wout


def im2col_cl(x, kw):
    """channels-last x: (B, W, C) -> patches (B*Wout, kw*C) in (kw, C) flatten order."""
    B, W, C = x.shape
    Wout = W - kw + 1
    cols = jnp.stack([x[:, i:i + Wout, :] for i in range(kw)], axis=2)   # (B, Wout, kw, C)
    return cols.reshape(B * Wout, kw * C), Wout


def maxpool_cl(x, p):
    """channels-last max pool along W, stride == kernel == p, floor semantics."""
    B, W, C = x.shape
    Wo = W // p
    return jnp.max(x[:, : Wo * p, :].reshape(B, Wo, p, C), axis=2)


def fold_bn(w2d, b, gamma, beta, mean, var, eps=BN_EPS):
    """Fold inference-mode BatchNorm (over the N = output axis) into (K, N) weights + bias."""
    scale = gamma / jnp.sqrt(var + eps)
    return w2d * scale[None, :], (b - mean) * scale + beta


# ----------------------------- parameters -----------------------------
def init_params(key):
    ks = jax.random.split(key, 16)
    n = lambda k, shp, s=0.05: s * jax.random.normal(k, shp, jnp.float32)

    def bn(kg, kb, dim):
        gamma = 1.0 + 0.1 * jax.random.normal(kg, (dim,), jnp.float32)
        beta = 0.05 * jax.random.normal(kb, (dim,), jnp.float32)
        mean = 0.02 * jnp.arange(dim, dtype=jnp.float32) / dim
        var = 1.0 + 0.1 * (jnp.arange(dim, dtype=jnp.float32) % 7) / 7.0
        return gamma, beta, mean, var

    return dict(
        conv1_w=n(ks[0], (160, 1, 4, 15)), conv1_b=n(ks[1], (160,)),
        conv2_w=n(ks[2], (160, 160, 1, 12), 0.02), conv2_b=n(ks[3], (160,)),
        conv3_w=n(ks[4], (160, 160, 1, 12), 0.02), conv3_b=n(ks[5], (160,)),
        fc1_w=n(ks[6], (256, NUM_GENE), 0.02), fc1_b=n(ks[7], (256,)),
        fc2_w=n(ks[8], (256, 1760), 0.02), fc2_b=n(ks[9], (256,)),
        fc3_w=n(ks[10], (64, 512), 0.05), fc3_b=n(ks[11], (64,)),
        fc4_w=n(ks[12], (1, 64), 0.1), fc4_b=n(ks[13], (1,)),
        bn1=bn(ks[14], ks[15], 160),   # the torch model reuses a single BN1 for all 3 convs
        bn4=bn(ks[14], ks[15], 64),
    )


def prepare_params(p):
    """One-time weight prep (hoisted out of forward): fold inference-mode BN into conv/fc3
    weights, reorder for channels-last im2col, transpose to (K, N), zero-pad K/N to tile
    multiples and cast weights to bf16 (biases stay f32)."""
    def pad(w, b, k_mult=64, n_mult=256):
        K, N = w.shape
        Kp, Np = _round_up(K, k_mult), _round_up(N, n_mult)
        wp = jnp.zeros((Kp, Np), jnp.bfloat16).at[:K, :N].set(w.astype(jnp.bfloat16))
        bp = jnp.zeros((1, Np), jnp.float32).at[0, :N].set(b.astype(jnp.float32))
        return wp, bp

    prep = {}
    # conv1: (160,1,4,15) -> (60, 160) in torch (h, kw) order, BN1 folded, K padded 60 -> 64.
    w = p["conv1_w"].reshape(160, 60).T
    prep["conv1"] = pad(*fold_bn(w, p["conv1_b"], *p["bn1"]))
    # conv2 / conv3: (160,160,1,12) -> (kw, Cin) row order -> (1920, 160), BN1 folded.
    for name in ("conv2", "conv3"):
        w = p[f"{name}_w"].reshape(160, 160, 12).transpose(2, 1, 0).reshape(1920, 160)
        prep[name] = pad(*fold_bn(w, p[f"{name}_b"], *p["bn1"]))
    # fc1: (256, 2500) -> (2500, 256)
    prep["fc1"] = pad(p["fc1_w"].T, p["fc1_b"])
    # fc2: permute columns from torch's (C, W) flatten order to channels-last (W, C) order.
    w = p["fc2_w"].reshape(256, 160, 11).transpose(0, 2, 1).reshape(256, 1760).T
    prep["fc2"] = pad(w, p["fc2_b"])
    # fc3 + BN4 folded; kept at native N=64 (consumed by the fused fc3/fc4 kernel).
    w3, b3 = fold_bn(p["fc3_w"].T, p["fc3_b"], *p["bn4"])
    prep["fc3"] = (w3.astype(jnp.bfloat16), b3.reshape(1, 64).astype(jnp.float32))
    # fc4: (1, 64) -> (64, 1), N padded to 128 lanes for a lane-dense output block.
    w4 = jnp.zeros((64, 128), jnp.bfloat16).at[:, :1].set(p["fc4_w"].T.astype(jnp.bfloat16))
    b4 = jnp.zeros((1, 128), jnp.float32).at[0, :1].set(p["fc4_b"].astype(jnp.float32))
    prep["fc4"] = (w4, b4)
    return prep


# ----------------------------- forward -----------------------------
def forward(seq_input, gexp_input, prep):
    B = seq_input.shape[0]
    seq = seq_input.astype(jnp.float32).reshape(B, 4, SEQ_LEN)
    gexp = gexp_input.astype(jnp.float32).reshape(B, NUM_GENE)

    # gexp branch: fc1 + relu
    g = matmul_bias(gexp, *prep["fc1"], 256, relu=True, out_dtype=jnp.bfloat16)      # (B, 256)

    # --- seq branch (channels-last (B, W, C) between layers: no transpose round trips) ---
    # conv1 (4x15) + BN1 + relu -> pool (1,4)
    cols, wout = im2col_seq(seq, 15)                                                 # (B*986, 60)
    y = matmul_bias(cols, *prep["conv1"], 160, relu=True, out_dtype=jnp.bfloat16)
    x = maxpool_cl(y.reshape(B, wout, 160), 4)                                       # (B, 246, 160)
    # dropout1: identity (inference)

    # conv2 (1x12) + BN1 + relu -> pool (1,4)
    cols, wout = im2col_cl(x, 12)                                                    # (B*235, 1920)
    y = matmul_bias(cols, *prep["conv2"], 160, relu=True, out_dtype=jnp.bfloat16)
    x = maxpool_cl(y.reshape(B, wout, 160), 4)                                       # (B, 58, 160)

    # conv3 (1x12) + BN1 + relu -> pool (1,4)
    cols, wout = im2col_cl(x, 12)                                                    # (B*47, 1920)
    y = matmul_bias(cols, *prep["conv3"], 160, relu=True, out_dtype=jnp.bfloat16)
    x = maxpool_cl(y.reshape(B, wout, 160), 4)                                       # (B, 11, 160)

    flat = jnp.maximum(x.reshape(B, -1), 0)       # (B, 1760); extra relu as in torch (idempotent)
    s = matmul_bias(flat, *prep["fc2"], 256, relu=False, out_dtype=jnp.bfloat16)     # (B, 256)

    cat = jnp.concatenate([s, g], axis=1)                                            # (B, 512)
    # fc3 (+BN4) + relu, dropout2 identity, fc4 + relu -- fused into one pallas_call.
    out = fc34_fused(cat, *prep["fc3"], *prep["fc4"])                                # (B, 1)
    return out


if __name__ == "__main__":
    key = jax.random.PRNGKey(0)
    kp, ks, kg = jax.random.split(key, 3)
    params = init_params(kp)
    prep = prepare_params(params)   # one-time fold / reorder / pad / bf16-cast of weights

    B = 2
    # one-hot DNA sequence input (B, 4, SEQ_LEN) and gene expression (B, NUM_GENE)
    seq_idx = jax.random.randint(ks, (B, SEQ_LEN), 0, 4)
    seq_input = jax.nn.one_hot(seq_idx, 4, axis=1).astype(jnp.float32)   # (B, 4, SEQ_LEN)
    gexp_input = jax.random.normal(kg, (B, NUM_GENE), jnp.float32)

    fwd = jax.jit(forward)
    out = fwd(seq_input, gexp_input, prep)
    out = jax.block_until_ready(out)
    assert out.shape == (B, 1), out.shape
    print("KERNEL_OK")
</pallas_src>

<mosaic_0001>
module attributes {stable_mosaic.version = 11 : i64} {
  func.func @_mm_bias_kernel(%arg0: i32, %arg1: i32, %arg2: memref<256x64xbf16, #tpu.memory_space<vmem>>, %arg3: memref<64x256xbf16, #tpu.memory_space<vmem>>, %arg4: memref<1x256xf32, #tpu.memory_space<vmem>>, %arg5: memref<256x256xbf16, #tpu.memory_space<vmem>>) attributes {dimension_semantics = [#tpu.dimension_semantics<parallel>, #tpu.dimension_semantics<parallel>], iteration_bounds = array<i64: 8, 1>, scalar_prefetch = 0 : i64, scratch_operands = 0 : i64, tpu.core_type = #tpu.core_type<tc>, window_params = [{transform_indices = @transform_0, window_bounds = array<i64: 256, 64>}, {transform_indices = @transform_1, window_bounds = array<i64: 64, 256>}, {transform_indices = @transform_2, window_bounds = array<i64: 1, 256>}, {transform_indices = @transform_3, window_bounds = array<i64: 256, 256>}]} {
    %c0 = arith.constant 0 : index
    %c0_0 = arith.constant 0 : index
    %0 = vector.load %arg2[%c0, %c0_0] : memref<256x64xbf16, #tpu.memory_space<vmem>>, vector<256x64xbf16>
    %c0_1 = arith.constant 0 : index
    %c0_2 = arith.constant 0 : index
    %1 = vector.load %arg3[%c0_1, %c0_2] : memref<64x256xbf16, #tpu.memory_space<vmem>>, vector<64x256xbf16>
    %cst = arith.constant dense<0.000000e+00> : vector<256x256xf32>
    %2 = tpu.matmul %0, %1, %cst {dimension_numbers = #tpu.dot_dimension_numbers<[1], [0], [0], [1], [0, 0, 1, 1], [], []>} : vector<256x64xbf16>, vector<64x256xbf16>, vector<256x256xf32> -> vector<256x256xf32>
    %c0_3 = arith.constant 0 : index
    %c0_4 = arith.constant 0 : index
    %3 = vector.load %arg4[%c0_3, %c0_4] : memref<1x256xf32, #tpu.memory_space<vmem>>, vector<1x256xf32>
    %4 = vector.broadcast %3 : vector<1x256xf32> to vector<256x256xf32>
    %5 = arith.addf %2, %4 : vector<256x256xf32>
    %cst_5 = arith.constant 0.000000e+00 : f32
    %6 = vector.broadcast %cst_5 : f32 to vector<256x256xf32>
    %7 = arith.maximumf %5, %6 : vector<256x256xf32>
    %8 = arith.truncf %7 : vector<256x256xf32> to vector<256x256xbf16>
    %c0_6 = arith.constant 0 : index
    %c0_7 = arith.constant 0 : index
    %9 = vector.load %arg5[%c0_6, %c0_7] : memref<256x256xbf16, #tpu.memory_space<vmem>>, vector<256x256xbf16>
    tpu.vector_store %arg5[%c0_6, %c0_7], %8 {strides = array<i32>} : memref<256x256xbf16, #tpu.memory_space<vmem>>, vector<256x256xbf16>,
    return
  }
  func.func @transform_0(%arg0: i32, %arg1: i32) -> (i32, i32) {
    %c0_i32 = arith.constant 0 : i32
    %c0_i32_0 = arith.constant 0 : i32
    return %arg0, %c0_i32 : i32, i32
  }
  func.func @transform_1(%arg0: i32, %arg1: i32) -> (i32, i32) {
    %c0_i32 = arith.constant 0 : i32
    %c0_i32_0 = arith.constant 0 : i32
    return %c0_i32, %arg1 : i32, i32
  }
  func.func @transform_2(%arg0: i32, %arg1: i32) -> (i32, i32) {
    %c0_i32 = arith.constant 0 : i32
    %c0_i32_0 = arith.constant 0 : i32
    return %c0_i32, %arg1 : i32, i32
  }
  func.func @transform_3(%arg0: i32, %arg1: i32) -> (i32, i32) {
    %c0_i32 = arith.constant 0 : i32
    return %arg0, %arg1 : i32, i32
  }
}

module attributes {stable_mosaic.version = 11 : i64} {
  func.func @_mm_bias_kernel(%arg0: i32, %arg1: i32, %arg2: memref<256x1920xbf16, #tpu.memory_space<vmem>>, %arg3: memref<1920x256xbf16, #tpu.memory_space<vmem>>, %arg4: memref<1x256xf32, #tpu.memory_space<vmem>>, %arg5: memref<256x256xbf16, #tpu.memory_space<vmem>>) attributes {dimension_semantics = [#tpu.dimension_semantics<parallel>, #tpu.dimension_semantics<parallel>], iteration_bounds = array<i64: 2, 1>, scalar_prefetch = 0 : i64, scratch_operands = 0 : i64, tpu.core_type = #tpu.core_type<tc>, window_params = [{transform_indices = @transform_0, window_bounds = array<i64: 256, 1920>}, {transform_indices = @transform_1, window_bounds = array<i64: 1920, 256>}, {transform_indices = @transform_2, window_bounds = array<i64: 1, 256>}, {transform_indices = @transform_3, window_bounds = array<i64: 256, 256>}]} {
    %c0 = arith.constant 0 : index
    %c0_0 = arith.constant 0 : index
    %0 = vector.load %arg2[%c0, %c0_0] : memref<256x1920xbf16, #tpu.memory_space<vmem>>, vector<256x1920xbf16>
    %c0_1 = arith.constant 0 : index
    %c0_2 = arith.constant 0 : index
    %1 = vector.load %arg3[%c0_1, %c0_2] : memref<1920x256xbf16, #tpu.memory_space<vmem>>, vector<1920x256xbf16>
    %cst = arith.constant dense<0.000000e+00> : vector<256x256xf32>
    %2 = tpu.matmul %0, %1, %cst {dimension_numbers = #tpu.dot_dimension_numbers<[1], [0], [0], [1], [0, 0, 1, 1], [], []>} : vector<256x1920xbf16>, vector<1920x256xbf16>, vector<256x256xf32> -> vector<256x256xf32>
    %c0_3 = arith.constant 0 : index
    %c0_4 = arith.constant 0 : index
    %3 = vector.load %arg4[%c0_3, %c0_4] : memref<1x256xf32, #tpu.memory_space<vmem>>, vector<1x256xf32>
    %4 = vector.broadcast %3 : vector<1x256xf32> to vector<256x256xf32>
    %5 = arith.addf %2, %4 : vector<256x256xf32>
    %cst_5 = arith.constant 0.000000e+00 : f32
    %6 = vector.broadcast %cst_5 : f32 to vector<256x256xf32>
    %7 = arith.maximumf %5, %6 : vector<256x256xf32>
    %8 = arith.truncf %7 : vector<256x256xf32> to vector<256x256xbf16>
    %c0_6 = arith.constant 0 : index
    %c0_7 = arith.constant 0 : index
    %9 = vector.load %arg5[%c0_6, %c0_7] : memref<256x256xbf16, #tpu.memory_space<vmem>>, vector<256x256xbf16>
    tpu.vector_store %arg5[%c0_6, %c0_7], %8 {strides = array<i32>} : memref<256x256xbf16, #tpu.memory_space<vmem>>, vector<256x256xbf16>,
    return
  }
  func.func @transform_0(%arg0: i32, %arg1: i32) -> (i32, i32) {
    %c0_i32 = arith.constant 0 : i32
    %c0_i32_0 = arith.constant 0 : i32
    return %arg0, %c0_i32 : i32, i32
  }
  func.func @transform_1(%arg0: i32, %arg1: i32) -> (i32, i32) {
    %c0_i32 = arith.constant 0 : i32
    %c0_i32_0 = arith.constant 0 : i32
    return %c0_i32, %arg1 : i32, i32
  }
  func.func @transform_2(%arg0: i32, %arg1: i32) -> (i32, i32) {
    %c0_i32 = arith.constant 0 : i32
    %c0_i32_0 = arith.constant 0 : i32
    return %c0_i32, %arg1 : i32, i32
  }
  func.func @transform_3(%arg0: i32, %arg1: i32) -> (i32, i32) {
    %c0_i32 = arith.constant 0 : i32
    return %arg0, %arg1 : i32, i32
  }
}

module attributes {stable_mosaic.version = 11 : i64} {
  func.func @_mm_bias_kernel(%arg0: i32, %arg1: i32, %arg2: memref<96x1920xbf16, #tpu.memory_space<vmem>>, %arg3: memref<1920x256xbf16, #tpu.memory_space<vmem>>, %arg4: memref<1x256xf32, #tpu.memory_space<vmem>>, %arg5: memref<96x256xbf16, #tpu.memory_space<vmem>>) attributes {dimension_semantics = [#tpu.dimension_semantics<parallel>, #tpu.dimension_semantics<parallel>], iteration_bounds = array<i64: 1, 1>, scalar_prefetch = 0 : i64, scratch_operands = 0 : i64, tpu.core_type = #tpu.core_type<tc>, window_params = [{transform_indices = @transform_0, window_bounds = array<i64: 96, 1920>}, {transform_indices = @transform_1, window_bounds = array<i64: 1920, 256>}, {transform_indices = @transform_2, window_bounds = array<i64: 1, 256>}, {transform_indices = @transform_3, window_bounds = array<i64: 96, 256>}]} {
    %c0 = arith.constant 0 : index
    %c0_0 = arith.constant 0 : index
    %0 = vector.load %arg2[%c0, %c0_0] : memref<96x1920xbf16, #tpu.memory_space<vmem>>, vector<96x1920xbf16>
    %c0_1 = arith.constant 0 : index
    %c0_2 = arith.constant 0 : index
    %1 = vector.load %arg3[%c0_1, %c0_2] : memref<1920x256xbf16, #tpu.memory_space<vmem>>, vector<1920x256xbf16>
    %cst = arith.constant dense<0.000000e+00> : vector<96x256xf32>
    %2 = tpu.matmul %0, %1, %cst {dimension_numbers = #tpu.dot_dimension_numbers<[1], [0], [0], [1], [0, 0, 1, 1], [], []>} : vector<96x1920xbf16>, vector<1920x256xbf16>, vector<96x256xf32> -> vector<96x256xf32>
    %c0_3 = arith.constant 0 : index
    %c0_4 = arith.constant 0 : index
    %3 = vector.load %arg4[%c0_3, %c0_4] : memref<1x256xf32, #tpu.memory_space<vmem>>, vector<1x256xf32>
    %4 = vector.broadcast %3 : vector<1x256xf32> to vector<96x256xf32>
    %5 = arith.addf %2, %4 : vector<96x256xf32>
    %cst_5 = arith.constant 0.000000e+00 : f32
    %6 = vector.broadcast %cst_5 : f32 to vector<96x256xf32>
    %7 = arith.maximumf %5, %6 : vector<96x256xf32>
    %8 = arith.truncf %7 : vector<96x256xf32> to vector<96x256xbf16>
    %c0_6 = arith.constant 0 : index
    %c0_7 = arith.constant 0 : index
    %9 = vector.load %arg5[%c0_6, %c0_7] : memref<96x256xbf16, #tpu.memory_space<vmem>>, vector<96x256xbf16>
    tpu.vector_store %arg5[%c0_6, %c0_7], %8 {strides = array<i32>} : memref<96x256xbf16, #tpu.memory_space<vmem>>, vector<96x256xbf16>,
    return
  }
  func.func @transform_0(%arg0: i32, %arg1: i32) -> (i32, i32) {
    %c0_i32 = arith.constant 0 : i32
    %c0_i32_0 = arith.constant 0 : i32
    return %arg0, %c0_i32 : i32, i32
  }
  func.func @transform_1(%arg0: i32, %arg1: i32) -> (i32, i32) {
    %c0_i32 = arith.constant 0 : i32
    %c0_i32_0 = arith.constant 0 : i32
    return %c0_i32, %arg1 : i32, i32
  }
  func.func @transform_2(%arg0: i32, %arg1: i32) -> (i32, i32) {
    %c0_i32 = arith.constant 0 : i32
    %c0_i32_0 = arith.constant 0 : i32
    return %c0_i32, %arg1 : i32, i32
  }
  func.func @transform_3(%arg0: i32, %arg1: i32) -> (i32, i32) {
    %c0_i32 = arith.constant 0 : i32
    return %arg0, %arg1 : i32, i32
  }
}

module attributes {stable_mosaic.version = 11 : i64} {
  func.func @_mm_bias_kernel(%arg0: i32, %arg1: i32, %arg2: memref<16x1792xbf16, #tpu.memory_space<vmem>>, %arg3: memref<1792x256xbf16, #tpu.memory_space<vmem>>, %arg4: memref<1x256xf32, #tpu.memory_space<vmem>>, %arg5: memref<16x256xbf16, #tpu.memory_space<vmem>>) attributes {dimension_semantics = [#tpu.dimension_semantics<parallel>, #tpu.dimension_semantics<parallel>], iteration_bounds = array<i64: 1, 1>, scalar_prefetch = 0 : i64, scratch_operands = 0 : i64, tpu.core_type = #tpu.core_type<tc>, window_params = [{transform_indices = @transform_0, window_bounds = array<i64: 16, 1792>}, {transform_indices = @transform_1, window_bounds = array<i64: 1792, 256>}, {transform_indices = @transform_2, window_bounds = array<i64: 1, 256>}, {transform_indices = @transform_3, window_bounds = array<i64: 16, 256>}]} {
    %c0 = arith.constant 0 : index
    %c0_0 = arith.constant 0 : index
    %0 = vector.load %arg2[%c0, %c0_0] : memref<16x1792xbf16, #tpu.memory_space<vmem>>, vector<16x1792xbf16>
    %c0_1 = arith.constant 0 : index
    %c0_2 = arith.constant 0 : index
    %1 = vector.load %arg3[%c0_1, %c0_2] : memref<1792x256xbf16, #tpu.memory_space<vmem>>, vector<1792x256xbf16>
    %cst = arith.constant dense<0.000000e+00> : vector<16x256xf32>
    %2 = tpu.matmul %0, %1, %cst {dimension_numbers = #tpu.dot_dimension_numbers<[1], [0], [0], [1], [0, 0, 1, 1], [], []>} : vector<16x1792xbf16>, vector<1792x256xbf16>, vector<16x256xf32> -> vector<16x256xf32>
    %c0_3 = arith.constant 0 : index
    %c0_4 = arith.constant 0 : index
    %3 = vector.load %arg4[%c0_3, %c0_4] : memref<1x256xf32, #tpu.memory_space<vmem>>, vector<1x256xf32>
    %4 = vector.broadcast %3 : vector<1x256xf32> to vector<16x256xf32>
    %5 = arith.addf %2, %4 : vector<16x256xf32>
    %6 = arith.truncf %5 : vector<16x256xf32> to vector<16x256xbf16>
    %c0_5 = arith.constant 0 : index
    %c0_6 = arith.constant 0 : index
    %7 = vector.load %arg5[%c0_5, %c0_6] : memref<16x256xbf16, #tpu.memory_space<vmem>>, vector<16x256xbf16>
    tpu.vector_store %arg5[%c0_5, %c0_6], %6 {strides = array<i32>} : memref<16x256xbf16, #tpu.memory_space<vmem>>, vector<16x256xbf16>,
    return
  }
  func.func @transform_0(%arg0: i32, %arg1: i32) -> (i32, i32) {
    %c0_i32 = arith.constant 0 : i32
    %c0_i32_0 = arith.constant 0 : i32
    return %arg0, %c0_i32 : i32, i32
  }
  func.func @transform_1(%arg0: i32, %arg1: i32) -> (i32, i32) {
    %c0_i32 = arith.constant 0 : i32
    %c0_i32_0 = arith.constant 0 : i32
    return %c0_i32, %arg1 : i32, i32
  }
  func.func @transform_2(%arg0: i32, %arg1: i32) -> (i32, i32) {
    %c0_i32 = arith.constant 0 : i32
    %c0_i32_0 = arith.constant 0 : i32
    return %c0_i32, %arg1 : i32, i32
  }
  func.func @transform_3(%arg0: i32, %arg1: i32) -> (i32, i32) {
    %c0_i32 = arith.constant 0 : i32
    return %arg0, %arg1 : i32, i32
  }
}

module attributes {stable_mosaic.version = 11 : i64} {
  func.func @_mm_bias_kernel(%arg0: i32, %arg1: i32, %arg2: memref<16x2560xbf16, #tpu.memory_space<vmem>>, %arg3: memref<2560x256xbf16, #tpu.memory_space<vmem>>, %arg4: memref<1x256xf32, #tpu.memory_space<vmem>>, %arg5: memref<16x256xbf16, #tpu.memory_space<vmem>>) attributes {dimension_semantics = [#tpu.dimension_semantics<parallel>, #tpu.dimension_semantics<parallel>], iteration_bounds = array<i64: 1, 1>, scalar_prefetch = 0 : i64, scratch_operands = 0 : i64, tpu.core_type = #tpu.core_type<tc>, window_params = [{transform_indices = @transform_0, window_bounds = array<i64: 16, 2560>}, {transform_indices = @transform_1, window_bounds = array<i64: 2560, 256>}, {transform_indices = @transform_2, window_bounds = array<i64: 1, 256>}, {transform_indices = @transform_3, window_bounds = array<i64: 16, 256>}]} {
    %c0 = arith.constant 0 : index
    %c0_0 = arith.constant 0 : index
    %0 = vector.load %arg2[%c0, %c0_0] : memref<16x2560xbf16, #tpu.memory_space<vmem>>, vector<16x2560xbf16>
    %c0_1 = arith.constant 0 : index
    %c0_2 = arith.constant 0 : index
    %1 = vector.load %arg3[%c0_1, %c0_2] : memref<2560x256xbf16, #tpu.memory_space<vmem>>, vector<2560x256xbf16>
    %cst = arith.constant dense<0.000000e+00> : vector<16x256xf32>
    %2 = tpu.matmul %0, %1, %cst {dimension_numbers = #tpu.dot_dimension_numbers<[1], [0], [0], [1], [0, 0, 1, 1], [], []>} : vector<16x2560xbf16>, vector<2560x256xbf16>, vector<16x256xf32> -> vector<16x256xf32>
    %c0_3 = arith.constant 0 : index
    %c0_4 = arith.constant 0 : index
    %3 = vector.load %arg4[%c0_3, %c0_4] : memref<1x256xf32, #tpu.memory_space<vmem>>, vector<1x256xf32>
    %4 = vector.broadcast %3 : vector<1x256xf32> to vector<16x256xf32>
    %5 = arith.addf %2, %4 : vector<16x256xf32>
    %cst_5 = arith.constant 0.000000e+00 : f32
    %6 = vector.broadcast %cst_5 : f32 to vector<16x256xf32>
    %7 = arith.maximumf %5, %6 : vector<16x256xf32>
    %8 = arith.truncf %7 : vector<16x256xf32> to vector<16x256xbf16>
    %c0_6 = arith.constant 0 : index
    %c0_7 = arith.constant 0 : index
    %9 = vector.load %arg5[%c0_6, %c0_7] : memref<16x256xbf16, #tpu.memory_space<vmem>>, vector<16x256xbf16>
    tpu.vector_store %arg5[%c0_6, %c0_7], %8 {strides = array<i32>} : memref<16x256xbf16, #tpu.memory_space<vmem>>, vector<16x256xbf16>,
    return
  }
  func.func @transform_0(%arg0: i32, %arg1: i32) -> (i32, i32) {
    %c0_i32 = arith.constant 0 : i32
    %c0_i32_0 = arith.constant 0 : i32
    return %arg0, %c0_i32 : i32, i32
  }
  func.func @transform_1(%arg0: i32, %arg1: i32) -> (i32, i32) {
    %c0_i32 = arith.constant 0 : i32
    %c0_i32_0 = arith.constant 0 : i32
    return %c0_i32, %arg1 : i32, i32
  }
  func.func @transform_2(%arg0: i32, %arg1: i32) -> (i32, i32) {
    %c0_i32 = arith.constant 0 : i32
    %c0_i32_0 = arith.constant 0 : i32
    return %c0_i32, %arg1 : i32, i32
  }
  func.func @transform_3(%arg0: i32, %arg1: i32) -> (i32, i32) {
    %c0_i32 = arith.constant 0 : i32
    return %arg0, %arg1 : i32, i32
  }
}

module attributes {stable_mosaic.version = 11 : i64} {
  func.func @_fc34_kernel(%arg0: i32, %arg1: memref<16x512xbf16, #tpu.memory_space<vmem>>, %arg2: memref<512x64xbf16, #tpu.memory_space<vmem>>, %arg3: memref<1x64xf32, #tpu.memory_space<vmem>>, %arg4: memref<64x128xbf16, #tpu.memory_space<vmem>>, %arg5: memref<1x128xf32, #tpu.memory_space<vmem>>, %arg6: memref<16x128xf32, #tpu.memory_space<vmem>>) attributes {dimension_semantics = [#tpu.dimension_semantics<arbitrary>], iteration_bounds = array<i64: 1>, scalar_prefetch = 0 : i64, scratch_operands = 0 : i64, tpu.core_type = #tpu.core_type<tc>, window_params = [{pipeline_mode = #tpu.pipeline_mode<synchronous>, transform_indices = @transform_0, window_bounds = array<i64: 16, 512>}, {pipeline_mode = #tpu.pipeline_mode<synchronous>, transform_indices = @transform_1, window_bounds = array<i64: 512, 64>}, {pipeline_mode = #tpu.pipeline_mode<synchronous>, transform_indices = @transform_2, window_bounds = array<i64: 1, 64>}, {pipeline_mode = #tpu.pipeline_mode<synchronous>, transform_indices = @transform_3, window_bounds = array<i64: 64, 128>}, {pipeline_mode = #tpu.pipeline_mode<synchronous>, transform_indices = @transform_4, window_bounds = array<i64: 1, 128>}, {pipeline_mode = #tpu.pipeline_mode<synchronous>, transform_indices = @transform_5, window_bounds = array<i64: 16, 128>}]} {
    %c0 = arith.constant 0 : index
    %c0_0 = arith.constant 0 : index
    %0 = vector.load %arg1[%c0, %c0_0] : memref<16x512xbf16, #tpu.memory_space<vmem>>, vector<16x512xbf16>
    %c0_1 = arith.constant 0 : index
    %c0_2 = arith.constant 0 : index
    %1 = vector.load %arg2[%c0_1, %c0_2] : memref<512x64xbf16, #tpu.memory_space<vmem>>, vector<512x64xbf16>
    %cst = arith.constant dense<0.000000e+00> : vector<16x64xf32>
    %2 = tpu.matmul %0, %1, %cst {dimension_numbers = #tpu.dot_dimension_numbers<[1], [0], [0], [1], [0, 0, 1, 1], [], []>} : vector<16x512xbf16>, vector<512x64xbf16>, vector<16x64xf32> -> vector<16x64xf32>
    %c0_3 = arith.constant 0 : index
    %c0_4 = arith.constant 0 : index
    %3 = vector.load %arg3[%c0_3, %c0_4] : memref<1x64xf32, #tpu.memory_space<vmem>>, vector<1x64xf32>
    %4 = vector.broadcast %3 : vector<1x64xf32> to vector<16x64xf32>
    %5 = arith.addf %2, %4 : vector<16x64xf32>
    %cst_5 = arith.constant 0.000000e+00 : f32
    %6 = vector.broadcast %cst_5 : f32 to vector<16x64xf32>
    %7 = arith.maximumf %5, %6 : vector<16x64xf32>
    %8 = arith.truncf %7 : vector<16x64xf32> to vector<16x64xbf16>
    %c0_6 = arith.constant 0 : index
    %c0_7 = arith.constant 0 : index
    %9 = vector.load %arg4[%c0_6, %c0_7] : memref<64x128xbf16, #tpu.memory_space<vmem>>, vector<64x128xbf16>
    %cst_8 = arith.constant dense<0.000000e+00> : vector<16x128xf32>
    %10 = tpu.matmul %8, %9, %cst_8 {dimension_numbers = #tpu.dot_dimension_numbers<[1], [0], [0], [1], [0, 0, 1, 1], [], []>} : vector<16x64xbf16>, vector<64x128xbf16>, vector<16x128xf32> -> vector<16x128xf32>
    %c0_9 = arith.constant 0 : index
    %c0_10 = arith.constant 0 : index
    %11 = vector.load %arg5[%c0_9, %c0_10] : memref<1x128xf32, #tpu.memory_space<vmem>>, vector<1x128xf32>
    %12 = vector.broadcast %11 : vector<1x128xf32> to vector<16x128xf32>
    %13 = arith.addf %10, %12 : vector<16x128xf32>
    %cst_11 = arith.constant 0.000000e+00 : f32
    %14 = vector.broadcast %cst_11 : f32 to vector<16x128xf32>
    %15 = arith.maximumf %13, %14 : vector<16x128xf32>
    %c0_12 = arith.constant 0 : index
    %c0_13 = arith.constant 0 : index
    %16 = vector.load %arg6[%c0_12, %c0_13] : memref<16x128xf32, #tpu.memory_space<vmem>>, vector<16x128xf32>
    tpu.vector_store %arg6[%c0_12, %c0_13], %15 {strides = array<i32>} : memref<16x128xf32, #tpu.memory_space<vmem>>, vector<16x128xf32>,
    return
  }
  func.func @transform_0(%arg0: i32) -> (i32, i32) {
    %c0_i32 = arith.constant 0 : i32
    %c0_i32_0 = arith.constant 0 : i32
    %c0_i32_1 = arith.constant 0 : i32
    return %c0_i32, %c0_i32_0 : i32, i32
  }
  func.func @transform_1(%arg0: i32) -> (i32, i32) {
    %c0_i32 = arith.constant 0 : i32
    %c0_i32_0 = arith.constant 0 : i32
    %c0_i32_1 = arith.constant 0 : i32
    return %c0_i32, %c0_i32_0 : i32, i32
  }
  func.func @transform_2(%arg0: i32) -> (i32, i32) {
    %c0_i32 = arith.constant 0 : i32
    %c0_i32_0 = arith.constant 0 : i32
    %c0_i32_1 = arith.constant 0 : i32
    return %c0_i32, %c0_i32_0 : i32, i32
  }
  func.func @transform_3(%arg0: i32) -> (i32, i32) {
    %c0_i32 = arith.constant 0 : i32
    %c0_i32_0 = arith.constant 0 : i32
    %c0_i32_1 = arith.constant 0 : i32
    return %c0_i32, %c0_i32_0 : i32, i32
  }
  func.func @transform_4(%arg0: i32) -> (i32, i32) {
    %c0_i32 = arith.constant 0 : i32
    %c0_i32_0 = arith.constant 0 : i32
    %c0_i32_1 = arith.constant 0 : i32
    return %c0_i32, %c0_i32_0 : i32, i32
  }
  func.func @transform_5(%arg0: i32) -> (i32, i32) {
    %c0_i32 = arith.constant 0 : i32
    %c0_i32_0 = arith.constant 0 : i32
    %c0_i32_1 = arith.constant 0 : i32
    return %c0_i32, %c0_i32_0 : i32, i32
  }
}

</mosaic_0001>

<llo_original>
// kernel: forward.7
$region0: #{forward.7}
  #allocation0 [shape = 'u32[]', space=smem, size = 0x4, offset = 0x4, fixed_abs, tag = 'smem constant byte address 0x4 - core index']
  #allocation1 [shape = 'u32[144,128]{1,0:T(1,128)}', space=vmem, size = 0x12000, scoped, tag = 'internal scratch']
  %s0 = inlined_call_operand.vmem [shape: bf16[2048,64], index: 0, kind: input, shape index: {}]
  %s1 = inlined_call_operand.vmem [shape: bf16[64,256], index: 1, kind: input, shape index: {}]
  %s2 = inlined_call_operand.vmem [shape: f32[1,256], index: 2, kind: input, shape index: {}]
  %s3 = inlined_call_operand.vmem [shape: bf16[2048,256], index: 3, kind: output, shape index: {}]
  %s4 = sld [smem:[#allocation0]]
  $region45: #{forward.7} parent=0
    _
  %s6 = ssub.s32 1, %s4
  %s7 = scalar_select 0, %s6, %s4
  loop: start=0, step=1, limit=10
  $region2: #{forward.7} parent=0 // loop_pre_header
    _
  $region3: #{forward.7} parent=0 // loop_header
    %s9 = sphi 0, %s13
    %p10 = scmp.ge.s32.totalorder %s9, 10
    %s16 = sphi 0, %s28
    %s17 = sphi 0, %s24
    %s18 = sphi 0, %s16
    %s19 = sphi 0, %s17
    %s20 = sphi 0, %s18
    %s21 = sphi 0, %s19
    %s31 = sphi 0, %s33
    %s34 = sphi 0, %s31
    %s35 = sphi 0, %s34
    %s51 = sphi 0, %s35
    %s57 = sphi 0, %s59
    %s60 = sphi 0, %s57
    %s61 = sphi 0, %s60
    %s77 = sphi 0, %s61
    %s83 = sphi 0, %s85
    %s86 = sphi 0, %s83
    %s87 = sphi 0, %s86
    %s103 = sphi 0, %s87
    %s111 = sphi 0, %s113
    %s114 = sphi 0, %s111
    %s115 = sphi 0, %s114
    %s131 = sphi 0, %s115
  $region4: #{forward.7} parent=0 // loop_header_branch
    %12 = sbr.rel (%p10) target = $region8
  $region5: #{forward.7} parent=0 // loop_body
    %s14 = ssub.s32 %s9, 1
    %s15 = ssub.s32 %s9, 2
    %s22 = sadd.s32 1, %s17
    %p23 = scmp.ge.s32.totalorder %s22, 1
    %s24 = scalar_select %p23, 0, %s22
    %s25 = sadd.s32 1, %s16
    %s26 = scalar_select %p23, %s25, %s16
    %p27 = scmp.ge.s32.totalorder %s26, 8
    %s28 = scalar_select %p27, 0, %s26
    %s29 = ssub.s32 %s16, %s28
    %p30 = scmp.eq.s32.totalorder %s29, 0
    %s32 = sadd.s32 %s31, 1
    %s33 = scalar_select %p30, %s31, %s32
    %p36 = pneg %p30
    %p37 = scmp.eq.s32.totalorder %s9, 7
    %p38 = por %p36, %p37
    %p39 = scmp.ne.s32.totalorder %s31, %s34
    %p40 = scmp.eq.s32.totalorder %s9, 0
    %p41 = por %p39, %p40
    %p42 = scmp.ne.s32.totalorder %s31, %s34
    %p43 = scmp.eq.s32.totalorder %s14, 7
    %p44 = por %p42, %p43
    %p45 = scmp.ne.s32.totalorder %s34, %s35
    %p46 = scmp.eq.s32.totalorder %s14, 0
    %p47 = por %p45, %p46
    %p48 = scmp.ne.s32.totalorder %s34, %s35
    %p49 = scmp.eq.s32.totalorder %s15, 7
    %p50 = por %p48, %p49
    %p52 = scmp.ne.s32.totalorder %s35, %s51
    %p53 = scmp.eq.s32.totalorder %s15, 0
    %p54 = por %p52, %p53
    %s55 = ssub.s32 %s17, %s24
    %p56 = scmp.eq.s32.totalorder %s55, 0
    %s58 = sadd.s32 %s57, 1
    %s59 = scalar_select %p56, %s57, %s58
    %p62 = pneg %p56
    %p63 = scmp.eq.s32.totalorder %s9, 7
    %p64 = por %p62, %p63
    %p65 = scmp.ne.s32.totalorder %s57, %s60
    %p66 = scmp.eq.s32.totalorder %s9, 0
    %p67 = por %p65, %p66
    %p68 = scmp.ne.s32.totalorder %s57, %s60
    %p69 = scmp.eq.s32.totalorder %s14, 7
    %p70 = por %p68, %p69
    %p71 = scmp.ne.s32.totalorder %s60, %s61
    %p72 = scmp.eq.s32.totalorder %s14, 0
    %p73 = por %p71, %p72
    %p74 = scmp.ne.s32.totalorder %s60, %s61
    %p75 = scmp.eq.s32.totalorder %s15, 7
    %p76 = por %p74, %p75
    %p78 = scmp.ne.s32.totalorder %s61, %s77
    %p79 = scmp.eq.s32.totalorder %s15, 0
    %p80 = por %p78, %p79
    %s81 = ssub.s32 %s17, %s24
    %p82 = scmp.eq.s32.totalorder %s81, 0
    %s84 = sadd.s32 %s83, 1
    %s85 = scalar_select %p82, %s83, %s84
    %p88 = pneg %p82
    %p89 = scmp.eq.s32.totalorder %s9, 7
    %p90 = por %p88, %p89
    %p91 = scmp.ne.s32.totalorder %s83, %s86
    %p92 = scmp.eq.s32.totalorder %s9, 0
    %p93 = por %p91, %p92
    %p94 = scmp.ne.s32.totalorder %s83, %s86
    %p95 = scmp.eq.s32.totalorder %s14, 7
    %p96 = por %p94, %p95
    %p97 = scmp.ne.s32.totalorder %s86, %s87
    %p98 = scmp.eq.s32.totalorder %s14, 0
    %p99 = por %p97, %p98
    %p100 = scmp.ne.s32.totalorder %s86, %s87
    %p101 = scmp.eq.s32.totalorder %s15, 7
    %p102 = por %p100, %p101
    %p104 = scmp.ne.s32.totalorder %s87, %s103
    %p105 = scmp.eq.s32.totalorder %s15, 0
    %p106 = por %p104, %p105
    %s107 = ssub.s32 %s16, %s28
    %s108 = ssub.s32 %s17, %s24
    %s109 = sor.u32 %s107, %s108
    %p110 = scmp.eq.s32.totalorder %s109, 0
    %s112 = sadd.s32 %s111, 1
    %s113 = scalar_select %p110, %s111, %s112
    %p116 = pneg %p110
    %p117 = scmp.eq.s32.totalorder %s9, 7
    %p118 = por %p116, %p117
    %p119 = scmp.ne.s32.totalorder %s111, %s114
    %p120 = scmp.eq.s32.totalorder %s9, 0
    %p121 = por %p119, %p120
    %p122 = scmp.ne.s32.totalorder %s111, %s114
    %p123 = scmp.eq.s32.totalorder %s14, 7
    %p124 = por %p122, %p123
    %p125 = scmp.ne.s32.totalorder %s114, %s115
    %p126 = scmp.eq.s32.totalorder %s14, 0
    %p127 = por %p125, %p126
    %p128 = scmp.ne.s32.totalorder %s114, %s115
    %p129 = scmp.eq.s32.totalorder %s15, 7
    %p130 = por %p128, %p129
    %p132 = scmp.ne.s32.totalorder %s115, %s131
    %p133 = scmp.eq.s32.totalorder %s15, 0
    %p134 = por %p132, %p133
    %p135 = scmp.le.s32.totalorder 1, %s9
    %p136 = scmp.lt.s32.totalorder %s9, 9
    %p137 = pnand %p135, %p136
    %p138 = pneg %p137
    // Predicated region
    $region9: #{forward.7} parent=5 // pred_check
      _
    $region10: #{forward.7} parent=5 // pred_check_branch
      %140 = sbr.rel (%p137) target = $region12
    $region11: #{forward.7} parent=5 // pred_region
      %s141 = ssub.s32 %s9, 1
      // Predicated region
      $region13: #{forward.7} parent=11 // pred_check
        %p142 = pneg %p73
      $region14: #{forward.7} parent=11 // pred_check_branch
        %144 = sbr.rel (%p142) target = $region16
      $region15: #{forward.7} parent=11 // pred_region
        %s145 = smul.u32 2, %s19
        %p146 = scmp.lt.s32.totalorder %s145, 1
        %s147 = scalar_select %p146, %s145, 1
        %s148 = smul.addr %s147, 4
        %s149 = scalar_lea.vmem %s1, %s148
        %s150 = smul.u32 2, %s19
      $region16: #{forward.7} parent=11 // pred_fallthru
        _
      // Predicated region
      $region17: #{forward.7} parent=11 // pred_check
        %p151 = pneg %p99
      $region18: #{forward.7} parent=11 // pred_check_branch
        %153 = sbr.rel (%p151) target = $region20
      $region19: #{forward.7} parent=11 // pred_region
        %s154 = smul.u32 2, %s19
        %p155 = scmp.lt.s32.totalorder %s154, 1
        %s156 = scalar_select %p155, %s154, 1
        %s157 = scalar_lea.vmem %s2, %s156
        %s158 = smul.u32 2, %s19
      $region20: #{forward.7} parent=11 // pred_fallthru
        _
    $region12: #{forward.7} parent=5 // pred_fallthru
      _
    %p159 = scmp.lt.s32.totalorder %s9, 8
    // Predicated region
    $region21: #{forward.7} parent=5 // pred_check
      %p160 = pneg %p159
    $region22: #{forward.7} parent=5 // pred_check_branch
      %162 = sbr.rel (%p160) target = $region24
    $region23: #{forward.7} parent=5 // pred_region
      // Predicated region
      $region25: #{forward.7} parent=23 // pred_check
        %p163 = pneg %p41
      $region26: #{forward.7} parent=23 // pred_check_branch
        %165 = sbr.rel (%p163) target = $region28
      $region27: #{forward.7} parent=23 // pred_region
        %s166 = smul.u32 32, %s16
        %p167 = scmp.lt.s32.totalorder %s166, 255
        %s168 = scalar_select %p167, %s166, 255
        %s169 = smul.addr %s168, 4
        %s170 = scalar_lea.vmem %s0, %s169
        %s171 = smul.u32 32, %s16
      $region28: #{forward.7} parent=23 // pred_fallthru
        _
    $region24: #{forward.7} parent=5 // pred_fallthru
      _
    %p172 = scmp.le.s32.totalorder 1, %s9
    %p173 = scmp.lt.s32.totalorder %s9, 9
    %p174 = pnand %p172, %p173
    %p175 = pneg %p174
    // Predicated region
    $region29: #{forward.7} parent=5 // pred_check
      _
    $region30: #{forward.7} parent=5 // pred_check_branch
      %177 = sbr.rel (%p174) target = $region32
    $region31: #{forward.7} parent=5 // pred_region
      %s178 = ssub.s32 %s9, 1
      %s179 = smul.u32 32, %s18
      %p180 = scmp.lt.s32.totalorder %s179, 255
      %s181 = scalar_select %p180, %s179, 255
      %s182 = smul.addr %s181, 4
      %s183 = scalar_lea.vmem %s0, %s182
      %p184 = pneg %p47
      %p185 = pneg %p44
      %s186 = smul.u32 2, %s19
      %p187 = scmp.lt.s32.totalorder %s186, 1
      %s188 = scalar_select %p187, %s186, 1
      %s189 = smul.addr %s188, 4
      %s190 = scalar_lea.vmem %s1, %s189
      %p191 = pneg %p73
      %p192 = pneg %p70
      %s193 = smul.u32 2, %s19
      %p194 = scmp.lt.s32.totalorder %s193, 1
      %s195 = scalar_select %p194, %s193, 1
      %s196 = scalar_lea.vmem %s2, %s195
      %p197 = pneg %p99
      %p198 = pneg %p96
      %p199 = pneg %p127
      %p200 = pneg %p124
      %s201 = smul.u32 32, %s18
      %s202 = smul.u32 2, %s19
      %p203 = scmp.lt.s32.totalorder %s201, 255
      %s204 = scalar_select %p203, %s201, 255
      %p205 = scmp.lt.s32.totalorder %s202, 1
      %s206 = scalar_select %p205, %s202, 1
      %s207 = smul.addr %s204, 2
      %s208 = sadd.s32 %s206, %s207
      %s209 = smul.addr %s208, 4
      %s210 = scalar_lea.vmem %s3, %s209
      %s211 = smul.u32 32, %s18
      %p212 = scmp.lt.s32.totalorder %s211, 255
      %s213 = scalar_select %p212, %s211, 255
      %s214 = smul.addr %s213, 4
      %s215 = scalar_lea.vmem %s0, %s214
      %s216 = smul.u32 32, %s18
      %s217 = smul.u32 2, %s19
      %p218 = scmp.lt.s32.totalorder %s217, 1
      %s219 = scalar_select %p218, %s217, 1
      %s220 = smul.addr %s219, 4
      %s221 = scalar_lea.vmem %s1, %s220
      %s222 = smul.u32 2, %s19
      %s223 = smul.u32 2, %s19
      %p224 = scmp.lt.s32.totalorder %s223, 1
      %s225 = scalar_select %p224, %s223, 1
      %s226 = scalar_lea.vmem %s2, %s225
      %s227 = smul.u32 2, %s19
      %s228 = smul.u32 32, %s18
      %s229 = smul.u32 2, %s19
      %p230 = scmp.lt.s32.totalorder %s228, 255
      %s231 = scalar_select %p230, %s228, 255
      %p232 = scmp.lt.s32.totalorder %s229, 1
      %s233 = scalar_select %p232, %s229, 1
      %s234 = smul.addr %s231, 2
      %s235 = sadd.s32 %s233, %s234
      %s236 = smul.addr %s235, 4
      %s237 = scalar_lea.vmem %s3, %s236
      %s238 = smul.u32 32, %s18
      %s239 = smul.u32 2, %s19
      %v241 = vld [vmem:[%s215] sm:$0xf]
      %v242 = vld [vmem:[%s215 + $0x4] sm:$0xf]
      %v243 = vld [vmem:[%s215 + $0x8] sm:$0xf]
      %v244 = vld [vmem:[%s215 + $0xc] sm:$0xf]
      %v245 = vld [vmem:[%s215 + $0x10] sm:$0xf]
      %v246 = vld [vmem:[%s215 + $0x14] sm:$0xf]
      %v247 = vld [vmem:[%s215 + $0x18] sm:$0xf]
      %v248 = vld [vmem:[%s215 + $0x1c] sm:$0xf]
      %v249 = vld [vmem:[%s215 + $0x20] sm:$0xf]
      %v250 = vld [vmem:[%s215 + $0x24] sm:$0xf]
      %v251 = vld [vmem:[%s215 + $0x28] sm:$0xf]
      %v252 = vld [vmem:[%s215 + $0x2c] sm:$0xf]
      %v253 = vld [vmem:[%s215 + $0x30] sm:$0xf]
      %v254 = vld [vmem:[%s215 + $0x34] sm:$0xf]
      %v255 = vld [vmem:[%s215 + $0x38] sm:$0xf]
      %v256 = vld [vmem:[%s215 + $0x3c] sm:$0xf]
      %v257 = vld [vmem:[%s215 + $0x40] sm:$0xf]
      %v258 = vld [vmem:[%s215 + $0x44] sm:$0xf]
      %v259 = vld [vmem:[%s215 + $0x48] sm:$0xf]
      %v260 = vld [vmem:[%s215 + $0x4c] sm:$0xf]
      %v261 = vld [vmem:[%s215 + $0x50] sm:$0xf]
      %v262 = vld [vmem:[%s215 + $0x54] sm:$0xf]
      %v263 = vld [vmem:[%s215 + $0x58] sm:$0xf]
      %v264 = vld [vmem:[%s215 + $0x5c] sm:$0xf]
      %v265 = vld [vmem:[%s215 + $0x60] sm:$0xf]
      %v266 = vld [vmem:[%s215 + $0x64] sm:$0xf]
      %v267 = vld [vmem:[%s215 + $0x68] sm:$0xf]
      %v268 = vld [vmem:[%s215 + $0x6c] sm:$0xf]
      %v269 = vld [vmem:[%s215 + $0x70] sm:$0xf]
      %v270 = vld [vmem:[%s215 + $0x74] sm:$0xf]
      %v271 = vld [vmem:[%s215 + $0x78] sm:$0xf]
      %v272 = vld [vmem:[%s215 + $0x7c] sm:$0xf]
      %v273 = vld [vmem:[%s221] sm:$0xff]
      %v274 = vld [vmem:[%s221 + $0x8] sm:$0xff]
      %v275 = vld [vmem:[%s221 + $0x10] sm:$0xff]
      %v276 = vld [vmem:[%s221 + $0x18] sm:$0xff]
      %v277 = vld [vmem:[%s221 + $0x20] sm:$0xff]
      %v278 = vld [vmem:[%s221 + $0x28] sm:$0xff]
      %v279 = vld [vmem:[%s221 + $0x30] sm:$0xff]
      %v280 = vld [vmem:[%s221 + $0x38] sm:$0xff]
      %v281 = vld [vmem:[%s226] sm:$0x3]
      %v283 = vlaneseq
      %v284 = vshrl.u32 %v283, 7
      %v285 = vsub.s32 0, %v284
      %v286 = vrot.slane %v281, %v285
      %v287 = vlaneseq
      %v288 = vshrl.u32 %v287, 7
      %v289 = vsub.s32 1, %v288
      %v290 = vrot.slane %v281, %v289
      %v325 = vunpack.c.l.b16 %v241
      %v326 = vunpack.c.l.b16 %v242
      %v327 = vunpack.c.l.b16 %v243
      %v328 = vunpack.c.l.b16 %v244
      %v329 = vunpack.c.l.b16 %v245
      %v330 = vunpack.c.l.b16 %v246
      %v331 = vunpack.c.l.b16 %v247
      %v332 = vunpack.c.l.b16 %v248
      %v333 = vunpack.c.l.b16 %v249
      %v334 = vunpack.c.l.b16 %v250
      %v335 = vunpack.c.l.b16 %v251
      %v336 = vunpack.c.l.b16 %v252
      %v337 = vunpack.c.l.b16 %v253
      %v338 = vunpack.c.l.b16 %v254
      %v339 = vunpack.c.l.b16 %v255
      %v340 = vunpack.c.l.b16 %v256
      %v341 = vunpack.c.l.b16 %v257
      %v342 = vunpack.c.l.b16 %v258
      %v343 = vunpack.c.l.b16 %v259
      %v344 = vunpack.c.l.b16 %v260
      %v345 = vunpack.c.l.b16 %v261
      %v346 = vunpack.c.l.b16 %v262
      %v347 = vunpack.c.l.b16 %v263
      %v348 = vunpack.c.l.b16 %v264
      %v349 = vunpack.c.l.b16 %v265
      %v350 = vunpack.c.l.b16 %v266
      %v351 = vunpack.c.l.b16 %v267
      %v352 = vunpack.c.l.b16 %v268
      %v353 = vunpack.c.l.b16 %v269
      %v354 = vunpack.c.l.b16 %v270
      %v355 = vunpack.c.l.b16 %v271
      %v356 = vunpack.c.l.b16 %v272
      %v357 = vpack.c.b16 %v326, %v325
      %v358 = vpack.c.b16 %v328, %v327
      %v359 = vpack.c.b16 %v330, %v329
      %v360 = vpack.c.b16 %v332, %v331
      %v361 = vpack.c.b16 %v334, %v333
      %v362 = vpack.c.b16 %v336, %v335
      %v363 = vpack.c.b16 %v338, %v337
      %v364 = vpack.c.b16 %v340, %v339
      %v365 = vpack.c.b16 %v342, %v341
      %v366 = vpack.c.b16 %v344, %v343
      %v367 = vpack.c.b16 %v346, %v345
      %v368 = vpack.c.b16 %v348, %v347
      %v369 = vpack.c.b16 %v350, %v349
      %v370 = vpack.c.b16 %v352, %v351
      %v371 = vpack.c.b16 %v354, %v353
      %v372 = vpack.c.b16 %v356, %v355
      %v381 = vunpack.c.l.b16 %v273
      %v382 = vunpack.c.h.b16 %v273
      %v383 = vunpack.c.l.b16 %v274
      %v384 = vunpack.c.h.b16 %v274
      %v385 = vunpack.c.l.b16 %v275
      %v386 = vunpack.c.h.b16 %v275
      %v387 = vunpack.c.l.b16 %v276
      %v388 = vunpack.c.h.b16 %v276
      %v389 = vunpack.c.l.b16 %v277
      %v390 = vunpack.c.h.b16 %v277
      %v391 = vunpack.c.l.b16 %v278
      %v392 = vunpack.c.h.b16 %v278
      %v393 = vunpack.c.l.b16 %v279
      %v394 = vunpack.c.h.b16 %v279
      %v395 = vunpack.c.l.b16 %v280
      %v396 = vunpack.c.h.b16 %v280
      %v397 = vpack.c.b16 %v383, %v381
      %v398 = vpack.c.b16 %v384, %v382
      %v399 = vpack.c.b16 %v387, %v385
      %v400 = vpack.c.b16 %v388, %v386
      %v401 = vpack.c.b16 %v391, %v389
      %v402 = vpack.c.b16 %v392, %v390
      %v403 = vpack.c.b16 %v395, %v393
      %v404 = vpack.c.b16 %v396, %v394
      %vm413 = vcmask 523264
      %v415 = vsel %vm413, %v357, 0
      %v418 = vsel %vm413, %v358, 0
      %v421 = vsel %vm413, %v359, 0
      %v424 = vsel %vm413, %v360, 0
      %v427 = vsel %vm413, %v361, 0
      %v430 = vsel %vm413, %v362, 0
      %v433 = vsel %vm413, %v363, 0
      %v436 = vsel %vm413, %v364, 0
      %v439 = vsel %vm413, %v365, 0
      %v442 = vsel %vm413, %v366, 0
      %v445 = vsel %vm413, %v367, 0
      %v448 = vsel %vm413, %v368, 0
      %v451 = vsel %vm413, %v369, 0
      %v454 = vsel %vm413, %v370, 0
      %v457 = vsel %vm413, %v371, 0
      %v460 = vsel %vm413, %v372, 0
      %462 = vmatprep.subr.bf16.mxu0 0
      %463 = vmatpush1.bf16.msra.mxu0 0
      %464 = vmatprep.subr.bf16.mxu0 0
      %465 = vmatpush1.bf16.msra.mxu0 0
      %466 = vmatprep.subr.bf16.mxu0 0
      %467 = vmatpush1.bf16.msra.mxu0 0
      %468 = vmatprep.subr.bf16.mxu0 0
      %469 = vmatpush1.bf16.msra.mxu0 0
      %470 = vmatprep.subr.bf16.mxu0 %v404
      %471 = vmatpush1.bf16.msra.mxu0 %v403
      %472 = vmatprep.subr.bf16.mxu0 %v402
      %473 = vmatpush1.bf16.msra.mxu0 %v401
      %474 = vmatprep.subr.bf16.mxu0 %v400
      %475 = vmatpush1.bf16.msra.mxu0 %v399
      %476 = vmatprep.subr.bf16.mxu0 %v398
      %477 = vmatpush1.bf16.msra.mxu0 %v397
      %478 = vmatprep.subr.bf16.mxu0 0
      %479 = vmatpush2.bf16.msra.mxu0 0
      %480 = vmatprep.subr.bf16.mxu0 0
      %481 = vmatpush2.bf16.msra.mxu0 0
      %482 = vmatprep.subr.bf16.mxu0 0
      %483 = vmatpush2.bf16.msra.mxu0 0
      %484 = vmatprep.subr.bf16.mxu0 0
      %485 = vmatpush2.bf16.msra.mxu0 0
      %486 = vmatprep.subr.bf16.mxu0 0
      %487 = vmatpush2.bf16.msra.mxu0 0
      %488 = vmatprep.subr.bf16.mxu0 0
      %489 = vmatpush2.bf16.msra.mxu0 0
      %490 = vmatprep.subr.bf16.mxu0 0
      %491 = vmatpush2.bf16.msra.mxu0 0
      %492 = vmatprep.subr.bf16.mxu0 0
      %493 = vmatpush2.bf16.msra.mxu0 0
      %494 = vmatprep.mubr.bf16.mxu0 0
      %495 = vmatmul.mubr.bf16.gmra.mxu0 %v415
      %v496 = vpop.f32.mrf.mxu0
      %v497 = vadd.f32 %v286, %v496
      %v498 = vpop.f32.mrf.mxu0
      %v499 = vadd.f32 %v290, %v498
      %v500 = vpop.f32.mrf.mxu0
      %v501 = vadd.f32 %v286, %v500
      %v502 = vpop.f32.mrf.mxu0
      %v503 = vadd.f32 %v290, %v502
      %504 = vmatprep.mubr.bf16.mxu0 0
      %505 = vmatmul.mubr.bf16.gmra.mxu0 %v418
      %v506 = vpop.f32.mrf.mxu0
      %v507 = vadd.f32 %v286, %v506
      %v508 = vpop.f32.mrf.mxu0
      %v509 = vadd.f32 %v290, %v508
      %v510 = vpop.f32.mrf.mxu0
      %v511 = vadd.f32 %v286, %v510
      %v512 = vpop.f32.mrf.mxu0
      %v513 = vadd.f32 %v290, %v512
      %514 = vmatprep.mubr.bf16.mxu0 0
      %515 = vmatmul.mubr.bf16.gmra.mxu0 %v421
      %v516 = vpop.f32.mrf.mxu0
      %v517 = vadd.f32 %v286, %v516
      %v518 = vpop.f32.mrf.mxu0
      %v519 = vadd.f32 %v290, %v518
      %v520 = vpop.f32.mrf.mxu0
      %v521 = vadd.f32 %v286, %v520
      %v522 = vpop.f32.mrf.mxu0
      %v523 = vadd.f32 %v290, %v522
      %524 = vmatprep.mubr.bf16.mxu0 0
      %525 = vmatmul.mubr.bf16.gmra.mxu0 %v424
      %v526 = vpop.f32.mrf.mxu0
      %v527 = vadd.f32 %v286, %v526
      %v528 = vpop.f32.mrf.mxu0
      %v529 = vadd.f32 %v290, %v528
      %v530 = vpop.f32.mrf.mxu0
      %v531 = vadd.f32 %v286, %v530
      %v532 = vpop.f32.mrf.mxu0
      %v533 = vadd.f32 %v290, %v532
      %534 = vmatprep.mubr.bf16.mxu0 0
      %535 = vmatmul.mubr.bf16.gmra.mxu0 %v427
      %v536 = vpop.f32.mrf.mxu0
      %v537 = vadd.f32 %v286, %v536
      %v538 = vpop.f32.mrf.mxu0
      %v539 = vadd.f32 %v290, %v538
      %v540 = vpop.f32.mrf.mxu0
      %v541 = vadd.f32 %v286, %v540
      %v542 = vpop.f32.mrf.mxu0
      %v543 = vadd.f32 %v290, %v542
      %544 = vmatprep.mubr.bf16.mxu0 0
      %545 = vmatmul.mubr.bf16.gmra.mxu0 %v430
      %v546 = vpop.f32.mrf.mxu0
      %v547 = vadd.f32 %v286, %v546
      %v548 = vpop.f32.mrf.mxu0
      %v549 = vadd.f32 %v290, %v548
      %v550 = vpop.f32.mrf.mxu0
      %v551 = vadd.f32 %v286, %v550
      %v552 = vpop.f32.mrf.mxu0
      %v553 = vadd.f32 %v290, %v552
      %554 = vmatprep.mubr.bf16.mxu0 0
      %555 = vmatmul.mubr.bf16.gmra.mxu0 %v433
      %v556 = vpop.f32.mrf.mxu0
      %v557 = vadd.f32 %v286, %v556
      %v558 = vpop.f32.mrf.mxu0
      %v559 = vadd.f32 %v290, %v558
      %v560 = vpop.f32.mrf.mxu0
      %v561 = vadd.f32 %v286, %v560
      %v562 = vpop.f32.mrf.mxu0
      %v563 = vadd.f32 %v290, %v562
      %564 = vmatprep.mubr.bf16.mxu0 0
      %565 = vmatmul.mubr.bf16.gmra.mxu0 %v436
      %v566 = vpop.f32.mrf.mxu0
      %v567 = vadd.f32 %v286, %v566
      %v568 = vpop.f32.mrf.mxu0
      %v569 = vadd.f32 %v290, %v568
      %v570 = vpop.f32.mrf.mxu0
      %v571 = vadd.f32 %v286, %v570
      %v572 = vpop.f32.mrf.mxu0
      %v573 = vadd.f32 %v290, %v572
      %574 = vmatprep.mubr.bf16.mxu0 0
      %575 = vmatmul.mubr.bf16.gmra.mxu0 %v439
      %v576 = vpop.f32.mrf.mxu0
      %v577 = vadd.f32 %v286, %v576
      %v578 = vpop.f32.mrf.mxu0
      %v579 = vadd.f32 %v290, %v578
      %v580 = vpop.f32.mrf.mxu0
      %v581 = vadd.f32 %v286, %v580
      %v582 = vpop.f32.mrf.mxu0
      %v583 = vadd.f32 %v290, %v582
      %584 = vmatprep.mubr.bf16.mxu0 0
      %585 = vmatmul.mubr.bf16.gmra.mxu0 %v442
      %v586 = vpop.f32.mrf.mxu0
      %v587 = vadd.f32 %v286, %v586
      %v588 = vpop.f32.mrf.mxu0
      %v589 = vadd.f32 %v290, %v588
      %v590 = vpop.f32.mrf.mxu0
      %v591 = vadd.f32 %v286, %v590
      %v592 = vpop.f32.mrf.mxu0
      %v593 = vadd.f32 %v290, %v592
      %594 = vmatprep.mubr.bf16.mxu0 0
      %595 = vmatmul.mubr.bf16.gmra.mxu0 %v445
      %v596 = vpop.f32.mrf.mxu0
      %v597 = vadd.f32 %v286, %v596
      %v598 = vpop.f32.mrf.mxu0
      %v599 = vadd.f32 %v290, %v598
      %v600 = vpop.f32.mrf.mxu0
      %v601 = vadd.f32 %v286, %v600
      %v602 = vpop.f32.mrf.mxu0
      %v603 = vadd.f32 %v290, %v602
      %604 = vmatprep.mubr.bf16.mxu0 0
      %605 = vmatmul.mubr.bf16.gmra.mxu0 %v448
      %v606 = vpop.f32.mrf.mxu0
      %v607 = vadd.f32 %v286, %v606
      %v608 = vpop.f32.mrf.mxu0
      %v609 = vadd.f32 %v290, %v608
      %v610 = vpop.f32.mrf.mxu0
      %v611 = vadd.f32 %v286, %v610
      %v612 = vpop.f32.mrf.mxu0
      %v613 = vadd.f32 %v290, %v612
      %614 = vmatprep.mubr.bf16.mxu0 0
      %615 = vmatmul.mubr.bf16.gmra.mxu0 %v451
      %v616 = vpop.f32.mrf.mxu0
      %v617 = vadd.f32 %v286, %v616
      %v618 = vpop.f32.mrf.mxu0
      %v619 = vadd.f32 %v290, %v618
      %v620 = vpop.f32.mrf.mxu0
      %v621 = vadd.f32 %v286, %v620
      %v622 = vpop.f32.mrf.mxu0
      %v623 = vadd.f32 %v290, %v622
      %624 = vmatprep.mubr.bf16.mxu0 0
      %625 = vmatmul.mubr.bf16.gmra.mxu0 %v454
      %v626 = vpop.f32.mrf.mxu0
      %v627 = vadd.f32 %v286, %v626
      %v628 = vpop.f32.mrf.mxu0
      %v629 = vadd.f32 %v290, %v628
      %v630 = vpop.f32.mrf.mxu0
      %v631 = vadd.f32 %v286, %v630
      %v632 = vpop.f32.mrf.mxu0
      %v633 = vadd.f32 %v290, %v632
      %634 = vmatprep.mubr.bf16.mxu0 0
      %635 = vmatmul.mubr.bf16.gmra.mxu0 %v457
      %v636 = vpop.f32.mrf.mxu0
      %v637 = vadd.f32 %v286, %v636
      %v638 = vpop.f32.mrf.mxu0
      %v639 = vadd.f32 %v290, %v638
      %v640 = vpop.f32.mrf.mxu0
      %v641 = vadd.f32 %v286, %v640
      %v642 = vpop.f32.mrf.mxu0
      %v643 = vadd.f32 %v290, %v642
      %644 = vmatprep.mubr.bf16.mxu0 0
      %645 = vmatmul.mubr.bf16.gmra.mxu0 %v460
      %v646 = vpop.f32.mrf.mxu0
      %v647 = vadd.f32 %v286, %v646
      %v648 = vpop.f32.mrf.mxu0
      %v649 = vadd.f32 %v290, %v648
      %v650 = vpop.f32.mrf.mxu0
      %v651 = vadd.f32 %v286, %v650
      %v652 = vpop.f32.mrf.mxu0
      %v653 = vadd.f32 %v290, %v652
      %654 = vdwg.mxu0
      %v655 = vmax.f32 %v497, 0.0
      %v656 = vmax.f32 %v499, 0.0
      %v657 = vmax.f32 %v501, 0.0
      %v658 = vmax.f32 %v503, 0.0
      %v659 = vmax.f32 %v507, 0.0
      %v660 = vmax.f32 %v509, 0.0
      %v661 = vmax.f32 %v511, 0.0
      %v662 = vmax.f32 %v513, 0.0
      %v663 = vmax.f32 %v517, 0.0
      %v664 = vmax.f32 %v519, 0.0
      %v665 = vmax.f32 %v521, 0.0
      %v666 = vmax.f32 %v523, 0.0
      %v667 = vmax.f32 %v527, 0.0
      %v668 = vmax.f32 %v529, 0.0
      %v669 = vmax.f32 %v531, 0.0
      %v670 = vmax.f32 %v533, 0.0
      %v671 = vmax.f32 %v537, 0.0
      %v672 = vmax.f32 %v539, 0.0
      %v673 = vmax.f32 %v541, 0.0
      %v674 = vmax.f32 %v543, 0.0
      %v675 = vmax.f32 %v547, 0.0
      %v676 = vmax.f32 %v549, 0.0
      %v677 = vmax.f32 %v551, 0.0
      %v678 = vmax.f32 %v553, 0.0
      %v679 = vmax.f32 %v557, 0.0
      %v680 = vmax.f32 %v559, 0.0
      %v681 = vmax.f32 %v561, 0.0
      %v682 = vmax.f32 %v563, 0.0
      %v683 = vmax.f32 %v567, 0.0
      %v684 = vmax.f32 %v569, 0.0
      %v685 = vmax.f32 %v571, 0.0
      %v686 = vmax.f32 %v573, 0.0
      %v687 = vmax.f32 %v577, 0.0
      %v688 = vmax.f32 %v579, 0.0
      %v689 = vmax.f32 %v581, 0.0
      %v690 = vmax.f32 %v583, 0.0
      %v691 = vmax.f32 %v587, 0.0
      %v692 = vmax.f32 %v589, 0.0
      %v693 = vmax.f32 %v591, 0.0
      %v694 = vmax.f32 %v593, 0.0
      %v695 = vmax.f32 %v597, 0.0
      %v696 = vmax.f32 %v599, 0.0
      %v697 = vmax.f32 %v601, 0.0
      %v698 = vmax.f32 %v603, 0.0
      %v699 = vmax.f32 %v607, 0.0
      %v700 = vmax.f32 %v609, 0.0
      %v701 = vmax.f32 %v611, 0.0
      %v702 = vmax.f32 %v613, 0.0
      %v703 = vmax.f32 %v617, 0.0
      %v704 = vmax.f32 %v619, 0.0
      %v705 = vmax.f32 %v621, 0.0
      %v706 = vmax.f32 %v623, 0.0
      %v707 = vmax.f32 %v627, 0.0
      %v708 = vmax.f32 %v629, 0.0
      %v709 = vmax.f32 %v631, 0.0
      %v710 = vmax.f32 %v633, 0.0
      %v711 = vmax.f32 %v637, 0.0
      %v712 = vmax.f32 %v639, 0.0
      %v713 = vmax.f32 %v641, 0.0
      %v714 = vmax.f32 %v643, 0.0
      %v715 = vmax.f32 %v647, 0.0
      %v716 = vmax.f32 %v649, 0.0
      %v717 = vmax.f32 %v651, 0.0
      %v718 = vmax.f32 %v653, 0.0
      %v719 = vpack.c.bf16 %v657, %v655
      %v720 = vpack.c.bf16 %v658, %v656
      %v721 = vpack.c.bf16 %v661, %v659
      %v722 = vpack.c.bf16 %v662, %v660
      %v723 = vpack.c.bf16 %v665, %v663
      %v724 = vpack.c.bf16 %v666, %v664
      %v725 = vpack.c.bf16 %v669, %v667
      %v726 = vpack.c.bf16 %v670, %v668
      %v727 = vpack.c.bf16 %v673, %v671
      %v728 = vpack.c.bf16 %v674, %v672
      %v729 = vpack.c.bf16 %v677, %v675
      %v730 = vpack.c.bf16 %v678, %v676
      %v731 = vpack.c.bf16 %v681, %v679
      %v732 = vpack.c.bf16 %v682, %v680
      %v733 = vpack.c.bf16 %v685, %v683
      %v734 = vpack.c.bf16 %v686, %v684
      %v735 = vpack.c.bf16 %v689, %v687
      %v736 = vpack.c.bf16 %v690, %v688
      %v737 = vpack.c.bf16 %v693, %v691
      %v738 = vpack.c.bf16 %v694, %v692
      %v739 = vpack.c.bf16 %v697, %v695
      %v740 = vpack.c.bf16 %v698, %v696
      %v741 = vpack.c.bf16 %v701, %v699
      %v742 = vpack.c.bf16 %v702, %v700
      %v743 = vpack.c.bf16 %v705, %v703
      %v744 = vpack.c.bf16 %v706, %v704
      %v745 = vpack.c.bf16 %v709, %v707
      %v746 = vpack.c.bf16 %v710, %v708
      %v747 = vpack.c.bf16 %v713, %v711
      %v748 = vpack.c.bf16 %v714, %v712
      %v749 = vpack.c.bf16 %v717, %v715
      %v750 = vpack.c.bf16 %v718, %v716
      %v783 = vunpack.c.l.b16 %v719
      %v784 = vunpack.c.l.b16 %v720
      %v785 = vunpack.c.h.b16 %v719
      %v786 = vunpack.c.h.b16 %v720
      %v787 = vunpack.c.l.b16 %v721
      %v788 = vunpack.c.l.b16 %v722
      %v789 = vunpack.c.h.b16 %v721
      %v790 = vunpack.c.h.b16 %v722
      %v791 = vunpack.c.l.b16 %v723
      %v792 = vunpack.c.l.b16 %v724
      %v793 = vunpack.c.h.b16 %v723
      %v794 = vunpack.c.h.b16 %v724
      %v795 = vunpack.c.l.b16 %v725
      %v796 = vunpack.c.l.b16 %v726
      %v797 = vunpack.c.h.b16 %v725
      %v798 = vunpack.c.h.b16 %v726
      %v799 = vunpack.c.l.b16 %v727
      %v800 = vunpack.c.l.b16 %v728
      %v801 = vunpack.c.h.b16 %v727
      %v802 = vunpack.c.h.b16 %v728
      %v803 = vunpack.c.l.b16 %v729
      %v804 = vunpack.c.l.b16 %v730
      %v805 = vunpack.c.h.b16 %v729
      %v806 = vunpack.c.h.b16 %v730
      %v807 = vunpack.c.l.b16 %v731
      %v808 = vunpack.c.l.b16 %v732
      %v809 = vunpack.c.h.b16 %v731
      %v810 = vunpack.c.h.b16 %v732
      %v811 = vunpack.c.l.b16 %v733
      %v812 = vunpack.c.l.b16 %v734
      %v813 = vunpack.c.h.b16 %v733
      %v814 = vunpack.c.h.b16 %v734
      %v815 = vunpack.c.l.b16 %v735
      %v816 = vunpack.c.l.b16 %v736
      %v817 = vunpack.c.h.b16 %v735
      %v818 = vunpack.c.h.b16 %v736
      %v819 = vunpack.c.l.b16 %v737
      %v820 = vunpack.c.l.b16 %v738
      %v821 = vunpack.c.h.b16 %v737
      %v822 = vunpack.c.h.b16 %v738
      %v823 = vunpack.c.l.b16 %v739
      %v824 = vunpack.c.l.b16 %v740
      %v825 = vunpack.c.h.b16 %v739
      %v826 = vunpack.c.h.b16 %v740
      %v827 = vunpack.c.l.b16 %v741
      %v828 = vunpack.c.l.b16 %v742
      %v829 = vunpack.c.h.b16 %v741
      %v830 = vunpack.c.h.b16 %v742
      %v831 = vunpack.c.l.b16 %v743
      %v832 = vunpack.c.l.b16 %v744
      %v833 = vunpack.c.h.b16 %v743
      %v834 = vunpack.c.h.b16 %v744
      %v835 = vunpack.c.l.b16 %v745
      %v836 = vunpack.c.l.b16 %v746
      %v837 = vunpack.c.h.b16 %v745
      %v838 = vunpack.c.h.b16 %v746
      %v839 = vunpack.c.l.b16 %v747
      %v840 = vunpack.c.l.b16 %v748
      %v841 = vunpack.c.h.b16 %v747
      %v842 = vunpack.c.h.b16 %v748
      %v843 = vunpack.c.l.b16 %v749
      %v844 = vunpack.c.l.b16 %v750
      %v845 = vunpack.c.h.b16 %v749
      %v846 = vunpack.c.h.b16 %v750
      %v847 = vpack.c.b16 %v784, %v783
      %v848 = vpack.c.b16 %v786, %v785
      %v849 = vpack.c.b16 %v788, %v787
      %v850 = vpack.c.b16 %v790, %v789
      %v851 = vpack.c.b16 %v792, %v791
      %v852 = vpack.c.b16 %v794, %v793
      %v853 = vpack.c.b16 %v796, %v795
      %v854 = vpack.c.b16 %v798, %v797
      %v855 = vpack.c.b16 %v800, %v799
      %v856 = vpack.c.b16 %v802, %v801
      %v857 = vpack.c.b16 %v804, %v803
      %v858 = vpack.c.b16 %v806, %v805
      %v859 = vpack.c.b16 %v808, %v807
      %v860 = vpack.c.b16 %v810, %v809
      %v861 = vpack.c.b16 %v812, %v811
      %v862 = vpack.c.b16 %v814, %v813
      %v863 = vpack.c.b16 %v816, %v815
      %v864 = vpack.c.b16 %v818, %v817
      %v865 = vpack.c.b16 %v820, %v819
      %v866 = vpack.c.b16 %v822, %v821
      %v867 = vpack.c.b16 %v824, %v823
      %v868 = vpack.c.b16 %v826, %v825
      %v869 = vpack.c.b16 %v828, %v827
      %v870 = vpack.c.b16 %v830, %v829
      %v871 = vpack.c.b16 %v832, %v831
      %v872 = vpack.c.b16 %v834, %v833
      %v873 = vpack.c.b16 %v836, %v835
      %v874 = vpack.c.b16 %v838, %v837
      %v875 = vpack.c.b16 %v840, %v839
      %v876 = vpack.c.b16 %v842, %v841
      %v877 = vpack.c.b16 %v844, %v843
      %v878 = vpack.c.b16 %v846, %v845
      %911 = vst [vmem:[%s237] sm:$0xff] %v847
      %912 = vst [vmem:[%s237 + $0x8] sm:$0xff] %v848
      %913 = vst [vmem:[%s237 + $0x10] sm:$0xff] %v849
      %914 = vst [vmem:[%s237 + $0x18] sm:$0xff] %v850
      %915 = vst [vmem:[%s237 + $0x20] sm:$0xff] %v851
      %916 = vst [vmem:[%s237 + $0x28] sm:$0xff] %v852
      %917 = vst [vmem:[%s237 + $0x30] sm:$0xff] %v853
      %918 = vst [vmem:[%s237 + $0x38] sm:$0xff] %v854
      %919 = vst [vmem:[%s237 + $0x40] sm:$0xff] %v855
      %920 = vst [vmem:[%s237 + $0x48] sm:$0xff] %v856
      %921 = vst [vmem:[%s237 + $0x50] sm:$0xff] %v857
      %922 = vst [vmem:[%s237 + $0x58] sm:$0xff] %v858
      %923 = vst [vmem:[%s237 + $0x60] sm:$0xff] %v859
      %924 = vst [vmem:[%s237 + $0x68] sm:$0xff] %v860
      %925 = vst [vmem:[%s237 + $0x70] sm:$0xff] %v861
      %926 = vst [vmem:[%s237 + $0x78] sm:$0xff] %v862
      %927 = vst [vmem:[%s237 + $0x80] sm:$0xff] %v863
      %928 = vst [vmem:[%s237 + $0x88] sm:$0xff] %v864
      %929 = vst [vmem:[%s237 + $0x90] sm:$0xff] %v865
      %930 = vst [vmem:[%s237 + $0x98] sm:$0xff] %v866
      %931 = vst [vmem:[%s237 + $0xa0] sm:$0xff] %v867
      %932 = vst [vmem:[%s237 + $0xa8] sm:$0xff] %v868
      %933 = vst [vmem:[%s237 + $0xb0] sm:$0xff] %v869
      %934 = vst [vmem:[%s237 + $0xb8] sm:$0xff] %v870
      %935 = vst [vmem:[%s237 + $0xc0] sm:$0xff] %v871
      %936 = vst [vmem:[%s237 + $0xc8] sm:$0xff] %v872
      %937 = vst [vmem:[%s237 + $0xd0] sm:$0xff] %v873
      %938 = vst [vmem:[%s237 + $0xd8] sm:$0xff] %v874
      %939 = vst [vmem:[%s237 + $0xe0] sm:$0xff] %v875
      %940 = vst [vmem:[%s237 + $0xe8] sm:$0xff] %v876
      %941 = vst [vmem:[%s237 + $0xf0] sm:$0xff] %v877
      %942 = vst [vmem:[%s237 + $0xf8] sm:$0xff] %v878
      %s943 = smul.u32 32, %s18
      %s944 = smul.u32 2, %s19
      %p945 = scmp.lt.s32.totalorder %s943, 255
      %s946 = scalar_select %p945, %s943, 255
      %p947 = scmp.lt.s32.totalorder %s944, 1
      %s948 = scalar_select %p947, %s944, 1
      %s949 = smul.addr %s946, 2
      %s950 = sadd.s32 %s948, %s949
      %s951 = smul.addr %s950, 4
      %s952 = scalar_lea.vmem %s3, %s951
      // Predicated region
      $region33: #{forward.7} parent=31 // pred_check
        %p953 = pneg %p124
      $region34: #{forward.7} parent=31 // pred_check_branch
        %955 = sbr.rel (%p953) target = $region36
      $region35: #{forward.7} parent=31 // pred_region
        %s956 = smul.u32 32, %s18
        %s957 = smul.u32 2, %s19
      $region36: #{forward.7} parent=31 // pred_fallthru
        _
    $region32: #{forward.7} parent=5 // pred_fallthru
      _
    %p958 = scmp.le.s32.totalorder 2, %s9
    // Predicated region
    $region37: #{forward.7} parent=5 // pred_check
      %p959 = pneg %p958
    $region38: #{forward.7} parent=5 // pred_check_branch
      %961 = sbr.rel (%p959) target = $region40
    $region39: #{forward.7} parent=5 // pred_region
      %s962 = ssub.s32 %s9, 2
      // Predicated region
      $region41: #{forward.7} parent=39 // pred_check
        %p963 = pneg %p130
      $region42: #{forward.7} parent=39 // pred_check_branch
        %965 = sbr.rel (%p963) target = $region44
      $region43: #{forward.7} parent=39 // pred_region
        %s966 = smul.u32 32, %s20
        %s967 = smul.u32 2, %s21
        %p968 = scmp.lt.s32.totalorder %s966, 255
        %s969 = scalar_select %p968, %s966, 255
        %p970 = scmp.lt.s32.totalorder %s967, 1
        %s971 = scalar_select %p970, %s967, 1
        %s972 = smul.addr %s969, 2
        %s973 = sadd.s32 %s971, %s972
        %s974 = smul.addr %s973, 4
        %s975 = scalar_lea.vmem %s3, %s974
      $region44: #{forward.7} parent=39 // pred_fallthru
        _
    $region40: #{forward.7} parent=5 // pred_fallthru
      _
  $region6: #{forward.7} parent=0 // loop_footer
    %s13 = sadd.s32 1, %s9
  $region7: #{forward.7} parent=0 // loop_footer_branch
    %8 = sbr.rel target = $region3
  $region8: #{forward.7} parent=0 // loop_exit
    _

// kernel: forward.8
$region0: #{forward.8}
  #allocation0 [shape = 'u32[]', space=smem, size = 0x4, offset = 0x4, fixed_abs, tag = 'smem constant byte address 0x4 - core index']
  #allocation1 [shape = 'u32[144,128]{1,0:T(1,128)}', space=vmem, size = 0x12000, scoped, tag = 'internal scratch']
  %s0 = inlined_call_operand.vmem [shape: bf16[512,1920], index: 0, kind: input, shape index: {}]
  %s1 = inlined_call_operand.vmem [shape: bf16[1920,256], index: 1, kind: input, shape index: {}]
  %s2 = inlined_call_operand.vmem [shape: f32[1,256], index: 2, kind: input, shape index: {}]
  %s3 = inlined_call_operand.vmem [shape: bf16[512,256], index: 3, kind: output, shape index: {}]
  %s4 = sld [smem:[#allocation0]]
  $region45: #{forward.8} parent=0
    _
  %s6 = ssub.s32 1, %s4
  %s7 = scalar_select 0, %s6, %s4
  loop: start=0, step=1, limit=4
  $region2: #{forward.8} parent=0 // loop_pre_header
    _
  $region3: #{forward.8} parent=0 // loop_header
    %s9 = sphi 0, %s13
    %p10 = scmp.ge.s32.totalorder %s9, 4
    %s16 = sphi 0, %s28
    %s17 = sphi 0, %s24
    %s18 = sphi 0, %s16
    %s19 = sphi 0, %s17
    %s20 = sphi 0, %s18
    %s21 = sphi 0, %s19
    %s31 = sphi 0, %s33
    %s34 = sphi 0, %s31
    %s35 = sphi 0, %s34
    %s51 = sphi 0, %s35
    %s57 = sphi 0, %s59
    %s60 = sphi 0, %s57
    %s61 = sphi 0, %s60
    %s77 = sphi 0, %s61
    %s83 = sphi 0, %s85
    %s86 = sphi 0, %s83
    %s87 = sphi 0, %s86
    %s103 = sphi 0, %s87
    %s111 = sphi 0, %s113
    %s114 = sphi 0, %s111
    %s115 = sphi 0, %s114
    %s131 = sphi 0, %s115
  $region4: #{forward.8} parent=0 // loop_header_branch
    %12 = sbr.rel (%p10) target = $region8
  $region5: #{forward.8} parent=0 // loop_body
    %s14 = ssub.s32 %s9, 1
    %s15 = ssub.s32 %s9, 2
    %s22 = sadd.s32 1, %s17
    %p23 = scmp.ge.s32.totalorder %s22, 1
    %s24 = scalar_select %p23, 0, %s22
    %s25 = sadd.s32 1, %s16
    %s26 = scalar_select %p23, %s25, %s16
    %p27 = scmp.ge.s32.totalorder %s26, 2
    %s28 = scalar_select %p27, 0, %s26
    %s29 = ssub.s32 %s16, %s28
    %p30 = scmp.eq.s32.totalorder %s29, 0
    %s32 = sadd.s32 %s31, 1
    %s33 = scalar_select %p30, %s31, %s32
    %p36 = pneg %p30
    %p37 = scmp.eq.s32.totalorder %s9, 1
    %p38 = por %p36, %p37
    %p39 = scmp.ne.s32.totalorder %s31, %s34
    %p40 = scmp.eq.s32.totalorder %s9, 0
    %p41 = por %p39, %p40
    %p42 = scmp.ne.s32.totalorder %s31, %s34
    %p43 = scmp.eq.s32.totalorder %s14, 1
    %p44 = por %p42, %p43
    %p45 = scmp.ne.s32.totalorder %s34, %s35
    %p46 = scmp.eq.s32.totalorder %s14, 0
    %p47 = por %p45, %p46
    %p48 = scmp.ne.s32.totalorder %s34, %s35
    %p49 = scmp.eq.s32.totalorder %s15, 1
    %p50 = por %p48, %p49
    %p52 = scmp.ne.s32.totalorder %s35, %s51
    %p53 = scmp.eq.s32.totalorder %s15, 0
    %p54 = por %p52, %p53
    %s55 = ssub.s32 %s17, %s24
    %p56 = scmp.eq.s32.totalorder %s55, 0
    %s58 = sadd.s32 %s57, 1
    %s59 = scalar_select %p56, %s57, %s58
    %p62 = pneg %p56
    %p63 = scmp.eq.s32.totalorder %s9, 1
    %p64 = por %p62, %p63
    %p65 = scmp.ne.s32.totalorder %s57, %s60
    %p66 = scmp.eq.s32.totalorder %s9, 0
    %p67 = por %p65, %p66
    %p68 = scmp.ne.s32.totalorder %s57, %s60
    %p69 = scmp.eq.s32.totalorder %s14, 1
    %p70 = por %p68, %p69
    %p71 = scmp.ne.s32.totalorder %s60, %s61
    %p72 = scmp.eq.s32.totalorder %s14, 0
    %p73 = por %p71, %p72
    %p74 = scmp.ne.s32.totalorder %s60, %s61
    %p75 = scmp.eq.s32.totalorder %s15, 1
    %p76 = por %p74, %p75
    %p78 = scmp.ne.s32.totalorder %s61, %s77
    %p79 = scmp.eq.s32.totalorder %s15, 0
    %p80 = por %p78, %p79
    %s81 = ssub.s32 %s17, %s24
    %p82 = scmp.eq.s32.totalorder %s81, 0
    %s84 = sadd.s32 %s83, 1
    %s85 = scalar_select %p82, %s83, %s84
    %p88 = pneg %p82
    %p89 = scmp.eq.s32.totalorder %s9, 1
    %p90 = por %p88, %p89
    %p91 = scmp.ne.s32.totalorder %s83, %s86
    %p92 = scmp.eq.s32.totalorder %s9, 0
    %p93 = por %p91, %p92
    %p94 = scmp.ne.s32.totalorder %s83, %s86
    %p95 = scmp.eq.s32.totalorder %s14, 1
    %p96 = por %p94, %p95
    %p97 = scmp.ne.s32.totalorder %s86, %s87
    %p98 = scmp.eq.s32.totalorder %s14, 0
    %p99 = por %p97, %p98
    %p100 = scmp.ne.s32.totalorder %s86, %s87
    %p101 = scmp.eq.s32.totalorder %s15, 1
    %p102 = por %p100, %p101
    %p104 = scmp.ne.s32.totalorder %s87, %s103
    %p105 = scmp.eq.s32.totalorder %s15, 0
    %p106 = por %p104, %p105
    %s107 = ssub.s32 %s16, %s28
    %s108 = ssub.s32 %s17, %s24
    %s109 = sor.u32 %s107, %s108
    %p110 = scmp.eq.s32.totalorder %s109, 0
    %s112 = sadd.s32 %s111, 1
    %s113 = scalar_select %p110, %s111, %s112
    %p116 = pneg %p110
    %p117 = scmp.eq.s32.totalorder %s9, 1
    %p118 = por %p116, %p117
    %p119 = scmp.ne.s32.totalorder %s111, %s114
    %p120 = scmp.eq.s32.totalorder %s9, 0
    %p121 = por %p119, %p120
    %p122 = scmp.ne.s32.totalorder %s111, %s114
    %p123 = scmp.eq.s32.totalorder %s14, 1
    %p124 = por %p122, %p123
    %p125 = scmp.ne.s32.totalorder %s114, %s115
    %p126 = scmp.eq.s32.totalorder %s14, 0
    %p127 = por %p125, %p126
    %p128 = scmp.ne.s32.totalorder %s114, %s115
    %p129 = scmp.eq.s32.totalorder %s15, 1
    %p130 = por %p128, %p129
    %p132 = scmp.ne.s32.totalorder %s115, %s131
    %p133 = scmp.eq.s32.totalorder %s15, 0
    %p134 = por %p132, %p133
    %p135 = scmp.le.s32.totalorder 1, %s9
    %p136 = scmp.lt.s32.totalorder %s9, 3
    %p137 = pnand %p135, %p136
    %p138 = pneg %p137
    // Predicated region
    $region9: #{forward.8} parent=5 // pred_check
      _
    $region10: #{forward.8} parent=5 // pred_check_branch
      %140 = sbr.rel (%p137) target = $region12
    $region11: #{forward.8} parent=5 // pred_region
      %s141 = ssub.s32 %s9, 1
      // Predicated region
      $region13: #{forward.8} parent=11 // pred_check
        %p142 = pneg %p73
      $region14: #{forward.8} parent=11 // pred_check_branch
        %144 = sbr.rel (%p142) target = $region16
      $region15: #{forward.8} parent=11 // pred_region
        %s145 = smul.u32 2, %s19
        %p146 = scmp.lt.s32.totalorder %s145, 1
        %s147 = scalar_select %p146, %s145, 1
        %s148 = smul.addr %s147, 4
        %s149 = scalar_lea.vmem %s1, %s148
        %s150 = smul.u32 2, %s19
      $region16: #{forward.8} parent=11 // pred_fallthru
        _
      // Predicated region
      $region17: #{forward.8} parent=11 // pred_check
        %p151 = pneg %p99
      $region18: #{forward.8} parent=11 // pred_check_branch
        %153 = sbr.rel (%p151) target = $region20
      $region19: #{forward.8} parent=11 // pred_region
        %s154 = smul.u32 2, %s19
        %p155 = scmp.lt.s32.totalorder %s154, 1
        %s156 = scalar_select %p155, %s154, 1
        %s157 = scalar_lea.vmem %s2, %s156
        %s158 = smul.u32 2, %s19
      $region20: #{forward.8} parent=11 // pred_fallthru
        _
    $region12: #{forward.8} parent=5 // pred_fallthru
      _
    %p159 = scmp.lt.s32.totalorder %s9, 2
    // Predicated region
    $region21: #{forward.8} parent=5 // pred_check
      %p160 = pneg %p159
    $region22: #{forward.8} parent=5 // pred_check_branch
      %162 = sbr.rel (%p160) target = $region24
    $region23: #{forward.8} parent=5 // pred_region
      // Predicated region
      $region25: #{forward.8} parent=23 // pred_check
        %p163 = pneg %p41
      $region26: #{forward.8} parent=23 // pred_check_branch
        %165 = sbr.rel (%p163) target = $region28
      $region27: #{forward.8} parent=23 // pred_region
        %s166 = smul.u32 32, %s16
        %p167 = scmp.lt.s32.totalorder %s166, 63
        %s168 = scalar_select %p167, %s166, 63
        %s169 = smul.addr %s168, 15
        %s170 = smul.addr %s169, 4
        %s171 = scalar_lea.vmem %s0, %s170
        %s172 = smul.u32 32, %s16
      $region28: #{forward.8} parent=23 // pred_fallthru
        _
    $region24: #{forward.8} parent=5 // pred_fallthru
      _
    %p173 = scmp.le.s32.totalorder 1, %s9
    %p174 = scmp.lt.s32.totalorder %s9, 3
    %p175 = pnand %p173, %p174
    %p176 = pneg %p175
    // Predicated region
    $region29: #{forward.8} parent=5 // pred_check
      _
    $region30: #{forward.8} parent=5 // pred_check_branch
      %178 = sbr.rel (%p175) target = $region32
    $region31: #{forward.8} parent=5 // pred_region
      %s179 = ssub.s32 %s9, 1
      %s180 = smul.u32 32, %s18
      %p181 = scmp.lt.s32.totalorder %s180, 63
      %s182 = scalar_select %p181, %s180, 63
      %s183 = smul.addr %s182, 15
      %s184 = smul.addr %s183, 4
      %s185 = scalar_lea.vmem %s0, %s184
      %p186 = pneg %p47
      %p187 = pneg %p44
      %s188 = smul.u32 2, %s19
      %p189 = scmp.lt.s32.totalorder %s188, 1
      %s190 = scalar_select %p189, %s188, 1
      %s191 = smul.addr %s190, 4
      %s192 = scalar_lea.vmem %s1, %s191
      %p193 = pneg %p73
      %p194 = pneg %p70
      %s195 = smul.u32 2, %s19
      %p196 = scmp.lt.s32.totalorder %s195, 1
      %s197 = scalar_select %p196, %s195, 1
      %s198 = scalar_lea.vmem %s2, %s197
      %p199 = pneg %p99
      %p200 = pneg %p96
      %p201 = pneg %p127
      %p202 = pneg %p124
      %s203 = smul.u32 32, %s18
      %s204 = smul.u32 2, %s19
      %p205 = scmp.lt.s32.totalorder %s203, 63
      %s206 = scalar_select %p205, %s203, 63
      %p207 = scmp.lt.s32.totalorder %s204, 1
      %s208 = scalar_select %p207, %s204, 1
      %s209 = smul.addr %s206, 2
      %s210 = sadd.s32 %s208, %s209
      %s211 = smul.addr %s210, 4
      %s212 = scalar_lea.vmem %s3, %s211
      %s213 = smul.u32 32, %s18
      %p214 = scmp.lt.s32.totalorder %s213, 63
      %s215 = scalar_select %p214, %s213, 63
      %s216 = smul.addr %s215, 15
      %s217 = smul.addr %s216, 4
      %s218 = scalar_lea.vmem %s0, %s217
      %s219 = smul.u32 32, %s18
      %s220 = smul.u32 2, %s19
      %p221 = scmp.lt.s32.totalorder %s220, 1
      %s222 = scalar_select %p221, %s220, 1
      %s223 = smul.addr %s222, 4
      %s224 = scalar_lea.vmem %s1, %s223
      %s225 = smul.u32 2, %s19
      %s226 = smul.u32 2, %s19
      %p227 = scmp.lt.s32.totalorder %s226, 1
      %s228 = scalar_select %p227, %s226, 1
      %s229 = scalar_lea.vmem %s2, %s228
      %s230 = smul.u32 2, %s19
      %s231 = smul.u32 32, %s18
      %s232 = smul.u32 2, %s19
      %p233 = scmp.lt.s32.totalorder %s231, 63
      %s234 = scalar_select %p233, %s231, 63
      %p235 = scmp.lt.s32.totalorder %s232, 1
      %s236 = scalar_select %p235, %s232, 1
      %s237 = smul.addr %s234, 2
      %s238 = sadd.s32 %s236, %s237
      %s239 = smul.addr %s238, 4
      %s240 = scalar_lea.vmem %s3, %s239
      %s241 = smul.u32 32, %s18
      %s242 = smul.u32 2, %s19
      %v244 = vld [vmem:[%s218] sm:$0xff]
      %v245 = vld [vmem:[%s218 + $0x8] sm:$0xff]
      %v246 = vld [vmem:[%s218 + $0x10] sm:$0xff]
      %v247 = vld [vmem:[%s218 + $0x18] sm:$0xff]
      %v248 = vld [vmem:[%s218 + $0x20] sm:$0xff]
      %v249 = vld [vmem:[%s218 + $0x28] sm:$0xff]
      %v250 = vld [vmem:[%s218 + $0x30] sm:$0xff]
      %v251 = vld [vmem:[%s218 + $0x38] sm:$0xf]
      %v252 = vld [vmem:[%s218 + $0x3c] sm:$0xff]
      %v253 = vld [vmem:[%s218 + $0x44] sm:$0xff]
      %v254 = vld [vmem:[%s218 + $0x4c] sm:$0xff]
      %v255 = vld [vmem:[%s218 + $0x54] sm:$0xff]
      %v256 = vld [vmem:[%s218 + $0x5c] sm:$0xff]
      %v257 = vld [vmem:[%s218 + $0x64] sm:$0xff]
      %v258 = vld [vmem:[%s218 + $0x6c] sm:$0xff]
      %v259 = vld [vmem:[%s218 + $0x74] sm:$0xf]
      %v260 = vld [vmem:[%s218 + $0x78] sm:$0xff]
      %v261 = vld [vmem:[%s218 + $0x80] sm:$0xff]
      %v262 = vld [vmem:[%s218 + $0x88] sm:$0xff]
      %v263 = vld [vmem:[%s218 + $0x90] sm:$0xff]
      %v264 = vld [vmem:[%s218 + $0x98] sm:$0xff]
      %v265 = vld [vmem:[%s218 + $0xa0] sm:$0xff]
      %v266 = vld [vmem:[%s218 + $0xa8] sm:$0xff]
      %v267 = vld [vmem:[%s218 + $0xb0] sm:$0xf]
      %v268 = vld [vmem:[%s218 + $0xb4] sm:$0xff]
      %v269 = vld [vmem:[%s218 + $0xbc] sm:$0xff]
      %v270 = vld [vmem:[%s218 + $0xc4] sm:$0xff]
      %v271 = vld [vmem:[%s218 + $0xcc] sm:$0xff]
      %v272 = vld [vmem:[%s218 + $0xd4] sm:$0xff]
      %v273 = vld [vmem:[%s218 + $0xdc] sm:$0xff]
      %v274 = vld [vmem:[%s218 + $0xe4] sm:$0xff]
      %v275 = vld [vmem:[%s218 + $0xec] sm:$0xf]
      %v276 = vld [vmem:[%s218 + $0xf0] sm:$0xff]
      %v277 = vld [vmem:[%s218 + $0xf8] sm:$0xff]
      %v278 = vld [vmem:[%s218 + $0x100] sm:$0xff]
      %v279 = vld [vmem:[%s218 + $0x108] sm:$0xff]
      %v280 = vld [vmem:[%s218 + $0x110] sm:$0xff]
      %v281 = vld [vmem:[%s218 + $0x118] sm:$0xff]
      %v282 = vld [vmem:[%s218 + $0x120] sm:$0xff]
      %v283 = vld [vmem:[%s218 + $0x128] sm:$0xf]
      %v284 = vld [vmem:[%s218 + $0x12c] sm:$0xff]
      %v285 = vld [vmem:[%s218 + $0x134] sm:$0xff]
      %v286 = vld [vmem:[%s218 + $0x13c] sm:$0xff]
      %v287 = vld [vmem:[%s218 + $0x144] sm:$0xff]
      %v288 = vld [vmem:[%s218 + $0x14c] sm:$0xff]
      %v289 = vld [vmem:[%s218 + $0x154] sm:$0xff]
      %v290 = vld [vmem:[%s218 + $0x15c] sm:$0xff]
      %v291 = vld [vmem:[%s218 + $0x164] sm:$0xf]
      %v292 = vld [vmem:[%s218 + $0x168] sm:$0xff]
      %v293 = vld [vmem:[%s218 + $0x170] sm:$0xff]
      %v294 = vld [vmem:[%s218 + $0x178] sm:$0xff]
      %v295 = vld [vmem:[%s218 + $0x180] sm:$0xff]
      %v296 = vld [vmem:[%s218 + $0x188] sm:$0xff]
      %v297 = vld [vmem:[%s218 + $0x190] sm:$0xff]
      %v298 = vld [vmem:[%s218 + $0x198] sm:$0xff]
      %v299 = vld [vmem:[%s218 + $0x1a0] sm:$0xf]
      %v300 = vld [vmem:[%s218 + $0x1a4] sm:$0xff]
      %v301 = vld [vmem:[%s218 + $0x1ac] sm:$0xff]
      %v302 = vld [vmem:[%s218 + $0x1b4] sm:$0xff]
      %v303 = vld [vmem:[%s218 + $0x1bc] sm:$0xff]
      %v304 = vld [vmem:[%s218 + $0x1c4] sm:$0xff]
      %v305 = vld [vmem:[%s218 + $0x1cc] sm:$0xff]
      %v306 = vld [vmem:[%s218 + $0x1d4] sm:$0xff]
      %v307 = vld [vmem:[%s218 + $0x1dc] sm:$0xf]
      %v308 = vld [vmem:[%s218 + $0x1e0] sm:$0xff]
      %v309 = vld [vmem:[%s218 + $0x1e8] sm:$0xff]
      %v310 = vld [vmem:[%s218 + $0x1f0] sm:$0xff]
      %v311 = vld [vmem:[%s218 + $0x1f8] sm:$0xff]
      %v312 = vld [vmem:[%s218 + $0x200] sm:$0xff]
      %v313 = vld [vmem:[%s218 + $0x208] sm:$0xff]
      %v314 = vld [vmem:[%s218 + $0x210] sm:$0xff]
      %v315 = vld [vmem:[%s218 + $0x218] sm:$0xf]
      %v316 = vld [vmem:[%s218 + $0x21c] sm:$0xff]
      %v317 = vld [vmem:[%s218 + $0x224] sm:$0xff]
      %v318 = vld [vmem:[%s218 + $0x22c] sm:$0xff]
      %v319 = vld [vmem:[%s218 + $0x234] sm:$0xff]
      %v320 = vld [vmem:[%s218 + $0x23c] sm:$0xff]
      %v321 = vld [vmem:[%s218 + $0x244] sm:$0xff]
      %v322 = vld [vmem:[%s218 + $0x24c] sm:$0xff]
      %v323 = vld [vmem:[%s218 + $0x254] sm:$0xf]
      %v324 = vld [vmem:[%s218 + $0x258] sm:$0xff]
      %v325 = vld [vmem:[%s218 + $0x260] sm:$0xff]
      %v326 = vld [vmem:[%s218 + $0x268] sm:$0xff]
      %v327 = vld [vmem:[%s218 + $0x270] sm:$0xff]
      %v328 = vld [vmem:[%s218 + $0x278] sm:$0xff]
      %v329 = vld [vmem:[%s218 + $0x280] sm:$0xff]
      %v330 = vld [vmem:[%s218 + $0x288] sm:$0xff]
      %v331 = vld [vmem:[%s218 + $0x290] sm:$0xf]
      %v332 = vld [vmem:[%s218 + $0x294] sm:$0xff]
      %v333 = vld [vmem:[%s218 + $0x29c] sm:$0xff]
      %v334 = vld [vmem:[%s218 + $0x2a4] sm:$0xff]
      %v335 = vld [vmem:[%s218 + $0x2ac] sm:$0xff]
      %v336 = vld [vmem:[%s218 + $0x2b4] sm:$0xff]
      %v337 = vld [vmem:[%s218 + $0x2bc] sm:$0xff]
      %v338 = vld [vmem:[%s218 + $0x2c4] sm:$0xff]
      %v339 = vld [vmem:[%s218 + $0x2cc] sm:$0xf]
      %v340 = vld [vmem:[%s218 + $0x2d0] sm:$0xff]
      %v341 = vld [vmem:[%s218 + $0x2d8] sm:$0xff]
      %v342 = vld [vmem:[%s218 + $0x2e0] sm:$0xff]
      %v343 = vld [vmem:[%s218 + $0x2e8] sm:$0xff]
      %v344 = vld [vmem:[%s218 + $0x2f0] sm:$0xff]
      %v345 = vld [vmem:[%s218 + $0x2f8] sm:$0xff]
      %v346 = vld [vmem:[%s218 + $0x300] sm:$0xff]
      %v347 = vld [vmem:[%s218 + $0x308] sm:$0xf]
      %v348 = vld [vmem:[%s218 + $0x30c] sm:$0xff]
      %v349 = vld [vmem:[%s218 + $0x314] sm:$0xff]
      %v350 = vld [vmem:[%s218 + $0x31c] sm:$0xff]
      %v351 = vld [vmem:[%s218 + $0x324] sm:$0xff]
      %v352 = vld [vmem:[%s218 + $0x32c] sm:$0xff]
      %v353 = vld [vmem:[%s218 + $0x334] sm:$0xff]
      %v354 = vld [vmem:[%s218 + $0x33c] sm:$0xff]
      %v355 = vld [vmem:[%s218 + $0x344] sm:$0xf]
      %v356 = vld [vmem:[%s218 + $0x348] sm:$0xff]
      %v357 = vld [vmem:[%s218 + $0x350] sm:$0xff]
      %v358 = vld [vmem:[%s218 + $0x358] sm:$0xff]
      %v359 = vld [vmem:[%s218 + $0x360] sm:$0xff]
      %v360 = vld [vmem:[%s218 + $0x368] sm:$0xff]
      %v361 = vld [vmem:[%s218 + $0x370] sm:$0xff]
      %v362 = vld [vmem:[%s218 + $0x378] sm:$0xff]
      %v363 = vld [vmem:[%s218 + $0x380] sm:$0xf]
      %v364 = vld [vmem:[%s218 + $0x384] sm:$0xff]
      %v365 = vld [vmem:[%s218 + $0x38c] sm:$0xff]
      %v366 = vld [vmem:[%s218 + $0x394] sm:$0xff]
      %v367 = vld [vmem:[%s218 + $0x39c] sm:$0xff]
      %v368 = vld [vmem:[%s218 + $0x3a4] sm:$0xff]
      %v369 = vld [vmem:[%s218 + $0x3ac] sm:$0xff]
      %v370 = vld [vmem:[%s218 + $0x3b4] sm:$0xff]
      %v371 = vld [vmem:[%s218 + $0x3bc] sm:$0xf]
      %v372 = vld [vmem:[%s218 + $0x3c0] sm:$0xff]
      %v373 = vld [vmem:[%s218 + $0x3c8] sm:$0xff]
      %v374 = vld [vmem:[%s218 + $0x3d0] sm:$0xff]
      %v375 = vld [vmem:[%s218 + $0x3d8] sm:$0xff]
      %v376 = vld [vmem:[%s218 + $0x3e0] sm:$0xff]
      %v377 = vld [vmem:[%s218 + $0x3e8] sm:$0xff]
      %v378 = vld [vmem:[%s218 + $0x3f0] sm:$0xff]
      %v379 = vld [vmem:[%s218 + $0x3f8] sm:$0xf]
      %v380 = vld [vmem:[%s218 + $0x3fc] sm:$0xff]
      %v381 = vld [vmem:[%s218 + $0x404] sm:$0xff]
      %v382 = vld [vmem:[%s218 + $0x40c] sm:$0xff]
      %v383 = vld [vmem:[%s218 + $0x414] sm:$0xff]
      %v384 = vld [vmem:[%s218 + $0x41c] sm:$0xff]
      %v385 = vld [vmem:[%s218 + $0x424] sm:$0xff]
      %v386 = vld [vmem:[%s218 + $0x42c] sm:$0xff]
      %v387 = vld [vmem:[%s218 + $0x434] sm:$0xf]
      %v388 = vld [vmem:[%s218 + $0x438] sm:$0xff]
      %v389 = vld [vmem:[%s218 + $0x440] sm:$0xff]
      %v390 = vld [vmem:[%s218 + $0x448] sm:$0xff]
      %v391 = vld [vmem:[%s218 + $0x450] sm:$0xff]
      %v392 = vld [vmem:[%s218 + $0x458] sm:$0xff]
      %v393 = vld [vmem:[%s218 + $0x460] sm:$0xff]
      %v394 = vld [vmem:[%s218 + $0x468] sm:$0xff]
      %v395 = vld [vmem:[%s218 + $0x470] sm:$0xf]
      %v396 = vld [vmem:[%s218 + $0x474] sm:$0xff]
      %v397 = vld [vmem:[%s218 + $0x47c] sm:$0xff]
      %v398 = vld [vmem:[%s218 + $0x484] sm:$0xff]
      %v399 = vld [vmem:[%s218 + $0x48c] sm:$0xff]
      %v400 = vld [vmem:[%s218 + $0x494] sm:$0xff]
      %v401 = vld [vmem:[%s218 + $0x49c] sm:$0xff]
      %v402 = vld [vmem:[%s218 + $0x4a4] sm:$0xff]
      %v403 = vld [vmem:[%s218 + $0x4ac] sm:$0xf]
      %v404 = vld [vmem:[%s218 + $0x4b0] sm:$0xff]
      %v405 = vld [vmem:[%s218 + $0x4b8] sm:$0xff]
      %v406 = vld [vmem:[%s218 + $0x4c0] sm:$0xff]
      %v407 = vld [vmem:[%s218 + $0x4c8] sm:$0xff]
      %v408 = vld [vmem:[%s218 + $0x4d0] sm:$0xff]
      %v409 = vld [vmem:[%s218 + $0x4d8] sm:$0xff]
      %v410 = vld [vmem:[%s218 + $0x4e0] sm:$0xff]
      %v411 = vld [vmem:[%s218 + $0x4e8] sm:$0xf]
      %v412 = vld [vmem:[%s218 + $0x4ec] sm:$0xff]
      %v413 = vld [vmem:[%s218 + $0x4f4] sm:$0xff]
      %v414 = vld [vmem:[%s218 + $0x4fc] sm:$0xff]
      %v415 = vld [vmem:[%s218 + $0x504] sm:$0xff]
      %v416 = vld [vmem:[%s218 + $0x50c] sm:$0xff]
      %v417 = vld [vmem:[%s218 + $0x514] sm:$0xff]
      %v418 = vld [vmem:[%s218 + $0x51c] sm:$0xff]
      %v419 = vld [vmem:[%s218 + $0x524] sm:$0xf]
      %v420 = vld [vmem:[%s218 + $0x528] sm:$0xff]
      %v421 = vld [vmem:[%s218 + $0x530] sm:$0xff]
      %v422 = vld [vmem:[%s218 + $0x538] sm:$0xff]
      %v423 = vld [vmem:[%s218 + $0x540] sm:$0xff]
      %v424 = vld [vmem:[%s218 + $0x548] sm:$0xff]
      %v425 = vld [vmem:[%s218 + $0x550] sm:$0xff]
      %v426 = vld [vmem:[%s218 + $0x558] sm:$0xff]
      %v427 = vld [vmem:[%s218 + $0x560] sm:$0xf]
      %v428 = vld [vmem:[%s218 + $0x564] sm:$0xff]
      %v429 = vld [vmem:[%s218 + $0x56c] sm:$0xff]
      %v430 = vld [vmem:[%s218 + $0x574] sm:$0xff]
      %v431 = vld [vmem:[%s218 + $0x57c] sm:$0xff]
      %v432 = vld [vmem:[%s218 + $0x584] sm:$0xff]
      %v433 = vld [vmem:[%s218 + $0x58c] sm:$0xff]
      %v434 = vld [vmem:[%s218 + $0x594] sm:$0xff]
      %v435 = vld [vmem:[%s218 + $0x59c] sm:$0xf]
      %v436 = vld [vmem:[%s218 + $0x5a0] sm:$0xff]
      %v437 = vld [vmem:[%s218 + $0x5a8] sm:$0xff]
      %v438 = vld [vmem:[%s218 + $0x5b0] sm:$0xff]
      %v439 = vld [vmem:[%s218 + $0x5b8] sm:$0xff]
      %v440 = vld [vmem:[%s218 + $0x5c0] sm:$0xff]
      %v441 = vld [vmem:[%s218 + $0x5c8] sm:$0xff]
      %v442 = vld [vmem:[%s218 + $0x5d0] sm:$0xff]
      %v443 = vld [vmem:[%s218 + $0x5d8] sm:$0xf]
      %v444 = vld [vmem:[%s218 + $0x5dc] sm:$0xff]
      %v445 = vld [vmem:[%s218 + $0x5e4] sm:$0xff]
      %v446 = vld [vmem:[%s218 + $0x5ec] sm:$0xff]
      %v447 = vld [vmem:[%s218 + $0x5f4] sm:$0xff]
      %v448 = vld [vmem:[%s218 + $0x5fc] sm:$0xff]
      %v449 = vld [vmem:[%s218 + $0x604] sm:$0xff]
      %v450 = vld [vmem:[%s218 + $0x60c] sm:$0xff]
      %v451 = vld [vmem:[%s218 + $0x614] sm:$0xf]
      %v452 = vld [vmem:[%s218 + $0x618] sm:$0xff]
      %v453 = vld [vmem:[%s218 + $0x620] sm:$0xff]
      %v454 = vld [vmem:[%s218 + $0x628] sm:$0xff]
      %v455 = vld [vmem:[%s218 + $0x630] sm:$0xff]
      %v456 = vld [vmem:[%s218 + $0x638] sm:$0xff]
      %v457 = vld [vmem:[%s218 + $0x640] sm:$0xff]
      %v458 = vld [vmem:[%s218 + $0x648] sm:$0xff]
      %v459 = vld [vmem:[%s218 + $0x650] sm:$0xf]
      %v460 = vld [vmem:[%s218 + $0x654] sm:$0xff]
      %v461 = vld [vmem:[%s218 + $0x65c] sm:$0xff]
      %v462 = vld [vmem:[%s218 + $0x664] sm:$0xff]
      %v463 = vld [vmem:[%s218 + $0x66c] sm:$0xff]
      %v464 = vld [vmem:[%s218 + $0x674] sm:$0xff]
      %v465 = vld [vmem:[%s218 + $0x67c] sm:$0xff]
      %v466 = vld [vmem:[%s218 + $0x684] sm:$0xff]
      %v467 = vld [vmem:[%s218 + $0x68c] sm:$0xf]
      %v468 = vld [vmem:[%s218 + $0x690] sm:$0xff]
      %v469 = vld [vmem:[%s218 + $0x698] sm:$0xff]
      %v470 = vld [vmem:[%s218 + $0x6a0] sm:$0xff]
      %v471 = vld [vmem:[%s218 + $0x6a8] sm:$0xff]
      %v472 = vld [vmem:[%s218 + $0x6b0] sm:$0xff]
      %v473 = vld [vmem:[%s218 + $0x6b8] sm:$0xff]
      %v474 = vld [vmem:[%s218 + $0x6c0] sm:$0xff]
      %v475 = vld [vmem:[%s218 + $0x6c8] sm:$0xf]
      %v476 = vld [vmem:[%s218 + $0x6cc] sm:$0xff]
      %v477 = vld [vmem:[%s218 + $0x6d4] sm:$0xff]
      %v478 = vld [vmem:[%s218 + $0x6dc] sm:$0xff]
      %v479 = vld [vmem:[%s218 + $0x6e4] sm:$0xff]
      %v480 = vld [vmem:[%s218 + $0x6ec] sm:$0xff]
      %v481 = vld [vmem:[%s218 + $0x6f4] sm:$0xff]
      %v482 = vld [vmem:[%s218 + $0x6fc] sm:$0xff]
      %v483 = vld [vmem:[%s218 + $0x704] sm:$0xf]
      %v484 = vld [vmem:[%s218 + $0x708] sm:$0xff]
      %v485 = vld [vmem:[%s218 + $0x710] sm:$0xff]
      %v486 = vld [vmem:[%s218 + $0x718] sm:$0xff]
      %v487 = vld [vmem:[%s218 + $0x720] sm:$0xff]
      %v488 = vld [vmem:[%s218 + $0x728] sm:$0xff]
      %v489 = vld [vmem:[%s218 + $0x730] sm:$0xff]
      %v490 = vld [vmem:[%s218 + $0x738] sm:$0xff]
      %v491 = vld [vmem:[%s218 + $0x740] sm:$0xf]
      %v492 = vld [vmem:[%s218 + $0x744] sm:$0xff]
      %v493 = vld [vmem:[%s218 + $0x74c] sm:$0xff]
      %v494 = vld [vmem:[%s218 + $0x754] sm:$0xff]
      %v495 = vld [vmem:[%s218 + $0x75c] sm:$0xff]
      %v496 = vld [vmem:[%s218 + $0x764] sm:$0xff]
      %v497 = vld [vmem:[%s218 + $0x76c] sm:$0xff]
      %v498 = vld [vmem:[%s218 + $0x774] sm:$0xff]
      %v499 = vld [vmem:[%s218 + $0x77c] sm:$0xf]
      %v500 = vld [vmem:[%s224] sm:$0xff]
      %v501 = vld [vmem:[%s224 + $0x8] sm:$0xff]
      %v502 = vld [vmem:[%s224 + $0x10] sm:$0xff]
      %v503 = vld [vmem:[%s224 + $0x18] sm:$0xff]
      %v504 = vld [vmem:[%s224 + $0x20] sm:$0xff]
      %v505 = vld [vmem:[%s224 + $0x28] sm:$0xff]
      %v506 = vld [vmem:[%s224 + $0x30] sm:$0xff]
      %v507 = vld [vmem:[%s224 + $0x38] sm:$0xff]
      %v508 = vld [vmem:[%s224 + $0x40] sm:$0xff]
      %v509 = vld [vmem:[%s224 + $0x48] sm:$0xff]
      %v510 = vld [vmem:[%s224 + $0x50] sm:$0xff]
      %v511 = vld [vmem:[%s224 + $0x58] sm:$0xff]
      %v512 = vld [vmem:[%s224 + $0x60] sm:$0xff]
      %v513 = vld [vmem:[%s224 + $0x68] sm:$0xff]
      %v514 = vld [vmem:[%s224 + $0x70] sm:$0xff]
      %v515 = vld [vmem:[%s224 + $0x78] sm:$0xff]
      %v516 = vld [vmem:[%s224 + $0x80] sm:$0xff]
      %v517 = vld [vmem:[%s224 + $0x88] sm:$0xff]
      %v518 = vld [vmem:[%s224 + $0x90] sm:$0xff]
      %v519 = vld [vmem:[%s224 + $0x98] sm:$0xff]
      %v520 = vld [vmem:[%s224 + $0xa0] sm:$0xff]
      %v521 = vld [vmem:[%s224 + $0xa8] sm:$0xff]
      %v522 = vld [vmem:[%s224 + $0xb0] sm:$0xff]
      %v523 = vld [vmem:[%s224 + $0xb8] sm:$0xff]
      %v524 = vld [vmem:[%s224 + $0xc0] sm:$0xff]
      %v525 = vld [vmem:[%s224 + $0xc8] sm:$0xff]
      %v526 = vld [vmem:[%s224 + $0xd0] sm:$0xff]
      %v527 = vld [vmem:[%s224 + $0xd8] sm:$0xff]
      %v528 = vld [vmem:[%s224 + $0xe0] sm:$0xff]
      %v529 = vld [vmem:[%s224 + $0xe8] sm:$0xff]
      %v530 = vld [vmem:[%s224 + $0xf0] sm:$0xff]
      %v531 = vld [vmem:[%s224 + $0xf8] sm:$0xff]
      %v532 = vld [vmem:[%s224 + $0x100] sm:$0xff]
      %v533 = vld [vmem:[%s224 + $0x108] sm:$0xff]
      %v534 = vld [vmem:[%s224 + $0x110] sm:$0xff]
      %v535 = vld [vmem:[%s224 + $0x118] sm:$0xff]
      %v536 = vld [vmem:[%s224 + $0x120] sm:$0xff]
      %v537 = vld [vmem:[%s224 + $0x128] sm:$0xff]
      %v538 = vld [vmem:[%s224 + $0x130] sm:$0xff]
      %v539 = vld [vmem:[%s224 + $0x138] sm:$0xff]
      %v540 = vld [vmem:[%s224 + $0x140] sm:$0xff]
      %v541 = vld [vmem:[%s224 + $0x148] sm:$0xff]
      %v542 = vld [vmem:[%s224 + $0x150] sm:$0xff]
      %v543 = vld [vmem:[%s224 + $0x158] sm:$0xff]
      %v544 = vld [vmem:[%s224 + $0x160] sm:$0xff]
      %v545 = vld [vmem:[%s224 + $0x168] sm:$0xff]
      %v546 = vld [vmem:[%s224 + $0x170] sm:$0xff]
      %v547 = vld [vmem:[%s224 + $0x178] sm:$0xff]
      %v548 = vld [vmem:[%s224 + $0x180] sm:$0xff]
      %v549 = vld [vmem:[%s224 + $0x188] sm:$0xff]
      %v550 = vld [vmem:[%s224 + $0x190] sm:$0xff]
      %v551 = vld [vmem:[%s224 + $0x198] sm:$0xff]
      %v552 = vld [vmem:[%s224 + $0x1a0] sm:$0xff]
      %v553 = vld [vmem:[%s224 + $0x1a8] sm:$0xff]
      %v554 = vld [vmem:[%s224 + $0x1b0] sm:$0xff]
      %v555 = vld [vmem:[%s224 + $0x1b8] sm:$0xff]
      %v556 = vld [vmem:[%s224 + $0x1c0] sm:$0xff]
      %v557 = vld [vmem:[%s224 + $0x1c8] sm:$0xff]
      %v558 = vld [vmem:[%s224 + $0x1d0] sm:$0xff]
      %v559 = vld [vmem:[%s224 + $0x1d8] sm:$0xff]
      %v560 = vld [vmem:[%s224 + $0x1e0] sm:$0xff]
      %v561 = vld [vmem:[%s224 + $0x1e8] sm:$0xff]
      %v562 = vld [vmem:[%s224 + $0x1f0] sm:$0xff]
      %v563 = vld [vmem:[%s224 + $0x1f8] sm:$0xff]
      %v564 = vld [vmem:[%s224 + $0x200] sm:$0xff]
      %v565 = vld [vmem:[%s224 + $0x208] sm:$0xff]
      %v566 = vld [vmem:[%s224 + $0x210] sm:$0xff]
      %v567 = vld [vmem:[%s224 + $0x218] sm:$0xff]
      %v568 = vld [vmem:[%s224 + $0x220] sm:$0xff]
      %v569 = vld [vmem:[%s224 + $0x228] sm:$0xff]
      %v570 = vld [vmem:[%s224 + $0x230] sm:$0xff]
      %v571 = vld [vmem:[%s224 + $0x238] sm:$0xff]
      %v572 = vld [vmem:[%s224 + $0x240] sm:$0xff]
      %v573 = vld [vmem:[%s224 + $0x248] sm:$0xff]
      %v574 = vld [vmem:[%s224 + $0x250] sm:$0xff]
      %v575 = vld [vmem:[%s224 + $0x258] sm:$0xff]
      %v576 = vld [vmem:[%s224 + $0x260] sm:$0xff]
      %v577 = vld [vmem:[%s224 + $0x268] sm:$0xff]
      %v578 = vld [vmem:[%s224 + $0x270] sm:$0xff]
      %v579 = vld [vmem:[%s224 + $0x278] sm:$0xff]
      %v580 = vld [vmem:[%s224 + $0x280] sm:$0xff]
      %v581 = vld [vmem:[%s224 + $0x288] sm:$0xff]
      %v582 = vld [vmem:[%s224 + $0x290] sm:$0xff]
      %v583 = vld [vmem:[%s224 + $0x298] sm:$0xff]
      %v584 = vld [vmem:[%s224 + $0x2a0] sm:$0xff]
      %v585 = vld [vmem:[%s224 + $0x2a8] sm:$0xff]
      %v586 = vld [vmem:[%s224 + $0x2b0] sm:$0xff]
      %v587 = vld [vmem:[%s224 + $0x2b8] sm:$0xff]
      %v588 = vld [vmem:[%s224 + $0x2c0] sm:$0xff]
      %v589 = vld [vmem:[%s224 + $0x2c8] sm:$0xff]
      %v590 = vld [vmem:[%s224 + $0x2d0] sm:$0xff]
      %v591 = vld [vmem:[%s224 + $0x2d8] sm:$0xff]
      %v592 = vld [vmem:[%s224 + $0x2e0] sm:$0xff]
      %v593 = vld [vmem:[%s224 + $0x2e8] sm:$0xff]
      %v594 = vld [vmem:[%s224 + $0x2f0] sm:$0xff]
      %v595 = vld [vmem:[%s224 + $0x2f8] sm:$0xff]
      %v596 = vld [vmem:[%s224 + $0x300] sm:$0xff]
      %v597 = vld [vmem:[%s224 + $0x308] sm:$0xff]
      %v598 = vld [vmem:[%s224 + $0x310] sm:$0xff]
      %v599 = vld [vmem:[%s224 + $0x318] sm:$0xff]
      %v600 = vld [vmem:[%s224 + $0x320] sm:$0xff]
      %v601 = vld [vmem:[%s224 + $0x328] sm:$0xff]
      %v602 = vld [vmem:[%s224 + $0x330] sm:$0xff]
      %v603 = vld [vmem:[%s224 + $0x338] sm:$0xff]
      %v604 = vld [vmem:[%s224 + $0x340] sm:$0xff]
      %v605 = vld [vmem:[%s224 + $0x348] sm:$0xff]
      %v606 = vld [vmem:[%s224 + $0x350] sm:$0xff]
      %v607 = vld [vmem:[%s224 + $0x358] sm:$0xff]
      %v608 = vld [vmem:[%s224 + $0x360] sm:$0xff]
      %v609 = vld [vmem:[%s224 + $0x368] sm:$0xff]
      %v610 = vld [vmem:[%s224 + $0x370] sm:$0xff]
      %v611 = vld [vmem:[%s224 + $0x378] sm:$0xff]
      %v612 = vld [vmem:[%s224 + $0x380] sm:$0xff]
      %v613 = vld [vmem:[%s224 + $0x388] sm:$0xff]
      %v614 = vld [vmem:[%s224 + $0x390] sm:$0xff]
      %v615 = vld [vmem:[%s224 + $0x398] sm:$0xff]
      %v616 = vld [vmem:[%s224 + $0x3a0] sm:$0xff]
      %v617 = vld [vmem:[%s224 + $0x3a8] sm:$0xff]
      %v618 = vld [vmem:[%s224 + $0x3b0] sm:$0xff]
      %v619 = vld [vmem:[%s224 + $0x3b8] sm:$0xff]
      %v620 = vld [vmem:[%s224 + $0x3c0] sm:$0xff]
      %v621 = vld [vmem:[%s224 + $0x3c8] sm:$0xff]
      %v622 = vld [vmem:[%s224 + $0x3d0] sm:$0xff]
      %v623 = vld [vmem:[%s224 + $0x3d8] sm:$0xff]
      %v624 = vld [vmem:[%s224 + $0x3e0] sm:$0xff]
      %v625 = vld [vmem:[%s224 + $0x3e8] sm:$0xff]
      %v626 = vld [vmem:[%s224 + $0x3f0] sm:$0xff]
      %v627 = vld [vmem:[%s224 + $0x3f8] sm:$0xff]
      %v628 = vld [vmem:[%s224 + $0x400] sm:$0xff]
      %v629 = vld [vmem:[%s224 + $0x408] sm:$0xff]
      %v630 = vld [vmem:[%s224 + $0x410] sm:$0xff]
      %v631 = vld [vmem:[%s224 + $0x418] sm:$0xff]
      %v632 = vld [vmem:[%s224 + $0x420] sm:$0xff]
      %v633 = vld [vmem:[%s224 + $0x428] sm:$0xff]
      %v634 = vld [vmem:[%s224 + $0x430] sm:$0xff]
      %v635 = vld [vmem:[%s224 + $0x438] sm:$0xff]
      %v636 = vld [vmem:[%s224 + $0x440] sm:$0xff]
      %v637 = vld [vmem:[%s224 + $0x448] sm:$0xff]
      %v638 = vld [vmem:[%s224 + $0x450] sm:$0xff]
      %v639 = vld [vmem:[%s224 + $0x458] sm:$0xff]
      %v640 = vld [vmem:[%s224 + $0x460] sm:$0xff]
      %v641 = vld [vmem:[%s224 + $0x468] sm:$0xff]
      %v642 = vld [vmem:[%s224 + $0x470] sm:$0xff]
      %v643 = vld [vmem:[%s224 + $0x478] sm:$0xff]
      %v644 = vld [vmem:[%s224 + $0x480] sm:$0xff]
      %v645 = vld [vmem:[%s224 + $0x488] sm:$0xff]
      %v646 = vld [vmem:[%s224 + $0x490] sm:$0xff]
      %v647 = vld [vmem:[%s224 + $0x498] sm:$0xff]
      %v648 = vld [vmem:[%s224 + $0x4a0] sm:$0xff]
      %v649 = vld [vmem:[%s224 + $0x4a8] sm:$0xff]
      %v650 = vld [vmem:[%s224 + $0x4b0] sm:$0xff]
      %v651 = vld [vmem:[%s224 + $0x4b8] sm:$0xff]
      %v652 = vld [vmem:[%s224 + $0x4c0] sm:$0xff]
      %v653 = vld [vmem:[%s224 + $0x4c8] sm:$0xff]
      %v654 = vld [vmem:[%s224 + $0x4d0] sm:$0xff]
      %v655 = vld [vmem:[%s224 + $0x4d8] sm:$0xff]
      %v656 = vld [vmem:[%s224 + $0x4e0] sm:$0xff]
      %v657 = vld [vmem:[%s224 + $0x4e8] sm:$0xff]
      %v658 = vld [vmem:[%s224 + $0x4f0] sm:$0xff]
      %v659 = vld [vmem:[%s224 + $0x4f8] sm:$0xff]
      %v660 = vld [vmem:[%s224 + $0x500] sm:$0xff]
      %v661 = vld [vmem:[%s224 + $0x508] sm:$0xff]
      %v662 = vld [vmem:[%s224 + $0x510] sm:$0xff]
      %v663 = vld [vmem:[%s224 + $0x518] sm:$0xff]
      %v664 = vld [vmem:[%s224 + $0x520] sm:$0xff]
      %v665 = vld [vmem:[%s224 + $0x528] sm:$0xff]
      %v666 = vld [vmem:[%s224 + $0x530] sm:$0xff]
      %v667 = vld [vmem:[%s224 + $0x538] sm:$0xff]
      %v668 = vld [vmem:[%s224 + $0x540] sm:$0xff]
      %v669 = vld [vmem:[%s224 + $0x548] sm:$0xff]
      %v670 = vld [vmem:[%s224 + $0x550] sm:$0xff]
      %v671 = vld [vmem:[%s224 + $0x558] sm:$0xff]
      %v672 = vld [vmem:[%s224 + $0x560] sm:$0xff]
      %v673 = vld [vmem:[%s224 + $0x568] sm:$0xff]
      %v674 = vld [vmem:[%s224 + $0x570] sm:$0xff]
      %v675 = vld [vmem:[%s224 + $0x578] sm:$0xff]
      %v676 = vld [vmem:[%s224 + $0x580] sm:$0xff]
      %v677 = vld [vmem:[%s224 + $0x588] sm:$0xff]
      %v678 = vld [vmem:[%s224 + $0x590] sm:$0xff]
      %v679 = vld [vmem:[%s224 + $0x598] sm:$0xff]
      %v680 = vld [vmem:[%s224 + $0x5a0] sm:$0xff]
      %v681 = vld [vmem:[%s224 + $0x5a8] sm:$0xff]
      %v682 = vld [vmem:[%s224 + $0x5b0] sm:$0xff]
      %v683 = vld [vmem:[%s224 + $0x5b8] sm:$0xff]
      %v684 = vld [vmem:[%s224 + $0x5c0] sm:$0xff]
      %v685 = vld [vmem:[%s224 + $0x5c8] sm:$0xff]
      %v686 = vld [vmem:[%s224 + $0x5d0] sm:$0xff]
      %v687 = vld [vmem:[%s224 + $0x5d8] sm:$0xff]
      %v688 = vld [vmem:[%s224 + $0x5e0] sm:$0xff]
      %v689 = vld [vmem:[%s224 + $0x5e8] sm:$0xff]
      %v690 = vld [vmem:[%s224 + $0x5f0] sm:$0xff]
      %v691 = vld [vmem:[%s224 + $0x5f8] sm:$0xff]
      %v692 = vld [vmem:[%s224 + $0x600] sm:$0xff]
      %v693 = vld [vmem:[%s224 + $0x608] sm:$0xff]
      %v694 = vld [vmem:[%s224 + $0x610] sm:$0xff]
      %v695 = vld [vmem:[%s224 + $0x618] sm:$0xff]
      %v696 = vld [vmem:[%s224 + $0x620] sm:$0xff]
      %v697 = vld [vmem:[%s224 + $0x628] sm:$0xff]
      %v698 = vld [vmem:[%s224 + $0x630] sm:$0xff]
      %v699 = vld [vmem:[%s224 + $0x638] sm:$0xff]
      %v700 = vld [vmem:[%s224 + $0x640] sm:$0xff]
      %v701 = vld [vmem:[%s224 + $0x648] sm:$0xff]
      %v702 = vld [vmem:[%s224 + $0x650] sm:$0xff]
      %v703 = vld [vmem:[%s224 + $0x658] sm:$0xff]
      %v704 = vld [vmem:[%s224 + $0x660] sm:$0xff]
      %v705 = vld [vmem:[%s224 + $0x668] sm:$0xff]
      %v706 = vld [vmem:[%s224 + $0x670] sm:$0xff]
      %v707 = vld [vmem:[%s224 + $0x678] sm:$0xff]
      %v708 = vld [vmem:[%s224 + $0x680] sm:$0xff]
      %v709 = vld [vmem:[%s224 + $0x688] sm:$0xff]
      %v710 = vld [vmem:[%s224 + $0x690] sm:$0xff]
      %v711 = vld [vmem:[%s224 + $0x698] sm:$0xff]
      %v712 = vld [vmem:[%s224 + $0x6a0] sm:$0xff]
      %v713 = vld [vmem:[%s224 + $0x6a8] sm:$0xff]
      %v714 = vld [vmem:[%s224 + $0x6b0] sm:$0xff]
      %v715 = vld [vmem:[%s224 + $0x6b8] sm:$0xff]
      %v716 = vld [vmem:[%s224 + $0x6c0] sm:$0xff]
      %v717 = vld [vmem:[%s224 + $0x6c8] sm:$0xff]
      %v718 = vld [vmem:[%s224 + $0x6d0] sm:$0xff]
      %v719 = vld [vmem:[%s224 + $0x6d8] sm:$0xff]
      %v720 = vld [vmem:[%s224 + $0x6e0] sm:$0xff]
      %v721 = vld [vmem:[%s224 + $0x6e8] sm:$0xff]
      %v722 = vld [vmem:[%s224 + $0x6f0] sm:$0xff]
      %v723 = vld [vmem:[%s224 + $0x6f8] sm:$0xff]
      %v724 = vld [vmem:[%s224 + $0x700] sm:$0xff]
      %v725 = vld [vmem:[%s224 + $0x708] sm:$0xff]
      %v726 = vld [vmem:[%s224 + $0x710] sm:$0xff]
      %v727 = vld [vmem:[%s224 + $0x718] sm:$0xff]
      %v728 = vld [vmem:[%s224 + $0x720] sm:$0xff]
      %v729 = vld [vmem:[%s224 + $0x728] sm:$0xff]
      %v730 = vld [vmem:[%s224 + $0x730] sm:$0xff]
      %v731 = vld [vmem:[%s224 + $0x738] sm:$0xff]
      %v732 = vld [vmem:[%s224 + $0x740] sm:$0xff]
      %v733 = vld [vmem:[%s224 + $0x748] sm:$0xff]
      %v734 = vld [vmem:[%s224 + $0x750] sm:$0xff]
      %v735 = vld [vmem:[%s224 + $0x758] sm:$0xff]
      %v736 = vld [vmem:[%s224 + $0x760] sm:$0xff]
      %v737 = vld [vmem:[%s224 + $0x768] sm:$0xff]
      %v738 = vld [vmem:[%s224 + $0x770] sm:$0xff]
      %v739 = vld [vmem:[%s224 + $0x778] sm:$0xff]
      %v740 = vld [vmem:[%s229] sm:$0x3]
      %v742 = vlaneseq
      %v743 = vshrl.u32 %v742, 7
      %v744 = vsub.s32 0, %v743
      %v745 = vrot.slane %v740, %v744
      %v746 = vlaneseq
      %v747 = vshrl.u32 %v746, 7
      %v748 = vsub.s32 1, %v747
      %v749 = vrot.slane %v740, %v748
      %v1008 = vunpack.c.l.b16 %v244
      %v1009 = vunpack.c.h.b16 %v244
      %v1010 = vunpack.c.l.b16 %v245
      %v1011 = vunpack.c.h.b16 %v245
      %v1012 = vunpack.c.l.b16 %v246
      %v1013 = vunpack.c.h.b16 %v246
      %v1014 = vunpack.c.l.b16 %v247
      %v1015 = vunpack.c.h.b16 %v247
      %v1016 = vunpack.c.l.b16 %v248
      %v1017 = vunpack.c.h.b16 %v248
      %v1018 = vunpack.c.l.b16 %v249
      %v1019 = vunpack.c.h.b16 %v249
      %v1020 = vunpack.c.l.b16 %v250
      %v1021 = vunpack.c.h.b16 %v250
      %v1022 = vunpack.c.l.b16 %v251
      %v1023 = vunpack.c.l.b16 %v252
      %v1024 = vunpack.c.h.b16 %v252
      %v1025 = vunpack.c.l.b16 %v253
      %v1026 = vunpack.c.h.b16 %v253
      %v1027 = vunpack.c.l.b16 %v254
      %v1028 = vunpack.c.h.b16 %v254
      %v1029 = vunpack.c.l.b16 %v255
      %v1030 = vunpack.c.h.b16 %v255
      %v1031 = vunpack.c.l.b16 %v256
      %v1032 = vunpack.c.h.b16 %v256
      %v1033 = vunpack.c.l.b16 %v257
      %v1034 = vunpack.c.h.b16 %v257
      %v1035 = vunpack.c.l.b16 %v258
      %v1036 = vunpack.c.h.b16 %v258
      %v1037 = vunpack.c.l.b16 %v259
      %v1038 = vunpack.c.l.b16 %v260
      %v1039 = vunpack.c.h.b16 %v260
      %v1040 = vunpack.c.l.b16 %v261
      %v1041 = vunpack.c.h.b16 %v261
      %v1042 = vunpack.c.l.b16 %v262
      %v1043 = vunpack.c.h.b16 %v262
      %v1044 = vunpack.c.l.b16 %v263
      %v1045 = vunpack.c.h.b16 %v263
      %v1046 = vunpack.c.l.b16 %v264
      %v1047 = vunpack.c.h.b16 %v264
      %v1048 = vunpack.c.l.b16 %v265
      %v1049 = vunpack.c.h.b16 %v265
      %v1050 = vunpack.c.l.b16 %v266
      %v1051 = vunpack.c.h.b16 %v266
      %v1052 = vunpack.c.l.b16 %v267
      %v1053 = vunpack.c.l.b16 %v268
      %v1054 = vunpack.c.h.b16 %v268
      %v1055 = vunpack.c.l.b16 %v269
      %v1056 = vunpack.c.h.b16 %v269
      %v1057 = vunpack.c.l.b16 %v270
      %v1058 = vunpack.c.h.b16 %v270
      %v1059 = vunpack.c.l.b16 %v271
      %v1060 = vunpack.c.h.b16 %v271
      %v1061 = vunpack.c.l.b16 %v272
      %v1062 = vunpack.c.h.b16 %v272
      %v1063 = vunpack.c.l.b16 %v273
      %v1064 = vunpack.c.h.b16 %v273
      %v1065 = vunpack.c.l.b16 %v274
      %v1066 = vunpack.c.h.b16 %v274
      %v1067 = vunpack.c.l.b16 %v275
      %v1068 = vunpack.c.l.b16 %v276
      %v1069 = vunpack.c.h.b16 %v276
      %v1070 = vunpack.c.l.b16 %v277
      %v1071 = vunpack.c.h.b16 %v277
      %v1072 = vunpack.c.l.b16 %v278
      %v1073 = vunpack.c.h.b16 %v278
      %v1074 = vunpack.c.l.b16 %v279
      %v1075 = vunpack.c.h.b16 %v279
      %v1076 = vunpack.c.l.b16 %v280
      %v1077 = vunpack.c.h.b16 %v280
      %v1078 = vunpack.c.l.b16 %v281
      %v1079 = vunpack.c.h.b16 %v281
      %v1080 = vunpack.c.l.b16 %v282
      %v1081 = vunpack.c.h.b16 %v282
      %v1082 = vunpack.c.l.b16 %v283
      %v1083 = vunpack.c.l.b16 %v284
      %v1084 = vunpack.c.h.b16 %v284
      %v1085 = vunpack.c.l.b16 %v285
      %v1086 = vunpack.c.h.b16 %v285
      %v1087 = vunpack.c.l.b16 %v286
      %v1088 = vunpack.c.h.b16 %v286
      %v1089 = vunpack.c.l.b16 %v287
      %v1090 = vunpack.c.h.b16 %v287
      %v1091 = vunpack.c.l.b16 %v288
      %v1092 = vunpack.c.h.b16 %v288
      %v1093 = vunpack.c.l.b16 %v289
      %v1094 = vunpack.c.h.b16 %v289
      %v1095 = vunpack.c.l.b16 %v290
      %v1096 = vunpack.c.h.b16 %v290
      %v1097 = vunpack.c.l.b16 %v291
      %v1098 = vunpack.c.l.b16 %v292
      %v1099 = vunpack.c.h.b16 %v292
      %v1100 = vunpack.c.l.b16 %v293
      %v1101 = vunpack.c.h.b16 %v293
      %v1102 = vunpack.c.l.b16 %v294
      %v1103 = vunpack.c.h.b16 %v294
      %v1104 = vunpack.c.l.b16 %v295
      %v1105 = vunpack.c.h.b16 %v295
      %v1106 = vunpack.c.l.b16 %v296
      %v1107 = vunpack.c.h.b16 %v296
      %v1108 = vunpack.c.l.b16 %v297
      %v1109 = vunpack.c.h.b16 %v297
      %v1110 = vunpack.c.l.b16 %v298
      %v1111 = vunpack.c.h.b16 %v298
      %v1112 = vunpack.c.l.b16 %v299
      %v1113 = vunpack.c.l.b16 %v300
      %v1114 = vunpack.c.h.b16 %v300
      %v1115 = vunpack.c.l.b16 %v301
      %v1116 = vunpack.c.h.b16 %v301
      %v1117 = vunpack.c.l.b16 %v302
      %v1118 = vunpack.c.h.b16 %v302
      %v1119 = vunpack.c.l.b16 %v303
      %v1120 = vunpack.c.h.b16 %v303
      %v1121 = vunpack.c.l.b16 %v304
      %v1122 = vunpack.c.h.b16 %v304
      %v1123 = vunpack.c.l.b16 %v305
      %v1124 = vunpack.c.h.b16 %v305
      %v1125 = vunpack.c.l.b16 %v306
      %v1126 = vunpack.c.h.b16 %v306
      %v1127 = vunpack.c.l.b16 %v307
      %v1128 = vunpack.c.l.b16 %v308
      %v1129 = vunpack.c.h.b16 %v308
      %v1130 = vunpack.c.l.b16 %v309
      %v1131 = vunpack.c.h.b16 %v309
      %v1132 = vunpack.c.l.b16 %v310
      %v1133 = vunpack.c.h.b16 %v310
      %v1134 = vunpack.c.l.b16 %v311
      %v1135 = vunpack.c.h.b16 %v311
      %v1136 = vunpack.c.l.b16 %v312
      %v1137 = vunpack.c.h.b16 %v312
      %v1138 = vunpack.c.l.b16 %v313
      %v1139 = vunpack.c.h.b16 %v313
      %v1140 = vunpack.c.l.b16 %v314
      %v1141 = vunpack.c.h.b16 %v314
      %v1142 = vunpack.c.l.b16 %v315
      %v1143 = vunpack.c.l.b16 %v316
      %v1144 = vunpack.c.h.b16 %v316
      %v1145 = vunpack.c.l.b16 %v317
      %v1146 = vunpack.c.h.b16 %v317
      %v1147 = vunpack.c.l.b16 %v318
      %v1148 = vunpack.c.h.b16 %v318
      %v1149 = vunpack.c.l.b16 %v319
      %v1150 = vunpack.c.h.b16 %v319
      %v1151 = vunpack.c.l.b16 %v320
      %v1152 = vunpack.c.h.b16 %v320
      %v1153 = vunpack.c.l.b16 %v321
      %v1154 = vunpack.c.h.b16 %v321
      %v1155 = vunpack.c.l.b16 %v322
      %v1156 = vunpack.c.h.b16 %v322
      %v1157 = vunpack.c.l.b16 %v323
      %v1158 = vunpack.c.l.b16 %v324
      %v1159 = vunpack.c.h.b16 %v324
      %v1160 = vunpack.c.l.b16 %v325
      %v1161 = vunpack.c.h.b16 %v325
      %v1162 = vunpack.c.l.b16 %v326
      %v1163 = vunpack.c.h.b16 %v326
      %v1164 = vunpack.c.l.b16 %v327
      %v1165 = vunpack.c.h.b16 %v327
      %v1166 = vunpack.c.l.b16 %v328
      %v1167 = vunpack.c.h.b16 %v328
      %v1168 = vunpack.c.l.b16 %v329
      %v1169 = vunpack.c.h.b16 %v329
      %v1170 = vunpack.c.l.b16 %v330
      %v1171 = vunpack.c.h.b16 %v330
      %v1172 = vunpack.c.l.b16 %v331
      %v1173 = vunpack.c.l.b16 %v332
      %v1174 = vunpack.c.h.b16 %v332
      %v1175 = vunpack.c.l.b16 %v333
      %v1176 = vunpack.c.h.b16 %v333
      %v1177 = vunpack.c.l.b16 %v334
      %v1178 = vunpack.c.h.b16 %v334
      %v1179 = vunpack.c.l.b16 %v335
      %v1180 = vunpack.c.h.b16 %v335
      %v1181 = vunpack.c.l.b16 %v336
      %v1182 = vunpack.c.h.b16 %v336
      %v1183 = vunpack.c.l.b16 %v337
      %v1184 = vunpack.c.h.b16 %v337
      %v1185 = vunpack.c.l.b16 %v338
      %v1186 = vunpack.c.h.b16 %v338
      %v1187 = vunpack.c.l.b16 %v339
      %v1188 = vunpack.c.l.b16 %v340
      %v1189 = vunpack.c.h.b16 %v340
      %v1190 = vunpack.c.l.b16 %v341
      %v1191 = vunpack.c.h.b16 %v341
      %v1192 = vunpack.c.l.b16 %v342
      %v1193 = vunpack.c.h.b16 %v342
      %v1194 = vunpack.c.l.b16 %v343
      %v1195 = vunpack.c.h.b16 %v343
      %v1196 = vunpack.c.l.b16 %v344
      %v1197 = vunpack.c.h.b16 %v344
      %v1198 = vunpack.c.l.b16 %v345
      %v1199 = vunpack.c.h.b16 %v345
      %v1200 = vunpack.c.l.b16 %v346
      %v1201 = vunpack.c.h.b16 %v346
      %v1202 = vunpack.c.l.b16 %v347
      %v1203 = vunpack.c.l.b16 %v348
      %v1204 = vunpack.c.h.b16 %v348
      %v1205 = vunpack.c.l.b16 %v349
      %v1206 = vunpack.c.h.b16 %v349
      %v1207 = vunpack.c.l.b16 %v350
      %v1208 = vunpack.c.h.b16 %v350
      %v1209 = vunpack.c.l.b16 %v351
      %v1210 = vunpack.c.h.b16 %v351
      %v1211 = vunpack.c.l.b16 %v352
      %v1212 = vunpack.c.h.b16 %v352
      %v1213 = vunpack.c.l.b16 %v353
      %v1214 = vunpack.c.h.b16 %v353
      %v1215 = vunpack.c.l.b16 %v354
      %v1216 = vunpack.c.h.b16 %v354
      %v1217 = vunpack.c.l.b16 %v355
      %v1218 = vunpack.c.l.b16 %v356
      %v1219 = vunpack.c.h.b16 %v356
      %v1220 = vunpack.c.l.b16 %v357
      %v1221 = vunpack.c.h.b16 %v357
      %v1222 = vunpack.c.l.b16 %v358
      %v1223 = vunpack.c.h.b16 %v358
      %v1224 = vunpack.c.l.b16 %v359
      %v1225 = vunpack.c.h.b16 %v359
      %v1226 = vunpack.c.l.b16 %v360
      %v1227 = vunpack.c.h.b16 %v360
      %v1228 = vunpack.c.l.b16 %v361
      %v1229 = vunpack.c.h.b16 %v361
      %v1230 = vunpack.c.l.b16 %v362
      %v1231 = vunpack.c.h.b16 %v362
      %v1232 = vunpack.c.l.b16 %v363
      %v1233 = vunpack.c.l.b16 %v364
      %v1234 = vunpack.c.h.b16 %v364
      %v1235 = vunpack.c.l.b16 %v365
      %v1236 = vunpack.c.h.b16 %v365
      %v1237 = vunpack.c.l.b16 %v366
      %v1238 = vunpack.c.h.b16 %v366
      %v1239 = vunpack.c.l.b16 %v367
      %v1240 = vunpack.c.h.b16 %v367
      %v1241 = vunpack.c.l.b16 %v368
      %v1242 = vunpack.c.h.b16 %v368
      %v1243 = vunpack.c.l.b16 %v369
      %v1244 = vunpack.c.h.b16 %v369
      %v1245 = vunpack.c.l.b16 %v370
      %v1246 = vunpack.c.h.b16 %v370
      %v1247 = vunpack.c.l.b16 %v371
      %v1248 = vunpack.c.l.b16 %v372
      %v1249 = vunpack.c.h.b16 %v372
      %v1250 = vunpack.c.l.b16 %v373
      %v1251 = vunpack.c.h.b16 %v373
      %v1252 = vunpack.c.l.b16 %v374
      %v1253 = vunpack.c.h.b16 %v374
      %v1254 = vunpack.c.l.b16 %v375
      %v1255 = vunpack.c.h.b16 %v375
      %v1256 = vunpack.c.l.b16 %v376
      %v1257 = vunpack.c.h.b16 %v376
      %v1258 = vunpack.c.l.b16 %v377
      %v1259 = vunpack.c.h.b16 %v377
      %v1260 = vunpack.c.l.b16 %v378
      %v1261 = vunpack.c.h.b16 %v378
      %v1262 = vunpack.c.l.b16 %v379
      %v1263 = vunpack.c.l.b16 %v380
      %v1264 = vunpack.c.h.b16 %v380
      %v1265 = vunpack.c.l.b16 %v381
      %v1266 = vunpack.c.h.b16 %v381
      %v1267 = vunpack.c.l.b16 %v382
      %v1268 = vunpack.c.h.b16 %v382
      %v1269 = vunpack.c.l.b16 %v383
      %v1270 = vunpack.c.h.b16 %v383
      %v1271 = vunpack.c.l.b16 %v384
      %v1272 = vunpack.c.h.b16 %v384
      %v1273 = vunpack.c.l.b16 %v385
      %v1274 = vunpack.c.h.b16 %v385
      %v1275 = vunpack.c.l.b16 %v386
      %v1276 = vunpack.c.h.b16 %v386
      %v1277 = vunpack.c.l.b16 %v387
      %v1278 = vunpack.c.l.b16 %v388
      %v1279 = vunpack.c.h.b16 %v388
      %v1280 = vunpack.c.l.b16 %v389
      %v1281 = vunpack.c.h.b16 %v389
      %v1282 = vunpack.c.l.b16 %v390
      %v1283 = vunpack.c.h.b16 %v390
      %v1284 = vunpack.c.l.b16 %v391
      %v1285 = vunpack.c.h.b16 %v391
      %v1286 = vunpack.c.l.b16 %v392
      %v1287 = vunpack.c.h.b16 %v392
      %v1288 = vunpack.c.l.b16 %v393
      %v1289 = vunpack.c.h.b16 %v393
      %v1290 = vunpack.c.l.b16 %v394
      %v1291 = vunpack.c.h.b16 %v394
      %v1292 = vunpack.c.l.b16 %v395
      %v1293 = vunpack.c.l.b16 %v396
      %v1294 = vunpack.c.h.b16 %v396
      %v1295 = vunpack.c.l.b16 %v397
      %v1296 = vunpack.c.h.b16 %v397
      %v1297 = vunpack.c.l.b16 %v398
      %v1298 = vunpack.c.h.b16 %v398
      %v1299 = vunpack.c.l.b16 %v399
      %v1300 = vunpack.c.h.b16 %v399
      %v1301 = vunpack.c.l.b16 %v400
      %v1302 = vunpack.c.h.b16 %v400
      %v1303 = vunpack.c.l.b16 %v401
      %v1304 = vunpack.c.h.b16 %v401
      %v1305 = vunpack.c.l.b16 %v402
      %v1306 = vunpack.c.h.b16 %v402
      %v1307 = vunpack.c.l.b16 %v403
      %v1308 = vunpack.c.l.b16 %v404
      %v1309 = vunpack.c.h.b16 %v404
      %v1310 = vunpack.c.l.b16 %v405
      %v1311 = vunpack.c.h.b16 %v405
      %v1312 = vunpack.c.l.b16 %v406
      %v1313 = vunpack.c.h.b16 %v406
      %v1314 = vunpack.c.l.b16 %v407
      %v1315 = vunpack.c.h.b16 %v407
      %v1316 = vunpack.c.l.b16 %v408
      %v1317 = vunpack.c.h.b16 %v408
      %v1318 = vunpack.c.l.b16 %v409
      %v1319 = vunpack.c.h.b16 %v409
      %v1320 = vunpack.c.l.b16 %v410
      %v1321 = vunpack.c.h.b16 %v410
      %v1322 = vunpack.c.l.b16 %v411
      %v1323 = vunpack.c.l.b16 %v412
      %v1324 = vunpack.c.h.b16 %v412
      %v1325 = vunpack.c.l.b16 %v413
      %v1326 = vunpack.c.h.b16 %v413
      %v1327 = vunpack.c.l.b16 %v414
      %v1328 = vunpack.c.h.b16 %v414
      %v1329 = vunpack.c.l.b16 %v415
      %v1330 = vunpack.c.h.b16 %v415
      %v1331 = vunpack.c.l.b16 %v416
      %v1332 = vunpack.c.h.b16 %v416
      %v1333 = vunpack.c.l.b16 %v417
      %v1334 = vunpack.c.h.b16 %v417
      %v1335 = vunpack.c.l.b16 %v418
      %v1336 = vunpack.c.h.b16 %v418
      %v1337 = vunpack.c.l.b16 %v419
      %v1338 = vunpack.c.l.b16 %v420
      %v1339 = vunpack.c.h.b16 %v420
      %v1340 = vunpack.c.l.b16 %v421
      %v1341 = vunpack.c.h.b16 %v421
      %v1342 = vunpack.c.l.b16 %v422
      %v1343 = vunpack.c.h.b16 %v422
      %v1344 = vunpack.c.l.b16 %v423
      %v1345 = vunpack.c.h.b16 %v423
      %v1346 = vunpack.c.l.b16 %v424
      %v1347 = vunpack.c.h.b16 %v424
      %v1348 = vunpack.c.l.b16 %v425
      %v1349 = vunpack.c.h.b16 %v425
      %v1350 = vunpack.c.l.b16 %v426
      %v1351 = vunpack.c.h.b16 %v426
      %v1352 = vunpack.c.l.b16 %v427
      %v1353 = vunpack.c.l.b16 %v428
      %v1354 = vunpack.c.h.b16 %v428
      %v1355 = vunpack.c.l.b16 %v429
      %v1356 = vunpack.c.h.b16 %v429
      %v1357 = vunpack.c.l.b16 %v430
      %v1358 = vunpack.c.h.b16 %v430
      %v1359 = vunpack.c.l.b16 %v431
      %v1360 = vunpack.c.h.b16 %v431
      %v1361 = vunpack.c.l.b16 %v432
      %v1362 = vunpack.c.h.b16 %v432
      %v1363 = vunpack.c.l.b16 %v433
      %v1364 = vunpack.c.h.b16 %v433
      %v1365 = vunpack.c.l.b16 %v434
      %v1366 = vunpack.c.h.b16 %v434
      %v1367 = vunpack.c.l.b16 %v435
      %v1368 = vunpack.c.l.b16 %v436
      %v1369 = vunpack.c.h.b16 %v436
      %v1370 = vunpack.c.l.b16 %v437
      %v1371 = vunpack.c.h.b16 %v437
      %v1372 = vunpack.c.l.b16 %v438
      %v1373 = vunpack.c.h.b16 %v438
      %v1374 = vunpack.c.l.b16 %v439
      %v1375 = vunpack.c.h.b16 %v439
      %v1376 = vunpack.c.l.b16 %v440
      %v1377 = vunpack.c.h.b16 %v440
      %v1378 = vunpack.c.l.b16 %v441
      %v1379 = vunpack.c.h.b16 %v441
      %v1380 = vunpack.c.l.b16 %v442
      %v1381 = vunpack.c.h.b16 %v442
      %v1382 = vunpack.c.l.b16 %v443
      %v1383 = vunpack.c.l.b16 %v444
      %v1384 = vunpack.c.h.b16 %v444
      %v1385 = vunpack.c.l.b16 %v445
      %v1386 = vunpack.c.h.b16 %v445
      %v1387 = vunpack.c.l.b16 %v446
      %v1388 = vunpack.c.h.b16 %v446
      %v1389 = vunpack.c.l.b16 %v447
      %v1390 = vunpack.c.h.b16 %v447
      %v1391 = vunpack.c.l.b16 %v448
      %v1392 = vunpack.c.h.b16 %v448
      %v1393 = vunpack.c.l.b16 %v449
      %v1394 = vunpack.c.h.b16 %v449
      %v1395 = vunpack.c.l.b16 %v450
      %v1396 = vunpack.c.h.b16 %v450
      %v1397 = vunpack.c.l.b16 %v451
      %v1398 = vunpack.c.l.b16 %v452
      %v1399 = vunpack.c.h.b16 %v452
      %v1400 = vunpack.c.l.b16 %v453
      %v1401 = vunpack.c.h.b16 %v453
      %v1402 = vunpack.c.l.b16 %v454
      %v1403 = vunpack.c.h.b16 %v454
      %v1404 = vunpack.c.l.b16 %v455
      %v1405 = vunpack.c.h.b16 %v455
      %v1406 = vunpack.c.l.b16 %v456
      %v1407 = vunpack.c.h.b16 %v456
      %v1408 = vunpack.c.l.b16 %v457
      %v1409 = vunpack.c.h.b16 %v457
      %v1410 = vunpack.c.l.b16 %v458
      %v1411 = vunpack.c.h.b16 %v458
      %v1412 = vunpack.c.l.b16 %v459
      %v1413 = vunpack.c.l.b16 %v460
      %v1414 = vunpack.c.h.b16 %v460
      %v1415 = vunpack.c.l.b16 %v461
      %v1416 = vunpack.c.h.b16 %v461
      %v1417 = vunpack.c.l.b16 %v462
      %v1418 = vunpack.c.h.b16 %v462
      %v1419 = vunpack.c.l.b16 %v463
      %v1420 = vunpack.c.h.b16 %v463
      %v1421 = vunpack.c.l.b16 %v464
      %v1422 = vunpack.c.h.b16 %v464
      %v1423 = vunpack.c.l.b16 %v465
      %v1424 = vunpack.c.h.b16 %v465
      %v1425 = vunpack.c.l.b16 %v466
      %v1426 = vunpack.c.h.b16 %v466
      %v1427 = vunpack.c.l.b16 %v467
      %v1428 = vunpack.c.l.b16 %v468
      %v1429 = vunpack.c.h.b16 %v468
      %v1430 = vunpack.c.l.b16 %v469
      %v1431 = vunpack.c.h.b16 %v469
      %v1432 = vunpack.c.l.b16 %v470
      %v1433 = vunpack.c.h.b16 %v470
      %v1434 = vunpack.c.l.b16 %v471
      %v1435 = vunpack.c.h.b16 %v471
      %v1436 = vunpack.c.l.b16 %v472
      %v1437 = vunpack.c.h.b16 %v472
      %v1438 = vunpack.c.l.b16 %v473
      %v1439 = vunpack.c.h.b16 %v473
      %v1440 = vunpack.c.l.b16 %v474
      %v1441 = vunpack.c.h.b16 %v474
      %v1442 = vunpack.c.l.b16 %v475
      %v1443 = vunpack.c.l.b16 %v476
      %v1444 = vunpack.c.h.b16 %v476
      %v1445 = vunpack.c.l.b16 %v477
      %v1446 = vunpack.c.h.b16 %v477
      %v1447 = vunpack.c.l.b16 %v478
      %v1448 = vunpack.c.h.b16 %v478
      %v1449 = vunpack.c.l.b16 %v479
      %v1450 = vunpack.c.h.b16 %v479
      %v1451 = vunpack.c.l.b16 %v480
      %v1452 = vunpack.c.h.b16 %v480
      %v1453 = vunpack.c.l.b16 %v481
      %v1454 = vunpack.c.h.b16 %v481
      %v1455 = vunpack.c.l.b16 %v482
      %v1456 = vunpack.c.h.b16 %v482
      %v1457 = vunpack.c.l.b16 %v483
      %v1458 = vunpack.c.l.b16 %v484
      %v1459 = vunpack.c.h.b16 %v484
      %v1460 = vunpack.c.l.b16 %v485
      %v1461 = vunpack.c.h.b16 %v485
      %v1462 = vunpack.c.l.b16 %v486
      %v1463 = vunpack.c.h.b16 %v486
      %v1464 = vunpack.c.l.b16 %v487
      %v1465 = vunpack.c.h.b16 %v487
      %v1466 = vunpack.c.l.b16 %v488
      %v1467 = vunpack.c.h.b16 %v488
      %v1468 = vunpack.c.l.b16 %v489
      %v1469 = vunpack.c.h.b16 %v489
      %v1470 = vunpack.c.l.b16 %v490
      %v1471 = vunpack.c.h.b16 %v490
      %v1472 = vunpack.c.l.b16 %v491
      %v1473 = vunpack.c.l.b16 %v492
      %v1474 = vunpack.c.h.b16 %v492
      %v1475 = vunpack.c.l.b16 %v493
      %v1476 = vunpack.c.h.b16 %v493
      %v1477 = vunpack.c.l.b16 %v494
      %v1478 = vunpack.c.h.b16 %v494
      %v1479 = vunpack.c.l.b16 %v495
      %v1480 = vunpack.c.h.b16 %v495
      %v1481 = vunpack.c.l.b16 %v496
      %v1482 = vunpack.c.h.b16 %v496
      %v1483 = vunpack.c.l.b16 %v497
      %v1484 = vunpack.c.h.b16 %v497
      %v1485 = vunpack.c.l.b16 %v498
      %v1486 = vunpack.c.h.b16 %v498
      %v1487 = vunpack.c.l.b16 %v499
      %v1488 = vpack.c.b16 %v1023, %v1008
      %v1489 = vpack.c.b16 %v1024, %v1009
      %v1490 = vpack.c.b16 %v1025, %v1010
      %v1491 = vpack.c.b16 %v1026, %v1011
      %v1492 = vpack.c.b16 %v1027, %v1012
      %v1493 = vpack.c.b16 %v1028, %v1013
      %v1494 = vpack.c.b16 %v1029, %v1014
      %v1495 = vpack.c.b16 %v1030, %v1015
      %v1496 = vpack.c.b16 %v1031, %v1016
      %v1497 = vpack.c.b16 %v1032, %v1017
      %v1498 = vpack.c.b16 %v1033, %v1018
      %v1499 = vpack.c.b16 %v1034, %v1019
      %v1500 = vpack.c.b16 %v1035, %v1020
      %v1501 = vpack.c.b16 %v1036, %v1021
      %v1502 = vpack.c.b16 %v1037, %v1022
      %v1503 = vpack.c.b16 %v1053, %v1038
      %v1504 = vpack.c.b16 %v1054, %v1039
      %v1505 = vpack.c.b16 %v1055, %v1040
      %v1506 = vpack.c.b16 %v1056, %v1041
      %v1507 = vpack.c.b16 %v1057, %v1042
      %v1508 = vpack.c.b16 %v1058, %v1043
      %v1509 = vpack.c.b16 %v1059, %v1044
      %v1510 = vpack.c.b16 %v1060, %v1045
      %v1511 = vpack.c.b16 %v1061, %v1046
      %v1512 = vpack.c.b16 %v1062, %v1047
      %v1513 = vpack.c.b16 %v1063, %v1048
      %v1514 = vpack.c.b16 %v1064, %v1049
      %v1515 = vpack.c.b16 %v1065, %v1050
      %v1516 = vpack.c.b16 %v1066, %v1051
      %v1517 = vpack.c.b16 %v1067, %v1052
      %v1518 = vpack.c.b16 %v1083, %v1068
      %v1519 = vpack.c.b16 %v1084, %v1069
      %v1520 = vpack.c.b16 %v1085, %v1070
      %v1521 = vpack.c.b16 %v1086, %v1071
      %v1522 = vpack.c.b16 %v1087, %v1072
      %v1523 = vpack.c.b16 %v1088, %v1073
      %v1524 = vpack.c.b16 %v1089, %v1074
      %v1525 = vpack.c.b16 %v1090, %v1075
      %v1526 = vpack.c.b16 %v1091, %v1076
      %v1527 = vpack.c.b16 %v1092, %v1077
      %v1528 = vpack.c.b16 %v1093, %v1078
      %v1529 = vpack.c.b16 %v1094, %v1079
      %v1530 = vpack.c.b16 %v1095, %v1080
      %v1531 = vpack.c.b16 %v1096, %v1081
      %v1532 = vpack.c.b16 %v1097, %v1082
      %v1533 = vpack.c.b16 %v1113, %v1098
      %v1534 = vpack.c.b16 %v1114, %v1099
      %v1535 = vpack.c.b16 %v1115, %v1100
      %v1536 = vpack.c.b16 %v1116, %v1101
      %v1537 = vpack.c.b16 %v1117, %v1102
      %v1538 = vpack.c.b16 %v1118, %v1103
      %v1539 = vpack.c.b16 %v1119, %v1104
      %v1540 = vpack.c.b16 %v1120, %v1105
      %v1541 = vpack.c.b16 %v1121, %v1106
      %v1542 = vpack.c.b16 %v1122, %v1107
      %v1543 = vpack.c.b16 %v1123, %v1108
      %v1544 = vpack.c.b16 %v1124, %v1109
      %v1545 = vpack.c.b16 %v1125, %v1110
      %v1546 = vpack.c.b16 %v1126, %v1111
      %v1547 = vpack.c.b16 %v1127, %v1112
      %v1548 = vpack.c.b16 %v1143, %v1128
      %v1549 = vpack.c.b16 %v1144, %v1129
      %v1550 = vpack.c.b16 %v1145, %v1130
      %v1551 = vpack.c.b16 %v1146, %v1131
      %v1552 = vpack.c.b16 %v1147, %v1132
      %v1553 = vpack.c.b16 %v1148, %v1133
      %v1554 = vpack.c.b16 %v1149, %v1134
      %v1555 = vpack.c.b16 %v1150, %v1135
      %v1556 = vpack.c.b16 %v1151, %v1136
      %v1557 = vpack.c.b16 %v1152, %v1137
      %v1558 = vpack.c.b16 %v1153, %v1138
      %v1559 = vpack.c.b16 %v1154, %v1139
      %v1560 = vpack.c.b16 %v1155, %v1140
      %v1561 = vpack.c.b16 %v1156, %v1141
      %v1562 = vpack.c.b16 %v1157, %v1142
      %v1563 = vpack.c.b16 %v1173, %v1158
      %v1564 = vpack.c.b16 %v1174, %v1159
      %v1565 = vpack.c.b16 %v1175, %v1160
      %v1566 = vpack.c.b16 %v1176, %v1161
      %v1567 = vpack.c.b16 %v1177, %v1162
      %v1568 = vpack.c.b16 %v1178, %v1163
      %v1569 = vpack.c.b16 %v1179, %v1164
      %v1570 = vpack.c.b16 %v1180, %v1165
      %v1571 = vpack.c.b16 %v1181, %v1166
      %v1572 = vpack.c.b16 %v1182, %v1167
      %v1573 = vpack.c.b16 %v1183, %v1168
      %v1574 = vpack.c.b16 %v1184, %v1169
      %v1575 = vpack.c.b16 %v1185, %v1170
      %v1576 = vpack.c.b16 %v1186, %v1171
      %v1577 = vpack.c.b16 %v1187, %v1172
      %v1578 = vpack.c.b16 %v1203, %v1188
      %v1579 = vpack.c.b16 %v1204, %v1189
      %v1580 = vpack.c.b16 %v1205, %v1190
      %v1581 = vpack.c.b16 %v1206, %v1191
      %v1582 = vpack.c.b16 %v1207, %v1192
      %v1583 = vpack.c.b16 %v1208, %v1193
      %v1584 = vpack.c.b16 %v1209, %v1194
      %v1585 = vpack.c.b16 %v1210, %v1195
      %v1586 = vpack.c.b16 %v1211, %v1196
      %v1587 = vpack.c.b16 %v1212, %v1197
      %v1588 = vpack.c.b16 %v1213, %v1198
      %v1589 = vpack.c.b16 %v1214, %v1199
      %v1590 = vpack.c.b16 %v1215, %v1200
      %v1591 = vpack.c.b16 %v1216, %v1201
      %v1592 = vpack.c.b16 %v1217, %v1202
      %v1593 = vpack.c.b16 %v1233, %v1218
      %v1594 = vpack.c.b16 %v1234, %v1219
      %v1595 = vpack.c.b16 %v1235, %v1220
      %v1596 = vpack.c.b16 %v1236, %v1221
      %v1597 = vpack.c.b16 %v1237, %v1222
      %v1598 = vpack.c.b16 %v1238, %v1223
      %v1599 = vpack.c.b16 %v1239, %v1224
      %v1600 = vpack.c.b16 %v1240, %v1225
      %v1601 = vpack.c.b16 %v1241, %v1226
      %v1602 = vpack.c.b16 %v1242, %v1227
      %v1603 = vpack.c.b16 %v1243, %v1228
      %v1604 = vpack.c.b16 %v1244, %v1229
      %v1605 = vpack.c.b16 %v1245, %v1230
      %v1606 = vpack.c.b16 %v1246, %v1231
      %v1607 = vpack.c.b16 %v1247, %v1232
      %v1608 = vpack.c.b16 %v1263, %v1248
      %v1609 = vpack.c.b16 %v1264, %v1249
      %v1610 = vpack.c.b16 %v1265, %v1250
      %v1611 = vpack.c.b16 %v1266, %v1251
      %v1612 = vpack.c.b16 %v1267, %v1252
      %v1613 = vpack.c.b16 %v1268, %v1253
      %v1614 = vpack.c.b16 %v1269, %v1254
      %v1615 = vpack.c.b16 %v1270, %v1255
      %v1616 = vpack.c.b16 %v1271, %v1256
      %v1617 = vpack.c.b16 %v1272, %v1257
      %v1618 = vpack.c.b16 %v1273, %v1258
      %v1619 = vpack.c.b16 %v1274, %v1259
      %v1620 = vpack.c.b16 %v1275, %v1260
      %v1621 = vpack.c.b16 %v1276, %v1261
      %v1622 = vpack.c.b16 %v1277, %v1262
      %v1623 = vpack.c.b16 %v1293, %v1278
      %v1624 = vpack.c.b16 %v1294, %v1279
      %v1625 = vpack.c.b16 %v1295, %v1280
      %v1626 = vpack.c.b16 %v1296, %v1281
      %v1627 = vpack.c.b16 %v1297, %v1282
      %v1628 = vpack.c.b16 %v1298, %v1283
      %v1629 = vpack.c.b16 %v1299, %v1284
      %v1630 = vpack.c.b16 %v1300, %v1285
      %v1631 = vpack.c.b16 %v1301, %v1286
      %v1632 = vpack.c.b16 %v1302, %v1287
      %v1633 = vpack.c.b16 %v1303, %v1288
      %v1634 = vpack.c.b16 %v1304, %v1289
      %v1635 = vpack.c.b16 %v1305, %v1290
      %v1636 = vpack.c.b16 %v1306, %v1291
      %v1637 = vpack.c.b16 %v1307, %v1292
      %v1638 = vpack.c.b16 %v1323, %v1308
      %v1639 = vpack.c.b16 %v1324, %v1309
      %v1640 = vpack.c.b16 %v1325, %v1310
      %v1641 = vpack.c.b16 %v1326, %v1311
      %v1642 = vpack.c.b16 %v1327, %v1312
      %v1643 = vpack.c.b16 %v1328, %v1313
      %v1644 = vpack.c.b16 %v1329, %v1314
      %v1645 = vpack.c.b16 %v1330, %v1315
      %v1646 = vpack.c.b16 %v1331, %v1316
      %v1647 = vpack.c.b16 %v1332, %v1317
      %v1648 = vpack.c.b16 %v1333, %v1318
      %v1649 = vpack.c.b16 %v1334, %v1319
      %v1650 = vpack.c.b16 %v1335, %v1320
      %v1651 = vpack.c.b16 %v1336, %v1321
      %v1652 = vpack.c.b16 %v1337, %v1322
      %v1653 = vpack.c.b16 %v1353, %v1338
      %v1654 = vpack.c.b16 %v1354, %v1339
      %v1655 = vpack.c.b16 %v1355, %v1340
      %v1656 = vpack.c.b16 %v1356, %v1341
      %v1657 = vpack.c.b16 %v1357, %v1342
      %v1658 = vpack.c.b16 %v1358, %v1343
      %v1659 = vpack.c.b16 %v1359, %v1344
      %v1660 = vpack.c.b16 %v1360, %v1345
      %v1661 = vpack.c.b16 %v1361, %v1346
      %v1662 = vpack.c.b16 %v1362, %v1347
      %v1663 = vpack.c.b16 %v1363, %v1348
      %v1664 = vpack.c.b16 %v1364, %v1349
      %v1665 = vpack.c.b16 %v1365, %v1350
      %v1666 = vpack.c.b16 %v1366, %v1351
      %v1667 = vpack.c.b16 %v1367, %v1352
      %v1668 = vpack.c.b16 %v1383, %v1368
      %v1669 = vpack.c.b16 %v1384, %v1369
      %v1670 = vpack.c.b16 %v1385, %v1370
      %v1671 = vpack.c.b16 %v1386, %v1371
      %v1672 = vpack.c.b16 %v1387, %v1372
      %v1673 = vpack.c.b16 %v1388, %v1373
      %v1674 = vpack.c.b16 %v1389, %v1374
      %v1675 = vpack.c.b16 %v1390, %v1375
      %v1676 = vpack.c.b16 %v1391, %v1376
      %v1677 = vpack.c.b16 %v1392, %v1377
      %v1678 = vpack.c.b16 %v1393, %v1378
      %v1679 = vpack.c.b16 %v1394, %v1379
      %v1680 = vpack.c.b16 %v1395, %v1380
      %v1681 = vpack.c.b16 %v1396, %v1381
      %v1682 = vpack.c.b16 %v1397, %v1382
      %v1683 = vpack.c.b16 %v1413, %v1398
      %v1684 = vpack.c.b16 %v1414, %v1399
      %v1685 = vpack.c.b16 %v1415, %v1400
      %v1686 = vpack.c.b16 %v1416, %v1401
      %v1687 = vpack.c.b16 %v1417, %v1402
      %v1688 = vpack.c.b16 %v1418, %v1403
      %v1689 = vpack.c.b16 %v1419, %v1404
      %v1690 = vpack.c.b16 %v1420, %v1405
      %v1691 = vpack.c.b16 %v1421, %v1406
      %v1692 = vpack.c.b16 %v1422, %v1407
      %v1693 = vpack.c.b16 %v1423, %v1408
      %v1694 = vpack.c.b16 %v1424, %v1409
      %v1695 = vpack.c.b16 %v1425, %v1410
      %v1696 = vpack.c.b16 %v1426, %v1411
      %v1697 = vpack.c.b16 %v1427, %v1412
      %v1698 = vpack.c.b16 %v1443, %v1428
      %v1699 = vpack.c.b16 %v1444, %v1429
      %v1700 = vpack.c.b16 %v1445, %v1430
      %v1701 = vpack.c.b16 %v1446, %v1431
      %v1702 = vpack.c.b16 %v1447, %v1432
      %v1703 = vpack.c.b16 %v1448, %v1433
      %v1704 = vpack.c.b16 %v1449, %v1434
      %v1705 = vpack.c.b16 %v1450, %v1435
      %v1706 = vpack.c.b16 %v1451, %v1436
      %v1707 = vpack.c.b16 %v1452, %v1437
      %v1708 = vpack.c.b16 %v1453, %v1438
      %v1709 = vpack.c.b16 %v1454, %v1439
      %v1710 = vpack.c.b16 %v1455, %v1440
      %v1711 = vpack.c.b16 %v1456, %v1441
      %v1712 = vpack.c.b16 %v1457, %v1442
      %v1713 = vpack.c.b16 %v1473, %v1458
      %v1714 = vpack.c.b16 %v1474, %v1459
      %v1715 = vpack.c.b16 %v1475, %v1460
      %v1716 = vpack.c.b16 %v1476, %v1461
      %v1717 = vpack.c.b16 %v1477, %v1462
      %v1718 = vpack.c.b16 %v1478, %v1463
      %v1719 = vpack.c.b16 %v1479, %v1464
      %v1720 = vpack.c.b16 %v1480, %v1465
      %v1721 = vpack.c.b16 %v1481, %v1466
      %v1722 = vpack.c.b16 %v1482, %v1467
      %v1723 = vpack.c.b16 %v1483, %v1468
      %v1724 = vpack.c.b16 %v1484, %v1469
      %v1725 = vpack.c.b16 %v1485, %v1470
      %v1726 = vpack.c.b16 %v1486, %v1471
      %v1727 = vpack.c.b16 %v1487, %v1472
      %v2208 = vunpack.c.l.b16 %v500
      %v2209 = vunpack.c.h.b16 %v500
      %v2210 = vunpack.c.l.b16 %v501
      %v2211 = vunpack.c.h.b16 %v501
      %v2212 = vunpack.c.l.b16 %v502
      %v2213 = vunpack.c.h.b16 %v502
      %v2214 = vunpack.c.l.b16 %v503
      %v2215 = vunpack.c.h.b16 %v503
      %v2216 = vunpack.c.l.b16 %v504
      %v2217 = vunpack.c.h.b16 %v504
      %v2218 = vunpack.c.l.b16 %v505
      %v2219 = vunpack.c.h.b16 %v505
      %v2220 = vunpack.c.l.b16 %v506
      %v2221 = vunpack.c.h.b16 %v506
      %v2222 = vunpack.c.l.b16 %v507
      %v2223 = vunpack.c.h.b16 %v507
      %v2224 = vunpack.c.l.b16 %v508
      %v2225 = vunpack.c.h.b16 %v508
      %v2226 = vunpack.c.l.b16 %v509
      %v2227 = vunpack.c.h.b16 %v509
      %v2228 = vunpack.c.l.b16 %v510
      %v2229 = vunpack.c.h.b16 %v510
      %v2230 = vunpack.c.l.b16 %v511
      %v2231 = vunpack.c.h.b16 %v511
      %v2232 = vunpack.c.l.b16 %v512
      %v2233 = vunpack.c.h.b16 %v512
      %v2234 = vunpack.c.l.b16 %v513
      %v2235 = vunpack.c.h.b16 %v513
      %v2236 = vunpack.c.l.b16 %v514
      %v2237 = vunpack.c.h.b16 %v514
      %v2238 = vunpack.c.l.b16 %v515
      %v2239 = vunpack.c.h.b16 %v515
      %v2240 = vunpack.c.l.b16 %v516
      %v2241 = vunpack.c.h.b16 %v516
      %v2242 = vunpack.c.l.b16 %v517
      %v2243 = vunpack.c.h.b16 %v517
      %v2244 = vunpack.c.l.b16 %v518
      %v2245 = vunpack.c.h.b16 %v518
      %v2246 = vunpack.c.l.b16 %v519
      %v2247 = vunpack.c.h.b16 %v519
      %v2248 = vunpack.c.l.b16 %v520
      %v2249 = vunpack.c.h.b16 %v520
      %v2250 = vunpack.c.l.b16 %v521
      %v2251 = vunpack.c.h.b16 %v521
      %v2252 = vunpack.c.l.b16 %v522
      %v2253 = vunpack.c.h.b16 %v522
      %v2254 = vunpack.c.l.b16 %v523
      %v2255 = vunpack.c.h.b16 %v523
      %v2256 = vunpack.c.l.b16 %v524
      %v2257 = vunpack.c.h.b16 %v524
      %v2258 = vunpack.c.l.b16 %v525
      %v2259 = vunpack.c.h.b16 %v525
      %v2260 = vunpack.c.l.b16 %v526
      %v2261 = vunpack.c.h.b16 %v526
      %v2262 = vunpack.c.l.b16 %v527
      %v2263 = vunpack.c.h.b16 %v527
      %v2264 = vunpack.c.l.b16 %v528
      %v2265 = vunpack.c.h.b16 %v528
      %v2266 = vunpack.c.l.b16 %v529
      %v2267 = vunpack.c.h.b16 %v529
      %v2268 = vunpack.c.l.b16 %v530
      %v2269 = vunpack.c.h.b16 %v530
      %v2270 = vunpack.c.l.b16 %v531
      %v2271 = vunpack.c.h.b16 %v531
      %v2272 = vunpack.c.l.b16 %v532
      %v2273 = vunpack.c.h.b16 %v532
      %v2274 = vunpack.c.l.b16 %v533
      %v2275 = vunpack.c.h.b16 %v533
      %v2276 = vunpack.c.l.b16 %v534
      %v2277 = vunpack.c.h.b16 %v534
      %v2278 = vunpack.c.l.b16 %v535
      %v2279 = vunpack.c.h.b16 %v535
      %v2280 = vunpack.c.l.b16 %v536
      %v2281 = vunpack.c.h.b16 %v536
      %v2282 = vunpack.c.l.b16 %v537
      %v2283 = vunpack.c.h.b16 %v537
      %v2284 = vunpack.c.l.b16 %v538
      %v2285 = vunpack.c.h.b16 %v538
      %v2286 = vunpack.c.l.b16 %v539
      %v2287 = vunpack.c.h.b16 %v539
      %v2288 = vunpack.c.l.b16 %v540
      %v2289 = vunpack.c.h.b16 %v540
      %v2290 = vunpack.c.l.b16 %v541
      %v2291 = vunpack.c.h.b16 %v541
      %v2292 = vunpack.c.l.b16 %v542
      %v2293 = vunpack.c.h.b16 %v542
      %v2294 = vunpack.c.l.b16 %v543
      %v2295 = vunpack.c.h.b16 %v543
      %v2296 = vunpack.c.l.b16 %v544
      %v2297 = vunpack.c.h.b16 %v544
      %v2298 = vunpack.c.l.b16 %v545
      %v2299 = vunpack.c.h.b16 %v545
      %v2300 = vunpack.c.l.b16 %v546
      %v2301 = vunpack.c.h.b16 %v546
      %v2302 = vunpack.c.l.b16 %v547
      %v2303 = vunpack.c.h.b16 %v547
      %v2304 = vunpack.c.l.b16 %v548
      %v2305 = vunpack.c.h.b16 %v548
      %v2306 = vunpack.c.l.b16 %v549
      %v2307 = vunpack.c.h.b16 %v549
      %v2308 = vunpack.c.l.b16 %v550
      %v2309 = vunpack.c.h.b16 %v550
      %v2310 = vunpack.c.l.b16 %v551
      %v2311 = vunpack.c.h.b16 %v551
      %v2312 = vunpack.c.l.b16 %v552
      %v2313 = vunpack.c.h.b16 %v552
      %v2314 = vunpack.c.l.b16 %v553
      %v2315 = vunpack.c.h.b16 %v553
      %v2316 = vunpack.c.l.b16 %v554
      %v2317 = vunpack.c.h.b16 %v554
      %v2318 = vunpack.c.l.b16 %v555
      %v2319 = vunpack.c.h.b16 %v555
      %v2320 = vunpack.c.l.b16 %v556
      %v2321 = vunpack.c.h.b16 %v556
      %v2322 = vunpack.c.l.b16 %v557
      %v2323 = vunpack.c.h.b16 %v557
      %v2324 = vunpack.c.l.b16 %v558
      %v2325 = vunpack.c.h.b16 %v558
      %v2326 = vunpack.c.l.b16 %v559
      %v2327 = vunpack.c.h.b16 %v559
      %v2328 = vunpack.c.l.b16 %v560
      %v2329 = vunpack.c.h.b16 %v560
      %v2330 = vunpack.c.l.b16 %v561
      %v2331 = vunpack.c.h.b16 %v561
      %v2332 = vunpack.c.l.b16 %v562
      %v2333 = vunpack.c.h.b16 %v562
      %v2334 = vunpack.c.l.b16 %v563
      %v2335 = vunpack.c.h.b16 %v563
      %v2336 = vunpack.c.l.b16 %v564
      %v2337 = vunpack.c.h.b16 %v564
      %v2338 = vunpack.c.l.b16 %v565
      %v2339 = vunpack.c.h.b16 %v565
      %v2340 = vunpack.c.l.b16 %v566
      %v2341 = vunpack.c.h.b16 %v566
      %v2342 = vunpack.c.l.b16 %v567
      %v2343 = vunpack.c.h.b16 %v567
      %v2344 = vunpack.c.l.b16 %v568
      %v2345 = vunpack.c.h.b16 %v568
      %v2346 = vunpack.c.l.b16 %v569
      %v2347 = vunpack.c.h.b16 %v569
      %v2348 = vunpack.c.l.b16 %v570
      %v2349 = vunpack.c.h.b16 %v570
      %v2350 = vunpack.c.l.b16 %v571
      %v2351 = vunpack.c.h.b16 %v571
      %v2352 = vunpack.c.l.b16 %v572
      %v2353 = vunpack.c.h.b16 %v572
      %v2354 = vunpack.c.l.b16 %v573
      %v2355 = vunpack.c.h.b16 %v573
      %v2356 = vunpack.c.l.b16 %v574
      %v2357 = vunpack.c.h.b16 %v574
      %v2358 = vunpack.c.l.b16 %v575
      %v2359 = vunpack.c.h.b16 %v575
      %v2360 = vunpack.c.l.b16 %v576
      %v2361 = vunpack.c.h.b16 %v576
      %v2362 = vunpack.c.l.b16 %v577
      %v2363 = vunpack.c.h.b16 %v577
      %v2364 = vunpack.c.l.b16 %v578
      %v2365 = vunpack.c.h.b16 %v578
      %v2366 = vunpack.c.l.b16 %v579
      %v2367 = vunpack.c.h.b16 %v579
      %v2368 = vunpack.c.l.b16 %v580
      %v2369 = vunpack.c.h.b16 %v580
      %v2370 = vunpack.c.l.b16 %v581
      %v2371 = vunpack.c.h.b16 %v581
      %v2372 = vunpack.c.l.b16 %v582
      %v2373 = vunpack.c.h.b16 %v582
      %v2374 = vunpack.c.l.b16 %v583
      %v2375 = vunpack.c.h.b16 %v583
      %v2376 = vunpack.c.l.b16 %v584
      %v2377 = vunpack.c.h.b16 %v584
      %v2378 = vunpack.c.l.b16 %v585
      %v2379 = vunpack.c.h.b16 %v585
      %v2380 = vunpack.c.l.b16 %v586
      %v2381 = vunpack.c.h.b16 %v586
      %v2382 = vunpack.c.l.b16 %v587
      %v2383 = vunpack.c.h.b16 %v587
      %v2384 = vunpack.c.l.b16 %v588
      %v2385 = vunpack.c.h.b16 %v588
      %v2386 = vunpack.c.l.b16 %v589
      %v2387 = vunpack.c.h.b16 %v589
      %v2388 = vunpack.c.l.b16 %v590
      %v2389 = vunpack.c.h.b16 %v590
      %v2390 = vunpack.c.l.b16 %v591
      %v2391 = vunpack.c.h.b16 %v591
      %v2392 = vunpack.c.l.b16 %v592
      %v2393 = vunpack.c.h.b16 %v592
      %v2394 = vunpack.c.l.b16 %v593
      %v2395 = vunpack.c.h.b16 %v593
      %v2396 = vunpack.c.l.b16 %v594
      %v2397 = vunpack.c.h.b16 %v594
      %v2398 = vunpack.c.l.b16 %v595
      %v2399 = vunpack.c.h.b16 %v595
      %v2400 = vunpack.c.l.b16 %v596
      %v2401 = vunpack.c.h.b16 %v596
      %v2402 = vunpack.c.l.b16 %v597
      %v2403 = vunpack.c.h.b16 %v597
      %v2404 = vunpack.c.l.b16 %v598
      %v2405 = vunpack.c.h.b16 %v598
      %v2406 = vunpack.c.l.b16 %v599
      %v2407 = vunpack.c.h.b16 %v599
      %v2408 = vunpack.c.l.b16 %v600
      %v2409 = vunpack.c.h.b16 %v600
      %v2410 = vunpack.c.l.b16 %v601
      %v2411 = vunpack.c.h.b16 %v601
      %v2412 = vunpack.c.l.b16 %v602
      %v2413 = vunpack.c.h.b16 %v602
      %v2414 = vunpack.c.l.b16 %v603
      %v2415 = vunpack.c.h.b16 %v603
      %v2416 = vunpack.c.l.b16 %v604
      %v2417 = vunpack.c.h.b16 %v604
      %v2418 = vunpack.c.l.b16 %v605
      %v2419 = vunpack.c.h.b16 %v605
      %v2420 = vunpack.c.l.b16 %v606
      %v2421 = vunpack.c.h.b16 %v606
      %v2422 = vunpack.c.l.b16 %v607
      %v2423 = vunpack.c.h.b16 %v607
      %v2424 = vunpack.c.l.b16 %v608
      %v2425 = vunpack.c.h.b16 %v608
      %v2426 = vunpack.c.l.b16 %v609
      %v2427 = vunpack.c.h.b16 %v609
      %v2428 = vunpack.c.l.b16 %v610
      %v2429 = vunpack.c.h.b16 %v610
      %v2430 = vunpack.c.l.b16 %v611
      %v2431 = vunpack.c.h.b16 %v611
      %v2432 = vunpack.c.l.b16 %v612
      %v2433 = vunpack.c.h.b16 %v612
      %v2434 = vunpack.c.l.b16 %v613
      %v2435 = vunpack.c.h.b16 %v613
      %v2436 = vunpack.c.l.b16 %v614
      %v2437 = vunpack.c.h.b16 %v614
      %v2438 = vunpack.c.l.b16 %v615
      %v2439 = vunpack.c.h.b16 %v615
      %v2440 = vunpack.c.l.b16 %v616
      %v2441 = vunpack.c.h.b16 %v616
      %v2442 = vunpack.c.l.b16 %v617
      %v2443 = vunpack.c.h.b16 %v617
      %v2444 = vunpack.c.l.b16 %v618
      %v2445 = vunpack.c.h.b16 %v618
      %v2446 = vunpack.c.l.b16 %v619
      %v2447 = vunpack.c.h.b16 %v619
      %v2448 = vunpack.c.l.b16 %v620
      %v2449 = vunpack.c.h.b16 %v620
      %v2450 = vunpack.c.l.b16 %v621
      %v2451 = vunpack.c.h.b16 %v621
      %v2452 = vunpack.c.l.b16 %v622
      %v2453 = vunpack.c.h.b16 %v622
      %v2454 = vunpack.c.l.b16 %v623
      %v2455 = vunpack.c.h.b16 %v623
      %v2456 = vunpack.c.l.b16 %v624
      %v2457 = vunpack.c.h.b16 %v624
      %v2458 = vunpack.c.l.b16 %v625
      %v2459 = vunpack.c.h.b16 %v625
      %v2460 = vunpack.c.l.b16 %v626
      %v2461 = vunpack.c.h.b16 %v626
      %v2462 = vunpack.c.l.b16 %v627
      %v2463 = vunpack.c.h.b16 %v627
      %v2464 = vunpack.c.l.b16 %v628
      %v2465 = vunpack.c.h.b16 %v628
      %v2466 = vunpack.c.l.b16 %v629
      %v2467 = vunpack.c.h.b16 %v629
      %v2468 = vunpack.c.l.b16 %v630
      %v2469 = vunpack.c.h.b16 %v630
      %v2470 = vunpack.c.l.b16 %v631
      %v2471 = vunpack.c.h.b16 %v631
      %v2472 = vunpack.c.l.b16 %v632
      %v2473 = vunpack.c.h.b16 %v632
      %v2474 = vunpack.c.l.b16 %v633
      %v2475 = vunpack.c.h.b16 %v633
      %v2476 = vunpack.c.l.b16 %v634
      %v2477 = vunpack.c.h.b16 %v634
      %v2478 = vunpack.c.l.b16 %v635
      %v2479 = vunpack.c.h.b16 %v635
      %v2480 = vunpack.c.l.b16 %v636
      %v2481 = vunpack.c.h.b16 %v636
      %v2482 = vunpack.c.l.b16 %v637
      %v2483 = vunpack.c.h.b16 %v637
      %v2484 = vunpack.c.l.b16 %v638
      %v2485 = vunpack.c.h.b16 %v638
      %v2486 = vunpack.c.l.b16 %v639
      %v2487 = vunpack.c.h.b16 %v639
      %v2488 = vunpack.c.l.b16 %v640
      %v2489 = vunpack.c.h.b16 %v640
      %v2490 = vunpack.c.l.b16 %v641
      %v2491 = vunpack.c.h.b16 %v641
      %v2492 = vunpack.c.l.b16 %v642
      %v2493 = vunpack.c.h.b16 %v642
      %v2494 = vunpack.c.l.b16 %v643
      %v2495 = vunpack.c.h.b16 %v643
      %v2496 = vunpack.c.l.b16 %v644
      %v2497 = vunpack.c.h.b16 %v644
      %v2498 = vunpack.c.l.b16 %v645
      %v2499 = vunpack.c.h.b16 %v645
      %v2500 = vunpack.c.l.b16 %v646
      %v2501 = vunpack.c.h.b16 %v646
      %v2502 = vunpack.c.l.b16 %v647
      %v2503 = vunpack.c.h.b16 %v647
      %v2504 = vunpack.c.l.b16 %v648
      %v2505 = vunpack.c.h.b16 %v648
      %v2506 = vunpack.c.l.b16 %v649
      %v2507 = vunpack.c.h.b16 %v649
      %v2508 = vunpack.c.l.b16 %v650
      %v2509 = vunpack.c.h.b16 %v650
      %v2510 = vunpack.c.l.b16 %v651
      %v2511 = vunpack.c.h.b16 %v651
      %v2512 = vunpack.c.l.b16 %v652
      %v2513 = vunpack.c.h.b16 %v652
      %v2514 = vunpack.c.l.b16 %v653
      %v2515 = vunpack.c.h.b16 %v653
      %v2516 = vunpack.c.l.b16 %v654
      %v2517 = vunpack.c.h.b16 %v654
      %v2518 = vunpack.c.l.b16 %v655
      %v2519 = vunpack.c.h.b16 %v655
      %v2520 = vunpack.c.l.b16 %v656
      %v2521 = vunpack.c.h.b16 %v656
      %v2522 = vunpack.c.l.b16 %v657
      %v2523 = vunpack.c.h.b16 %v657
      %v2524 = vunpack.c.l.b16 %v658
      %v2525 = vunpack.c.h.b16 %v658
      %v2526 = vunpack.c.l.b16 %v659
      %v2527 = vunpack.c.h.b16 %v659
      %v2528 = vunpack.c.l.b16 %v660
      %v2529 = vunpack.c.h.b16 %v660
      %v2530 = vunpack.c.l.b16 %v661
      %v2531 = vunpack.c.h.b16 %v661
      %v2532 = vunpack.c.l.b16 %v662
      %v2533 = vunpack.c.h.b16 %v662
      %v2534 = vunpack.c.l.b16 %v663
      %v2535 = vunpack.c.h.b16 %v663
      %v2536 = vunpack.c.l.b16 %v664
      %v2537 = vunpack.c.h.b16 %v664
      %v2538 = vunpack.c.l.b16 %v665
      %v2539 = vunpack.c.h.b16 %v665
      %v2540 = vunpack.c.l.b16 %v666
      %v2541 = vunpack.c.h.b16 %v666
      %v2542 = vunpack.c.l.b16 %v667
      %v2543 = vunpack.c.h.b16 %v667
      %v2544 = vunpack.c.l.b16 %v668
      %v2545 = vunpack.c.h.b16 %v668
      %v2546 = vunpack.c.l.b16 %v669
      %v2547 = vunpack.c.h.b16 %v669
      %v2548 = vunpack.c.l.b16 %v670
      %v2549 = vunpack.c.h.b16 %v670
      %v2550 = vunpack.c.l.b16 %v671
      %v2551 = vunpack.c.h.b16 %v671
      %v2552 = vunpack.c.l.b16 %v672
      %v2553 = vunpack.c.h.b16 %v672
      %v2554 = vunpack.c.l.b16 %v673
      %v2555 = vunpack.c.h.b16 %v673
      %v2556 = vunpack.c.l.b16 %v674
      %v2557 = vunpack.c.h.b16 %v674
      %v2558 = vunpack.c.l.b16 %v675
      %v2559 = vunpack.c.h.b16 %v675
      %v2560 = vunpack.c.l.b16 %v676
      %v2561 = vunpack.c.h.b16 %v676
      %v2562 = vunpack.c.l.b16 %v677
      %v2563 = vunpack.c.h.b16 %v677
      %v2564 = vunpack.c.l.b16 %v678
      %v2565 = vunpack.c.h.b16 %v678
      %v2566 = vunpack.c.l.b16 %v679
      %v2567 = vunpack.c.h.b16 %v679
      %v2568 = vunpack.c.l.b16 %v680
      %v2569 = vunpack.c.h.b16 %v680
      %v2570 = vunpack.c.l.b16 %v681
      %v2571 = vunpack.c.h.b16 %v681
      %v2572 = vunpack.c.l.b16 %v682
      %v2573 = vunpack.c.h.b16 %v682
      %v2574 = vunpack.c.l.b16 %v683
      %v2575 = vunpack.c.h.b16 %v683
      %v2576 = vunpack.c.l.b16 %v684
      %v2577 = vunpack.c.h.b16 %v684
      %v2578 = vunpack.c.l.b16 %v685
      %v2579 = vunpack.c.h.b16 %v685
      %v2580 = vunpack.c.l.b16 %v686
      %v2581 = vunpack.c.h.b16 %v686
      %v2582 = vunpack.c.l.b16 %v687
      %v2583 = vunpack.c.h.b16 %v687
      %v2584 = vunpack.c.l.b16 %v688
      %v2585 = vunpack.c.h.b16 %v688
      %v2586 = vunpack.c.l.b16 %v689
      %v2587 = vunpack.c.h.b16 %v689
      %v2588 = vunpack.c.l.b16 %v690
      %v2589 = vunpack.c.h.b16 %v690
      %v2590 = vunpack.c.l.b16 %v691
      %v2591 = vunpack.c.h.b16 %v691
      %v2592 = vunpack.c.l.b16 %v692
      %v2593 = vunpack.c.h.b16 %v692
      %v2594 = vunpack.c.l.b16 %v693
      %v2595 = vunpack.c.h.b16 %v693
      %v2596 = vunpack.c.l.b16 %v694
      %v2597 = vunpack.c.h.b16 %v694
      %v2598 = vunpack.c.l.b16 %v695
      %v2599 = vunpack.c.h.b16 %v695
      %v2600 = vunpack.c.l.b16 %v696
      %v2601 = vunpack.c.h.b16 %v696
      %v2602 = vunpack.c.l.b16 %v697
      %v2603 = vunpack.c.h.b16 %v697
      %v2604 = vunpack.c.l.b16 %v698
      %v2605 = vunpack.c.h.b16 %v698
      %v2606 = vunpack.c.l.b16 %v699
      %v2607 = vunpack.c.h.b16 %v699
      %v2608 = vunpack.c.l.b16 %v700
      %v2609 = vunpack.c.h.b16 %v700
      %v2610 = vunpack.c.l.b16 %v701
      %v2611 = vunpack.c.h.b16 %v701
      %v2612 = vunpack.c.l.b16 %v702
      %v2613 = vunpack.c.h.b16 %v702
      %v2614 = vunpack.c.l.b16 %v703
      %v2615 = vunpack.c.h.b16 %v703
      %v2616 = vunpack.c.l.b16 %v704
      %v2617 = vunpack.c.h.b16 %v704
      %v2618 = vunpack.c.l.b16 %v705
      %v2619 = vunpack.c.h.b16 %v705
      %v2620 = vunpack.c.l.b16 %v706
      %v2621 = vunpack.c.h.b16 %v706
      %v2622 = vunpack.c.l.b16 %v707
      %v2623 = vunpack.c.h.b16 %v707
      %v2624 = vunpack.c.l.b16 %v708
      %v2625 = vunpack.c.h.b16 %v708
      %v2626 = vunpack.c.l.b16 %v709
      %v2627 = vunpack.c.h.b16 %v709
      %v2628 = vunpack.c.l.b16 %v710
      %v2629 = vunpack.c.h.b16 %v710
      %v2630 = vunpack.c.l.b16 %v711
      %v2631 = vunpack.c.h.b16 %v711
      %v2632 = vunpack.c.l.b16 %v712
      %v2633 = vunpack.c.h.b16 %v712
      %v2634 = vunpack.c.l.b16 %v713
      %v2635 = vunpack.c.h.b16 %v713
      %v2636 = vunpack.c.l.b16 %v714
      %v2637 = vunpack.c.h.b16 %v714
      %v2638 = vunpack.c.l.b16 %v715
      %v2639 = vunpack.c.h.b16 %v715
      %v2640 = vunpack.c.l.b16 %v716
      %v2641 = vunpack.c.h.b16 %v716
      %v2642 = vunpack.c.l.b16 %v717
      %v2643 = vunpack.c.h.b16 %v717
      %v2644 = vunpack.c.l.b16 %v718
      %v2645 = vunpack.c.h.b16 %v718
      %v2646 = vunpack.c.l.b16 %v719
      %v2647 = vunpack.c.h.b16 %v719
      %v2648 = vunpack.c.l.b16 %v720
      %v2649 = vunpack.c.h.b16 %v720
      %v2650 = vunpack.c.l.b16 %v721
      %v2651 = vunpack.c.h.b16 %v721
      %v2652 = vunpack.c.l.b16 %v722
      %v2653 = vunpack.c.h.b16 %v722
      %v2654 = vunpack.c.l.b16 %v723
      %v2655 = vunpack.c.h.b16 %v723
      %v2656 = vunpack.c.l.b16 %v724
      %v2657 = vunpack.c.h.b16 %v724
      %v2658 = vunpack.c.l.b16 %v725
      %v2659 = vunpack.c.h.b16 %v725
      %v2660 = vunpack.c.l.b16 %v726
      %v2661 = vunpack.c.h.b16 %v726
      %v2662 = vunpack.c.l.b16 %v727
      %v2663 = vunpack.c.h.b16 %v727
      %v2664 = vunpack.c.l.b16 %v728
      %v2665 = vunpack.c.h.b16 %v728
      %v2666 = vunpack.c.l.b16 %v729
      %v2667 = vunpack.c.h.b16 %v729
      %v2668 = vunpack.c.l.b16 %v730
      %v2669 = vunpack.c.h.b16 %v730
      %v2670 = vunpack.c.l.b16 %v731
      %v2671 = vunpack.c.h.b16 %v731
      %v2672 = vunpack.c.l.b16 %v732
      %v2673 = vunpack.c.h.b16 %v732
      %v2674 = vunpack.c.l.b16 %v733
      %v2675 = vunpack.c.h.b16 %v733
      %v2676 = vunpack.c.l.b16 %v734
      %v2677 = vunpack.c.h.b16 %v734
      %v2678 = vunpack.c.l.b16 %v735
      %v2679 = vunpack.c.h.b16 %v735
      %v2680 = vunpack.c.l.b16 %v736
      %v2681 = vunpack.c.h.b16 %v736
      %v2682 = vunpack.c.l.b16 %v737
      %v2683 = vunpack.c.h.b16 %v737
      %v2684 = vunpack.c.l.b16 %v738
      %v2685 = vunpack.c.h.b16 %v738
      %v2686 = vunpack.c.l.b16 %v739
      %v2687 = vunpack.c.h.b16 %v739
      %v2688 = vpack.c.b16 %v2210, %v2208
      %v2689 = vpack.c.b16 %v2211, %v2209
      %v2690 = vpack.c.b16 %v2214, %v2212
      %v2691 = vpack.c.b16 %v2215, %v2213
      %v2692 = vpack.c.b16 %v2218, %v2216
      %v2693 = vpack.c.b16 %v2219, %v2217
      %v2694 = vpack.c.b16 %v2222, %v2220
      %v2695 = vpack.c.b16 %v2223, %v2221
      %v2696 = vpack.c.b16 %v2226, %v2224
      %v2697 = vpack.c.b16 %v2227, %v2225
      %v2698 = vpack.c.b16 %v2230, %v2228
      %v2699 = vpack.c.b16 %v2231, %v2229
      %v2700 = vpack.c.b16 %v2234, %v2232
      %v2701 = vpack.c.b16 %v2235, %v2233
      %v2702 = vpack.c.b16 %v2238, %v2236
      %v2703 = vpack.c.b16 %v2239, %v2237
      %v2704 = vpack.c.b16 %v2242, %v2240
      %v2705 = vpack.c.b16 %v2243, %v2241
      %v2706 = vpack.c.b16 %v2246, %v2244
      %v2707 = vpack.c.b16 %v2247, %v2245
      %v2708 = vpack.c.b16 %v2250, %v2248
      %v2709 = vpack.c.b16 %v2251, %v2249
      %v2710 = vpack.c.b16 %v2254, %v2252
      %v2711 = vpack.c.b16 %v2255, %v2253
      %v2712 = vpack.c.b16 %v2258, %v2256
      %v2713 = vpack.c.b16 %v2259, %v2257
      %v2714 = vpack.c.b16 %v2262, %v2260
      %v2715 = vpack.c.b16 %v2263, %v2261
      %v2716 = vpack.c.b16 %v2266, %v2264
      %v2717 = vpack.c.b16 %v2267, %v2265
      %v2718 = vpack.c.b16 %v2270, %v2268
      %v2719 = vpack.c.b16 %v2271, %v2269
      %v2720 = vpack.c.b16 %v2274, %v2272
      %v2721 = vpack.c.b16 %v2275, %v2273
      %v2722 = vpack.c.b16 %v2278, %v2276
      %v2723 = vpack.c.b16 %v2279, %v2277
      %v2724 = vpack.c.b16 %v2282, %v2280
      %v2725 = vpack.c.b16 %v2283, %v2281
      %v2726 = vpack.c.b16 %v2286, %v2284
      %v2727 = vpack.c.b16 %v2287, %v2285
      %v2728 = vpack.c.b16 %v2290, %v2288
      %v2729 = vpack.c.b16 %v2291, %v2289
      %v2730 = vpack.c.b16 %v2294, %v2292
      %v2731 = vpack.c.b16 %v2295, %v2293
      %v2732 = vpack.c.b16 %v2298, %v2296
      %v2733 = vpack.c.b16 %v2299, %v2297
      %v2734 = vpack.c.b16 %v2302, %v2300
      %v2735 = vpack.c.b16 %v2303, %v2301
      %v2736 = vpack.c.b16 %v2306, %v2304
      %v2737 = vpack.c.b16 %v2307, %v2305
      %v2738 = vpack.c.b16 %v2310, %v2308
      %v2739 = vpack.c.b16 %v2311, %v2309
      %v2740 = vpack.c.b16 %v2314, %v2312
      %v2741 = vpack.c.b16 %v2315, %v2313
      %v2742 = vpack.c.b16 %v2318, %v2316
      %v2743 = vpack.c.b16 %v2319, %v2317
      %v2744 = vpack.c.b16 %v2322, %v2320
      %v2745 = vpack.c.b16 %v2323, %v2321
      %v2746 = vpack.c.b16 %v2326, %v2324
      %v2747 = vpack.c.b16 %v2327, %v2325
      %v2748 = vpack.c.b16 %v2330, %v2328
      %v2749 = vpack.c.b16 %v2331, %v2329
      %v2750 = vpack.c.b16 %v2334, %v2332
      %v2751 = vpack.c.b16 %v2335, %v2333
      %v2752 = vpack.c.b16 %v2338, %v2336
      %v2753 = vpack.c.b16 %v2339, %v2337
      %v2754 = vpack.c.b16 %v2342, %v2340
      %v2755 = vpack.c.b16 %v2343, %v2341
      %v2756 = vpack.c.b16 %v2346, %v2344
      %v2757 = vpack.c.b16 %v2347, %v2345
      %v2758 = vpack.c.b16 %v2350, %v2348
      %v2759 = vpack.c.b16 %v2351, %v2349
      %v2760 = vpack.c.b16 %v2354, %v2352
      %v2761 = vpack.c.b16 %v2355, %v2353
      %v2762 = vpack.c.b16 %v2358, %v2356
      %v2763 = vpack.c.b16 %v2359, %v2357
      %v2764 = vpack.c.b16 %v2362, %v2360
      %v2765 = vpack.c.b16 %v2363, %v2361
      %v2766 = vpack.c.b16 %v2366, %v2364
      %v2767 = vpack.c.b16 %v2367, %v2365
      %v2768 = vpack.c.b16 %v2370, %v2368
      %v2769 = vpack.c.b16 %v2371, %v2369
      %v2770 = vpack.c.b16 %v2374, %v2372
      %v2771 = vpack.c.b16 %v2375, %v2373
      %v2772 = vpack.c.b16 %v2378, %v2376
      %v2773 = vpack.c.b16 %v2379, %v2377
      %v2774 = vpack.c.b16 %v2382, %v2380
      %v2775 = vpack.c.b16 %v2383, %v2381
      %v2776 = vpack.c.b16 %v2386, %v2384
      %v2777 = vpack.c.b16 %v2387, %v2385
      %v2778 = vpack.c.b16 %v2390, %v2388
      %v2779 = vpack.c.b16 %v2391, %v2389
      %v2780 = vpack.c.b16 %v2394, %v2392
      %v2781 = vpack.c.b16 %v2395, %v2393
      %v2782 = vpack.c.b16 %v2398, %v2396
      %v2783 = vpack.c.b16 %v2399, %v2397
      %v2784 = vpack.c.b16 %v2402, %v2400
      %v2785 = vpack.c.b16 %v2403, %v2401
      %v2786 = vpack.c.b16 %v2406, %v2404
      %v2787 = vpack.c.b16 %v2407, %v2405
      %v2788 = vpack.c.b16 %v2410, %v2408
      %v2789 = vpack.c.b16 %v2411, %v2409
      %v2790 = vpack.c.b16 %v2414, %v2412
      %v2791 = vpack.c.b16 %v2415, %v2413
      %v2792 = vpack.c.b16 %v2418, %v2416
      %v2793 = vpack.c.b16 %v2419, %v2417
      %v2794 = vpack.c.b16 %v2422, %v2420
      %v2795 = vpack.c.b16 %v2423, %v2421
      %v2796 = vpack.c.b16 %v2426, %v2424
      %v2797 = vpack.c.b16 %v2427, %v2425
      %v2798 = vpack.c.b16 %v2430, %v2428
      %v2799 = vpack.c.b16 %v2431, %v2429
      %v2800 = vpack.c.b16 %v2434, %v2432
      %v2801 = vpack.c.b16 %v2435, %v2433
      %v2802 = vpack.c.b16 %v2438, %v2436
      %v2803 = vpack.c.b16 %v2439, %v2437
      %v2804 = vpack.c.b16 %v2442, %v2440
      %v2805 = vpack.c.b16 %v2443, %v2441
      %v2806 = vpack.c.b16 %v2446, %v2444
      %v2807 = vpack.c.b16 %v2447, %v2445
      %v2808 = vpack.c.b16 %v2450, %v2448
      %v2809 = vpack.c.b16 %v2451, %v2449
      %v2810 = vpack.c.b16 %v2454, %v2452
      %v2811 = vpack.c.b16 %v2455, %v2453
      %v2812 = vpack.c.b16 %v2458, %v2456
      %v2813 = vpack.c.b16 %v2459, %v2457
      %v2814 = vpack.c.b16 %v2462, %v2460
      %v2815 = vpack.c.b16 %v2463, %v2461
      %v2816 = vpack.c.b16 %v2466, %v2464
      %v2817 = vpack.c.b16 %v2467, %v2465
      %v2818 = vpack.c.b16 %v2470, %v2468
      %v2819 = vpack.c.b16 %v2471, %v2469
      %v2820 = vpack.c.b16 %v2474, %v2472
      %v2821 = vpack.c.b16 %v2475, %v2473
      %v2822 = vpack.c.b16 %v2478, %v2476
      %v2823 = vpack.c.b16 %v2479, %v2477
      %v2824 = vpack.c.b16 %v2482, %v2480
      %v2825 = vpack.c.b16 %v2483, %v2481
      %v2826 = vpack.c.b16 %v2486, %v2484
      %v2827 = vpack.c.b16 %v2487, %v2485
      %v2828 = vpack.c.b16 %v2490, %v2488
      %v2829 = vpack.c.b16 %v2491, %v2489
      %v2830 = vpack.c.b16 %v2494, %v2492
      %v2831 = vpack.c.b16 %v2495, %v2493
      %v2832 = vpack.c.b16 %v2498, %v2496
      %v2833 = vpack.c.b16 %v2499, %v2497
      %v2834 = vpack.c.b16 %v2502, %v2500
      %v2835 = vpack.c.b16 %v2503, %v2501
      %v2836 = vpack.c.b16 %v2506, %v2504
      %v2837 = vpack.c.b16 %v2507, %v2505
      %v2838 = vpack.c.b16 %v2510, %v2508
      %v2839 = vpack.c.b16 %v2511, %v2509
      %v2840 = vpack.c.b16 %v2514, %v2512
      %v2841 = vpack.c.b16 %v2515, %v2513
      %v2842 = vpack.c.b16 %v2518, %v2516
      %v2843 = vpack.c.b16 %v2519, %v2517
      %v2844 = vpack.c.b16 %v2522, %v2520
      %v2845 = vpack.c.b16 %v2523, %v2521
      %v2846 = vpack.c.b16 %v2526, %v2524
      %v2847 = vpack.c.b16 %v2527, %v2525
      %v2848 = vpack.c.b16 %v2530, %v2528
      %v2849 = vpack.c.b16 %v2531, %v2529
      %v2850 = vpack.c.b16 %v2534, %v2532
      %v2851 = vpack.c.b16 %v2535, %v2533
      %v2852 = vpack.c.b16 %v2538, %v2536
      %v2853 = vpack.c.b16 %v2539, %v2537
      %v2854 = vpack.c.b16 %v2542, %v2540
      %v2855 = vpack.c.b16 %v2543, %v2541
      %v2856 = vpack.c.b16 %v2546, %v2544
      %v2857 = vpack.c.b16 %v2547, %v2545
      %v2858 = vpack.c.b16 %v2550, %v2548
      %v2859 = vpack.c.b16 %v2551, %v2549
      %v2860 = vpack.c.b16 %v2554, %v2552
      %v2861 = vpack.c.b16 %v2555, %v2553
      %v2862 = vpack.c.b16 %v2558, %v2556
      %v2863 = vpack.c.b16 %v2559, %v2557
      %v2864 = vpack.c.b16 %v2562, %v2560
      %v2865 = vpack.c.b16 %v2563, %v2561
      %v2866 = vpack.c.b16 %v2566, %v2564
      %v2867 = vpack.c.b16 %v2567, %v2565
      %v2868 = vpack.c.b16 %v2570, %v2568
      %v2869 = vpack.c.b16 %v2571, %v2569
      %v2870 = vpack.c.b16 %v2574, %v2572
      %v2871 = vpack.c.b16 %v2575, %v2573
      %v2872 = vpack.c.b16 %v2578, %v2576
      %v2873 = vpack.c.b16 %v2579, %v2577
      %v2874 = vpack.c.b16 %v2582, %v2580
      %v2875 = vpack.c.b16 %v2583, %v2581
      %v2876 = vpack.c.b16 %v2586, %v2584
      %v2877 = vpack.c.b16 %v2587, %v2585
      %v2878 = vpack.c.b16 %v2590, %v2588
      %v2879 = vpack.c.b16 %v2591, %v2589
      %v2880 = vpack.c.b16 %v2594, %v2592
      %v2881 = vpack.c.b16 %v2595, %v2593
      %v2882 = vpack.c.b16 %v2598, %v2596
      %v2883 = vpack.c.b16 %v2599, %v2597
      %v2884 = vpack.c.b16 %v2602, %v2600
      %v2885 = vpack.c.b16 %v2603, %v2601
      %v2886 = vpack.c.b16 %v2606, %v2604
      %v2887 = vpack.c.b16 %v2607, %v2605
      %v2888 = vpack.c.b16 %v2610, %v2608
      %v2889 = vpack.c.b16 %v2611, %v2609
      %v2890 = vpack.c.b16 %v2614, %v2612
      %v2891 = vpack.c.b16 %v2615, %v2613
      %v2892 = vpack.c.b16 %v2618, %v2616
      %v2893 = vpack.c.b16 %v2619, %v2617
      %v2894 = vpack.c.b16 %v2622, %v2620
      %v2895 = vpack.c.b16 %v2623, %v2621
      %v2896 = vpack.c.b16 %v2626, %v2624
      %v2897 = vpack.c.b16 %v2627, %v2625
      %v2898 = vpack.c.b16 %v2630, %v2628
      %v2899 = vpack.c.b16 %v2631, %v2629
      %v2900 = vpack.c.b16 %v2634, %v2632
      %v2901 = vpack.c.b16 %v2635, %v2633
      %v2902 = vpack.c.b16 %v2638, %v2636
      %v2903 = vpack.c.b16 %v2639, %v2637
      %v2904 = vpack.c.b16 %v2642, %v2640
      %v2905 = vpack.c.b16 %v2643, %v2641
      %v2906 = vpack.c.b16 %v2646, %v2644
      %v2907 = vpack.c.b16 %v2647, %v2645
      %v2908 = vpack.c.b16 %v2650, %v2648
      %v2909 = vpack.c.b16 %v2651, %v2649
      %v2910 = vpack.c.b16 %v2654, %v2652
      %v2911 = vpack.c.b16 %v2655, %v2653
      %v2912 = vpack.c.b16 %v2658, %v2656
      %v2913 = vpack.c.b16 %v2659, %v2657
      %v2914 = vpack.c.b16 %v2662, %v2660
      %v2915 = vpack.c.b16 %v2663, %v2661
      %v2916 = vpack.c.b16 %v2666, %v2664
      %v2917 = vpack.c.b16 %v2667, %v2665
      %v2918 = vpack.c.b16 %v2670, %v2668
      %v2919 = vpack.c.b16 %v2671, %v2669
      %v2920 = vpack.c.b16 %v2674, %v2672
      %v2921 = vpack.c.b16 %v2675, %v2673
      %v2922 = vpack.c.b16 %v2678, %v2676
      %v2923 = vpack.c.b16 %v2679, %v2677
      %v2924 = vpack.c.b16 %v2682, %v2680
      %v2925 = vpack.c.b16 %v2683, %v2681
      %v2926 = vpack.c.b16 %v2686, %v2684
      %v2927 = vpack.c.b16 %v2687, %v2685
      %3168 = vmatprep.subr.bf16.mxu0 %v2703
      %3169 = vmatpush1.bf16.msra.mxu0 %v2702
      %3170 = vmatprep.subr.bf16.mxu0 %v2701
      %3171 = vmatpush1.bf16.msra.mxu0 %v2700
      %3172 = vmatprep.subr.bf16.mxu0 %v2699
      %3173 = vmatpush1.bf16.msra.mxu0 %v2698
      %3174 = vmatprep.subr.bf16.mxu0 %v2697
      %3175 = vmatpush1.bf16.msra.mxu0 %v2696
      %3176 = vmatprep.subr.bf16.mxu0 %v2695
      %3177 = vmatpush1.bf16.msra.mxu0 %v2694
      %3178 = vmatprep.subr.bf16.mxu0 %v2693
      %3179 = vmatpush1.bf16.msra.mxu0 %v2692
      %3180 = vmatprep.subr.bf16.mxu0 %v2691
      %3181 = vmatpush1.bf16.msra.mxu0 %v2690
      %3182 = vmatprep.subr.bf16.mxu0 %v2689
      %3183 = vmatpush1.bf16.msra.mxu0 %v2688
      %3184 = vmatprep.subr.bf16.mxu0 %v2719
      %3185 = vmatpush2.bf16.msra.mxu0 %v2718
      %3186 = vmatprep.subr.bf16.mxu0 %v2717
      %3187 = vmatpush2.bf16.msra.mxu0 %v2716
      %3188 = vmatprep.subr.bf16.mxu0 %v2715
      %3189 = vmatpush2.bf16.msra.mxu0 %v2714
      %3190 = vmatprep.subr.bf16.mxu0 %v2713
      %3191 = vmatpush2.bf16.msra.mxu0 %v2712
      %3192 = vmatprep.subr.bf16.mxu0 %v2711
      %3193 = vmatpush2.bf16.msra.mxu0 %v2710
      %3194 = vmatprep.subr.bf16.mxu0 %v2709
      %3195 = vmatpush2.bf16.msra.mxu0 %v2708
      %3196 = vmatprep.subr.bf16.mxu0 %v2707
      %3197 = vmatpush2.bf16.msra.mxu0 %v2706
      %3198 = vmatprep.subr.bf16.mxu0 %v2705
      %3199 = vmatpush2.bf16.msra.mxu0 %v2704
      %3200 = vmatprep.mubr.bf16.mxu0 %v1489
      %3201 = vmatmul.mubr.bf16.gmra.mxu0 %v1488
      %v3202 = vpop.f32.mrf.mxu0
      %v3203 = vadd.f32 %v745, %v3202
      %v3204 = vpop.f32.mrf.mxu0
      %v3205 = vadd.f32 %v749, %v3204
      %v3206 = vpop.f32.mrf.mxu0
      %v3207 = vadd.f32 %v745, %v3206
      %v3208 = vpop.f32.mrf.mxu0
      %v3209 = vadd.f32 %v749, %v3208
      %3210 = vmatprep.mubr.bf16.mxu0 %v1504
      %3211 = vmatmul.mubr.bf16.gmra.mxu0 %v1503
      %v3212 = vpop.f32.mrf.mxu0
      %v3213 = vadd.f32 %v745, %v3212
      %v3214 = vpop.f32.mrf.mxu0
      %v3215 = vadd.f32 %v749, %v3214
      %v3216 = vpop.f32.mrf.mxu0
      %v3217 = vadd.f32 %v745, %v3216
      %v3218 = vpop.f32.mrf.mxu0
      %v3219 = vadd.f32 %v749, %v3218
      %3220 = vmatprep.mubr.bf16.mxu0 %v1519
      %3221 = vmatmul.mubr.bf16.gmra.mxu0 %v1518
      %v3222 = vpop.f32.mrf.mxu0
      %v3223 = vadd.f32 %v745, %v3222
      %v3224 = vpop.f32.mrf.mxu0
      %v3225 = vadd.f32 %v749, %v3224
      %v3226 = vpop.f32.mrf.mxu0
      %v3227 = vadd.f32 %v745, %v3226
      %v3228 = vpop.f32.mrf.mxu0
      %v3229 = vadd.f32 %v749, %v3228
      %3230 = vmatprep.mubr.bf16.mxu0 %v1534
      %3231 = vmatmul.mubr.bf16.gmra.mxu0 %v1533
      %v3232 = vpop.f32.mrf.mxu0
      %v3233 = vadd.f32 %v745, %v3232
      %v3234 = vpop.f32.mrf.mxu0
      %v3235 = vadd.f32 %v749, %v3234
      %v3236 = vpop.f32.mrf.mxu0
      %v3237 = vadd.f32 %v745, %v3236
      %v3238 = vpop.f32.mrf.mxu0
      %v3239 = vadd.f32 %v749, %v3238
      %3240 = vmatprep.mubr.bf16.mxu0 %v1549
      %3241 = vmatmul.mubr.bf16.gmra.mxu0 %v1548
      %v3242 = vpop.f32.mrf.mxu0
      %v3243 = vadd.f32 %v745, %v3242
      %v3244 = vpop.f32.mrf.mxu0
      %v3245 = vadd.f32 %v749, %v3244
      %v3246 = vpop.f32.mrf.mxu0
      %v3247 = vadd.f32 %v745, %v3246
      %v3248 = vpop.f32.mrf.mxu0
      %v3249 = vadd.f32 %v749, %v3248
      %3250 = vmatprep.mubr.bf16.mxu0 %v1564
      %3251 = vmatmul.mubr.bf16.gmra.mxu0 %v1563
      %v3252 = vpop.f32.mrf.mxu0
      %v3253 = vadd.f32 %v745, %v3252
      %v3254 = vpop.f32.mrf.mxu0
      %v3255 = vadd.f32 %v749, %v3254
      %v3256 = vpop.f32.mrf.mxu0
      %v3257 = vadd.f32 %v745, %v3256
      %v3258 = vpop.f32.mrf.mxu0
      %v3259 = vadd.f32 %v749, %v3258
      %3260 = vmatprep.mubr.bf16.mxu0 %v1579
      %3261 = vmatmul.mubr.bf16.gmra.mxu0 %v1578
      %v3262 = vpop.f32.mrf.mxu0
      %v3263 = vadd.f32 %v745, %v3262
      %v3264 = vpop.f32.mrf.mxu0
      %v3265 = vadd.f32 %v749, %v3264
      %v3266 = vpop.f32.mrf.mxu0
      %v3267 = vadd.f32 %v745, %v3266
      %v3268 = vpop.f32.mrf.mxu0
      %v3269 = vadd.f32 %v749, %v3268
      %3270 = vmatprep.mubr.bf16.mxu0 %v1594
      %3271 = vmatmul.mubr.bf16.gmra.mxu0 %v1593
      %v3272 = vpop.f32.mrf.mxu0
      %v3273 = vadd.f32 %v745, %v3272
      %v3274 = vpop.f32.mrf.mxu0
      %v3275 = vadd.f32 %v749, %v3274
      %v3276 = vpop.f32.mrf.mxu0
      %v3277 = vadd.f32 %v745, %v3276
      %v3278 = vpop.f32.mrf.mxu0
      %v3279 = vadd.f32 %v749, %v3278
      %3280 = vmatprep.mubr.bf16.mxu0 %v1609
      %3281 = vmatmul.mubr.bf16.gmra.mxu0 %v1608
      %v3282 = vpop.f32.mrf.mxu0
      %v3283 = vadd.f32 %v745, %v3282
      %v3284 = vpop.f32.mrf.mxu0
      %v3285 = vadd.f32 %v749, %v3284
      %v3286 = vpop.f32.mrf.mxu0
      %v3287 = vadd.f32 %v745, %v3286
      %v3288 = vpop.f32.mrf.mxu0
      %v3289 = vadd.f32 %v749, %v3288
      %3290 = vmatprep.mubr.bf16.mxu0 %v1624
      %3291 = vmatmul.mubr.bf16.gmra.mxu0 %v1623
      %v3292 = vpop.f32.mrf.mxu0
      %v3293 = vadd.f32 %v745, %v3292
      %v3294 = vpop.f32.mrf.mxu0
      %v3295 = vadd.f32 %v749, %v3294
      %v3296 = vpop.f32.mrf.mxu0
      %v3297 = vadd.f32 %v745, %v3296
      %v3298 = vpop.f32.mrf.mxu0
      %v3299 = vadd.f32 %v749, %v3298
      %3300 = vmatprep.mubr.bf16.mxu0 %v1639
      %3301 = vmatmul.mubr.bf16.gmra.mxu0 %v1638
      %v3302 = vpop.f32.mrf.mxu0
      %v3303 = vadd.f32 %v745, %v3302
      %v3304 = vpop.f32.mrf.mxu0
      %v3305 = vadd.f32 %v749, %v3304
      %v3306 = vpop.f32.mrf.mxu0
      %v3307 = vadd.f32 %v745, %v3306
      %v3308 = vpop.f32.mrf.mxu0
      %v3309 = vadd.f32 %v749, %v3308
      %3310 = vmatprep.mubr.bf16.mxu0 %v1654
      %3311 = vmatmul.mubr.bf16.gmra.mxu0 %v1653
      %v3312 = vpop.f32.mrf.mxu0
      %v3313 = vadd.f32 %v745, %v3312
      %v3314 = vpop.f32.mrf.mxu0
      %v3315 = vadd.f32 %v749, %v3314
      %v3316 = vpop.f32.mrf.mxu0
      %v3317 = vadd.f32 %v745, %v3316
      %v3318 = vpop.f32.mrf.mxu0
      %v3319 = vadd.f32 %v749, %v3318
      %3320 = vmatprep.mubr.bf16.mxu0 %v1669
      %3321 = vmatmul.mubr.bf16.gmra.mxu0 %v1668
      %v3322 = vpop.f32.mrf.mxu0
      %v3323 = vadd.f32 %v745, %v3322
      %v3324 = vpop.f32.mrf.mxu0
      %v3325 = vadd.f32 %v749, %v3324
      %v3326 = vpop.f32.mrf.mxu0
      %v3327 = vadd.f32 %v745, %v3326
      %v3328 = vpop.f32.mrf.mxu0
      %v3329 = vadd.f32 %v749, %v3328
      %3330 = vmatprep.mubr.bf16.mxu0 %v1684
      %3331 = vmatmul.mubr.bf16.gmra.mxu0 %v1683
      %v3332 = vpop.f32.mrf.mxu0
      %v3333 = vadd.f32 %v745, %v3332
      %v3334 = vpop.f32.mrf.mxu0
      %v3335 = vadd.f32 %v749, %v3334
      %v3336 = vpop.f32.mrf.mxu0
      %v3337 = vadd.f32 %v745, %v3336
      %v3338 = vpop.f32.mrf.mxu0
      %v3339 = vadd.f32 %v749, %v3338
      %3340 = vmatprep.mubr.bf16.mxu0 %v1699
      %3341 = vmatmul.mubr.bf16.gmra.mxu0 %v1698
      %v3342 = vpop.f32.mrf.mxu0
      %v3343 = vadd.f32 %v745, %v3342
      %v3344 = vpop.f32.mrf.mxu0
      %v3345 = vadd.f32 %v749, %v3344
      %v3346 = vpop.f32.mrf.mxu0
      %v3347 = vadd.f32 %v745, %v3346
      %v3348 = vpop.f32.mrf.mxu0
      %v3349 = vadd.f32 %v749, %v3348
      %3350 = vmatprep.mubr.bf16.mxu0 %v1714
      %3351 = vmatmul.mubr.bf16.gmra.mxu0 %v1713
      %v3352 = vpop.f32.mrf.mxu0
      %v3353 = vadd.f32 %v745, %v3352
      %v3354 = vpop.f32.mrf.mxu0
      %v3355 = vadd.f32 %v749, %v3354
      %v3356 = vpop.f32.mrf.mxu0
      %v3357 = vadd.f32 %v745, %v3356
      %v3358 = vpop.f32.mrf.mxu0
      %v3359 = vadd.f32 %v749, %v3358
      %3360 = vdwg.mxu0
      %3361 = vmatprep.subr.bf16.mxu0 %v2735
      %3362 = vmatpush1.bf16.msra.mxu0 %v2734
      %3363 = vmatprep.subr.bf16.mxu0 %v2733
      %3364 = vmatpush1.bf16.msra.mxu0 %v2732
      %3365 = vmatprep.subr.bf16.mxu0 %v2731
      %3366 = vmatpush1.bf16.msra.mxu0 %v2730
      %3367 = vmatprep.subr.bf16.mxu0 %v2729
      %3368 = vmatpush1.bf16.msra.mxu0 %v2728
      %3369 = vmatprep.subr.bf16.mxu0 %v2727
      %3370 = vmatpush1.bf16.msra.mxu0 %v2726
      %3371 = vmatprep.subr.bf16.mxu0 %v2725
      %3372 = vmatpush1.bf16.msra.mxu0 %v2724
      %3373 = vmatprep.subr.bf16.mxu0 %v2723
      %3374 = vmatpush1.bf16.msra.mxu0 %v2722
      %3375 = vmatprep.subr.bf16.mxu0 %v2721
      %3376 = vmatpush1.bf16.msra.mxu0 %v2720
      %3377 = vmatprep.subr.bf16.mxu0 %v2751
      %3378 = vmatpush2.bf16.msra.mxu0 %v2750
      %3379 = vmatprep.subr.bf16.mxu0 %v2749
      %3380 = vmatpush2.bf16.msra.mxu0 %v2748
      %3381 = vmatprep.subr.bf16.mxu0 %v2747
      %3382 = vmatpush2.bf16.msra.mxu0 %v2746
      %3383 = vmatprep.subr.bf16.mxu0 %v2745
      %3384 = vmatpush2.bf16.msra.mxu0 %v2744
      %3385 = vmatprep.subr.bf16.mxu0 %v2743
      %3386 = vmatpush2.bf16.msra.mxu0 %v2742
      %3387 = vmatprep.subr.bf16.mxu0 %v2741
      %3388 = vmatpush2.bf16.msra.mxu0 %v2740
      %3389 = vmatprep.subr.bf16.mxu0 %v2739
      %3390 = vmatpush2.bf16.msra.mxu0 %v2738
      %3391 = vmatprep.subr.bf16.mxu0 %v2737
      %3392 = vmatpush2.bf16.msra.mxu0 %v2736
      %3393 = vmatprep.mubr.bf16.mxu0 %v1491
      %3394 = vmatmul.mubr.bf16.gmra.mxu0 %v1490
      %v3395 = vpop.f32.mrf.mxu0
      %v3396 = vadd.f32 %v3203, %v3395
      %v3397 = vpop.f32.mrf.mxu0
      %v3398 = vadd.f32 %v3205, %v3397
      %v3399 = vpop.f32.mrf.mxu0
      %v3400 = vadd.f32 %v3207, %v3399
      %v3401 = vpop.f32.mrf.mxu0
      %v3402 = vadd.f32 %v3209, %v3401
      %3403 = vmatprep.mubr.bf16.mxu0 %v1506
      %3404 = vmatmul.mubr.bf16.gmra.mxu0 %v1505
      %v3405 = vpop.f32.mrf.mxu0
      %v3406 = vadd.f32 %v3213, %v3405
      %v3407 = vpop.f32.mrf.mxu0
      %v3408 = vadd.f32 %v3215, %v3407
      %v3409 = vpop.f32.mrf.mxu0
      %v3410 = vadd.f32 %v3217, %v3409
      %v3411 = vpop.f32.mrf.mxu0
      %v3412 = vadd.f32 %v3219, %v3411
      %3413 = vmatprep.mubr.bf16.mxu0 %v1521
      %3414 = vmatmul.mubr.bf16.gmra.mxu0 %v1520
      %v3415 = vpop.f32.mrf.mxu0
      %v3416 = vadd.f32 %v3223, %v3415
      %v3417 = vpop.f32.mrf.mxu0
      %v3418 = vadd.f32 %v3225, %v3417
      %v3419 = vpop.f32.mrf.mxu0
      %v3420 = vadd.f32 %v3227, %v3419
      %v3421 = vpop.f32.mrf.mxu0
      %v3422 = vadd.f32 %v3229, %v3421
      %3423 = vmatprep.mubr.bf16.mxu0 %v1536
      %3424 = vmatmul.mubr.bf16.gmra.mxu0 %v1535
      %v3425 = vpop.f32.mrf.mxu0
      %v3426 = vadd.f32 %v3233, %v3425
      %v3427 = vpop.f32.mrf.mxu0
      %v3428 = vadd.f32 %v3235, %v3427
      %v3429 = vpop.f32.mrf.mxu0
      %v3430 = vadd.f32 %v3237, %v3429
      %v3431 = vpop.f32.mrf.mxu0
      %v3432 = vadd.f32 %v3239, %v3431
      %3433 = vmatprep.mubr.bf16.mxu0 %v1551
      %3434 = vmatmul.mubr.bf16.gmra.mxu0 %v1550
      %v3435 = vpop.f32.mrf.mxu0
      %v3436 = vadd.f32 %v3243, %v3435
      %v3437 = vpop.f32.mrf.mxu0
      %v3438 = vadd.f32 %v3245, %v3437
      %v3439 = vpop.f32.mrf.mxu0
      %v3440 = vadd.f32 %v3247, %v3439
      %v3441 = vpop.f32.mrf.mxu0
      %v3442 = vadd.f32 %v3249, %v3441
      %3443 = vmatprep.mubr.bf16.mxu0 %v1566
      %3444 = vmatmul.mubr.bf16.gmra.mxu0 %v1565
      %v3445 = vpop.f32.mrf.mxu0
      %v3446 = vadd.f32 %v3253, %v3445
      %v3447 = vpop.f32.mrf.mxu0
      %v3448 = vadd.f32 %v3255, %v3447
      %v3449 = vpop.f32.mrf.mxu0
      %v3450 = vadd.f32 %v3257, %v3449
      %v3451 = vpop.f32.mrf.mxu0
      %v3452 = vadd.f32 %v3259, %v3451
      %3453 = vmatprep.mubr.bf16.mxu0 %v1581
      %3454 = vmatmul.mubr.bf16.gmra.mxu0 %v1580
      %v3455 = vpop.f32.mrf.mxu0
      %v3456 = vadd.f32 %v3263, %v3455
      %v3457 = vpop.f32.mrf.mxu0
      %v3458 = vadd.f32 %v3265, %v3457
      %v3459 = vpop.f32.mrf.mxu0
      %v3460 = vadd.f32 %v3267, %v3459
      %v3461 = vpop.f32.mrf.mxu0
      %v3462 = vadd.f32 %v3269, %v3461
      %3463 = vmatprep.mubr.bf16.mxu0 %v1596
      %3464 = vmatmul.mubr.bf16.gmra.mxu0 %v1595
      %v3465 = vpop.f32.mrf.mxu0
      %v3466 = vadd.f32 %v3273, %v3465
      %v3467 = vpop.f32.mrf.mxu0
      %v3468 = vadd.f32 %v3275, %v3467
      %v3469 = vpop.f32.mrf.mxu0
      %v3470 = vadd.f32 %v3277, %v3469
      %v3471 = vpop.f32.mrf.mxu0
      %v3472 = vadd.f32 %v3279, %v3471
      %3473 = vmatprep.mubr.bf16.mxu0 %v1611
      %3474 = vmatmul.mubr.bf16.gmra.mxu0 %v1610
      %v3475 = vpop.f32.mrf.mxu0
      %v3476 = vadd.f32 %v3283, %v3475
      %v3477 = vpop.f32.mrf.mxu0
      %v3478 = vadd.f32 %v3285, %v3477
      %v3479 = vpop.f32.mrf.mxu0
      %v3480 = vadd.f32 %v3287, %v3479
      %v3481 = vpop.f32.mrf.mxu0
      %v3482 = vadd.f32 %v3289, %v3481
      %3483 = vmatprep.mubr.bf16.mxu0 %v1626
      %3484 = vmatmul.mubr.bf16.gmra.mxu0 %v1625
      %v3485 = vpop.f32.mrf.mxu0
      %v3486 = vadd.f32 %v3293, %v3485
      %v3487 = vpop.f32.mrf.mxu0
      %v3488 = vadd.f32 %v3295, %v3487
      %v3489 = vpop.f32.mrf.mxu0
      %v3490 = vadd.f32 %v3297, %v3489
      %v3491 = vpop.f32.mrf.mxu0
      %v3492 = vadd.f32 %v3299, %v3491
      %3493 = vmatprep.mubr.bf16.mxu0 %v1641
      %3494 = vmatmul.mubr.bf16.gmra.mxu0 %v1640
      %v3495 = vpop.f32.mrf.mxu0
      %v3496 = vadd.f32 %v3303, %v3495
      %v3497 = vpop.f32.mrf.mxu0
      %v3498 = vadd.f32 %v3305, %v3497
      %v3499 = vpop.f32.mrf.mxu0
      %v3500 = vadd.f32 %v3307, %v3499
      %v3501 = vpop.f32.mrf.mxu0
      %v3502 = vadd.f32 %v3309, %v3501
      %3503 = vmatprep.mubr.bf16.mxu0 %v1656
      %3504 = vmatmul.mubr.bf16.gmra.mxu0 %v1655
      %v3505 = vpop.f32.mrf.mxu0
      %v3506 = vadd.f32 %v3313, %v3505
      %v3507 = vpop.f32.mrf.mxu0
      %v3508 = vadd.f32 %v3315, %v3507
      %v3509 = vpop.f32.mrf.mxu0
      %v3510 = vadd.f32 %v3317, %v3509
      %v3511 = vpop.f32.mrf.mxu0
      %v3512 = vadd.f32 %v3319, %v3511
      %3513 = vmatprep.mubr.bf16.mxu0 %v1671
      %3514 = vmatmul.mubr.bf16.gmra.mxu0 %v1670
      %v3515 = vpop.f32.mrf.mxu0
      %v3516 = vadd.f32 %v3323, %v3515
      %v3517 = vpop.f32.mrf.mxu0
      %v3518 = vadd.f32 %v3325, %v3517
      %v3519 = vpop.f32.mrf.mxu0
      %v3520 = vadd.f32 %v3327, %v3519
      %v3521 = vpop.f32.mrf.mxu0
      %v3522 = vadd.f32 %v3329, %v3521
      %3523 = vmatprep.mubr.bf16.mxu0 %v1686
      %3524 = vmatmul.mubr.bf16.gmra.mxu0 %v1685
      %v3525 = vpop.f32.mrf.mxu0
      %v3526 = vadd.f32 %v3333, %v3525
      %v3527 = vpop.f32.mrf.mxu0
      %v3528 = vadd.f32 %v3335, %v3527
      %v3529 = vpop.f32.mrf.mxu0
      %v3530 = vadd.f32 %v3337, %v3529
      %v3531 = vpop.f32.mrf.mxu0
      %v3532 = vadd.f32 %v3339, %v3531
      %3533 = vmatprep.mubr.bf16.mxu0 %v1701
      %3534 = vmatmul.mubr.bf16.gmra.mxu0 %v1700
      %v3535 = vpop.f32.mrf.mxu0
      %v3536 = vadd.f32 %v3343, %v3535
      %v3537 = vpop.f32.mrf.mxu0
      %v3538 = vadd.f32 %v3345, %v3537
      %v3539 = vpop.f32.mrf.mxu0
      %v3540 = vadd.f32 %v3347, %v3539
      %v3541 = vpop.f32.mrf.mxu0
      %v3542 = vadd.f32 %v3349, %v3541
      %3543 = vmatprep.mubr.bf16.mxu0 %v1716
      %3544 = vmatmul.mubr.bf16.gmra.mxu0 %v1715
      %v3545 = vpop.f32.mrf.mxu0
      %v3546 = vadd.f32 %v3353, %v3545
      %v3547 = vpop.f32.mrf.mxu0
      %v3548 = vadd.f32 %v3355, %v3547
      %v3549 = vpop.f32.mrf.mxu0
      %v3550 = vadd.f32 %v3357, %v3549
      %v3551 = vpop.f32.mrf.mxu0
      %v3552 = vadd.f32 %v3359, %v3551
      %3553 = vdwg.mxu0
      %3554 = vmatprep.subr.bf16.mxu0 %v2767
      %3555 = vmatpush1.bf16.msra.mxu0 %v2766
      %3556 = vmatprep.subr.bf16.mxu0 %v2765
      %3557 = vmatpush1.bf16.msra.mxu0 %v2764
      %3558 = vmatprep.subr.bf16.mxu0 %v2763
      %3559 = vmatpush1.bf16.msra.mxu0 %v2762
      %3560 = vmatprep.subr.bf16.mxu0 %v2761
      %3561 = vmatpush1.bf16.msra.mxu0 %v2760
      %3562 = vmatprep.subr.bf16.mxu0 %v2759
      %3563 = vmatpush1.bf16.msra.mxu0 %v2758
      %3564 = vmatprep.subr.bf16.mxu0 %v2757
      %3565 = vmatpush1.bf16.msra.mxu0 %v2756
      %3566 = vmatprep.subr.bf16.mxu0 %v2755
      %3567 = vmatpush1.bf16.msra.mxu0 %v2754
      %3568 = vmatprep.subr.bf16.mxu0 %v2753
      %3569 = vmatpush1.bf16.msra.mxu0 %v2752
      %3570 = vmatprep.subr.bf16.mxu0 %v2783
      %3571 = vmatpush2.bf16.msra.mxu0 %v2782
      %3572 = vmatprep.subr.bf16.mxu0 %v2781
      %3573 = vmatpush2.bf16.msra.mxu0 %v2780
      %3574 = vmatprep.subr.bf16.mxu0 %v2779
      %3575 = vmatpush2.bf16.msra.mxu0 %v2778
      %3576 = vmatprep.subr.bf16.mxu0 %v2777
      %3577 = vmatpush2.bf16.msra.mxu0 %v2776
      %3578 = vmatprep.subr.bf16.mxu0 %v2775
      %3579 = vmatpush2.bf16.msra.mxu0 %v2774
      %3580 = vmatprep.subr.bf16.mxu0 %v2773
      %3581 = vmatpush2.bf16.msra.mxu0 %v2772
      %3582 = vmatprep.subr.bf16.mxu0 %v2771
      %3583 = vmatpush2.bf16.msra.mxu0 %v2770
      %3584 = vmatprep.subr.bf16.mxu0 %v2769
      %3585 = vmatpush2.bf16.msra.mxu0 %v2768
      %3586 = vmatprep.mubr.bf16.mxu0 %v1493
      %3587 = vmatmul.mubr.bf16.gmra.mxu0 %v1492
      %v3588 = vpop.f32.mrf.mxu0
      %v3589 = vadd.f32 %v3396, %v3588
      %v3590 = vpop.f32.mrf.mxu0
      %v3591 = vadd.f32 %v3398, %v3590
      %v3592 = vpop.f32.mrf.mxu0
      %v3593 = vadd.f32 %v3400, %v3592
      %v3594 = vpop.f32.mrf.mxu0
      %v3595 = vadd.f32 %v3402, %v3594
      %3596 = vmatprep.mubr.bf16.mxu0 %v1508
      %3597 = vmatmul.mubr.bf16.gmra.mxu0 %v1507
      %v3598 = vpop.f32.mrf.mxu0
      %v3599 = vadd.f32 %v3406, %v3598
      %v3600 = vpop.f32.mrf.mxu0
      %v3601 = vadd.f32 %v3408, %v3600
      %v3602 = vpop.f32.mrf.mxu0
      %v3603 = vadd.f32 %v3410, %v3602
      %v3604 = vpop.f32.mrf.mxu0
      %v3605 = vadd.f32 %v3412, %v3604
      %3606 = vmatprep.mubr.bf16.mxu0 %v1523
      %3607 = vmatmul.mubr.bf16.gmra.mxu0 %v1522
      %v3608 = vpop.f32.mrf.mxu0
      %v3609 = vadd.f32 %v3416, %v3608
      %v3610 = vpop.f32.mrf.mxu0
      %v3611 = vadd.f32 %v3418, %v3610
      %v3612 = vpop.f32.mrf.mxu0
      %v3613 = vadd.f32 %v3420, %v3612
      %v3614 = vpop.f32.mrf.mxu0
      %v3615 = vadd.f32 %v3422, %v3614
      %3616 = vmatprep.mubr.bf16.mxu0 %v1538
      %3617 = vmatmul.mubr.bf16.gmra.mxu0 %v1537
      %v3618 = vpop.f32.mrf.mxu0
      %v3619 = vadd.f32 %v3426, %v3618
      %v3620 = vpop.f32.mrf.mxu0
      %v3621 = vadd.f32 %v3428, %v3620
      %v3622 = vpop.f32.mrf.mxu0
      %v3623 = vadd.f32 %v3430, %v3622
      %v3624 = vpop.f32.mrf.mxu0
      %v3625 = vadd.f32 %v3432, %v3624
      %3626 = vmatprep.mubr.bf16.mxu0 %v1553
      %3627 = vmatmul.mubr.bf16.gmra.mxu0 %v1552
      %v3628 = vpop.f32.mrf.mxu0
      %v3629 = vadd.f32 %v3436, %v3628
      %v3630 = vpop.f32.mrf.mxu0
      %v3631 = vadd.f32 %v3438, %v3630
      %v3632 = vpop.f32.mrf.mxu0
      %v3633 = vadd.f32 %v3440, %v3632
      %v3634 = vpop.f32.mrf.mxu0
      %v3635 = vadd.f32 %v3442, %v3634
      %3636 = vmatprep.mubr.bf16.mxu0 %v1568
      %3637 = vmatmul.mubr.bf16.gmra.mxu0 %v1567
      %v3638 = vpop.f32.mrf.mxu0
      %v3639 = vadd.f32 %v3446, %v3638
      %v3640 = vpop.f32.mrf.mxu0
      %v3641 = vadd.f32 %v3448, %v3640
      %v3642 = vpop.f32.mrf.mxu0
      %v3643 = vadd.f32 %v3450, %v3642
      %v3644 = vpop.f32.mrf.mxu0
      %v3645 = vadd.f32 %v3452, %v3644
      %3646 = vmatprep.mubr.bf16.mxu0 %v1583
      %3647 = vmatmul.mubr.bf16.gmra.mxu0 %v1582
      %v3648 = vpop.f32.mrf.mxu0
      %v3649 = vadd.f32 %v3456, %v3648
      %v3650 = vpop.f32.mrf.mxu0
      %v3651 = vadd.f32 %v3458, %v3650
      %v3652 = vpop.f32.mrf.mxu0
      %v3653 = vadd.f32 %v3460, %v3652
      %v3654 = vpop.f32.mrf.mxu0
      %v3655 = vadd.f32 %v3462, %v3654
      %3656 = vmatprep.mubr.bf16.mxu0 %v1598
      %3657 = vmatmul.mubr.bf16.gmra.mxu0 %v1597
      %v3658 = vpop.f32.mrf.mxu0
      %v3659 = vadd.f32 %v3466, %v3658
      %v3660 = vpop.f32.mrf.mxu0
      %v3661 = vadd.f32 %v3468, %v3660
      %v3662 = vpop.f32.mrf.mxu0
      %v3663 = vadd.f32 %v3470, %v3662
      %v3664 = vpop.f32.mrf.mxu0
      %v3665 = vadd.f32 %v3472, %v3664
      %3666 = vmatprep.mubr.bf16.mxu0 %v1613
      %3667 = vmatmul.mubr.bf16.gmra.mxu0 %v1612
      %v3668 = vpop.f32.mrf.mxu0
      %v3669 = vadd.f32 %v3476, %v3668
      %v3670 = vpop.f32.mrf.mxu0
      %v3671 = vadd.f32 %v3478, %v3670
      %v3672 = vpop.f32.mrf.mxu0
      %v3673 = vadd.f32 %v3480, %v3672
      %v3674 = vpop.f32.mrf.mxu0
      %v3675 = vadd.f32 %v3482, %v3674
      %3676 = vmatprep.mubr.bf16.mxu0 %v1628
      %3677 = vmatmul.mubr.bf16.gmra.mxu0 %v1627
      %v3678 = vpop.f32.mrf.mxu0
      %v3679 = vadd.f32 %v3486, %v3678
      %v3680 = vpop.f32.mrf.mxu0
      %v3681 = vadd.f32 %v3488, %v3680
      %v3682 = vpop.f32.mrf.mxu0
      %v3683 = vadd.f32 %v3490, %v3682
      %v3684 = vpop.f32.mrf.mxu0
      %v3685 = vadd.f32 %v3492, %v3684
      %3686 = vmatprep.mubr.bf16.mxu0 %v1643
      %3687 = vmatmul.mubr.bf16.gmra.mxu0 %v1642
      %v3688 = vpop.f32.mrf.mxu0
      %v3689 = vadd.f32 %v3496, %v3688
      %v3690 = vpop.f32.mrf.mxu0
      %v3691 = vadd.f32 %v3498, %v3690
      %v3692 = vpop.f32.mrf.mxu0
      %v3693 = vadd.f32 %v3500, %v3692
      %v3694 = vpop.f32.mrf.mxu0
      %v3695 = vadd.f32 %v3502, %v3694
      %3696 = vmatprep.mubr.bf16.mxu0 %v1658
      %3697 = vmatmul.mubr.bf16.gmra.mxu0 %v1657
      %v3698 = vpop.f32.mrf.mxu0
      %v3699 = vadd.f32 %v3506, %v3698
      %v3700 = vpop.f32.mrf.mxu0
      %v3701 = vadd.f32 %v3508, %v3700
      %v3702 = vpop.f32.mrf.mxu0
      %v3703 = vadd.f32 %v3510, %v3702
      %v3704 = vpop.f32.mrf.mxu0
      %v3705 = vadd.f32 %v3512, %v3704
      %3706 = vmatprep.mubr.bf16.mxu0 %v1673
      %3707 = vmatmul.mubr.bf16.gmra.mxu0 %v1672
      %v3708 = vpop.f32.mrf.mxu0
      %v3709 = vadd.f32 %v3516, %v3708
      %v3710 = vpop.f32.mrf.mxu0
      %v3711 = vadd.f32 %v3518, %v3710
      %v3712 = vpop.f32.mrf.mxu0
      %v3713 = vadd.f32 %v3520, %v3712
      %v3714 = vpop.f32.mrf.mxu0
      %v3715 = vadd.f32 %v3522, %v3714
      %3716 = vmatprep.mubr.bf16.mxu0 %v1688
      %3717 = vmatmul.mubr.bf16.gmra.mxu0 %v1687
      %v3718 = vpop.f32.mrf.mxu0
      %v3719 = vadd.f32 %v3526, %v3718
      %v3720 = vpop.f32.mrf.mxu0
      %v3721 = vadd.f32 %v3528, %v3720
      %v3722 = vpop.f32.mrf.mxu0
      %v3723 = vadd.f32 %v3530, %v3722
      %v3724 = vpop.f32.mrf.mxu0
      %v3725 = vadd.f32 %v3532, %v3724
      %3726 = vmatprep.mubr.bf16.mxu0 %v1703
      %3727 = vmatmul.mubr.bf16.gmra.mxu0 %v1702
      %v3728 = vpop.f32.mrf.mxu0
      %v3729 = vadd.f32 %v3536, %v3728
      %v3730 = vpop.f32.mrf.mxu0
      %v3731 = vadd.f32 %v3538, %v3730
      %v3732 = vpop.f32.mrf.mxu0
      %v3733 = vadd.f32 %v3540, %v3732
      %v3734 = vpop.f32.mrf.mxu0
      %v3735 = vadd.f32 %v3542, %v3734
      %3736 = vmatprep.mubr.bf16.mxu0 %v1718
      %3737 = vmatmul.mubr.bf16.gmra.mxu0 %v1717
      %v3738 = vpop.f32.mrf.mxu0
      %v3739 = vadd.f32 %v3546, %v3738
      %v3740 = vpop.f32.mrf.mxu0
      %v3741 = vadd.f32 %v3548, %v3740
      %v3742 = vpop.f32.mrf.mxu0
      %v3743 = vadd.f32 %v3550, %v3742
      %v3744 = vpop.f32.mrf.mxu0
      %v3745 = vadd.f32 %v3552, %v3744
      %3746 = vdwg.mxu0
      %3747 = vmatprep.subr.bf16.mxu0 %v2799
      %3748 = vmatpush1.bf16.msra.mxu0 %v2798
      %3749 = vmatprep.subr.bf16.mxu0 %v2797
      %3750 = vmatpush1.bf16.msra.mxu0 %v2796
      %3751 = vmatprep.subr.bf16.mxu0 %v2795
      %3752 = vmatpush1.bf16.msra.mxu0 %v2794
      %3753 = vmatprep.subr.bf16.mxu0 %v2793
      %3754 = vmatpush1.bf16.msra.mxu0 %v2792
      %3755 = vmatprep.subr.bf16.mxu0 %v2791
      %3756 = vmatpush1.bf16.msra.mxu0 %v2790
      %3757 = vmatprep.subr.bf16.mxu0 %v2789
      %3758 = vmatpush1.bf16.msra.mxu0 %v2788
      %3759 = vmatprep.subr.bf16.mxu0 %v2787
      %3760 = vmatpush1.bf16.msra.mxu0 %v2786
      %3761 = vmatprep.subr.bf16.mxu0 %v2785
      %3762 = vmatpush1.bf16.msra.mxu0 %v2784
      %3763 = vmatprep.subr.bf16.mxu0 %v2815
      %3764 = vmatpush2.bf16.msra.mxu0 %v2814
      %3765 = vmatprep.subr.bf16.mxu0 %v2813
      %3766 = vmatpush2.bf16.msra.mxu0 %v2812
      %3767 = vmatprep.subr.bf16.mxu0 %v2811
      %3768 = vmatpush2.bf16.msra.mxu0 %v2810
      %3769 = vmatprep.subr.bf16.mxu0 %v2809
      %3770 = vmatpush2.bf16.msra.mxu0 %v2808
      %3771 = vmatprep.subr.bf16.mxu0 %v2807
      %3772 = vmatpush2.bf16.msra.mxu0 %v2806
      %3773 = vmatprep.subr.bf16.mxu0 %v2805
      %3774 = vmatpush2.bf16.msra.mxu0 %v2804
      %3775 = vmatprep.subr.bf16.mxu0 %v2803
      %3776 = vmatpush2.bf16.msra.mxu0 %v2802
      %3777 = vmatprep.subr.bf16.mxu0 %v2801
      %3778 = vmatpush2.bf16.msra.mxu0 %v2800
      %3779 = vmatprep.mubr.bf16.mxu0 %v1495
      %3780 = vmatmul.mubr.bf16.gmra.mxu0 %v1494
      %v3781 = vpop.f32.mrf.mxu0
      %v3782 = vadd.f32 %v3589, %v3781
      %v3783 = vpop.f32.mrf.mxu0
      %v3784 = vadd.f32 %v3591, %v3783
      %v3785 = vpop.f32.mrf.mxu0
      %v3786 = vadd.f32 %v3593, %v3785
      %v3787 = vpop.f32.mrf.mxu0
      %v3788 = vadd.f32 %v3595, %v3787
      %3789 = vmatprep.mubr.bf16.mxu0 %v1510
      %3790 = vmatmul.mubr.bf16.gmra.mxu0 %v1509
      %v3791 = vpop.f32.mrf.mxu0
      %v3792 = vadd.f32 %v3599, %v3791
      %v3793 = vpop.f32.mrf.mxu0
      %v3794 = vadd.f32 %v3601, %v3793
      %v3795 = vpop.f32.mrf.mxu0
      %v3796 = vadd.f32 %v3603, %v3795
      %v3797 = vpop.f32.mrf.mxu0
      %v3798 = vadd.f32 %v3605, %v3797
      %3799 = vmatprep.mubr.bf16.mxu0 %v1525
      %3800 = vmatmul.mubr.bf16.gmra.mxu0 %v1524
      %v3801 = vpop.f32.mrf.mxu0
      %v3802 = vadd.f32 %v3609, %v3801
      %v3803 = vpop.f32.mrf.mxu0
      %v3804 = vadd.f32 %v3611, %v3803
      %v3805 = vpop.f32.mrf.mxu0
      %v3806 = vadd.f32 %v3613, %v3805
      %v3807 = vpop.f32.mrf.mxu0
      %v3808 = vadd.f32 %v3615, %v3807
      %3809 = vmatprep.mubr.bf16.mxu0 %v1540
      %3810 = vmatmul.mubr.bf16.gmra.mxu0 %v1539
      %v3811 = vpop.f32.mrf.mxu0
      %v3812 = vadd.f32 %v3619, %v3811
      %v3813 = vpop.f32.mrf.mxu0
      %v3814 = vadd.f32 %v3621, %v3813
      %v3815 = vpop.f32.mrf.mxu0
      %v3816 = vadd.f32 %v3623, %v3815
      %v3817 = vpop.f32.mrf.mxu0
      %v3818 = vadd.f32 %v3625, %v3817
      %3819 = vmatprep.mubr.bf16.mxu0 %v1555
      %3820 = vmatmul.mubr.bf16.gmra.mxu0 %v1554
      %v3821 = vpop.f32.mrf.mxu0
      %v3822 = vadd.f32 %v3629, %v3821
      %v3823 = vpop.f32.mrf.mxu0
      %v3824 = vadd.f32 %v3631, %v3823
      %v3825 = vpop.f32.mrf.mxu0
      %v3826 = vadd.f32 %v3633, %v3825
      %v3827 = vpop.f32.mrf.mxu0
      %v3828 = vadd.f32 %v3635, %v3827
      %3829 = vmatprep.mubr.bf16.mxu0 %v1570
      %3830 = vmatmul.mubr.bf16.gmra.mxu0 %v1569
      %v3831 = vpop.f32.mrf.mxu0
      %v3832 = vadd.f32 %v3639, %v3831
      %v3833 = vpop.f32.mrf.mxu0
      %v3834 = vadd.f32 %v3641, %v3833
      %v3835 = vpop.f32.mrf.mxu0
      %v3836 = vadd.f32 %v3643, %v3835
      %v3837 = vpop.f32.mrf.mxu0
      %v3838 = vadd.f32 %v3645, %v3837
      %3839 = vmatprep.mubr.bf16.mxu0 %v1585
      %3840 = vmatmul.mubr.bf16.gmra.mxu0 %v1584
      %v3841 = vpop.f32.mrf.mxu0
      %v3842 = vadd.f32 %v3649, %v3841
      %v3843 = vpop.f32.mrf.mxu0
      %v3844 = vadd.f32 %v3651, %v3843
      %v3845 = vpop.f32.mrf.mxu0
      %v3846 = vadd.f32 %v3653, %v3845
      %v3847 = vpop.f32.mrf.mxu0
      %v3848 = vadd.f32 %v3655, %v3847
      %3849 = vmatprep.mubr.bf16.mxu0 %v1600
      %3850 = vmatmul.mubr.bf16.gmra.mxu0 %v1599
      %v3851 = vpop.f32.mrf.mxu0
      %v3852 = vadd.f32 %v3659, %v3851
      %v3853 = vpop.f32.mrf.mxu0
      %v3854 = vadd.f32 %v3661, %v3853
      %v3855 = vpop.f32.mrf.mxu0
      %v3856 = vadd.f32 %v3663, %v3855
      %v3857 = vpop.f32.mrf.mxu0
      %v3858 = vadd.f32 %v3665, %v3857
      %3859 = vmatprep.mubr.bf16.mxu0 %v1615
      %3860 = vmatmul.mubr.bf16.gmra.mxu0 %v1614
      %v3861 = vpop.f32.mrf.mxu0
      %v3862 = vadd.f32 %v3669, %v3861
      %v3863 = vpop.f32.mrf.mxu0
      %v3864 = vadd.f32 %v3671, %v3863
      %v3865 = vpop.f32.mrf.mxu0
      %v3866 = vadd.f32 %v3673, %v3865
      %v3867 = vpop.f32.mrf.mxu0
      %v3868 = vadd.f32 %v3675, %v3867
      %3869 = vmatprep.mubr.bf16.mxu0 %v1630
      %3870 = vmatmul.mubr.bf16.gmra.mxu0 %v1629
      %v3871 = vpop.f32.mrf.mxu0
      %v3872 = vadd.f32 %v3679, %v3871
      %v3873 = vpop.f32.mrf.mxu0
      %v3874 = vadd.f32 %v3681, %v3873
      %v3875 = vpop.f32.mrf.mxu0
      %v3876 = vadd.f32 %v3683, %v3875
      %v3877 = vpop.f32.mrf.mxu0
      %v3878 = vadd.f32 %v3685, %v3877
      %3879 = vmatprep.mubr.bf16.mxu0 %v1645
      %3880 = vmatmul.mubr.bf16.gmra.mxu0 %v1644
      %v3881 = vpop.f32.mrf.mxu0
      %v3882 = vadd.f32 %v3689, %v3881
      %v3883 = vpop.f32.mrf.mxu0
      %v3884 = vadd.f32 %v3691, %v3883
      %v3885 = vpop.f32.mrf.mxu0
      %v3886 = vadd.f32 %v3693, %v3885
      %v3887 = vpop.f32.mrf.mxu0
      %v3888 = vadd.f32 %v3695, %v3887
      %3889 = vmatprep.mubr.bf16.mxu0 %v1660
      %3890 = vmatmul.mubr.bf16.gmra.mxu0 %v1659
      %v3891 = vpop.f32.mrf.mxu0
      %v3892 = vadd.f32 %v3699, %v3891
      %v3893 = vpop.f32.mrf.mxu0
      %v3894 = vadd.f32 %v3701, %v3893
      %v3895 = vpop.f32.mrf.mxu0
      %v3896 = vadd.f32 %v3703, %v3895
      %v3897 = vpop.f32.mrf.mxu0
      %v3898 = vadd.f32 %v3705, %v3897
      %3899 = vmatprep.mubr.bf16.mxu0 %v1675
      %3900 = vmatmul.mubr.bf16.gmra.mxu0 %v1674
      %v3901 = vpop.f32.mrf.mxu0
      %v3902 = vadd.f32 %v3709, %v3901
      %v3903 = vpop.f32.mrf.mxu0
      %v3904 = vadd.f32 %v3711, %v3903
      %v3905 = vpop.f32.mrf.mxu0
      %v3906 = vadd.f32 %v3713, %v3905
      %v3907 = vpop.f32.mrf.mxu0
      %v3908 = vadd.f32 %v3715, %v3907
      %3909 = vmatprep.mubr.bf16.mxu0 %v1690
      %3910 = vmatmul.mubr.bf16.gmra.mxu0 %v1689
      %v3911 = vpop.f32.mrf.mxu0
      %v3912 = vadd.f32 %v3719, %v3911
      %v3913 = vpop.f32.mrf.mxu0
      %v3914 = vadd.f32 %v3721, %v3913
      %v3915 = vpop.f32.mrf.mxu0
      %v3916 = vadd.f32 %v3723, %v3915
      %v3917 = vpop.f32.mrf.mxu0
      %v3918 = vadd.f32 %v3725, %v3917
      %3919 = vmatprep.mubr.bf16.mxu0 %v1705
      %3920 = vmatmul.mubr.bf16.gmra.mxu0 %v1704
      %v3921 = vpop.f32.mrf.mxu0
      %v3922 = vadd.f32 %v3729, %v3921
      %v3923 = vpop.f32.mrf.mxu0
      %v3924 = vadd.f32 %v3731, %v3923
      %v3925 = vpop.f32.mrf.mxu0
      %v3926 = vadd.f32 %v3733, %v3925
      %v3927 = vpop.f32.mrf.mxu0
      %v3928 = vadd.f32 %v3735, %v3927
      %3929 = vmatprep.mubr.bf16.mxu0 %v1720
      %3930 = vmatmul.mubr.bf16.gmra.mxu0 %v1719
      %v3931 = vpop.f32.mrf.mxu0
      %v3932 = vadd.f32 %v3739, %v3931
      %v3933 = vpop.f32.mrf.mxu0
      %v3934 = vadd.f32 %v3741, %v3933
      %v3935 = vpop.f32.mrf.mxu0
      %v3936 = vadd.f32 %v3743, %v3935
      %v3937 = vpop.f32.mrf.mxu0
      %v3938 = vadd.f32 %v3745, %v3937
      %3939 = vdwg.mxu0
      %3940 = vmatprep.subr.bf16.mxu0 %v2831
      %3941 = vmatpush1.bf16.msra.mxu0 %v2830
      %3942 = vmatprep.subr.bf16.mxu0 %v2829
      %3943 = vmatpush1.bf16.msra.mxu0 %v2828
      %3944 = vmatprep.subr.bf16.mxu0 %v2827
      %3945 = vmatpush1.bf16.msra.mxu0 %v2826
      %3946 = vmatprep.subr.bf16.mxu0 %v2825
      %3947 = vmatpush1.bf16.msra.mxu0 %v2824
      %3948 = vmatprep.subr.bf16.mxu0 %v2823
      %3949 = vmatpush1.bf16.msra.mxu0 %v2822
      %3950 = vmatprep.subr.bf16.mxu0 %v2821
      %3951 = vmatpush1.bf16.msra.mxu0 %v2820
      %3952 = vmatprep.subr.bf16.mxu0 %v2819
      %3953 = vmatpush1.bf16.msra.mxu0 %v2818
      %3954 = vmatprep.subr.bf16.mxu0 %v2817
      %3955 = vmatpush1.bf16.msra.mxu0 %v2816
      %3956 = vmatprep.subr.bf16.mxu0 %v2847
      %3957 = vmatpush2.bf16.msra.mxu0 %v2846
      %3958 = vmatprep.subr.bf16.mxu0 %v2845
      %3959 = vmatpush2.bf16.msra.mxu0 %v2844
      %3960 = vmatprep.subr.bf16.mxu0 %v2843
      %3961 = vmatpush2.bf16.msra.mxu0 %v2842
      %3962 = vmatprep.subr.bf16.mxu0 %v2841
      %3963 = vmatpush2.bf16.msra.mxu0 %v2840
      %3964 = vmatprep.subr.bf16.mxu0 %v2839
      %3965 = vmatpush2.bf16.msra.mxu0 %v2838
      %3966 = vmatprep.subr.bf16.mxu0 %v2837
      %3967 = vmatpush2.bf16.msra.mxu0 %v2836
      %3968 = vmatprep.subr.bf16.mxu0 %v2835
      %3969 = vmatpush2.bf16.msra.mxu0 %v2834
      %3970 = vmatprep.subr.bf16.mxu0 %v2833
      %3971 = vmatpush2.bf16.msra.mxu0 %v2832
      %3972 = vmatprep.mubr.bf16.mxu0 %v1497
      %3973 = vmatmul.mubr.bf16.gmra.mxu0 %v1496
      %v3974 = vpop.f32.mrf.mxu0
      %v3975 = vadd.f32 %v3782, %v3974
      %v3976 = vpop.f32.mrf.mxu0
      %v3977 = vadd.f32 %v3784, %v3976
      %v3978 = vpop.f32.mrf.mxu0
      %v3979 = vadd.f32 %v3786, %v3978
      %v3980 = vpop.f32.mrf.mxu0
      %v3981 = vadd.f32 %v3788, %v3980
      %3982 = vmatprep.mubr.bf16.mxu0 %v1512
      %3983 = vmatmul.mubr.bf16.gmra.mxu0 %v1511
      %v3984 = vpop.f32.mrf.mxu0
      %v3985 = vadd.f32 %v3792, %v3984
      %v3986 = vpop.f32.mrf.mxu0
      %v3987 = vadd.f32 %v3794, %v3986
      %v3988 = vpop.f32.mrf.mxu0
      %v3989 = vadd.f32 %v3796, %v3988
      %v3990 = vpop.f32.mrf.mxu0
      %v3991 = vadd.f32 %v3798, %v3990
      %3992 = vmatprep.mubr.bf16.mxu0 %v1527
      %3993 = vmatmul.mubr.bf16.gmra.mxu0 %v1526
      %v3994 = vpop.f32.mrf.mxu0
      %v3995 = vadd.f32 %v3802, %v3994
      %v3996 = vpop.f32.mrf.mxu0
      %v3997 = vadd.f32 %v3804, %v3996
      %v3998 = vpop.f32.mrf.mxu0
      %v3999 = vadd.f32 %v3806, %v3998
      %v4000 = vpop.f32.mrf.mxu0
      %v4001 = vadd.f32 %v3808, %v4000
      %4002 = vmatprep.mubr.bf16.mxu0 %v1542
      %4003 = vmatmul.mubr.bf16.gmra.mxu0 %v1541
      %v4004 = vpop.f32.mrf.mxu0
      %v4005 = vadd.f32 %v3812, %v4004
      %v4006 = vpop.f32.mrf.mxu0
      %v4007 = vadd.f32 %v3814, %v4006
      %v4008 = vpop.f32.mrf.mxu0
      %v4009 = vadd.f32 %v3816, %v4008
      %v4010 = vpop.f32.mrf.mxu0
      %v4011 = vadd.f32 %v3818, %v4010
      %4012 = vmatprep.mubr.bf16.mxu0 %v1557
      %4013 = vmatmul.mubr.bf16.gmra.mxu0 %v1556
      %v4014 = vpop.f32.mrf.mxu0
      %v4015 = vadd.f32 %v3822, %v4014
      %v4016 = vpop.f32.mrf.mxu0
      %v4017 = vadd.f32 %v3824, %v4016
      %v4018 = vpop.f32.mrf.mxu0
      %v4019 = vadd.f32 %v3826, %v4018
      %v4020 = vpop.f32.mrf.mxu0
      %v4021 = vadd.f32 %v3828, %v4020
      %4022 = vmatprep.mubr.bf16.mxu0 %v1572
      %4023 = vmatmul.mubr.bf16.gmra.mxu0 %v1571
      %v4024 = vpop.f32.mrf.mxu0
      %v4025 = vadd.f32 %v3832, %v4024
      %v4026 = vpop.f32.mrf.mxu0
      %v4027 = vadd.f32 %v3834, %v4026
      %v4028 = vpop.f32.mrf.mxu0
      %v4029 = vadd.f32 %v3836, %v4028
      %v4030 = vpop.f32.mrf.mxu0
      %v4031 = vadd.f32 %v3838, %v4030
      %4032 = vmatprep.mubr.bf16.mxu0 %v1587
      %4033 = vmatmul.mubr.bf16.gmra.mxu0 %v1586
      %v4034 = vpop.f32.mrf.mxu0
      %v4035 = vadd.f32 %v3842, %v4034
      %v4036 = vpop.f32.mrf.mxu0
      %v4037 = vadd.f32 %v3844, %v4036
      %v4038 = vpop.f32.mrf.mxu0
      %v4039 = vadd.f32 %v3846, %v4038
      %v4040 = vpop.f32.mrf.mxu0
      %v4041 = vadd.f32 %v3848, %v4040
      %4042 = vmatprep.mubr.bf16.mxu0 %v1602
      %4043 = vmatmul.mubr.bf16.gmra.mxu0 %v1601
      %v4044 = vpop.f32.mrf.mxu0
      %v4045 = vadd.f32 %v3852, %v4044
      %v4046 = vpop.f32.mrf.mxu0
      %v4047 = vadd.f32 %v3854, %v4046
      %v4048 = vpop.f32.mrf.mxu0
      %v4049 = vadd.f32 %v3856, %v4048
      %v4050 = vpop.f32.mrf.mxu0
      %v4051 = vadd.f32 %v3858, %v4050
      %4052 = vmatprep.mubr.bf16.mxu0 %v1617
      %4053 = vmatmul.mubr.bf16.gmra.mxu0 %v1616
      %v4054 = vpop.f32.mrf.mxu0
      %v4055 = vadd.f32 %v3862, %v4054
      %v4056 = vpop.f32.mrf.mxu0
      %v4057 = vadd.f32 %v3864, %v4056
      %v4058 = vpop.f32.mrf.mxu0
      %v4059 = vadd.f32 %v3866, %v4058
      %v4060 = vpop.f32.mrf.mxu0
      %v4061 = vadd.f32 %v3868, %v4060
      %4062 = vmatprep.mubr.bf16.mxu0 %v1632
      %4063 = vmatmul.mubr.bf16.gmra.mxu0 %v1631
      %v4064 = vpop.f32.mrf.mxu0
      %v4065 = vadd.f32 %v3872, %v4064
      %v4066 = vpop.f32.mrf.mxu0
      %v4067 = vadd.f32 %v3874, %v4066
      %v4068 = vpop.f32.mrf.mxu0
      %v4069 = vadd.f32 %v3876, %v4068
      %v4070 = vpop.f32.mrf.mxu0
      %v4071 = vadd.f32 %v3878, %v4070
      %4072 = vmatprep.mubr.bf16.mxu0 %v1647
      %4073 = vmatmul.mubr.bf16.gmra.mxu0 %v1646
      %v4074 = vpop.f32.mrf.mxu0
      %v4075 = vadd.f32 %v3882, %v4074
      %v4076 = vpop.f32.mrf.mxu0
      %v4077 = vadd.f32 %v3884, %v4076
      %v4078 = vpop.f32.mrf.mxu0
      %v4079 = vadd.f32 %v3886, %v4078
      %v4080 = vpop.f32.mrf.mxu0
      %v4081 = vadd.f32 %v3888, %v4080
      %4082 = vmatprep.mubr.bf16.mxu0 %v1662
      %4083 = vmatmul.mubr.bf16.gmra.mxu0 %v1661
      %v4084 = vpop.f32.mrf.mxu0
      %v4085 = vadd.f32 %v3892, %v4084
      %v4086 = vpop.f32.mrf.mxu0
      %v4087 = vadd.f32 %v3894, %v4086
      %v4088 = vpop.f32.mrf.mxu0
      %v4089 = vadd.f32 %v3896, %v4088
      %v4090 = vpop.f32.mrf.mxu0
      %v4091 = vadd.f32 %v3898, %v4090
      %4092 = vmatprep.mubr.bf16.mxu0 %v1677
      %4093 = vmatmul.mubr.bf16.gmra.mxu0 %v1676
      %v4094 = vpop.f32.mrf.mxu0
      %v4095 = vadd.f32 %v3902, %v4094
      %v4096 = vpop.f32.mrf.mxu0
      %v4097 = vadd.f32 %v3904, %v4096
      %v4098 = vpop.f32.mrf.mxu0
      %v4099 = vadd.f32 %v3906, %v4098
      %v4100 = vpop.f32.mrf.mxu0
      %v4101 = vadd.f32 %v3908, %v4100
      %4102 = vmatprep.mubr.bf16.mxu0 %v1692
      %4103 = vmatmul.mubr.bf16.gmra.mxu0 %v1691
      %v4104 = vpop.f32.mrf.mxu0
      %v4105 = vadd.f32 %v3912, %v4104
      %v4106 = vpop.f32.mrf.mxu0
      %v4107 = vadd.f32 %v3914, %v4106
      %v4108 = vpop.f32.mrf.mxu0
      %v4109 = vadd.f32 %v3916, %v4108
      %v4110 = vpop.f32.mrf.mxu0
      %v4111 = vadd.f32 %v3918, %v4110
      %4112 = vmatprep.mubr.bf16.mxu0 %v1707
      %4113 = vmatmul.mubr.bf16.gmra.mxu0 %v1706
      %v4114 = vpop.f32.mrf.mxu0
      %v4115 = vadd.f32 %v3922, %v4114
      %v4116 = vpop.f32.mrf.mxu0
      %v4117 = vadd.f32 %v3924, %v4116
      %v4118 = vpop.f32.mrf.mxu0
      %v4119 = vadd.f32 %v3926, %v4118
      %v4120 = vpop.f32.mrf.mxu0
      %v4121 = vadd.f32 %v3928, %v4120
      %4122 = vmatprep.mubr.bf16.mxu0 %v1722
      %4123 = vmatmul.mubr.bf16.gmra.mxu0 %v1721
      %v4124 = vpop.f32.mrf.mxu0
      %v4125 = vadd.f32 %v3932, %v4124
      %v4126 = vpop.f32.mrf.mxu0
      %v4127 = vadd.f32 %v3934, %v4126
      %v4128 = vpop.f32.mrf.mxu0
      %v4129 = vadd.f32 %v3936, %v4128
      %v4130 = vpop.f32.mrf.mxu0
      %v4131 = vadd.f32 %v3938, %v4130
      %4132 = vdwg.mxu0
      %4133 = vmatprep.subr.bf16.mxu0 %v2863
      %4134 = vmatpush1.bf16.msra.mxu0 %v2862
      %4135 = vmatprep.subr.bf16.mxu0 %v2861
      %4136 = vmatpush1.bf16.msra.mxu0 %v2860
      %4137 = vmatprep.subr.bf16.mxu0 %v2859
      %4138 = vmatpush1.bf16.msra.mxu0 %v2858
      %4139 = vmatprep.subr.bf16.mxu0 %v2857
      %4140 = vmatpush1.bf16.msra.mxu0 %v2856
      %4141 = vmatprep.subr.bf16.mxu0 %v2855
      %4142 = vmatpush1.bf16.msra.mxu0 %v2854
      %4143 = vmatprep.subr.bf16.mxu0 %v2853
      %4144 = vmatpush1.bf16.msra.mxu0 %v2852
      %4145 = vmatprep.subr.bf16.mxu0 %v2851
      %4146 = vmatpush1.bf16.msra.mxu0 %v2850
      %4147 = vmatprep.subr.bf16.mxu0 %v2849
      %4148 = vmatpush1.bf16.msra.mxu0 %v2848
      %4149 = vmatprep.subr.bf16.mxu0 %v2879
      %4150 = vmatpush2.bf16.msra.mxu0 %v2878
      %4151 = vmatprep.subr.bf16.mxu0 %v2877
      %4152 = vmatpush2.bf16.msra.mxu0 %v2876
      %4153 = vmatprep.subr.bf16.mxu0 %v2875
      %4154 = vmatpush2.bf16.msra.mxu0 %v2874
      %4155 = vmatprep.subr.bf16.mxu0 %v2873
      %4156 = vmatpush2.bf16.msra.mxu0 %v2872
      %4157 = vmatprep.subr.bf16.mxu0 %v2871
      %4158 = vmatpush2.bf16.msra.mxu0 %v2870
      %4159 = vmatprep.subr.bf16.mxu0 %v2869
      %4160 = vmatpush2.bf16.msra.mxu0 %v2868
      %4161 = vmatprep.subr.bf16.mxu0 %v2867
      %4162 = vmatpush2.bf16.msra.mxu0 %v2866
      %4163 = vmatprep.subr.bf16.mxu0 %v2865
      %4164 = vmatpush2.bf16.msra.mxu0 %v2864
      %4165 = vmatprep.mubr.bf16.mxu0 %v1499
      %4166 = vmatmul.mubr.bf16.gmra.mxu0 %v1498
      %v4167 = vpop.f32.mrf.mxu0
      %v4168 = vadd.f32 %v3975, %v4167
      %v4169 = vpop.f32.mrf.mxu0
      %v4170 = vadd.f32 %v3977, %v4169
      %v4171 = vpop.f32.mrf.mxu0
      %v4172 = vadd.f32 %v3979, %v4171
      %v4173 = vpop.f32.mrf.mxu0
      %v4174 = vadd.f32 %v3981, %v4173
      %4175 = vmatprep.mubr.bf16.mxu0 %v1514
      %4176 = vmatmul.mubr.bf16.gmra.mxu0 %v1513
      %v4177 = vpop.f32.mrf.mxu0
      %v4178 = vadd.f32 %v3985, %v4177
      %v4179 = vpop.f32.mrf.mxu0
      %v4180 = vadd.f32 %v3987, %v4179
      %v4181 = vpop.f32.mrf.mxu0
      %v4182 = vadd.f32 %v3989, %v4181
      %v4183 = vpop.f32.mrf.mxu0
      %v4184 = vadd.f32 %v3991, %v4183
      %4185 = vmatprep.mubr.bf16.mxu0 %v1529
      %4186 = vmatmul.mubr.bf16.gmra.mxu0 %v1528
      %v4187 = vpop.f32.mrf.mxu0
      %v4188 = vadd.f32 %v3995, %v4187
      %v4189 = vpop.f32.mrf.mxu0
      %v4190 = vadd.f32 %v3997, %v4189
      %v4191 = vpop.f32.mrf.mxu0
      %v4192 = vadd.f32 %v3999, %v4191
      %v4193 = vpop.f32.mrf.mxu0
      %v4194 = vadd.f32 %v4001, %v4193
      %4195 = vmatprep.mubr.bf16.mxu0 %v1544
      %4196 = vmatmul.mubr.bf16.gmra.mxu0 %v1543
      %v4197 = vpop.f32.mrf.mxu0
      %v4198 = vadd.f32 %v4005, %v4197
      %v4199 = vpop.f32.mrf.mxu0
      %v4200 = vadd.f32 %v4007, %v4199
      %v4201 = vpop.f32.mrf.mxu0
      %v4202 = vadd.f32 %v4009, %v4201
      %v4203 = vpop.f32.mrf.mxu0
      %v4204 = vadd.f32 %v4011, %v4203
      %4205 = vmatprep.mubr.bf16.mxu0 %v1559
      %4206 = vmatmul.mubr.bf16.gmra.mxu0 %v1558
      %v4207 = vpop.f32.mrf.mxu0
      %v4208 = vadd.f32 %v4015, %v4207
      %v4209 = vpop.f32.mrf.mxu0
      %v4210 = vadd.f32 %v4017, %v4209
      %v4211 = vpop.f32.mrf.mxu0
      %v4212 = vadd.f32 %v4019, %v4211
      %v4213 = vpop.f32.mrf.mxu0
      %v4214 = vadd.f32 %v4021, %v4213
      %4215 = vmatprep.mubr.bf16.mxu0 %v1574
      %4216 = vmatmul.mubr.bf16.gmra.mxu0 %v1573
      %v4217 = vpop.f32.mrf.mxu0
      %v4218 = vadd.f32 %v4025, %v4217
      %v4219 = vpop.f32.mrf.mxu0
      %v4220 = vadd.f32 %v4027, %v4219
      %v4221 = vpop.f32.mrf.mxu0
      %v4222 = vadd.f32 %v4029, %v4221
      %v4223 = vpop.f32.mrf.mxu0
      %v4224 = vadd.f32 %v4031, %v4223
      %4225 = vmatprep.mubr.bf16.mxu0 %v1589
      %4226 = vmatmul.mubr.bf16.gmra.mxu0 %v1588
      %v4227 = vpop.f32.mrf.mxu0
      %v4228 = vadd.f32 %v4035, %v4227
      %v4229 = vpop.f32.mrf.mxu0
      %v4230 = vadd.f32 %v4037, %v4229
      %v4231 = vpop.f32.mrf.mxu0
      %v4232 = vadd.f32 %v4039, %v4231
      %v4233 = vpop.f32.mrf.mxu0
      %v4234 = vadd.f32 %v4041, %v4233
      %4235 = vmatprep.mubr.bf16.mxu0 %v1604
      %4236 = vmatmul.mubr.bf16.gmra.mxu0 %v1603
      %v4237 = vpop.f32.mrf.mxu0
      %v4238 = vadd.f32 %v4045, %v4237
      %v4239 = vpop.f32.mrf.mxu0
      %v4240 = vadd.f32 %v4047, %v4239
      %v4241 = vpop.f32.mrf.mxu0
      %v4242 = vadd.f32 %v4049, %v4241
      %v4243 = vpop.f32.mrf.mxu0
      %v4244 = vadd.f32 %v4051, %v4243
      %4245 = vmatprep.mubr.bf16.mxu0 %v1619
      %4246 = vmatmul.mubr.bf16.gmra.mxu0 %v1618
      %v4247 = vpop.f32.mrf.mxu0
      %v4248 = vadd.f32 %v4055, %v4247
      %v4249 = vpop.f32.mrf.mxu0
      %v4250 = vadd.f32 %v4057, %v4249
      %v4251 = vpop.f32.mrf.mxu0
      %v4252 = vadd.f32 %v4059, %v4251
      %v4253 = vpop.f32.mrf.mxu0
      %v4254 = vadd.f32 %v4061, %v4253
      %4255 = vmatprep.mubr.bf16.mxu0 %v1634
      %4256 = vmatmul.mubr.bf16.gmra.mxu0 %v1633
      %v4257 = vpop.f32.mrf.mxu0
      %v4258 = vadd.f32 %v4065, %v4257
      %v4259 = vpop.f32.mrf.mxu0
      %v4260 = vadd.f32 %v4067, %v4259
      %v4261 = vpop.f32.mrf.mxu0
      %v4262 = vadd.f32 %v4069, %v4261
      %v4263 = vpop.f32.mrf.mxu0
      %v4264 = vadd.f32 %v4071, %v4263
      %4265 = vmatprep.mubr.bf16.mxu0 %v1649
      %4266 = vmatmul.mubr.bf16.gmra.mxu0 %v1648
      %v4267 = vpop.f32.mrf.mxu0
      %v4268 = vadd.f32 %v4075, %v4267
      %v4269 = vpop.f32.mrf.mxu0
      %v4270 = vadd.f32 %v4077, %v4269
      %v4271 = vpop.f32.mrf.mxu0
      %v4272 = vadd.f32 %v4079, %v4271
      %v4273 = vpop.f32.mrf.mxu0
      %v4274 = vadd.f32 %v4081, %v4273
      %4275 = vmatprep.mubr.bf16.mxu0 %v1664
      %4276 = vmatmul.mubr.bf16.gmra.mxu0 %v1663
      %v4277 = vpop.f32.mrf.mxu0
      %v4278 = vadd.f32 %v4085, %v4277
      %v4279 = vpop.f32.mrf.mxu0
      %v4280 = vadd.f32 %v4087, %v4279
      %v4281 = vpop.f32.mrf.mxu0
      %v4282 = vadd.f32 %v4089, %v4281
      %v4283 = vpop.f32.mrf.mxu0
      %v4284 = vadd.f32 %v4091, %v4283
      %4285 = vmatprep.mubr.bf16.mxu0 %v1679
      %4286 = vmatmul.mubr.bf16.gmra.mxu0 %v1678
      %v4287 = vpop.f32.mrf.mxu0
      %v4288 = vadd.f32 %v4095, %v4287
      %v4289 = vpop.f32.mrf.mxu0
      %v4290 = vadd.f32 %v4097, %v4289
      %v4291 = vpop.f32.mrf.mxu0
      %v4292 = vadd.f32 %v4099, %v4291
      %v4293 = vpop.f32.mrf.mxu0
      %v4294 = vadd.f32 %v4101, %v4293
      %4295 = vmatprep.mubr.bf16.mxu0 %v1694
      %4296 = vmatmul.mubr.bf16.gmra.mxu0 %v1693
      %v4297 = vpop.f32.mrf.mxu0
      %v4298 = vadd.f32 %v4105, %v4297
      %v4299 = vpop.f32.mrf.mxu0
      %v4300 = vadd.f32 %v4107, %v4299
      %v4301 = vpop.f32.mrf.mxu0
      %v4302 = vadd.f32 %v4109, %v4301
      %v4303 = vpop.f32.mrf.mxu0
      %v4304 = vadd.f32 %v4111, %v4303
      %4305 = vmatprep.mubr.bf16.mxu0 %v1709
      %4306 = vmatmul.mubr.bf16.gmra.mxu0 %v1708
      %v4307 = vpop.f32.mrf.mxu0
      %v4308 = vadd.f32 %v4115, %v4307
      %v4309 = vpop.f32.mrf.mxu0
      %v4310 = vadd.f32 %v4117, %v4309
      %v4311 = vpop.f32.mrf.mxu0
      %v4312 = vadd.f32 %v4119, %v4311
      %v4313 = vpop.f32.mrf.mxu0
      %v4314 = vadd.f32 %v4121, %v4313
      %4315 = vmatprep.mubr.bf16.mxu0 %v1724
      %4316 = vmatmul.mubr.bf16.gmra.mxu0 %v1723
      %v4317 = vpop.f32.mrf.mxu0
      %v4318 = vadd.f32 %v4125, %v4317
      %v4319 = vpop.f32.mrf.mxu0
      %v4320 = vadd.f32 %v4127, %v4319
      %v4321 = vpop.f32.mrf.mxu0
      %v4322 = vadd.f32 %v4129, %v4321
      %v4323 = vpop.f32.mrf.mxu0
      %v4324 = vadd.f32 %v4131, %v4323
      %4325 = vdwg.mxu0
      %4326 = vmatprep.subr.bf16.mxu0 %v2895
      %4327 = vmatpush1.bf16.msra.mxu0 %v2894
      %4328 = vmatprep.subr.bf16.mxu0 %v2893
      %4329 = vmatpush1.bf16.msra.mxu0 %v2892
      %4330 = vmatprep.subr.bf16.mxu0 %v2891
      %4331 = vmatpush1.bf16.msra.mxu0 %v2890
      %4332 = vmatprep.subr.bf16.mxu0 %v2889
      %4333 = vmatpush1.bf16.msra.mxu0 %v2888
      %4334 = vmatprep.subr.bf16.mxu0 %v2887
      %4335 = vmatpush1.bf16.msra.mxu0 %v2886
      %4336 = vmatprep.subr.bf16.mxu0 %v2885
      %4337 = vmatpush1.bf16.msra.mxu0 %v2884
      %4338 = vmatprep.subr.bf16.mxu0 %v2883
      %4339 = vmatpush1.bf16.msra.mxu0 %v2882
      %4340 = vmatprep.subr.bf16.mxu0 %v2881
      %4341 = vmatpush1.bf16.msra.mxu0 %v2880
      %4342 = vmatprep.subr.bf16.mxu0 %v2911
      %4343 = vmatpush2.bf16.msra.mxu0 %v2910
      %4344 = vmatprep.subr.bf16.mxu0 %v2909
      %4345 = vmatpush2.bf16.msra.mxu0 %v2908
      %4346 = vmatprep.subr.bf16.mxu0 %v2907
      %4347 = vmatpush2.bf16.msra.mxu0 %v2906
      %4348 = vmatprep.subr.bf16.mxu0 %v2905
      %4349 = vmatpush2.bf16.msra.mxu0 %v2904
      %4350 = vmatprep.subr.bf16.mxu0 %v2903
      %4351 = vmatpush2.bf16.msra.mxu0 %v2902
      %4352 = vmatprep.subr.bf16.mxu0 %v2901
      %4353 = vmatpush2.bf16.msra.mxu0 %v2900
      %4354 = vmatprep.subr.bf16.mxu0 %v2899
      %4355 = vmatpush2.bf16.msra.mxu0 %v2898
      %4356 = vmatprep.subr.bf16.mxu0 %v2897
      %4357 = vmatpush2.bf16.msra.mxu0 %v2896
      %4358 = vmatprep.mubr.bf16.mxu0 %v1501
      %4359 = vmatmul.mubr.bf16.gmra.mxu0 %v1500
      %v4360 = vpop.f32.mrf.mxu0
      %v4361 = vadd.f32 %v4168, %v4360
      %v4362 = vpop.f32.mrf.mxu0
      %v4363 = vadd.f32 %v4170, %v4362
      %v4364 = vpop.f32.mrf.mxu0
      %v4365 = vadd.f32 %v4172, %v4364
      %v4366 = vpop.f32.mrf.mxu0
      %v4367 = vadd.f32 %v4174, %v4366
      %4368 = vmatprep.mubr.bf16.mxu0 %v1516
      %4369 = vmatmul.mubr.bf16.gmra.mxu0 %v1515
      %v4370 = vpop.f32.mrf.mxu0
      %v4371 = vadd.f32 %v4178, %v4370
      %v4372 = vpop.f32.mrf.mxu0
      %v4373 = vadd.f32 %v4180, %v4372
      %v4374 = vpop.f32.mrf.mxu0
      %v4375 = vadd.f32 %v4182, %v4374
      %v4376 = vpop.f32.mrf.mxu0
      %v4377 = vadd.f32 %v4184, %v4376
      %4378 = vmatprep.mubr.bf16.mxu0 %v1531
      %4379 = vmatmul.mubr.bf16.gmra.mxu0 %v1530
      %v4380 = vpop.f32.mrf.mxu0
      %v4381 = vadd.f32 %v4188, %v4380
      %v4382 = vpop.f32.mrf.mxu0
      %v4383 = vadd.f32 %v4190, %v4382
      %v4384 = vpop.f32.mrf.mxu0
      %v4385 = vadd.f32 %v4192, %v4384
      %v4386 = vpop.f32.mrf.mxu0
      %v4387 = vadd.f32 %v4194, %v4386
      %4388 = vmatprep.mubr.bf16.mxu0 %v1546
      %4389 = vmatmul.mubr.bf16.gmra.mxu0 %v1545
      %v4390 = vpop.f32.mrf.mxu0
      %v4391 = vadd.f32 %v4198, %v4390
      %v4392 = vpop.f32.mrf.mxu0
      %v4393 = vadd.f32 %v4200, %v4392
      %v4394 = vpop.f32.mrf.mxu0
      %v4395 = vadd.f32 %v4202, %v4394
      %v4396 = vpop.f32.mrf.mxu0
      %v4397 = vadd.f32 %v4204, %v4396
      %4398 = vmatprep.mubr.bf16.mxu0 %v1561
      %4399 = vmatmul.mubr.bf16.gmra.mxu0 %v1560
      %v4400 = vpop.f32.mrf.mxu0
      %v4401 = vadd.f32 %v4208, %v4400
      %v4402 = vpop.f32.mrf.mxu0
      %v4403 = vadd.f32 %v4210, %v4402
      %v4404 = vpop.f32.mrf.mxu0
      %v4405 = vadd.f32 %v4212, %v4404
      %v4406 = vpop.f32.mrf.mxu0
      %v4407 = vadd.f32 %v4214, %v4406
      %4408 = vmatprep.mubr.bf16.mxu0 %v1576
      %4409 = vmatmul.mubr.bf16.gmra.mxu0 %v1575
      %v4410 = vpop.f32.mrf.mxu0
      %v4411 = vadd.f32 %v4218, %v4410
      %v4412 = vpop.f32.mrf.mxu0
      %v4413 = vadd.f32 %v4220, %v4412
      %v4414 = vpop.f32.mrf.mxu0
      %v4415 = vadd.f32 %v4222, %v4414
      %v4416 = vpop.f32.mrf.mxu0
      %v4417 = vadd.f32 %v4224, %v4416
      %4418 = vmatprep.mubr.bf16.mxu0 %v1591
      %4419 = vmatmul.mubr.bf16.gmra.mxu0 %v1590
      %v4420 = vpop.f32.mrf.mxu0
      %v4421 = vadd.f32 %v4228, %v4420
      %v4422 = vpop.f32.mrf.mxu0
      %v4423 = vadd.f32 %v4230, %v4422
      %v4424 = vpop.f32.mrf.mxu0
      %v4425 = vadd.f32 %v4232, %v4424
      %v4426 = vpop.f32.mrf.mxu0
      %v4427 = vadd.f32 %v4234, %v4426
      %4428 = vmatprep.mubr.bf16.mxu0 %v1606
      %4429 = vmatmul.mubr.bf16.gmra.mxu0 %v1605
      %v4430 = vpop.f32.mrf.mxu0
      %v4431 = vadd.f32 %v4238, %v4430
      %v4432 = vpop.f32.mrf.mxu0
      %v4433 = vadd.f32 %v4240, %v4432
      %v4434 = vpop.f32.mrf.mxu0
      %v4435 = vadd.f32 %v4242, %v4434
      %v4436 = vpop.f32.mrf.mxu0
      %v4437 = vadd.f32 %v4244, %v4436
      %4438 = vmatprep.mubr.bf16.mxu0 %v1621
      %4439 = vmatmul.mubr.bf16.gmra.mxu0 %v1620
      %v4440 = vpop.f32.mrf.mxu0
      %v4441 = vadd.f32 %v4248, %v4440
      %v4442 = vpop.f32.mrf.mxu0
      %v4443 = vadd.f32 %v4250, %v4442
      %v4444 = vpop.f32.mrf.mxu0
      %v4445 = vadd.f32 %v4252, %v4444
      %v4446 = vpop.f32.mrf.mxu0
      %v4447 = vadd.f32 %v4254, %v4446
      %4448 = vmatprep.mubr.bf16.mxu0 %v1636
      %4449 = vmatmul.mubr.bf16.gmra.mxu0 %v1635
      %v4450 = vpop.f32.mrf.mxu0
      %v4451 = vadd.f32 %v4258, %v4450
      %v4452 = vpop.f32.mrf.mxu0
      %v4453 = vadd.f32 %v4260, %v4452
      %v4454 = vpop.f32.mrf.mxu0
      %v4455 = vadd.f32 %v4262, %v4454
      %v4456 = vpop.f32.mrf.mxu0
      %v4457 = vadd.f32 %v4264, %v4456
      %4458 = vmatprep.mubr.bf16.mxu0 %v1651
      %4459 = vmatmul.mubr.bf16.gmra.mxu0 %v1650
      %v4460 = vpop.f32.mrf.mxu0
      %v4461 = vadd.f32 %v4268, %v4460
      %v4462 = vpop.f32.mrf.mxu0
      %v4463 = vadd.f32 %v4270, %v4462
      %v4464 = vpop.f32.mrf.mxu0
      %v4465 = vadd.f32 %v4272, %v4464
      %v4466 = vpop.f32.mrf.mxu0
      %v4467 = vadd.f32 %v4274, %v4466
      %4468 = vmatprep.mubr.bf16.mxu0 %v1666
      %4469 = vmatmul.mubr.bf16.gmra.mxu0 %v1665
      %v4470 = vpop.f32.mrf.mxu0
      %v4471 = vadd.f32 %v4278, %v4470
      %v4472 = vpop.f32.mrf.mxu0
      %v4473 = vadd.f32 %v4280, %v4472
      %v4474 = vpop.f32.mrf.mxu0
      %v4475 = vadd.f32 %v4282, %v4474
      %v4476 = vpop.f32.mrf.mxu0
      %v4477 = vadd.f32 %v4284, %v4476
      %4478 = vmatprep.mubr.bf16.mxu0 %v1681
      %4479 = vmatmul.mubr.bf16.gmra.mxu0 %v1680
      %v4480 = vpop.f32.mrf.mxu0
      %v4481 = vadd.f32 %v4288, %v4480
      %v4482 = vpop.f32.mrf.mxu0
      %v4483 = vadd.f32 %v4290, %v4482
      %v4484 = vpop.f32.mrf.mxu0
      %v4485 = vadd.f32 %v4292, %v4484
      %v4486 = vpop.f32.mrf.mxu0
      %v4487 = vadd.f32 %v4294, %v4486
      %4488 = vmatprep.mubr.bf16.mxu0 %v1696
      %4489 = vmatmul.mubr.bf16.gmra.mxu0 %v1695
      %v4490 = vpop.f32.mrf.mxu0
      %v4491 = vadd.f32 %v4298, %v4490
      %v4492 = vpop.f32.mrf.mxu0
      %v4493 = vadd.f32 %v4300, %v4492
      %v4494 = vpop.f32.mrf.mxu0
      %v4495 = vadd.f32 %v4302, %v4494
      %v4496 = vpop.f32.mrf.mxu0
      %v4497 = vadd.f32 %v4304, %v4496
      %4498 = vmatprep.mubr.bf16.mxu0 %v1711
      %4499 = vmatmul.mubr.bf16.gmra.mxu0 %v1710
      %v4500 = vpop.f32.mrf.mxu0
      %v4501 = vadd.f32 %v4308, %v4500
      %v4502 = vpop.f32.mrf.mxu0
      %v4503 = vadd.f32 %v4310, %v4502
      %v4504 = vpop.f32.mrf.mxu0
      %v4505 = vadd.f32 %v4312, %v4504
      %v4506 = vpop.f32.mrf.mxu0
      %v4507 = vadd.f32 %v4314, %v4506
      %4508 = vmatprep.mubr.bf16.mxu0 %v1726
      %4509 = vmatmul.mubr.bf16.gmra.mxu0 %v1725
      %v4510 = vpop.f32.mrf.mxu0
      %v4511 = vadd.f32 %v4318, %v4510
      %v4512 = vpop.f32.mrf.mxu0
      %v4513 = vadd.f32 %v4320, %v4512
      %v4514 = vpop.f32.mrf.mxu0
      %v4515 = vadd.f32 %v4322, %v4514
      %v4516 = vpop.f32.mrf.mxu0
      %v4517 = vadd.f32 %v4324, %v4516
      %4518 = vdwg.mxu0
      %4519 = vmatprep.subr.bf16.mxu0 %v2927
      %4520 = vmatpush1.bf16.msra.mxu0 %v2926
      %4521 = vmatprep.subr.bf16.mxu0 %v2925
      %4522 = vmatpush1.bf16.msra.mxu0 %v2924
      %4523 = vmatprep.subr.bf16.mxu0 %v2923
      %4524 = vmatpush1.bf16.msra.mxu0 %v2922
      %4525 = vmatprep.subr.bf16.mxu0 %v2921
      %4526 = vmatpush1.bf16.msra.mxu0 %v2920
      %4527 = vmatprep.subr.bf16.mxu0 %v2919
      %4528 = vmatpush1.bf16.msra.mxu0 %v2918
      %4529 = vmatprep.subr.bf16.mxu0 %v2917
      %4530 = vmatpush1.bf16.msra.mxu0 %v2916
      %4531 = vmatprep.subr.bf16.mxu0 %v2915
      %4532 = vmatpush1.bf16.msra.mxu0 %v2914
      %4533 = vmatprep.subr.bf16.mxu0 %v2913
      %4534 = vmatpush1.bf16.msra.mxu0 %v2912
      %4535 = vmatprep.subr.bf16.mxu0 0
      %4536 = vmatpush2.bf16.msra.mxu0 0
      %4537 = vmatprep.subr.bf16.mxu0 0
      %4538 = vmatpush2.bf16.msra.mxu0 0
      %4539 = vmatprep.subr.bf16.mxu0 0
      %4540 = vmatpush2.bf16.msra.mxu0 0
      %4541 = vmatprep.subr.bf16.mxu0 0
      %4542 = vmatpush2.bf16.msra.mxu0 0
      %4543 = vmatprep.subr.bf16.mxu0 0
      %4544 = vmatpush2.bf16.msra.mxu0 0
      %4545 = vmatprep.subr.bf16.mxu0 0
      %4546 = vmatpush2.bf16.msra.mxu0 0
      %4547 = vmatprep.subr.bf16.mxu0 0
      %4548 = vmatpush2.bf16.msra.mxu0 0
      %4549 = vmatprep.subr.bf16.mxu0 0
      %4550 = vmatpush2.bf16.msra.mxu0 0
      %4551 = vmatprep.mubr.bf16.mxu0 0
      %4552 = vmatmul.mubr.bf16.gmra.mxu0 %v1502
      %v4553 = vpop.f32.mrf.mxu0
      %v4554 = vadd.f32 %v4361, %v4553
      %v4555 = vpop.f32.mrf.mxu0
      %v4556 = vadd.f32 %v4363, %v4555
      %v4557 = vpop.f32.mrf.mxu0
      %v4558 = vadd.f32 %v4365, %v4557
      %v4559 = vpop.f32.mrf.mxu0
      %v4560 = vadd.f32 %v4367, %v4559
      %4561 = vmatprep.mubr.bf16.mxu0 0
      %4562 = vmatmul.mubr.bf16.gmra.mxu0 %v1517
      %v4563 = vpop.f32.mrf.mxu0
      %v4564 = vadd.f32 %v4371, %v4563
      %v4565 = vpop.f32.mrf.mxu0
      %v4566 = vadd.f32 %v4373, %v4565
      %v4567 = vpop.f32.mrf.mxu0
      %v4568 = vadd.f32 %v4375, %v4567
      %v4569 = vpop.f32.mrf.mxu0
      %v4570 = vadd.f32 %v4377, %v4569
      %4571 = vmatprep.mubr.bf16.mxu0 0
      %4572 = vmatmul.mubr.bf16.gmra.mxu0 %v1532
      %v4573 = vpop.f32.mrf.mxu0
      %v4574 = vadd.f32 %v4381, %v4573
      %v4575 = vpop.f32.mrf.mxu0
      %v4576 = vadd.f32 %v4383, %v4575
      %v4577 = vpop.f32.mrf.mxu0
      %v4578 = vadd.f32 %v4385, %v4577
      %v4579 = vpop.f32.mrf.mxu0
      %v4580 = vadd.f32 %v4387, %v4579
      %4581 = vmatprep.mubr.bf16.mxu0 0
      %4582 = vmatmul.mubr.bf16.gmra.mxu0 %v1547
      %v4583 = vpop.f32.mrf.mxu0
      %v4584 = vadd.f32 %v4391, %v4583
      %v4585 = vpop.f32.mrf.mxu0
      %v4586 = vadd.f32 %v4393, %v4585
      %v4587 = vpop.f32.mrf.mxu0
      %v4588 = vadd.f32 %v4395, %v4587
      %v4589 = vpop.f32.mrf.mxu0
      %v4590 = vadd.f32 %v4397, %v4589
      %4591 = vmatprep.mubr.bf16.mxu0 0
      %4592 = vmatmul.mubr.bf16.gmra.mxu0 %v1562
      %v4593 = vpop.f32.mrf.mxu0
      %v4594 = vadd.f32 %v4401, %v4593
      %v4595 = vpop.f32.mrf.mxu0
      %v4596 = vadd.f32 %v4403, %v4595
      %v4597 = vpop.f32.mrf.mxu0
      %v4598 = vadd.f32 %v4405, %v4597
      %v4599 = vpop.f32.mrf.mxu0
      %v4600 = vadd.f32 %v4407, %v4599
      %4601 = vmatprep.mubr.bf16.mxu0 0
      %4602 = vmatmul.mubr.bf16.gmra.mxu0 %v1577
      %v4603 = vpop.f32.mrf.mxu0
      %v4604 = vadd.f32 %v4411, %v4603
      %v4605 = vpop.f32.mrf.mxu0
      %v4606 = vadd.f32 %v4413, %v4605
      %v4607 = vpop.f32.mrf.mxu0
      %v4608 = vadd.f32 %v4415, %v4607
      %v4609 = vpop.f32.mrf.mxu0
      %v4610 = vadd.f32 %v4417, %v4609
      %4611 = vmatprep.mubr.bf16.mxu0 0
      %4612 = vmatmul.mubr.bf16.gmra.mxu0 %v1592
      %v4613 = vpop.f32.mrf.mxu0
      %v4614 = vadd.f32 %v4421, %v4613
      %v4615 = vpop.f32.mrf.mxu0
      %v4616 = vadd.f32 %v4423, %v4615
      %v4617 = vpop.f32.mrf.mxu0
      %v4618 = vadd.f32 %v4425, %v4617
      %v4619 = vpop.f32.mrf.mxu0
      %v4620 = vadd.f32 %v4427, %v4619
      %4621 = vmatprep.mubr.bf16.mxu0 0
      %4622 = vmatmul.mubr.bf16.gmra.mxu0 %v1607
      %v4623 = vpop.f32.mrf.mxu0
      %v4624 = vadd.f32 %v4431, %v4623
      %v4625 = vpop.f32.mrf.mxu0
      %v4626 = vadd.f32 %v4433, %v4625
      %v4627 = vpop.f32.mrf.mxu0
      %v4628 = vadd.f32 %v4435, %v4627
      %v4629 = vpop.f32.mrf.mxu0
      %v4630 = vadd.f32 %v4437, %v4629
      %4631 = vmatprep.mubr.bf16.mxu0 0
      %4632 = vmatmul.mubr.bf16.gmra.mxu0 %v1622
      %v4633 = vpop.f32.mrf.mxu0
      %v4634 = vadd.f32 %v4441, %v4633
      %v4635 = vpop.f32.mrf.mxu0
      %v4636 = vadd.f32 %v4443, %v4635
      %v4637 = vpop.f32.mrf.mxu0
      %v4638 = vadd.f32 %v4445, %v4637
      %v4639 = vpop.f32.mrf.mxu0
      %v4640 = vadd.f32 %v4447, %v4639
      %4641 = vmatprep.mubr.bf16.mxu0 0
      %4642 = vmatmul.mubr.bf16.gmra.mxu0 %v1637
      %v4643 = vpop.f32.mrf.mxu0
      %v4644 = vadd.f32 %v4451, %v4643
      %v4645 = vpop.f32.mrf.mxu0
      %v4646 = vadd.f32 %v4453, %v4645
      %v4647 = vpop.f32.mrf.mxu0
      %v4648 = vadd.f32 %v4455, %v4647
      %v4649 = vpop.f32.mrf.mxu0
      %v4650 = vadd.f32 %v4457, %v4649
      %4651 = vmatprep.mubr.bf16.mxu0 0
      %4652 = vmatmul.mubr.bf16.gmra.mxu0 %v1652
      %v4653 = vpop.f32.mrf.mxu0
      %v4654 = vadd.f32 %v4461, %v4653
      %v4655 = vpop.f32.mrf.mxu0
      %v4656 = vadd.f32 %v4463, %v4655
      %v4657 = vpop.f32.mrf.mxu0
      %v4658 = vadd.f32 %v4465, %v4657
      %v4659 = vpop.f32.mrf.mxu0
      %v4660 = vadd.f32 %v4467, %v4659
      %4661 = vmatprep.mubr.bf16.mxu0 0
      %4662 = vmatmul.mubr.bf16.gmra.mxu0 %v1667
      %v4663 = vpop.f32.mrf.mxu0
      %v4664 = vadd.f32 %v4471, %v4663
      %v4665 = vpop.f32.mrf.mxu0
      %v4666 = vadd.f32 %v4473, %v4665
      %v4667 = vpop.f32.mrf.mxu0
      %v4668 = vadd.f32 %v4475, %v4667
      %v4669 = vpop.f32.mrf.mxu0
      %v4670 = vadd.f32 %v4477, %v4669
      %4671 = vmatprep.mubr.bf16.mxu0 0
      %4672 = vmatmul.mubr.bf16.gmra.mxu0 %v1682
      %v4673 = vpop.f32.mrf.mxu0
      %v4674 = vadd.f32 %v4481, %v4673
      %v4675 = vpop.f32.mrf.mxu0
      %v4676 = vadd.f32 %v4483, %v4675
      %v4677 = vpop.f32.mrf.mxu0
      %v4678 = vadd.f32 %v4485, %v4677
      %v4679 = vpop.f32.mrf.mxu0
      %v4680 = vadd.f32 %v4487, %v4679
      %4681 = vmatprep.mubr.bf16.mxu0 0
      %4682 = vmatmul.mubr.bf16.gmra.mxu0 %v1697
      %v4683 = vpop.f32.mrf.mxu0
      %v4684 = vadd.f32 %v4491, %v4683
      %v4685 = vpop.f32.mrf.mxu0
      %v4686 = vadd.f32 %v4493, %v4685
      %v4687 = vpop.f32.mrf.mxu0
      %v4688 = vadd.f32 %v4495, %v4687
      %v4689 = vpop.f32.mrf.mxu0
      %v4690 = vadd.f32 %v4497, %v4689
      %4691 = vmatprep.mubr.bf16.mxu0 0
      %4692 = vmatmul.mubr.bf16.gmra.mxu0 %v1712
      %v4693 = vpop.f32.mrf.mxu0
      %v4694 = vadd.f32 %v4501, %v4693
      %v4695 = vpop.f32.mrf.mxu0
      %v4696 = vadd.f32 %v4503, %v4695
      %v4697 = vpop.f32.mrf.mxu0
      %v4698 = vadd.f32 %v4505, %v4697
      %v4699 = vpop.f32.mrf.mxu0
      %v4700 = vadd.f32 %v4507, %v4699
      %4701 = vmatprep.mubr.bf16.mxu0 0
      %4702 = vmatmul.mubr.bf16.gmra.mxu0 %v1727
      %v4703 = vpop.f32.mrf.mxu0
      %v4704 = vadd.f32 %v4511, %v4703
      %v4705 = vpop.f32.mrf.mxu0
      %v4706 = vadd.f32 %v4513, %v4705
      %v4707 = vpop.f32.mrf.mxu0
      %v4708 = vadd.f32 %v4515, %v4707
      %v4709 = vpop.f32.mrf.mxu0
      %v4710 = vadd.f32 %v4517, %v4709
      %4711 = vdwg.mxu0
      %v4712 = vmax.f32 %v4554, 0.0
      %v4713 = vmax.f32 %v4556, 0.0
      %v4714 = vmax.f32 %v4558, 0.0
      %v4715 = vmax.f32 %v4560, 0.0
      %v4716 = vmax.f32 %v4564, 0.0
      %v4717 = vmax.f32 %v4566, 0.0
      %v4718 = vmax.f32 %v4568, 0.0
      %v4719 = vmax.f32 %v4570, 0.0
      %v4720 = vmax.f32 %v4574, 0.0
      %v4721 = vmax.f32 %v4576, 0.0
      %v4722 = vmax.f32 %v4578, 0.0
      %v4723 = vmax.f32 %v4580, 0.0
      %v4724 = vmax.f32 %v4584, 0.0
      %v4725 = vmax.f32 %v4586, 0.0
      %v4726 = vmax.f32 %v4588, 0.0
      %v4727 = vmax.f32 %v4590, 0.0
      %v4728 = vmax.f32 %v4594, 0.0
      %v4729 = vmax.f32 %v4596, 0.0
      %v4730 = vmax.f32 %v4598, 0.0
      %v4731 = vmax.f32 %v4600, 0.0
      %v4732 = vmax.f32 %v4604, 0.0
      %v4733 = vmax.f32 %v4606, 0.0
      %v4734 = vmax.f32 %v4608, 0.0
      %v4735 = vmax.f32 %v4610, 0.0
      %v4736 = vmax.f32 %v4614, 0.0
      %v4737 = vmax.f32 %v4616, 0.0
      %v4738 = vmax.f32 %v4618, 0.0
      %v4739 = vmax.f32 %v4620, 0.0
      %v4740 = vmax.f32 %v4624, 0.0
      %v4741 = vmax.f32 %v4626, 0.0
      %v4742 = vmax.f32 %v4628, 0.0
      %v4743 = vmax.f32 %v4630, 0.0
      %v4744 = vmax.f32 %v4634, 0.0
      %v4745 = vmax.f32 %v4636, 0.0
      %v4746 = vmax.f32 %v4638, 0.0
      %v4747 = vmax.f32 %v4640, 0.0
      %v4748 = vmax.f32 %v4644, 0.0
      %v4749 = vmax.f32 %v4646, 0.0
      %v4750 = vmax.f32 %v4648, 0.0
      %v4751 = vmax.f32 %v4650, 0.0
      %v4752 = vmax.f32 %v4654, 0.0
      %v4753 = vmax.f32 %v4656, 0.0
      %v4754 = vmax.f32 %v4658, 0.0
      %v4755 = vmax.f32 %v4660, 0.0
      %v4756 = vmax.f32 %v4664, 0.0
      %v4757 = vmax.f32 %v4666, 0.0
      %v4758 = vmax.f32 %v4668, 0.0
      %v4759 = vmax.f32 %v4670, 0.0
      %v4760 = vmax.f32 %v4674, 0.0
      %v4761 = vmax.f32 %v4676, 0.0
      %v4762 = vmax.f32 %v4678, 0.0
      %v4763 = vmax.f32 %v4680, 0.0
      %v4764 = vmax.f32 %v4684, 0.0
      %v4765 = vmax.f32 %v4686, 0.0
      %v4766 = vmax.f32 %v4688, 0.0
      %v4767 = vmax.f32 %v4690, 0.0
      %v4768 = vmax.f32 %v4694, 0.0
      %v4769 = vmax.f32 %v4696, 0.0
      %v4770 = vmax.f32 %v4698, 0.0
      %v4771 = vmax.f32 %v4700, 0.0
      %v4772 = vmax.f32 %v4704, 0.0
      %v4773 = vmax.f32 %v4706, 0.0
      %v4774 = vmax.f32 %v4708, 0.0
      %v4775 = vmax.f32 %v4710, 0.0
      %v4776 = vpack.c.bf16 %v4714, %v4712
      %v4777 = vpack.c.bf16 %v4715, %v4713
      %v4778 = vpack.c.bf16 %v4718, %v4716
      %v4779 = vpack.c.bf16 %v4719, %v4717
      %v4780 = vpack.c.bf16 %v4722, %v4720
      %v4781 = vpack.c.bf16 %v4723, %v4721
      %v4782 = vpack.c.bf16 %v4726, %v4724
      %v4783 = vpack.c.bf16 %v4727, %v4725
      %v4784 = vpack.c.bf16 %v4730, %v4728
      %v4785 = vpack.c.bf16 %v4731, %v4729
      %v4786 = vpack.c.bf16 %v4734, %v4732
      %v4787 = vpack.c.bf16 %v4735, %v4733
      %v4788 = vpack.c.bf16 %v4738, %v4736
      %v4789 = vpack.c.bf16 %v4739, %v4737
      %v4790 = vpack.c.bf16 %v4742, %v4740
      %v4791 = vpack.c.bf16 %v4743, %v4741
      %v4792 = vpack.c.bf16 %v4746, %v4744
      %v4793 = vpack.c.bf16 %v4747, %v4745
      %v4794 = vpack.c.bf16 %v4750, %v4748
      %v4795 = vpack.c.bf16 %v4751, %v4749
      %v4796 = vpack.c.bf16 %v4754, %v4752
      %v4797 = vpack.c.bf16 %v4755, %v4753
      %v4798 = vpack.c.bf16 %v4758, %v4756
      %v4799 = vpack.c.bf16 %v4759, %v4757
      %v4800 = vpack.c.bf16 %v4762, %v4760
      %v4801 = vpack.c.bf16 %v4763, %v4761
      %v4802 = vpack.c.bf16 %v4766, %v4764
      %v4803 = vpack.c.bf16 %v4767, %v4765
      %v4804 = vpack.c.bf16 %v4770, %v4768
      %v4805 = vpack.c.bf16 %v4771, %v4769
      %v4806 = vpack.c.bf16 %v4774, %v4772
      %v4807 = vpack.c.bf16 %v4775, %v4773
      %v4840 = vunpack.c.l.b16 %v4776
      %v4841 = vunpack.c.l.b16 %v4777
      %v4842 = vunpack.c.h.b16 %v4776
      %v4843 = vunpack.c.h.b16 %v4777
      %v4844 = vunpack.c.l.b16 %v4778
      %v4845 = vunpack.c.l.b16 %v4779
      %v4846 = vunpack.c.h.b16 %v4778
      %v4847 = vunpack.c.h.b16 %v4779
      %v4848 = vunpack.c.l.b16 %v4780
      %v4849 = vunpack.c.l.b16 %v4781
      %v4850 = vunpack.c.h.b16 %v4780
      %v4851 = vunpack.c.h.b16 %v4781
      %v4852 = vunpack.c.l.b16 %v4782
      %v4853 = vunpack.c.l.b16 %v4783
      %v4854 = vunpack.c.h.b16 %v4782
      %v4855 = vunpack.c.h.b16 %v4783
      %v4856 = vunpack.c.l.b16 %v4784
      %v4857 = vunpack.c.l.b16 %v4785
      %v4858 = vunpack.c.h.b16 %v4784
      %v4859 = vunpack.c.h.b16 %v4785
      %v4860 = vunpack.c.l.b16 %v4786
      %v4861 = vunpack.c.l.b16 %v4787
      %v4862 = vunpack.c.h.b16 %v4786
      %v4863 = vunpack.c.h.b16 %v4787
      %v4864 = vunpack.c.l.b16 %v4788
      %v4865 = vunpack.c.l.b16 %v4789
      %v4866 = vunpack.c.h.b16 %v4788
      %v4867 = vunpack.c.h.b16 %v4789
      %v4868 = vunpack.c.l.b16 %v4790
      %v4869 = vunpack.c.l.b16 %v4791
      %v4870 = vunpack.c.h.b16 %v4790
      %v4871 = vunpack.c.h.b16 %v4791
      %v4872 = vunpack.c.l.b16 %v4792
      %v4873 = vunpack.c.l.b16 %v4793
      %v4874 = vunpack.c.h.b16 %v4792
      %v4875 = vunpack.c.h.b16 %v4793
      %v4876 = vunpack.c.l.b16 %v4794
      %v4877 = vunpack.c.l.b16 %v4795
      %v4878 = vunpack.c.h.b16 %v4794
      %v4879 = vunpack.c.h.b16 %v4795
      %v4880 = vunpack.c.l.b16 %v4796
      %v4881 = vunpack.c.l.b16 %v4797
      %v4882 = vunpack.c.h.b16 %v4796
      %v4883 = vunpack.c.h.b16 %v4797
      %v4884 = vunpack.c.l.b16 %v4798
      %v4885 = vunpack.c.l.b16 %v4799
      %v4886 = vunpack.c.h.b16 %v4798
      %v4887 = vunpack.c.h.b16 %v4799
      %v4888 = vunpack.c.l.b16 %v4800
      %v4889 = vunpack.c.l.b16 %v4801
      %v4890 = vunpack.c.h.b16 %v4800
      %v4891 = vunpack.c.h.b16 %v4801
      %v4892 = vunpack.c.l.b16 %v4802
      %v4893 = vunpack.c.l.b16 %v4803
      %v4894 = vunpack.c.h.b16 %v4802
      %v4895 = vunpack.c.h.b16 %v4803
      %v4896 = vunpack.c.l.b16 %v4804
      %v4897 = vunpack.c.l.b16 %v4805
      %v4898 = vunpack.c.h.b16 %v4804
      %v4899 = vunpack.c.h.b16 %v4805
      %v4900 = vunpack.c.l.b16 %v4806
      %v4901 = vunpack.c.l.b16 %v4807
      %v4902 = vunpack.c.h.b16 %v4806
      %v4903 = vunpack.c.h.b16 %v4807
      %v4904 = vpack.c.b16 %v4841, %v4840
      %v4905 = vpack.c.b16 %v4843, %v4842
      %v4906 = vpack.c.b16 %v4845, %v4844
      %v4907 = vpack.c.b16 %v4847, %v4846
      %v4908 = vpack.c.b16 %v4849, %v4848
      %v4909 = vpack.c.b16 %v4851, %v4850
      %v4910 = vpack.c.b16 %v4853, %v4852
      %v4911 = vpack.c.b16 %v4855, %v4854
      %v4912 = vpack.c.b16 %v4857, %v4856
      %v4913 = vpack.c.b16 %v4859, %v4858
      %v4914 = vpack.c.b16 %v4861, %v4860
      %v4915 = vpack.c.b16 %v4863, %v4862
      %v4916 = vpack.c.b16 %v4865, %v4864
      %v4917 = vpack.c.b16 %v4867, %v4866
      %v4918 = vpack.c.b16 %v4869, %v4868
      %v4919 = vpack.c.b16 %v4871, %v4870
      %v4920 = vpack.c.b16 %v4873, %v4872
      %v4921 = vpack.c.b16 %v4875, %v4874
      %v4922 = vpack.c.b16 %v4877, %v4876
      %v4923 = vpack.c.b16 %v4879, %v4878
      %v4924 = vpack.c.b16 %v4881, %v4880
      %v4925 = vpack.c.b16 %v4883, %v4882
      %v4926 = vpack.c.b16 %v4885, %v4884
      %v4927 = vpack.c.b16 %v4887, %v4886
      %v4928 = vpack.c.b16 %v4889, %v4888
      %v4929 = vpack.c.b16 %v4891, %v4890
      %v4930 = vpack.c.b16 %v4893, %v4892
      %v4931 = vpack.c.b16 %v4895, %v4894
      %v4932 = vpack.c.b16 %v4897, %v4896
      %v4933 = vpack.c.b16 %v4899, %v4898
      %v4934 = vpack.c.b16 %v4901, %v4900
      %v4935 = vpack.c.b16 %v4903, %v4902
      %4968 = vst [vmem:[%s240] sm:$0xff] %v4904
      %4969 = vst [vmem:[%s240 + $0x8] sm:$0xff] %v4905
      %4970 = vst [vmem:[%s240 + $0x10] sm:$0xff] %v4906
      %4971 = vst [vmem:[%s240 + $0x18] sm:$0xff] %v4907
      %4972 = vst [vmem:[%s240 + $0x20] sm:$0xff] %v4908
      %4973 = vst [vmem:[%s240 + $0x28] sm:$0xff] %v4909
      %4974 = vst [vmem:[%s240 + $0x30] sm:$0xff] %v4910
      %4975 = vst [vmem:[%s240 + $0x38] sm:$0xff] %v4911
      %4976 = vst [vmem:[%s240 + $0x40] sm:$0xff] %v4912
      %4977 = vst [vmem:[%s240 + $0x48] sm:$0xff] %v4913
      %4978 = vst [vmem:[%s240 + $0x50] sm:$0xff] %v4914
      %4979 = vst [vmem:[%s240 + $0x58] sm:$0xff] %v4915
      %4980 = vst [vmem:[%s240 + $0x60] sm:$0xff] %v4916
      %4981 = vst [vmem:[%s240 + $0x68] sm:$0xff] %v4917
      %4982 = vst [vmem:[%s240 + $0x70] sm:$0xff] %v4918
      %4983 = vst [vmem:[%s240 + $0x78] sm:$0xff] %v4919
      %4984 = vst [vmem:[%s240 + $0x80] sm:$0xff] %v4920
      %4985 = vst [vmem:[%s240 + $0x88] sm:$0xff] %v4921
      %4986 = vst [vmem:[%s240 + $0x90] sm:$0xff] %v4922
      %4987 = vst [vmem:[%s240 + $0x98] sm:$0xff] %v4923
      %4988 = vst [vmem:[%s240 + $0xa0] sm:$0xff] %v4924
      %4989 = vst [vmem:[%s240 + $0xa8] sm:$0xff] %v4925
      %4990 = vst [vmem:[%s240 + $0xb0] sm:$0xff] %v4926
      %4991 = vst [vmem:[%s240 + $0xb8] sm:$0xff] %v4927
      %4992 = vst [vmem:[%s240 + $0xc0] sm:$0xff] %v4928
      %4993 = vst [vmem:[%s240 + $0xc8] sm:$0xff] %v4929
      %4994 = vst [vmem:[%s240 + $0xd0] sm:$0xff] %v4930
      %4995 = vst [vmem:[%s240 + $0xd8] sm:$0xff] %v4931
      %4996 = vst [vmem:[%s240 + $0xe0] sm:$0xff] %v4932
      %4997 = vst [vmem:[%s240 + $0xe8] sm:$0xff] %v4933
      %4998 = vst [vmem:[%s240 + $0xf0] sm:$0xff] %v4934
      %4999 = vst [vmem:[%s240 + $0xf8] sm:$0xff] %v4935
      %s5000 = smul.u32 32, %s18
      %s5001 = smul.u32 2, %s19
      %p5002 = scmp.lt.s32.totalorder %s5000, 63
      %s5003 = scalar_select %p5002, %s5000, 63
      %p5004 = scmp.lt.s32.totalorder %s5001, 1
      %s5005 = scalar_select %p5004, %s5001, 1
      %s5006 = smul.addr %s5003, 2
      %s5007 = sadd.s32 %s5005, %s5006
      %s5008 = smul.addr %s5007, 4
      %s5009 = scalar_lea.vmem %s3, %s5008
      // Predicated region
      $region33: #{forward.8} parent=31 // pred_check
        %p5010 = pneg %p124
      $region34: #{forward.8} parent=31 // pred_check_branch
        %5012 = sbr.rel (%p5010) target = $region36
      $region35: #{forward.8} parent=31 // pred_region
        %s5013 = smul.u32 32, %s18
        %s5014 = smul.u32 2, %s19
      $region36: #{forward.8} parent=31 // pred_fallthru
        _
    $region32: #{forward.8} parent=5 // pred_fallthru
      _
    %p5015 = scmp.le.s32.totalorder 2, %s9
    // Predicated region
    $region37: #{forward.8} parent=5 // pred_check
      %p5016 = pneg %p5015
    $region38: #{forward.8} parent=5 // pred_check_branch
      %5018 = sbr.rel (%p5016) target = $region40
    $region39: #{forward.8} parent=5 // pred_region
      %s5019 = ssub.s32 %s9, 2
      // Predicated region
      $region41: #{forward.8} parent=39 // pred_check
        %p5020 = pneg %p130
      $region42: #{forward.8} parent=39 // pred_check_branch
        %5022 = sbr.rel (%p5020) target = $region44
      $region43: #{forward.8} parent=39 // pred_region
        %s5023 = smul.u32 32, %s20
        %s5024 = smul.u32 2, %s21
        %p5025 = scmp.lt.s32.totalorder %s5023, 63
        %s5026 = scalar_select %p5025, %s5023, 63
        %p5027 = scmp.lt.s32.totalorder %s5024, 1
        %s5028 = scalar_select %p5027, %s5024, 1
        %s5029 = smul.addr %s5026, 2
        %s5030 = sadd.s32 %s5028, %s5029
        %s5031 = smul.addr %s5030, 4
        %s5032 = scalar_lea.vmem %s3, %s5031
      $region44: #{forward.8} parent=39 // pred_fallthru
        _
    $region40: #{forward.8} parent=5 // pred_fallthru
      _
  $region6: #{forward.8} parent=0 // loop_footer
    %s13 = sadd.s32 1, %s9
  $region7: #{forward.8} parent=0 // loop_footer_branch
    %8 = sbr.rel target = $region3
  $region8: #{forward.8} parent=0 // loop_exit
    _

// kernel: forward.9
$region0: #{forward.9}
  #allocation0 [shape = 'u32[]', space=smem, size = 0x4, offset = 0x4, fixed_abs, tag = 'smem constant byte address 0x4 - core index']
  #allocation1 [shape = 'u32[144,128]{1,0:T(1,128)}', space=vmem, size = 0x12000, scoped, tag = 'internal scratch']
  %s0 = inlined_call_operand.vmem [shape: bf16[96,1920], index: 0, kind: input, shape index: {}]
  %s1 = inlined_call_operand.vmem [shape: bf16[1920,256], index: 1, kind: input, shape index: {}]
  %s2 = inlined_call_operand.vmem [shape: f32[1,256], index: 2, kind: input, shape index: {}]
  %s3 = inlined_call_operand.vmem [shape: bf16[96,256], index: 3, kind: output, shape index: {}]
  %s4 = sld [smem:[#allocation0]]
  $region22: #{forward.9} parent=0
    _
  %s6 = ssub.s32 1, %s4
  %s7 = scalar_select 0, %s6, %s4
  // Predicated region
  $region2: #{forward.9} parent=0 // pred_check
    _
  $region3: #{forward.9} parent=0 // pred_check_branch
    %9 = sbr.rel (0) target = $region5
  $region4: #{forward.9} parent=0 // pred_region
    _
  $region5: #{forward.9} parent=0 // pred_fallthru
    _
  // Predicated region
  $region6: #{forward.9} parent=0 // pred_check
    _
  $region7: #{forward.9} parent=0 // pred_check_branch
    %11 = sbr.rel (0) target = $region9
  $region8: #{forward.9} parent=0 // pred_region
    _
  $region9: #{forward.9} parent=0 // pred_fallthru
    _
  // Predicated region
  $region10: #{forward.9} parent=0 // pred_check
    _
  $region11: #{forward.9} parent=0 // pred_check_branch
    %13 = sbr.rel (0) target = $region13
  $region12: #{forward.9} parent=0 // pred_region
    _
  $region13: #{forward.9} parent=0 // pred_fallthru
    _
  %v15 = vld [vmem:[%s0] sm:$0xff]
  %v16 = vld [vmem:[%s0 + $0x8] sm:$0xff]
  %v17 = vld [vmem:[%s0 + $0x10] sm:$0xff]
  %v18 = vld [vmem:[%s0 + $0x18] sm:$0xff]
  %v19 = vld [vmem:[%s0 + $0x20] sm:$0xff]
  %v20 = vld [vmem:[%s0 + $0x28] sm:$0xff]
  %v21 = vld [vmem:[%s0 + $0x30] sm:$0xff]
  %v22 = vld [vmem:[%s0 + $0x38] sm:$0xf]
  %v23 = vld [vmem:[%s0 + $0x3c] sm:$0xff]
  %v24 = vld [vmem:[%s0 + $0x44] sm:$0xff]
  %v25 = vld [vmem:[%s0 + $0x4c] sm:$0xff]
  %v26 = vld [vmem:[%s0 + $0x54] sm:$0xff]
  %v27 = vld [vmem:[%s0 + $0x5c] sm:$0xff]
  %v28 = vld [vmem:[%s0 + $0x64] sm:$0xff]
  %v29 = vld [vmem:[%s0 + $0x6c] sm:$0xff]
  %v30 = vld [vmem:[%s0 + $0x74] sm:$0xf]
  %v31 = vld [vmem:[%s0 + $0x78] sm:$0xff]
  %v32 = vld [vmem:[%s0 + $0x80] sm:$0xff]
  %v33 = vld [vmem:[%s0 + $0x88] sm:$0xff]
  %v34 = vld [vmem:[%s0 + $0x90] sm:$0xff]
  %v35 = vld [vmem:[%s0 + $0x98] sm:$0xff]
  %v36 = vld [vmem:[%s0 + $0xa0] sm:$0xff]
  %v37 = vld [vmem:[%s0 + $0xa8] sm:$0xff]
  %v38 = vld [vmem:[%s0 + $0xb0] sm:$0xf]
  %v39 = vld [vmem:[%s0 + $0xb4] sm:$0xff]
  %v40 = vld [vmem:[%s0 + $0xbc] sm:$0xff]
  %v41 = vld [vmem:[%s0 + $0xc4] sm:$0xff]
  %v42 = vld [vmem:[%s0 + $0xcc] sm:$0xff]
  %v43 = vld [vmem:[%s0 + $0xd4] sm:$0xff]
  %v44 = vld [vmem:[%s0 + $0xdc] sm:$0xff]
  %v45 = vld [vmem:[%s0 + $0xe4] sm:$0xff]
  %v46 = vld [vmem:[%s0 + $0xec] sm:$0xf]
  %v47 = vld [vmem:[%s0 + $0xf0] sm:$0xff]
  %v48 = vld [vmem:[%s0 + $0xf8] sm:$0xff]
  %v49 = vld [vmem:[%s0 + $0x100] sm:$0xff]
  %v50 = vld [vmem:[%s0 + $0x108] sm:$0xff]
  %v51 = vld [vmem:[%s0 + $0x110] sm:$0xff]
  %v52 = vld [vmem:[%s0 + $0x118] sm:$0xff]
  %v53 = vld [vmem:[%s0 + $0x120] sm:$0xff]
  %v54 = vld [vmem:[%s0 + $0x128] sm:$0xf]
  %v55 = vld [vmem:[%s0 + $0x12c] sm:$0xff]
  %v56 = vld [vmem:[%s0 + $0x134] sm:$0xff]
  %v57 = vld [vmem:[%s0 + $0x13c] sm:$0xff]
  %v58 = vld [vmem:[%s0 + $0x144] sm:$0xff]
  %v59 = vld [vmem:[%s0 + $0x14c] sm:$0xff]
  %v60 = vld [vmem:[%s0 + $0x154] sm:$0xff]
  %v61 = vld [vmem:[%s0 + $0x15c] sm:$0xff]
  %v62 = vld [vmem:[%s0 + $0x164] sm:$0xf]
  %v63 = vld [vmem:[%s0 + $0x168] sm:$0xff]
  %v64 = vld [vmem:[%s0 + $0x170] sm:$0xff]
  %v65 = vld [vmem:[%s0 + $0x178] sm:$0xff]
  %v66 = vld [vmem:[%s0 + $0x180] sm:$0xff]
  %v67 = vld [vmem:[%s0 + $0x188] sm:$0xff]
  %v68 = vld [vmem:[%s0 + $0x190] sm:$0xff]
  %v69 = vld [vmem:[%s0 + $0x198] sm:$0xff]
  %v70 = vld [vmem:[%s0 + $0x1a0] sm:$0xf]
  %v71 = vld [vmem:[%s0 + $0x1a4] sm:$0xff]
  %v72 = vld [vmem:[%s0 + $0x1ac] sm:$0xff]
  %v73 = vld [vmem:[%s0 + $0x1b4] sm:$0xff]
  %v74 = vld [vmem:[%s0 + $0x1bc] sm:$0xff]
  %v75 = vld [vmem:[%s0 + $0x1c4] sm:$0xff]
  %v76 = vld [vmem:[%s0 + $0x1cc] sm:$0xff]
  %v77 = vld [vmem:[%s0 + $0x1d4] sm:$0xff]
  %v78 = vld [vmem:[%s0 + $0x1dc] sm:$0xf]
  %v79 = vld [vmem:[%s0 + $0x1e0] sm:$0xff]
  %v80 = vld [vmem:[%s0 + $0x1e8] sm:$0xff]
  %v81 = vld [vmem:[%s0 + $0x1f0] sm:$0xff]
  %v82 = vld [vmem:[%s0 + $0x1f8] sm:$0xff]
  %v83 = vld [vmem:[%s0 + $0x200] sm:$0xff]
  %v84 = vld [vmem:[%s0 + $0x208] sm:$0xff]
  %v85 = vld [vmem:[%s0 + $0x210] sm:$0xff]
  %v86 = vld [vmem:[%s0 + $0x218] sm:$0xf]
  %v87 = vld [vmem:[%s0 + $0x21c] sm:$0xff]
  %v88 = vld [vmem:[%s0 + $0x224] sm:$0xff]
  %v89 = vld [vmem:[%s0 + $0x22c] sm:$0xff]
  %v90 = vld [vmem:[%s0 + $0x234] sm:$0xff]
  %v91 = vld [vmem:[%s0 + $0x23c] sm:$0xff]
  %v92 = vld [vmem:[%s0 + $0x244] sm:$0xff]
  %v93 = vld [vmem:[%s0 + $0x24c] sm:$0xff]
  %v94 = vld [vmem:[%s0 + $0x254] sm:$0xf]
  %v95 = vld [vmem:[%s0 + $0x258] sm:$0xff]
  %v96 = vld [vmem:[%s0 + $0x260] sm:$0xff]
  %v97 = vld [vmem:[%s0 + $0x268] sm:$0xff]
  %v98 = vld [vmem:[%s0 + $0x270] sm:$0xff]
  %v99 = vld [vmem:[%s0 + $0x278] sm:$0xff]
  %v100 = vld [vmem:[%s0 + $0x280] sm:$0xff]
  %v101 = vld [vmem:[%s0 + $0x288] sm:$0xff]
  %v102 = vld [vmem:[%s0 + $0x290] sm:$0xf]
  %v103 = vld [vmem:[%s0 + $0x294] sm:$0xff]
  %v104 = vld [vmem:[%s0 + $0x29c] sm:$0xff]
  %v105 = vld [vmem:[%s0 + $0x2a4] sm:$0xff]
  %v106 = vld [vmem:[%s0 + $0x2ac] sm:$0xff]
  %v107 = vld [vmem:[%s0 + $0x2b4] sm:$0xff]
  %v108 = vld [vmem:[%s0 + $0x2bc] sm:$0xff]
  %v109 = vld [vmem:[%s0 + $0x2c4] sm:$0xff]
  %v110 = vld [vmem:[%s0 + $0x2cc] sm:$0xf]
  %v111 = vld [vmem:[%s1] sm:$0xff]
  %v112 = vld [vmem:[%s1 + $0x8] sm:$0xff]
  %v113 = vld [vmem:[%s1 + $0x10] sm:$0xff]
  %v114 = vld [vmem:[%s1 + $0x18] sm:$0xff]
  %v115 = vld [vmem:[%s1 + $0x20] sm:$0xff]
  %v116 = vld [vmem:[%s1 + $0x28] sm:$0xff]
  %v117 = vld [vmem:[%s1 + $0x30] sm:$0xff]
  %v118 = vld [vmem:[%s1 + $0x38] sm:$0xff]
  %v119 = vld [vmem:[%s1 + $0x40] sm:$0xff]
  %v120 = vld [vmem:[%s1 + $0x48] sm:$0xff]
  %v121 = vld [vmem:[%s1 + $0x50] sm:$0xff]
  %v122 = vld [vmem:[%s1 + $0x58] sm:$0xff]
  %v123 = vld [vmem:[%s1 + $0x60] sm:$0xff]
  %v124 = vld [vmem:[%s1 + $0x68] sm:$0xff]
  %v125 = vld [vmem:[%s1 + $0x70] sm:$0xff]
  %v126 = vld [vmem:[%s1 + $0x78] sm:$0xff]
  %v127 = vld [vmem:[%s1 + $0x80] sm:$0xff]
  %v128 = vld [vmem:[%s1 + $0x88] sm:$0xff]
  %v129 = vld [vmem:[%s1 + $0x90] sm:$0xff]
  %v130 = vld [vmem:[%s1 + $0x98] sm:$0xff]
  %v131 = vld [vmem:[%s1 + $0xa0] sm:$0xff]
  %v132 = vld [vmem:[%s1 + $0xa8] sm:$0xff]
  %v133 = vld [vmem:[%s1 + $0xb0] sm:$0xff]
  %v134 = vld [vmem:[%s1 + $0xb8] sm:$0xff]
  %v135 = vld [vmem:[%s1 + $0xc0] sm:$0xff]
  %v136 = vld [vmem:[%s1 + $0xc8] sm:$0xff]
  %v137 = vld [vmem:[%s1 + $0xd0] sm:$0xff]
  %v138 = vld [vmem:[%s1 + $0xd8] sm:$0xff]
  %v139 = vld [vmem:[%s1 + $0xe0] sm:$0xff]
  %v140 = vld [vmem:[%s1 + $0xe8] sm:$0xff]
  %v141 = vld [vmem:[%s1 + $0xf0] sm:$0xff]
  %v142 = vld [vmem:[%s1 + $0xf8] sm:$0xff]
  %v143 = vld [vmem:[%s1 + $0x100] sm:$0xff]
  %v144 = vld [vmem:[%s1 + $0x108] sm:$0xff]
  %v145 = vld [vmem:[%s1 + $0x110] sm:$0xff]
  %v146 = vld [vmem:[%s1 + $0x118] sm:$0xff]
  %v147 = vld [vmem:[%s1 + $0x120] sm:$0xff]
  %v148 = vld [vmem:[%s1 + $0x128] sm:$0xff]
  %v149 = vld [vmem:[%s1 + $0x130] sm:$0xff]
  %v150 = vld [vmem:[%s1 + $0x138] sm:$0xff]
  %v151 = vld [vmem:[%s1 + $0x140] sm:$0xff]
  %v152 = vld [vmem:[%s1 + $0x148] sm:$0xff]
  %v153 = vld [vmem:[%s1 + $0x150] sm:$0xff]
  %v154 = vld [vmem:[%s1 + $0x158] sm:$0xff]
  %v155 = vld [vmem:[%s1 + $0x160] sm:$0xff]
  %v156 = vld [vmem:[%s1 + $0x168] sm:$0xff]
  %v157 = vld [vmem:[%s1 + $0x170] sm:$0xff]
  %v158 = vld [vmem:[%s1 + $0x178] sm:$0xff]
  %v159 = vld [vmem:[%s1 + $0x180] sm:$0xff]
  %v160 = vld [vmem:[%s1 + $0x188] sm:$0xff]
  %v161 = vld [vmem:[%s1 + $0x190] sm:$0xff]
  %v162 = vld [vmem:[%s1 + $0x198] sm:$0xff]
  %v163 = vld [vmem:[%s1 + $0x1a0] sm:$0xff]
  %v164 = vld [vmem:[%s1 + $0x1a8] sm:$0xff]
  %v165 = vld [vmem:[%s1 + $0x1b0] sm:$0xff]
  %v166 = vld [vmem:[%s1 + $0x1b8] sm:$0xff]
  %v167 = vld [vmem:[%s1 + $0x1c0] sm:$0xff]
  %v168 = vld [vmem:[%s1 + $0x1c8] sm:$0xff]
  %v169 = vld [vmem:[%s1 + $0x1d0] sm:$0xff]
  %v170 = vld [vmem:[%s1 + $0x1d8] sm:$0xff]
  %v171 = vld [vmem:[%s1 + $0x1e0] sm:$0xff]
  %v172 = vld [vmem:[%s1 + $0x1e8] sm:$0xff]
  %v173 = vld [vmem:[%s1 + $0x1f0] sm:$0xff]
  %v174 = vld [vmem:[%s1 + $0x1f8] sm:$0xff]
  %v175 = vld [vmem:[%s1 + $0x200] sm:$0xff]
  %v176 = vld [vmem:[%s1 + $0x208] sm:$0xff]
  %v177 = vld [vmem:[%s1 + $0x210] sm:$0xff]
  %v178 = vld [vmem:[%s1 + $0x218] sm:$0xff]
  %v179 = vld [vmem:[%s1 + $0x220] sm:$0xff]
  %v180 = vld [vmem:[%s1 + $0x228] sm:$0xff]
  %v181 = vld [vmem:[%s1 + $0x230] sm:$0xff]
  %v182 = vld [vmem:[%s1 + $0x238] sm:$0xff]
  %v183 = vld [vmem:[%s1 + $0x240] sm:$0xff]
  %v184 = vld [vmem:[%s1 + $0x248] sm:$0xff]
  %v185 = vld [vmem:[%s1 + $0x250] sm:$0xff]
  %v186 = vld [vmem:[%s1 + $0x258] sm:$0xff]
  %v187 = vld [vmem:[%s1 + $0x260] sm:$0xff]
  %v188 = vld [vmem:[%s1 + $0x268] sm:$0xff]
  %v189 = vld [vmem:[%s1 + $0x270] sm:$0xff]
  %v190 = vld [vmem:[%s1 + $0x278] sm:$0xff]
  %v191 = vld [vmem:[%s1 + $0x280] sm:$0xff]
  %v192 = vld [vmem:[%s1 + $0x288] sm:$0xff]
  %v193 = vld [vmem:[%s1 + $0x290] sm:$0xff]
  %v194 = vld [vmem:[%s1 + $0x298] sm:$0xff]
  %v195 = vld [vmem:[%s1 + $0x2a0] sm:$0xff]
  %v196 = vld [vmem:[%s1 + $0x2a8] sm:$0xff]
  %v197 = vld [vmem:[%s1 + $0x2b0] sm:$0xff]
  %v198 = vld [vmem:[%s1 + $0x2b8] sm:$0xff]
  %v199 = vld [vmem:[%s1 + $0x2c0] sm:$0xff]
  %v200 = vld [vmem:[%s1 + $0x2c8] sm:$0xff]
  %v201 = vld [vmem:[%s1 + $0x2d0] sm:$0xff]
  %v202 = vld [vmem:[%s1 + $0x2d8] sm:$0xff]
  %v203 = vld [vmem:[%s1 + $0x2e0] sm:$0xff]
  %v204 = vld [vmem:[%s1 + $0x2e8] sm:$0xff]
  %v205 = vld [vmem:[%s1 + $0x2f0] sm:$0xff]
  %v206 = vld [vmem:[%s1 + $0x2f8] sm:$0xff]
  %v207 = vld [vmem:[%s1 + $0x300] sm:$0xff]
  %v208 = vld [vmem:[%s1 + $0x308] sm:$0xff]
  %v209 = vld [vmem:[%s1 + $0x310] sm:$0xff]
  %v210 = vld [vmem:[%s1 + $0x318] sm:$0xff]
  %v211 = vld [vmem:[%s1 + $0x320] sm:$0xff]
  %v212 = vld [vmem:[%s1 + $0x328] sm:$0xff]
  %v213 = vld [vmem:[%s1 + $0x330] sm:$0xff]
  %v214 = vld [vmem:[%s1 + $0x338] sm:$0xff]
  %v215 = vld [vmem:[%s1 + $0x340] sm:$0xff]
  %v216 = vld [vmem:[%s1 + $0x348] sm:$0xff]
  %v217 = vld [vmem:[%s1 + $0x350] sm:$0xff]
  %v218 = vld [vmem:[%s1 + $0x358] sm:$0xff]
  %v219 = vld [vmem:[%s1 + $0x360] sm:$0xff]
  %v220 = vld [vmem:[%s1 + $0x368] sm:$0xff]
  %v221 = vld [vmem:[%s1 + $0x370] sm:$0xff]
  %v222 = vld [vmem:[%s1 + $0x378] sm:$0xff]
  %v223 = vld [vmem:[%s1 + $0x380] sm:$0xff]
  %v224 = vld [vmem:[%s1 + $0x388] sm:$0xff]
  %v225 = vld [vmem:[%s1 + $0x390] sm:$0xff]
  %v226 = vld [vmem:[%s1 + $0x398] sm:$0xff]
  %v227 = vld [vmem:[%s1 + $0x3a0] sm:$0xff]
  %v228 = vld [vmem:[%s1 + $0x3a8] sm:$0xff]
  %v229 = vld [vmem:[%s1 + $0x3b0] sm:$0xff]
  %v230 = vld [vmem:[%s1 + $0x3b8] sm:$0xff]
  %v231 = vld [vmem:[%s1 + $0x3c0] sm:$0xff]
  %v232 = vld [vmem:[%s1 + $0x3c8] sm:$0xff]
  %v233 = vld [vmem:[%s1 + $0x3d0] sm:$0xff]
  %v234 = vld [vmem:[%s1 + $0x3d8] sm:$0xff]
  %v235 = vld [vmem:[%s1 + $0x3e0] sm:$0xff]
  %v236 = vld [vmem:[%s1 + $0x3e8] sm:$0xff]
  %v237 = vld [vmem:[%s1 + $0x3f0] sm:$0xff]
  %v238 = vld [vmem:[%s1 + $0x3f8] sm:$0xff]
  %v239 = vld [vmem:[%s1 + $0x400] sm:$0xff]
  %v240 = vld [vmem:[%s1 + $0x408] sm:$0xff]
  %v241 = vld [vmem:[%s1 + $0x410] sm:$0xff]
  %v242 = vld [vmem:[%s1 + $0x418] sm:$0xff]
  %v243 = vld [vmem:[%s1 + $0x420] sm:$0xff]
  %v244 = vld [vmem:[%s1 + $0x428] sm:$0xff]
  %v245 = vld [vmem:[%s1 + $0x430] sm:$0xff]
  %v246 = vld [vmem:[%s1 + $0x438] sm:$0xff]
  %v247 = vld [vmem:[%s1 + $0x440] sm:$0xff]
  %v248 = vld [vmem:[%s1 + $0x448] sm:$0xff]
  %v249 = vld [vmem:[%s1 + $0x450] sm:$0xff]
  %v250 = vld [vmem:[%s1 + $0x458] sm:$0xff]
  %v251 = vld [vmem:[%s1 + $0x460] sm:$0xff]
  %v252 = vld [vmem:[%s1 + $0x468] sm:$0xff]
  %v253 = vld [vmem:[%s1 + $0x470] sm:$0xff]
  %v254 = vld [vmem:[%s1 + $0x478] sm:$0xff]
  %v255 = vld [vmem:[%s1 + $0x480] sm:$0xff]
  %v256 = vld [vmem:[%s1 + $0x488] sm:$0xff]
  %v257 = vld [vmem:[%s1 + $0x490] sm:$0xff]
  %v258 = vld [vmem:[%s1 + $0x498] sm:$0xff]
  %v259 = vld [vmem:[%s1 + $0x4a0] sm:$0xff]
  %v260 = vld [vmem:[%s1 + $0x4a8] sm:$0xff]
  %v261 = vld [vmem:[%s1 + $0x4b0] sm:$0xff]
  %v262 = vld [vmem:[%s1 + $0x4b8] sm:$0xff]
  %v263 = vld [vmem:[%s1 + $0x4c0] sm:$0xff]
  %v264 = vld [vmem:[%s1 + $0x4c8] sm:$0xff]
  %v265 = vld [vmem:[%s1 + $0x4d0] sm:$0xff]
  %v266 = vld [vmem:[%s1 + $0x4d8] sm:$0xff]
  %v267 = vld [vmem:[%s1 + $0x4e0] sm:$0xff]
  %v268 = vld [vmem:[%s1 + $0x4e8] sm:$0xff]
  %v269 = vld [vmem:[%s1 + $0x4f0] sm:$0xff]
  %v270 = vld [vmem:[%s1 + $0x4f8] sm:$0xff]
  %v271 = vld [vmem:[%s1 + $0x500] sm:$0xff]
  %v272 = vld [vmem:[%s1 + $0x508] sm:$0xff]
  %v273 = vld [vmem:[%s1 + $0x510] sm:$0xff]
  %v274 = vld [vmem:[%s1 + $0x518] sm:$0xff]
  %v275 = vld [vmem:[%s1 + $0x520] sm:$0xff]
  %v276 = vld [vmem:[%s1 + $0x528] sm:$0xff]
  %v277 = vld [vmem:[%s1 + $0x530] sm:$0xff]
  %v278 = vld [vmem:[%s1 + $0x538] sm:$0xff]
  %v279 = vld [vmem:[%s1 + $0x540] sm:$0xff]
  %v280 = vld [vmem:[%s1 + $0x548] sm:$0xff]
  %v281 = vld [vmem:[%s1 + $0x550] sm:$0xff]
  %v282 = vld [vmem:[%s1 + $0x558] sm:$0xff]
  %v283 = vld [vmem:[%s1 + $0x560] sm:$0xff]
  %v284 = vld [vmem:[%s1 + $0x568] sm:$0xff]
  %v285 = vld [vmem:[%s1 + $0x570] sm:$0xff]
  %v286 = vld [vmem:[%s1 + $0x578] sm:$0xff]
  %v287 = vld [vmem:[%s1 + $0x580] sm:$0xff]
  %v288 = vld [vmem:[%s1 + $0x588] sm:$0xff]
  %v289 = vld [vmem:[%s1 + $0x590] sm:$0xff]
  %v290 = vld [vmem:[%s1 + $0x598] sm:$0xff]
  %v291 = vld [vmem:[%s1 + $0x5a0] sm:$0xff]
  %v292 = vld [vmem:[%s1 + $0x5a8] sm:$0xff]
  %v293 = vld [vmem:[%s1 + $0x5b0] sm:$0xff]
  %v294 = vld [vmem:[%s1 + $0x5b8] sm:$0xff]
  %v295 = vld [vmem:[%s1 + $0x5c0] sm:$0xff]
  %v296 = vld [vmem:[%s1 + $0x5c8] sm:$0xff]
  %v297 = vld [vmem:[%s1 + $0x5d0] sm:$0xff]
  %v298 = vld [vmem:[%s1 + $0x5d8] sm:$0xff]
  %v299 = vld [vmem:[%s1 + $0x5e0] sm:$0xff]
  %v300 = vld [vmem:[%s1 + $0x5e8] sm:$0xff]
  %v301 = vld [vmem:[%s1 + $0x5f0] sm:$0xff]
  %v302 = vld [vmem:[%s1 + $0x5f8] sm:$0xff]
  %v303 = vld [vmem:[%s1 + $0x600] sm:$0xff]
  %v304 = vld [vmem:[%s1 + $0x608] sm:$0xff]
  %v305 = vld [vmem:[%s1 + $0x610] sm:$0xff]
  %v306 = vld [vmem:[%s1 + $0x618] sm:$0xff]
  %v307 = vld [vmem:[%s1 + $0x620] sm:$0xff]
  %v308 = vld [vmem:[%s1 + $0x628] sm:$0xff]
  %v309 = vld [vmem:[%s1 + $0x630] sm:$0xff]
  %v310 = vld [vmem:[%s1 + $0x638] sm:$0xff]
  %v311 = vld [vmem:[%s1 + $0x640] sm:$0xff]
  %v312 = vld [vmem:[%s1 + $0x648] sm:$0xff]
  %v313 = vld [vmem:[%s1 + $0x650] sm:$0xff]
  %v314 = vld [vmem:[%s1 + $0x658] sm:$0xff]
  %v315 = vld [vmem:[%s1 + $0x660] sm:$0xff]
  %v316 = vld [vmem:[%s1 + $0x668] sm:$0xff]
  %v317 = vld [vmem:[%s1 + $0x670] sm:$0xff]
  %v318 = vld [vmem:[%s1 + $0x678] sm:$0xff]
  %v319 = vld [vmem:[%s1 + $0x680] sm:$0xff]
  %v320 = vld [vmem:[%s1 + $0x688] sm:$0xff]
  %v321 = vld [vmem:[%s1 + $0x690] sm:$0xff]
  %v322 = vld [vmem:[%s1 + $0x698] sm:$0xff]
  %v323 = vld [vmem:[%s1 + $0x6a0] sm:$0xff]
  %v324 = vld [vmem:[%s1 + $0x6a8] sm:$0xff]
  %v325 = vld [vmem:[%s1 + $0x6b0] sm:$0xff]
  %v326 = vld [vmem:[%s1 + $0x6b8] sm:$0xff]
  %v327 = vld [vmem:[%s1 + $0x6c0] sm:$0xff]
  %v328 = vld [vmem:[%s1 + $0x6c8] sm:$0xff]
  %v329 = vld [vmem:[%s1 + $0x6d0] sm:$0xff]
  %v330 = vld [vmem:[%s1 + $0x6d8] sm:$0xff]
  %v331 = vld [vmem:[%s1 + $0x6e0] sm:$0xff]
  %v332 = vld [vmem:[%s1 + $0x6e8] sm:$0xff]
  %v333 = vld [vmem:[%s1 + $0x6f0] sm:$0xff]
  %v334 = vld [vmem:[%s1 + $0x6f8] sm:$0xff]
  %v335 = vld [vmem:[%s1 + $0x700] sm:$0xff]
  %v336 = vld [vmem:[%s1 + $0x708] sm:$0xff]
  %v337 = vld [vmem:[%s1 + $0x710] sm:$0xff]
  %v338 = vld [vmem:[%s1 + $0x718] sm:$0xff]
  %v339 = vld [vmem:[%s1 + $0x720] sm:$0xff]
  %v340 = vld [vmem:[%s1 + $0x728] sm:$0xff]
  %v341 = vld [vmem:[%s1 + $0x730] sm:$0xff]
  %v342 = vld [vmem:[%s1 + $0x738] sm:$0xff]
  %v343 = vld [vmem:[%s1 + $0x740] sm:$0xff]
  %v344 = vld [vmem:[%s1 + $0x748] sm:$0xff]
  %v345 = vld [vmem:[%s1 + $0x750] sm:$0xff]
  %v346 = vld [vmem:[%s1 + $0x758] sm:$0xff]
  %v347 = vld [vmem:[%s1 + $0x760] sm:$0xff]
  %v348 = vld [vmem:[%s1 + $0x768] sm:$0xff]
  %v349 = vld [vmem:[%s1 + $0x770] sm:$0xff]
  %v350 = vld [vmem:[%s1 + $0x778] sm:$0xff]
  %v351 = vld [vmem:[%s2] sm:$0x3]
  %v353 = vlaneseq
  %v354 = vshrl.u32 %v353, 7
  %v355 = vsub.s32 0, %v354
  %v356 = vrot.slane %v351, %v355
  %v357 = vlaneseq
  %v358 = vshrl.u32 %v357, 7
  %v359 = vsub.s32 1, %v358
  %v360 = vrot.slane %v351, %v359
  %v459 = vunpack.c.l.b16 %v15
  %v460 = vunpack.c.h.b16 %v15
  %v461 = vunpack.c.l.b16 %v16
  %v462 = vunpack.c.h.b16 %v16
  %v463 = vunpack.c.l.b16 %v17
  %v464 = vunpack.c.h.b16 %v17
  %v465 = vunpack.c.l.b16 %v18
  %v466 = vunpack.c.h.b16 %v18
  %v467 = vunpack.c.l.b16 %v19
  %v468 = vunpack.c.h.b16 %v19
  %v469 = vunpack.c.l.b16 %v20
  %v470 = vunpack.c.h.b16 %v20
  %v471 = vunpack.c.l.b16 %v21
  %v472 = vunpack.c.h.b16 %v21
  %v473 = vunpack.c.l.b16 %v22
  %v474 = vunpack.c.l.b16 %v23
  %v475 = vunpack.c.h.b16 %v23
  %v476 = vunpack.c.l.b16 %v24
  %v477 = vunpack.c.h.b16 %v24
  %v478 = vunpack.c.l.b16 %v25
  %v479 = vunpack.c.h.b16 %v25
  %v480 = vunpack.c.l.b16 %v26
  %v481 = vunpack.c.h.b16 %v26
  %v482 = vunpack.c.l.b16 %v27
  %v483 = vunpack.c.h.b16 %v27
  %v484 = vunpack.c.l.b16 %v28
  %v485 = vunpack.c.h.b16 %v28
  %v486 = vunpack.c.l.b16 %v29
  %v487 = vunpack.c.h.b16 %v29
  %v488 = vunpack.c.l.b16 %v30
  %v489 = vunpack.c.l.b16 %v31
  %v490 = vunpack.c.h.b16 %v31
  %v491 = vunpack.c.l.b16 %v32
  %v492 = vunpack.c.h.b16 %v32
  %v493 = vunpack.c.l.b16 %v33
  %v494 = vunpack.c.h.b16 %v33
  %v495 = vunpack.c.l.b16 %v34
  %v496 = vunpack.c.h.b16 %v34
  %v497 = vunpack.c.l.b16 %v35
  %v498 = vunpack.c.h.b16 %v35
  %v499 = vunpack.c.l.b16 %v36
  %v500 = vunpack.c.h.b16 %v36
  %v501 = vunpack.c.l.b16 %v37
  %v502 = vunpack.c.h.b16 %v37
  %v503 = vunpack.c.l.b16 %v38
  %v504 = vunpack.c.l.b16 %v39
  %v505 = vunpack.c.h.b16 %v39
  %v506 = vunpack.c.l.b16 %v40
  %v507 = vunpack.c.h.b16 %v40
  %v508 = vunpack.c.l.b16 %v41
  %v509 = vunpack.c.h.b16 %v41
  %v510 = vunpack.c.l.b16 %v42
  %v511 = vunpack.c.h.b16 %v42
  %v512 = vunpack.c.l.b16 %v43
  %v513 = vunpack.c.h.b16 %v43
  %v514 = vunpack.c.l.b16 %v44
  %v515 = vunpack.c.h.b16 %v44
  %v516 = vunpack.c.l.b16 %v45
  %v517 = vunpack.c.h.b16 %v45
  %v518 = vunpack.c.l.b16 %v46
  %v519 = vunpack.c.l.b16 %v47
  %v520 = vunpack.c.h.b16 %v47
  %v521 = vunpack.c.l.b16 %v48
  %v522 = vunpack.c.h.b16 %v48
  %v523 = vunpack.c.l.b16 %v49
  %v524 = vunpack.c.h.b16 %v49
  %v525 = vunpack.c.l.b16 %v50
  %v526 = vunpack.c.h.b16 %v50
  %v527 = vunpack.c.l.b16 %v51
  %v528 = vunpack.c.h.b16 %v51
  %v529 = vunpack.c.l.b16 %v52
  %v530 = vunpack.c.h.b16 %v52
  %v531 = vunpack.c.l.b16 %v53
  %v532 = vunpack.c.h.b16 %v53
  %v533 = vunpack.c.l.b16 %v54
  %v534 = vunpack.c.l.b16 %v55
  %v535 = vunpack.c.h.b16 %v55
  %v536 = vunpack.c.l.b16 %v56
  %v537 = vunpack.c.h.b16 %v56
  %v538 = vunpack.c.l.b16 %v57
  %v539 = vunpack.c.h.b16 %v57
  %v540 = vunpack.c.l.b16 %v58
  %v541 = vunpack.c.h.b16 %v58
  %v542 = vunpack.c.l.b16 %v59
  %v543 = vunpack.c.h.b16 %v59
  %v544 = vunpack.c.l.b16 %v60
  %v545 = vunpack.c.h.b16 %v60
  %v546 = vunpack.c.l.b16 %v61
  %v547 = vunpack.c.h.b16 %v61
  %v548 = vunpack.c.l.b16 %v62
  %v549 = vunpack.c.l.b16 %v63
  %v550 = vunpack.c.h.b16 %v63
  %v551 = vunpack.c.l.b16 %v64
  %v552 = vunpack.c.h.b16 %v64
  %v553 = vunpack.c.l.b16 %v65
  %v554 = vunpack.c.h.b16 %v65
  %v555 = vunpack.c.l.b16 %v66
  %v556 = vunpack.c.h.b16 %v66
  %v557 = vunpack.c.l.b16 %v67
  %v558 = vunpack.c.h.b16 %v67
  %v559 = vunpack.c.l.b16 %v68
  %v560 = vunpack.c.h.b16 %v68
  %v561 = vunpack.c.l.b16 %v69
  %v562 = vunpack.c.h.b16 %v69
  %v563 = vunpack.c.l.b16 %v70
  %v564 = vunpack.c.l.b16 %v71
  %v565 = vunpack.c.h.b16 %v71
  %v566 = vunpack.c.l.b16 %v72
  %v567 = vunpack.c.h.b16 %v72
  %v568 = vunpack.c.l.b16 %v73
  %v569 = vunpack.c.h.b16 %v73
  %v570 = vunpack.c.l.b16 %v74
  %v571 = vunpack.c.h.b16 %v74
  %v572 = vunpack.c.l.b16 %v75
  %v573 = vunpack.c.h.b16 %v75
  %v574 = vunpack.c.l.b16 %v76
  %v575 = vunpack.c.h.b16 %v76
  %v576 = vunpack.c.l.b16 %v77
  %v577 = vunpack.c.h.b16 %v77
  %v578 = vunpack.c.l.b16 %v78
  %v579 = vunpack.c.l.b16 %v79
  %v580 = vunpack.c.h.b16 %v79
  %v581 = vunpack.c.l.b16 %v80
  %v582 = vunpack.c.h.b16 %v80
  %v583 = vunpack.c.l.b16 %v81
  %v584 = vunpack.c.h.b16 %v81
  %v585 = vunpack.c.l.b16 %v82
  %v586 = vunpack.c.h.b16 %v82
  %v587 = vunpack.c.l.b16 %v83
  %v588 = vunpack.c.h.b16 %v83
  %v589 = vunpack.c.l.b16 %v84
  %v590 = vunpack.c.h.b16 %v84
  %v591 = vunpack.c.l.b16 %v85
  %v592 = vunpack.c.h.b16 %v85
  %v593 = vunpack.c.l.b16 %v86
  %v594 = vunpack.c.l.b16 %v87
  %v595 = vunpack.c.h.b16 %v87
  %v596 = vunpack.c.l.b16 %v88
  %v597 = vunpack.c.h.b16 %v88
  %v598 = vunpack.c.l.b16 %v89
  %v599 = vunpack.c.h.b16 %v89
  %v600 = vunpack.c.l.b16 %v90
  %v601 = vunpack.c.h.b16 %v90
  %v602 = vunpack.c.l.b16 %v91
  %v603 = vunpack.c.h.b16 %v91
  %v604 = vunpack.c.l.b16 %v92
  %v605 = vunpack.c.h.b16 %v92
  %v606 = vunpack.c.l.b16 %v93
  %v607 = vunpack.c.h.b16 %v93
  %v608 = vunpack.c.l.b16 %v94
  %v609 = vunpack.c.l.b16 %v95
  %v610 = vunpack.c.h.b16 %v95
  %v611 = vunpack.c.l.b16 %v96
  %v612 = vunpack.c.h.b16 %v96
  %v613 = vunpack.c.l.b16 %v97
  %v614 = vunpack.c.h.b16 %v97
  %v615 = vunpack.c.l.b16 %v98
  %v616 = vunpack.c.h.b16 %v98
  %v617 = vunpack.c.l.b16 %v99
  %v618 = vunpack.c.h.b16 %v99
  %v619 = vunpack.c.l.b16 %v100
  %v620 = vunpack.c.h.b16 %v100
  %v621 = vunpack.c.l.b16 %v101
  %v622 = vunpack.c.h.b16 %v101
  %v623 = vunpack.c.l.b16 %v102
  %v624 = vunpack.c.l.b16 %v103
  %v625 = vunpack.c.h.b16 %v103
  %v626 = vunpack.c.l.b16 %v104
  %v627 = vunpack.c.h.b16 %v104
  %v628 = vunpack.c.l.b16 %v105
  %v629 = vunpack.c.h.b16 %v105
  %v630 = vunpack.c.l.b16 %v106
  %v631 = vunpack.c.h.b16 %v106
  %v632 = vunpack.c.l.b16 %v107
  %v633 = vunpack.c.h.b16 %v107
  %v634 = vunpack.c.l.b16 %v108
  %v635 = vunpack.c.h.b16 %v108
  %v636 = vunpack.c.l.b16 %v109
  %v637 = vunpack.c.h.b16 %v109
  %v638 = vunpack.c.l.b16 %v110
  %v639 = vpack.c.b16 %v474, %v459
  %v640 = vpack.c.b16 %v475, %v460
  %v641 = vpack.c.b16 %v476, %v461
  %v642 = vpack.c.b16 %v477, %v462
  %v643 = vpack.c.b16 %v478, %v463
  %v644 = vpack.c.b16 %v479, %v464
  %v645 = vpack.c.b16 %v480, %v465
  %v646 = vpack.c.b16 %v481, %v466
  %v647 = vpack.c.b16 %v482, %v467
  %v648 = vpack.c.b16 %v483, %v468
  %v649 = vpack.c.b16 %v484, %v469
  %v650 = vpack.c.b16 %v485, %v470
  %v651 = vpack.c.b16 %v486, %v471
  %v652 = vpack.c.b16 %v487, %v472
  %v653 = vpack.c.b16 %v488, %v473
  %v654 = vpack.c.b16 %v504, %v489
  %v655 = vpack.c.b16 %v505, %v490
  %v656 = vpack.c.b16 %v506, %v491
  %v657 = vpack.c.b16 %v507, %v492
  %v658 = vpack.c.b16 %v508, %v493
  %v659 = vpack.c.b16 %v509, %v494
  %v660 = vpack.c.b16 %v510, %v495
  %v661 = vpack.c.b16 %v511, %v496
  %v662 = vpack.c.b16 %v512, %v497
  %v663 = vpack.c.b16 %v513, %v498
  %v664 = vpack.c.b16 %v514, %v499
  %v665 = vpack.c.b16 %v515, %v500
  %v666 = vpack.c.b16 %v516, %v501
  %v667 = vpack.c.b16 %v517, %v502
  %v668 = vpack.c.b16 %v518, %v503
  %v669 = vpack.c.b16 %v534, %v519
  %v670 = vpack.c.b16 %v535, %v520
  %v671 = vpack.c.b16 %v536, %v521
  %v672 = vpack.c.b16 %v537, %v522
  %v673 = vpack.c.b16 %v538, %v523
  %v674 = vpack.c.b16 %v539, %v524
  %v675 = vpack.c.b16 %v540, %v525
  %v676 = vpack.c.b16 %v541, %v526
  %v677 = vpack.c.b16 %v542, %v527
  %v678 = vpack.c.b16 %v543, %v528
  %v679 = vpack.c.b16 %v544, %v529
  %v680 = vpack.c.b16 %v545, %v530
  %v681 = vpack.c.b16 %v546, %v531
  %v682 = vpack.c.b16 %v547, %v532
  %v683 = vpack.c.b16 %v548, %v533
  %v684 = vpack.c.b16 %v564, %v549
  %v685 = vpack.c.b16 %v565, %v550
  %v686 = vpack.c.b16 %v566, %v551
  %v687 = vpack.c.b16 %v567, %v552
  %v688 = vpack.c.b16 %v568, %v553
  %v689 = vpack.c.b16 %v569, %v554
  %v690 = vpack.c.b16 %v570, %v555
  %v691 = vpack.c.b16 %v571, %v556
  %v692 = vpack.c.b16 %v572, %v557
  %v693 = vpack.c.b16 %v573, %v558
  %v694 = vpack.c.b16 %v574, %v559
  %v695 = vpack.c.b16 %v575, %v560
  %v696 = vpack.c.b16 %v576, %v561
  %v697 = vpack.c.b16 %v577, %v562
  %v698 = vpack.c.b16 %v578, %v563
  %v699 = vpack.c.b16 %v594, %v579
  %v700 = vpack.c.b16 %v595, %v580
  %v701 = vpack.c.b16 %v596, %v581
  %v702 = vpack.c.b16 %v597, %v582
  %v703 = vpack.c.b16 %v598, %v583
  %v704 = vpack.c.b16 %v599, %v584
  %v705 = vpack.c.b16 %v600, %v585
  %v706 = vpack.c.b16 %v601, %v586
  %v707 = vpack.c.b16 %v602, %v587
  %v708 = vpack.c.b16 %v603, %v588
  %v709 = vpack.c.b16 %v604, %v589
  %v710 = vpack.c.b16 %v605, %v590
  %v711 = vpack.c.b16 %v606, %v591
  %v712 = vpack.c.b16 %v607, %v592
  %v713 = vpack.c.b16 %v608, %v593
  %v714 = vpack.c.b16 %v624, %v609
  %v715 = vpack.c.b16 %v625, %v610
  %v716 = vpack.c.b16 %v626, %v611
  %v717 = vpack.c.b16 %v627, %v612
  %v718 = vpack.c.b16 %v628, %v613
  %v719 = vpack.c.b16 %v629, %v614
  %v720 = vpack.c.b16 %v630, %v615
  %v721 = vpack.c.b16 %v631, %v616
  %v722 = vpack.c.b16 %v632, %v617
  %v723 = vpack.c.b16 %v633, %v618
  %v724 = vpack.c.b16 %v634, %v619
  %v725 = vpack.c.b16 %v635, %v620
  %v726 = vpack.c.b16 %v636, %v621
  %v727 = vpack.c.b16 %v637, %v622
  %v728 = vpack.c.b16 %v638, %v623
  %v1059 = vunpack.c.l.b16 %v111
  %v1060 = vunpack.c.h.b16 %v111
  %v1061 = vunpack.c.l.b16 %v112
  %v1062 = vunpack.c.h.b16 %v112
  %v1063 = vunpack.c.l.b16 %v113
  %v1064 = vunpack.c.h.b16 %v113
  %v1065 = vunpack.c.l.b16 %v114
  %v1066 = vunpack.c.h.b16 %v114
  %v1067 = vunpack.c.l.b16 %v115
  %v1068 = vunpack.c.h.b16 %v115
  %v1069 = vunpack.c.l.b16 %v116
  %v1070 = vunpack.c.h.b16 %v116
  %v1071 = vunpack.c.l.b16 %v117
  %v1072 = vunpack.c.h.b16 %v117
  %v1073 = vunpack.c.l.b16 %v118
  %v1074 = vunpack.c.h.b16 %v118
  %v1075 = vunpack.c.l.b16 %v119
  %v1076 = vunpack.c.h.b16 %v119
  %v1077 = vunpack.c.l.b16 %v120
  %v1078 = vunpack.c.h.b16 %v120
  %v1079 = vunpack.c.l.b16 %v121
  %v1080 = vunpack.c.h.b16 %v121
  %v1081 = vunpack.c.l.b16 %v122
  %v1082 = vunpack.c.h.b16 %v122
  %v1083 = vunpack.c.l.b16 %v123
  %v1084 = vunpack.c.h.b16 %v123
  %v1085 = vunpack.c.l.b16 %v124
  %v1086 = vunpack.c.h.b16 %v124
  %v1087 = vunpack.c.l.b16 %v125
  %v1088 = vunpack.c.h.b16 %v125
  %v1089 = vunpack.c.l.b16 %v126
  %v1090 = vunpack.c.h.b16 %v126
  %v1091 = vunpack.c.l.b16 %v127
  %v1092 = vunpack.c.h.b16 %v127
  %v1093 = vunpack.c.l.b16 %v128
  %v1094 = vunpack.c.h.b16 %v128
  %v1095 = vunpack.c.l.b16 %v129
  %v1096 = vunpack.c.h.b16 %v129
  %v1097 = vunpack.c.l.b16 %v130
  %v1098 = vunpack.c.h.b16 %v130
  %v1099 = vunpack.c.l.b16 %v131
  %v1100 = vunpack.c.h.b16 %v131
  %v1101 = vunpack.c.l.b16 %v132
  %v1102 = vunpack.c.h.b16 %v132
  %v1103 = vunpack.c.l.b16 %v133
  %v1104 = vunpack.c.h.b16 %v133
  %v1105 = vunpack.c.l.b16 %v134
  %v1106 = vunpack.c.h.b16 %v134
  %v1107 = vunpack.c.l.b16 %v135
  %v1108 = vunpack.c.h.b16 %v135
  %v1109 = vunpack.c.l.b16 %v136
  %v1110 = vunpack.c.h.b16 %v136
  %v1111 = vunpack.c.l.b16 %v137
  %v1112 = vunpack.c.h.b16 %v137
  %v1113 = vunpack.c.l.b16 %v138
  %v1114 = vunpack.c.h.b16 %v138
  %v1115 = vunpack.c.l.b16 %v139
  %v1116 = vunpack.c.h.b16 %v139
  %v1117 = vunpack.c.l.b16 %v140
  %v1118 = vunpack.c.h.b16 %v140
  %v1119 = vunpack.c.l.b16 %v141
  %v1120 = vunpack.c.h.b16 %v141
  %v1121 = vunpack.c.l.b16 %v142
  %v1122 = vunpack.c.h.b16 %v142
  %v1123 = vunpack.c.l.b16 %v143
  %v1124 = vunpack.c.h.b16 %v143
  %v1125 = vunpack.c.l.b16 %v144
  %v1126 = vunpack.c.h.b16 %v144
  %v1127 = vunpack.c.l.b16 %v145
  %v1128 = vunpack.c.h.b16 %v145
  %v1129 = vunpack.c.l.b16 %v146
  %v1130 = vunpack.c.h.b16 %v146
  %v1131 = vunpack.c.l.b16 %v147
  %v1132 = vunpack.c.h.b16 %v147
  %v1133 = vunpack.c.l.b16 %v148
  %v1134 = vunpack.c.h.b16 %v148
  %v1135 = vunpack.c.l.b16 %v149
  %v1136 = vunpack.c.h.b16 %v149
  %v1137 = vunpack.c.l.b16 %v150
  %v1138 = vunpack.c.h.b16 %v150
  %v1139 = vunpack.c.l.b16 %v151
  %v1140 = vunpack.c.h.b16 %v151
  %v1141 = vunpack.c.l.b16 %v152
  %v1142 = vunpack.c.h.b16 %v152
  %v1143 = vunpack.c.l.b16 %v153
  %v1144 = vunpack.c.h.b16 %v153
  %v1145 = vunpack.c.l.b16 %v154
  %v1146 = vunpack.c.h.b16 %v154
  %v1147 = vunpack.c.l.b16 %v155
  %v1148 = vunpack.c.h.b16 %v155
  %v1149 = vunpack.c.l.b16 %v156
  %v1150 = vunpack.c.h.b16 %v156
  %v1151 = vunpack.c.l.b16 %v157
  %v1152 = vunpack.c.h.b16 %v157
  %v1153 = vunpack.c.l.b16 %v158
  %v1154 = vunpack.c.h.b16 %v158
  %v1155 = vunpack.c.l.b16 %v159
  %v1156 = vunpack.c.h.b16 %v159
  %v1157 = vunpack.c.l.b16 %v160
  %v1158 = vunpack.c.h.b16 %v160
  %v1159 = vunpack.c.l.b16 %v161
  %v1160 = vunpack.c.h.b16 %v161
  %v1161 = vunpack.c.l.b16 %v162
  %v1162 = vunpack.c.h.b16 %v162
  %v1163 = vunpack.c.l.b16 %v163
  %v1164 = vunpack.c.h.b16 %v163
  %v1165 = vunpack.c.l.b16 %v164
  %v1166 = vunpack.c.h.b16 %v164
  %v1167 = vunpack.c.l.b16 %v165
  %v1168 = vunpack.c.h.b16 %v165
  %v1169 = vunpack.c.l.b16 %v166
  %v1170 = vunpack.c.h.b16 %v166
  %v1171 = vunpack.c.l.b16 %v167
  %v1172 = vunpack.c.h.b16 %v167
  %v1173 = vunpack.c.l.b16 %v168
  %v1174 = vunpack.c.h.b16 %v168
  %v1175 = vunpack.c.l.b16 %v169
  %v1176 = vunpack.c.h.b16 %v169
  %v1177 = vunpack.c.l.b16 %v170
  %v1178 = vunpack.c.h.b16 %v170
  %v1179 = vunpack.c.l.b16 %v171
  %v1180 = vunpack.c.h.b16 %v171
  %v1181 = vunpack.c.l.b16 %v172
  %v1182 = vunpack.c.h.b16 %v172
  %v1183 = vunpack.c.l.b16 %v173
  %v1184 = vunpack.c.h.b16 %v173
  %v1185 = vunpack.c.l.b16 %v174
  %v1186 = vunpack.c.h.b16 %v174
  %v1187 = vunpack.c.l.b16 %v175
  %v1188 = vunpack.c.h.b16 %v175
  %v1189 = vunpack.c.l.b16 %v176
  %v1190 = vunpack.c.h.b16 %v176
  %v1191 = vunpack.c.l.b16 %v177
  %v1192 = vunpack.c.h.b16 %v177
  %v1193 = vunpack.c.l.b16 %v178
  %v1194 = vunpack.c.h.b16 %v178
  %v1195 = vunpack.c.l.b16 %v179
  %v1196 = vunpack.c.h.b16 %v179
  %v1197 = vunpack.c.l.b16 %v180
  %v1198 = vunpack.c.h.b16 %v180
  %v1199 = vunpack.c.l.b16 %v181
  %v1200 = vunpack.c.h.b16 %v181
  %v1201 = vunpack.c.l.b16 %v182
  %v1202 = vunpack.c.h.b16 %v182
  %v1203 = vunpack.c.l.b16 %v183
  %v1204 = vunpack.c.h.b16 %v183
  %v1205 = vunpack.c.l.b16 %v184
  %v1206 = vunpack.c.h.b16 %v184
  %v1207 = vunpack.c.l.b16 %v185
  %v1208 = vunpack.c.h.b16 %v185
  %v1209 = vunpack.c.l.b16 %v186
  %v1210 = vunpack.c.h.b16 %v186
  %v1211 = vunpack.c.l.b16 %v187
  %v1212 = vunpack.c.h.b16 %v187
  %v1213 = vunpack.c.l.b16 %v188
  %v1214 = vunpack.c.h.b16 %v188
  %v1215 = vunpack.c.l.b16 %v189
  %v1216 = vunpack.c.h.b16 %v189
  %v1217 = vunpack.c.l.b16 %v190
  %v1218 = vunpack.c.h.b16 %v190
  %v1219 = vunpack.c.l.b16 %v191
  %v1220 = vunpack.c.h.b16 %v191
  %v1221 = vunpack.c.l.b16 %v192
  %v1222 = vunpack.c.h.b16 %v192
  %v1223 = vunpack.c.l.b16 %v193
  %v1224 = vunpack.c.h.b16 %v193
  %v1225 = vunpack.c.l.b16 %v194
  %v1226 = vunpack.c.h.b16 %v194
  %v1227 = vunpack.c.l.b16 %v195
  %v1228 = vunpack.c.h.b16 %v195
  %v1229 = vunpack.c.l.b16 %v196
  %v1230 = vunpack.c.h.b16 %v196
  %v1231 = vunpack.c.l.b16 %v197
  %v1232 = vunpack.c.h.b16 %v197
  %v1233 = vunpack.c.l.b16 %v198
  %v1234 = vunpack.c.h.b16 %v198
  %v1235 = vunpack.c.l.b16 %v199
  %v1236 = vunpack.c.h.b16 %v199
  %v1237 = vunpack.c.l.b16 %v200
  %v1238 = vunpack.c.h.b16 %v200
  %v1239 = vunpack.c.l.b16 %v201
  %v1240 = vunpack.c.h.b16 %v201
  %v1241 = vunpack.c.l.b16 %v202
  %v1242 = vunpack.c.h.b16 %v202
  %v1243 = vunpack.c.l.b16 %v203
  %v1244 = vunpack.c.h.b16 %v203
  %v1245 = vunpack.c.l.b16 %v204
  %v1246 = vunpack.c.h.b16 %v204
  %v1247 = vunpack.c.l.b16 %v205
  %v1248 = vunpack.c.h.b16 %v205
  %v1249 = vunpack.c.l.b16 %v206
  %v1250 = vunpack.c.h.b16 %v206
  %v1251 = vunpack.c.l.b16 %v207
  %v1252 = vunpack.c.h.b16 %v207
  %v1253 = vunpack.c.l.b16 %v208
  %v1254 = vunpack.c.h.b16 %v208
  %v1255 = vunpack.c.l.b16 %v209
  %v1256 = vunpack.c.h.b16 %v209
  %v1257 = vunpack.c.l.b16 %v210
  %v1258 = vunpack.c.h.b16 %v210
  %v1259 = vunpack.c.l.b16 %v211
  %v1260 = vunpack.c.h.b16 %v211
  %v1261 = vunpack.c.l.b16 %v212
  %v1262 = vunpack.c.h.b16 %v212
  %v1263 = vunpack.c.l.b16 %v213
  %v1264 = vunpack.c.h.b16 %v213
  %v1265 = vunpack.c.l.b16 %v214
  %v1266 = vunpack.c.h.b16 %v214
  %v1267 = vunpack.c.l.b16 %v215
  %v1268 = vunpack.c.h.b16 %v215
  %v1269 = vunpack.c.l.b16 %v216
  %v1270 = vunpack.c.h.b16 %v216
  %v1271 = vunpack.c.l.b16 %v217
  %v1272 = vunpack.c.h.b16 %v217
  %v1273 = vunpack.c.l.b16 %v218
  %v1274 = vunpack.c.h.b16 %v218
  %v1275 = vunpack.c.l.b16 %v219
  %v1276 = vunpack.c.h.b16 %v219
  %v1277 = vunpack.c.l.b16 %v220
  %v1278 = vunpack.c.h.b16 %v220
  %v1279 = vunpack.c.l.b16 %v221
  %v1280 = vunpack.c.h.b16 %v221
  %v1281 = vunpack.c.l.b16 %v222
  %v1282 = vunpack.c.h.b16 %v222
  %v1283 = vunpack.c.l.b16 %v223
  %v1284 = vunpack.c.h.b16 %v223
  %v1285 = vunpack.c.l.b16 %v224
  %v1286 = vunpack.c.h.b16 %v224
  %v1287 = vunpack.c.l.b16 %v225
  %v1288 = vunpack.c.h.b16 %v225
  %v1289 = vunpack.c.l.b16 %v226
  %v1290 = vunpack.c.h.b16 %v226
  %v1291 = vunpack.c.l.b16 %v227
  %v1292 = vunpack.c.h.b16 %v227
  %v1293 = vunpack.c.l.b16 %v228
  %v1294 = vunpack.c.h.b16 %v228
  %v1295 = vunpack.c.l.b16 %v229
  %v1296 = vunpack.c.h.b16 %v229
  %v1297 = vunpack.c.l.b16 %v230
  %v1298 = vunpack.c.h.b16 %v230
  %v1299 = vunpack.c.l.b16 %v231
  %v1300 = vunpack.c.h.b16 %v231
  %v1301 = vunpack.c.l.b16 %v232
  %v1302 = vunpack.c.h.b16 %v232
  %v1303 = vunpack.c.l.b16 %v233
  %v1304 = vunpack.c.h.b16 %v233
  %v1305 = vunpack.c.l.b16 %v234
  %v1306 = vunpack.c.h.b16 %v234
  %v1307 = vunpack.c.l.b16 %v235
  %v1308 = vunpack.c.h.b16 %v235
  %v1309 = vunpack.c.l.b16 %v236
  %v1310 = vunpack.c.h.b16 %v236
  %v1311 = vunpack.c.l.b16 %v237
  %v1312 = vunpack.c.h.b16 %v237
  %v1313 = vunpack.c.l.b16 %v238
  %v1314 = vunpack.c.h.b16 %v238
  %v1315 = vunpack.c.l.b16 %v239
  %v1316 = vunpack.c.h.b16 %v239
  %v1317 = vunpack.c.l.b16 %v240
  %v1318 = vunpack.c.h.b16 %v240
  %v1319 = vunpack.c.l.b16 %v241
  %v1320 = vunpack.c.h.b16 %v241
  %v1321 = vunpack.c.l.b16 %v242
  %v1322 = vunpack.c.h.b16 %v242
  %v1323 = vunpack.c.l.b16 %v243
  %v1324 = vunpack.c.h.b16 %v243
  %v1325 = vunpack.c.l.b16 %v244
  %v1326 = vunpack.c.h.b16 %v244
  %v1327 = vunpack.c.l.b16 %v245
  %v1328 = vunpack.c.h.b16 %v245
  %v1329 = vunpack.c.l.b16 %v246
  %v1330 = vunpack.c.h.b16 %v246
  %v1331 = vunpack.c.l.b16 %v247
  %v1332 = vunpack.c.h.b16 %v247
  %v1333 = vunpack.c.l.b16 %v248
  %v1334 = vunpack.c.h.b16 %v248
  %v1335 = vunpack.c.l.b16 %v249
  %v1336 = vunpack.c.h.b16 %v249
  %v1337 = vunpack.c.l.b16 %v250
  %v1338 = vunpack.c.h.b16 %v250
  %v1339 = vunpack.c.l.b16 %v251
  %v1340 = vunpack.c.h.b16 %v251
  %v1341 = vunpack.c.l.b16 %v252
  %v1342 = vunpack.c.h.b16 %v252
  %v1343 = vunpack.c.l.b16 %v253
  %v1344 = vunpack.c.h.b16 %v253
  %v1345 = vunpack.c.l.b16 %v254
  %v1346 = vunpack.c.h.b16 %v254
  %v1347 = vunpack.c.l.b16 %v255
  %v1348 = vunpack.c.h.b16 %v255
  %v1349 = vunpack.c.l.b16 %v256
  %v1350 = vunpack.c.h.b16 %v256
  %v1351 = vunpack.c.l.b16 %v257
  %v1352 = vunpack.c.h.b16 %v257
  %v1353 = vunpack.c.l.b16 %v258
  %v1354 = vunpack.c.h.b16 %v258
  %v1355 = vunpack.c.l.b16 %v259
  %v1356 = vunpack.c.h.b16 %v259
  %v1357 = vunpack.c.l.b16 %v260
  %v1358 = vunpack.c.h.b16 %v260
  %v1359 = vunpack.c.l.b16 %v261
  %v1360 = vunpack.c.h.b16 %v261
  %v1361 = vunpack.c.l.b16 %v262
  %v1362 = vunpack.c.h.b16 %v262
  %v1363 = vunpack.c.l.b16 %v263
  %v1364 = vunpack.c.h.b16 %v263
  %v1365 = vunpack.c.l.b16 %v264
  %v1366 = vunpack.c.h.b16 %v264
  %v1367 = vunpack.c.l.b16 %v265
  %v1368 = vunpack.c.h.b16 %v265
  %v1369 = vunpack.c.l.b16 %v266
  %v1370 = vunpack.c.h.b16 %v266
  %v1371 = vunpack.c.l.b16 %v267
  %v1372 = vunpack.c.h.b16 %v267
  %v1373 = vunpack.c.l.b16 %v268
  %v1374 = vunpack.c.h.b16 %v268
  %v1375 = vunpack.c.l.b16 %v269
  %v1376 = vunpack.c.h.b16 %v269
  %v1377 = vunpack.c.l.b16 %v270
  %v1378 = vunpack.c.h.b16 %v270
  %v1379 = vunpack.c.l.b16 %v271
  %v1380 = vunpack.c.h.b16 %v271
  %v1381 = vunpack.c.l.b16 %v272
  %v1382 = vunpack.c.h.b16 %v272
  %v1383 = vunpack.c.l.b16 %v273
  %v1384 = vunpack.c.h.b16 %v273
  %v1385 = vunpack.c.l.b16 %v274
  %v1386 = vunpack.c.h.b16 %v274
  %v1387 = vunpack.c.l.b16 %v275
  %v1388 = vunpack.c.h.b16 %v275
  %v1389 = vunpack.c.l.b16 %v276
  %v1390 = vunpack.c.h.b16 %v276
  %v1391 = vunpack.c.l.b16 %v277
  %v1392 = vunpack.c.h.b16 %v277
  %v1393 = vunpack.c.l.b16 %v278
  %v1394 = vunpack.c.h.b16 %v278
  %v1395 = vunpack.c.l.b16 %v279
  %v1396 = vunpack.c.h.b16 %v279
  %v1397 = vunpack.c.l.b16 %v280
  %v1398 = vunpack.c.h.b16 %v280
  %v1399 = vunpack.c.l.b16 %v281
  %v1400 = vunpack.c.h.b16 %v281
  %v1401 = vunpack.c.l.b16 %v282
  %v1402 = vunpack.c.h.b16 %v282
  %v1403 = vunpack.c.l.b16 %v283
  %v1404 = vunpack.c.h.b16 %v283
  %v1405 = vunpack.c.l.b16 %v284
  %v1406 = vunpack.c.h.b16 %v284
  %v1407 = vunpack.c.l.b16 %v285
  %v1408 = vunpack.c.h.b16 %v285
  %v1409 = vunpack.c.l.b16 %v286
  %v1410 = vunpack.c.h.b16 %v286
  %v1411 = vunpack.c.l.b16 %v287
  %v1412 = vunpack.c.h.b16 %v287
  %v1413 = vunpack.c.l.b16 %v288
  %v1414 = vunpack.c.h.b16 %v288
  %v1415 = vunpack.c.l.b16 %v289
  %v1416 = vunpack.c.h.b16 %v289
  %v1417 = vunpack.c.l.b16 %v290
  %v1418 = vunpack.c.h.b16 %v290
  %v1419 = vunpack.c.l.b16 %v291
  %v1420 = vunpack.c.h.b16 %v291
  %v1421 = vunpack.c.l.b16 %v292
  %v1422 = vunpack.c.h.b16 %v292
  %v1423 = vunpack.c.l.b16 %v293
  %v1424 = vunpack.c.h.b16 %v293
  %v1425 = vunpack.c.l.b16 %v294
  %v1426 = vunpack.c.h.b16 %v294
  %v1427 = vunpack.c.l.b16 %v295
  %v1428 = vunpack.c.h.b16 %v295
  %v1429 = vunpack.c.l.b16 %v296
  %v1430 = vunpack.c.h.b16 %v296
  %v1431 = vunpack.c.l.b16 %v297
  %v1432 = vunpack.c.h.b16 %v297
  %v1433 = vunpack.c.l.b16 %v298
  %v1434 = vunpack.c.h.b16 %v298
  %v1435 = vunpack.c.l.b16 %v299
  %v1436 = vunpack.c.h.b16 %v299
  %v1437 = vunpack.c.l.b16 %v300
  %v1438 = vunpack.c.h.b16 %v300
  %v1439 = vunpack.c.l.b16 %v301
  %v1440 = vunpack.c.h.b16 %v301
  %v1441 = vunpack.c.l.b16 %v302
  %v1442 = vunpack.c.h.b16 %v302
  %v1443 = vunpack.c.l.b16 %v303
  %v1444 = vunpack.c.h.b16 %v303
  %v1445 = vunpack.c.l.b16 %v304
  %v1446 = vunpack.c.h.b16 %v304
  %v1447 = vunpack.c.l.b16 %v305
  %v1448 = vunpack.c.h.b16 %v305
  %v1449 = vunpack.c.l.b16 %v306
  %v1450 = vunpack.c.h.b16 %v306
  %v1451 = vunpack.c.l.b16 %v307
  %v1452 = vunpack.c.h.b16 %v307
  %v1453 = vunpack.c.l.b16 %v308
  %v1454 = vunpack.c.h.b16 %v308
  %v1455 = vunpack.c.l.b16 %v309
  %v1456 = vunpack.c.h.b16 %v309
  %v1457 = vunpack.c.l.b16 %v310
  %v1458 = vunpack.c.h.b16 %v310
  %v1459 = vunpack.c.l.b16 %v311
  %v1460 = vunpack.c.h.b16 %v311
  %v1461 = vunpack.c.l.b16 %v312
  %v1462 = vunpack.c.h.b16 %v312
  %v1463 = vunpack.c.l.b16 %v313
  %v1464 = vunpack.c.h.b16 %v313
  %v1465 = vunpack.c.l.b16 %v314
  %v1466 = vunpack.c.h.b16 %v314
  %v1467 = vunpack.c.l.b16 %v315
  %v1468 = vunpack.c.h.b16 %v315
  %v1469 = vunpack.c.l.b16 %v316
  %v1470 = vunpack.c.h.b16 %v316
  %v1471 = vunpack.c.l.b16 %v317
  %v1472 = vunpack.c.h.b16 %v317
  %v1473 = vunpack.c.l.b16 %v318
  %v1474 = vunpack.c.h.b16 %v318
  %v1475 = vunpack.c.l.b16 %v319
  %v1476 = vunpack.c.h.b16 %v319
  %v1477 = vunpack.c.l.b16 %v320
  %v1478 = vunpack.c.h.b16 %v320
  %v1479 = vunpack.c.l.b16 %v321
  %v1480 = vunpack.c.h.b16 %v321
  %v1481 = vunpack.c.l.b16 %v322
  %v1482 = vunpack.c.h.b16 %v322
  %v1483 = vunpack.c.l.b16 %v323
  %v1484 = vunpack.c.h.b16 %v323
  %v1485 = vunpack.c.l.b16 %v324
  %v1486 = vunpack.c.h.b16 %v324
  %v1487 = vunpack.c.l.b16 %v325
  %v1488 = vunpack.c.h.b16 %v325
  %v1489 = vunpack.c.l.b16 %v326
  %v1490 = vunpack.c.h.b16 %v326
  %v1491 = vunpack.c.l.b16 %v327
  %v1492 = vunpack.c.h.b16 %v327
  %v1493 = vunpack.c.l.b16 %v328
  %v1494 = vunpack.c.h.b16 %v328
  %v1495 = vunpack.c.l.b16 %v329
  %v1496 = vunpack.c.h.b16 %v329
  %v1497 = vunpack.c.l.b16 %v330
  %v1498 = vunpack.c.h.b16 %v330
  %v1499 = vunpack.c.l.b16 %v331
  %v1500 = vunpack.c.h.b16 %v331
  %v1501 = vunpack.c.l.b16 %v332
  %v1502 = vunpack.c.h.b16 %v332
  %v1503 = vunpack.c.l.b16 %v333
  %v1504 = vunpack.c.h.b16 %v333
  %v1505 = vunpack.c.l.b16 %v334
  %v1506 = vunpack.c.h.b16 %v334
  %v1507 = vunpack.c.l.b16 %v335
  %v1508 = vunpack.c.h.b16 %v335
  %v1509 = vunpack.c.l.b16 %v336
  %v1510 = vunpack.c.h.b16 %v336
  %v1511 = vunpack.c.l.b16 %v337
  %v1512 = vunpack.c.h.b16 %v337
  %v1513 = vunpack.c.l.b16 %v338
  %v1514 = vunpack.c.h.b16 %v338
  %v1515 = vunpack.c.l.b16 %v339
  %v1516 = vunpack.c.h.b16 %v339
  %v1517 = vunpack.c.l.b16 %v340
  %v1518 = vunpack.c.h.b16 %v340
  %v1519 = vunpack.c.l.b16 %v341
  %v1520 = vunpack.c.h.b16 %v341
  %v1521 = vunpack.c.l.b16 %v342
  %v1522 = vunpack.c.h.b16 %v342
  %v1523 = vunpack.c.l.b16 %v343
  %v1524 = vunpack.c.h.b16 %v343
  %v1525 = vunpack.c.l.b16 %v344
  %v1526 = vunpack.c.h.b16 %v344
  %v1527 = vunpack.c.l.b16 %v345
  %v1528 = vunpack.c.h.b16 %v345
  %v1529 = vunpack.c.l.b16 %v346
  %v1530 = vunpack.c.h.b16 %v346
  %v1531 = vunpack.c.l.b16 %v347
  %v1532 = vunpack.c.h.b16 %v347
  %v1533 = vunpack.c.l.b16 %v348
  %v1534 = vunpack.c.h.b16 %v348
  %v1535 = vunpack.c.l.b16 %v349
  %v1536 = vunpack.c.h.b16 %v349
  %v1537 = vunpack.c.l.b16 %v350
  %v1538 = vunpack.c.h.b16 %v350
  %v1539 = vpack.c.b16 %v1061, %v1059
  %v1540 = vpack.c.b16 %v1062, %v1060
  %v1541 = vpack.c.b16 %v1065, %v1063
  %v1542 = vpack.c.b16 %v1066, %v1064
  %v1543 = vpack.c.b16 %v1069, %v1067
  %v1544 = vpack.c.b16 %v1070, %v1068
  %v1545 = vpack.c.b16 %v1073, %v1071
  %v1546 = vpack.c.b16 %v1074, %v1072
  %v1547 = vpack.c.b16 %v1077, %v1075
  %v1548 = vpack.c.b16 %v1078, %v1076
  %v1549 = vpack.c.b16 %v1081, %v1079
  %v1550 = vpack.c.b16 %v1082, %v1080
  %v1551 = vpack.c.b16 %v1085, %v1083
  %v1552 = vpack.c.b16 %v1086, %v1084
  %v1553 = vpack.c.b16 %v1089, %v1087
  %v1554 = vpack.c.b16 %v1090, %v1088
  %v1555 = vpack.c.b16 %v1093, %v1091
  %v1556 = vpack.c.b16 %v1094, %v1092
  %v1557 = vpack.c.b16 %v1097, %v1095
  %v1558 = vpack.c.b16 %v1098, %v1096
  %v1559 = vpack.c.b16 %v1101, %v1099
  %v1560 = vpack.c.b16 %v1102, %v1100
  %v1561 = vpack.c.b16 %v1105, %v1103
  %v1562 = vpack.c.b16 %v1106, %v1104
  %v1563 = vpack.c.b16 %v1109, %v1107
  %v1564 = vpack.c.b16 %v1110, %v1108
  %v1565 = vpack.c.b16 %v1113, %v1111
  %v1566 = vpack.c.b16 %v1114, %v1112
  %v1567 = vpack.c.b16 %v1117, %v1115
  %v1568 = vpack.c.b16 %v1118, %v1116
  %v1569 = vpack.c.b16 %v1121, %v1119
  %v1570 = vpack.c.b16 %v1122, %v1120
  %v1571 = vpack.c.b16 %v1125, %v1123
  %v1572 = vpack.c.b16 %v1126, %v1124
  %v1573 = vpack.c.b16 %v1129, %v1127
  %v1574 = vpack.c.b16 %v1130, %v1128
  %v1575 = vpack.c.b16 %v1133, %v1131
  %v1576 = vpack.c.b16 %v1134, %v1132
  %v1577 = vpack.c.b16 %v1137, %v1135
  %v1578 = vpack.c.b16 %v1138, %v1136
  %v1579 = vpack.c.b16 %v1141, %v1139
  %v1580 = vpack.c.b16 %v1142, %v1140
  %v1581 = vpack.c.b16 %v1145, %v1143
  %v1582 = vpack.c.b16 %v1146, %v1144
  %v1583 = vpack.c.b16 %v1149, %v1147
  %v1584 = vpack.c.b16 %v1150, %v1148
  %v1585 = vpack.c.b16 %v1153, %v1151
  %v1586 = vpack.c.b16 %v1154, %v1152
  %v1587 = vpack.c.b16 %v1157, %v1155
  %v1588 = vpack.c.b16 %v1158, %v1156
  %v1589 = vpack.c.b16 %v1161, %v1159
  %v1590 = vpack.c.b16 %v1162, %v1160
  %v1591 = vpack.c.b16 %v1165, %v1163
  %v1592 = vpack.c.b16 %v1166, %v1164
  %v1593 = vpack.c.b16 %v1169, %v1167
  %v1594 = vpack.c.b16 %v1170, %v1168
  %v1595 = vpack.c.b16 %v1173, %v1171
  %v1596 = vpack.c.b16 %v1174, %v1172
  %v1597 = vpack.c.b16 %v1177, %v1175
  %v1598 = vpack.c.b16 %v1178, %v1176
  %v1599 = vpack.c.b16 %v1181, %v1179
  %v1600 = vpack.c.b16 %v1182, %v1180
  %v1601 = vpack.c.b16 %v1185, %v1183
  %v1602 = vpack.c.b16 %v1186, %v1184
  %v1603 = vpack.c.b16 %v1189, %v1187
  %v1604 = vpack.c.b16 %v1190, %v1188
  %v1605 = vpack.c.b16 %v1193, %v1191
  %v1606 = vpack.c.b16 %v1194, %v1192
  %v1607 = vpack.c.b16 %v1197, %v1195
  %v1608 = vpack.c.b16 %v1198, %v1196
  %v1609 = vpack.c.b16 %v1201, %v1199
  %v1610 = vpack.c.b16 %v1202, %v1200
  %v1611 = vpack.c.b16 %v1205, %v1203
  %v1612 = vpack.c.b16 %v1206, %v1204
  %v1613 = vpack.c.b16 %v1209, %v1207
  %v1614 = vpack.c.b16 %v1210, %v1208
  %v1615 = vpack.c.b16 %v1213, %v1211
  %v1616 = vpack.c.b16 %v1214, %v1212
  %v1617 = vpack.c.b16 %v1217, %v1215
  %v1618 = vpack.c.b16 %v1218, %v1216
  %v1619 = vpack.c.b16 %v1221, %v1219
  %v1620 = vpack.c.b16 %v1222, %v1220
  %v1621 = vpack.c.b16 %v1225, %v1223
  %v1622 = vpack.c.b16 %v1226, %v1224
  %v1623 = vpack.c.b16 %v1229, %v1227
  %v1624 = vpack.c.b16 %v1230, %v1228
  %v1625 = vpack.c.b16 %v1233, %v1231
  %v1626 = vpack.c.b16 %v1234, %v1232
  %v1627 = vpack.c.b16 %v1237, %v1235
  %v1628 = vpack.c.b16 %v1238, %v1236
  %v1629 = vpack.c.b16 %v1241, %v1239
  %v1630 = vpack.c.b16 %v1242, %v1240
  %v1631 = vpack.c.b16 %v1245, %v1243
  %v1632 = vpack.c.b16 %v1246, %v1244
  %v1633 = vpack.c.b16 %v1249, %v1247
  %v1634 = vpack.c.b16 %v1250, %v1248
  %v1635 = vpack.c.b16 %v1253, %v1251
  %v1636 = vpack.c.b16 %v1254, %v1252
  %v1637 = vpack.c.b16 %v1257, %v1255
  %v1638 = vpack.c.b16 %v1258, %v1256
  %v1639 = vpack.c.b16 %v1261, %v1259
  %v1640 = vpack.c.b16 %v1262, %v1260
  %v1641 = vpack.c.b16 %v1265, %v1263
  %v1642 = vpack.c.b16 %v1266, %v1264
  %v1643 = vpack.c.b16 %v1269, %v1267
  %v1644 = vpack.c.b16 %v1270, %v1268
  %v1645 = vpack.c.b16 %v1273, %v1271
  %v1646 = vpack.c.b16 %v1274, %v1272
  %v1647 = vpack.c.b16 %v1277, %v1275
  %v1648 = vpack.c.b16 %v1278, %v1276
  %v1649 = vpack.c.b16 %v1281, %v1279
  %v1650 = vpack.c.b16 %v1282, %v1280
  %v1651 = vpack.c.b16 %v1285, %v1283
  %v1652 = vpack.c.b16 %v1286, %v1284
  %v1653 = vpack.c.b16 %v1289, %v1287
  %v1654 = vpack.c.b16 %v1290, %v1288
  %v1655 = vpack.c.b16 %v1293, %v1291
  %v1656 = vpack.c.b16 %v1294, %v1292
  %v1657 = vpack.c.b16 %v1297, %v1295
  %v1658 = vpack.c.b16 %v1298, %v1296
  %v1659 = vpack.c.b16 %v1301, %v1299
  %v1660 = vpack.c.b16 %v1302, %v1300
  %v1661 = vpack.c.b16 %v1305, %v1303
  %v1662 = vpack.c.b16 %v1306, %v1304
  %v1663 = vpack.c.b16 %v1309, %v1307
  %v1664 = vpack.c.b16 %v1310, %v1308
  %v1665 = vpack.c.b16 %v1313, %v1311
  %v1666 = vpack.c.b16 %v1314, %v1312
  %v1667 = vpack.c.b16 %v1317, %v1315
  %v1668 = vpack.c.b16 %v1318, %v1316
  %v1669 = vpack.c.b16 %v1321, %v1319
  %v1670 = vpack.c.b16 %v1322, %v1320
  %v1671 = vpack.c.b16 %v1325, %v1323
  %v1672 = vpack.c.b16 %v1326, %v1324
  %v1673 = vpack.c.b16 %v1329, %v1327
  %v1674 = vpack.c.b16 %v1330, %v1328
  %v1675 = vpack.c.b16 %v1333, %v1331
  %v1676 = vpack.c.b16 %v1334, %v1332
  %v1677 = vpack.c.b16 %v1337, %v1335
  %v1678 = vpack.c.b16 %v1338, %v1336
  %v1679 = vpack.c.b16 %v1341, %v1339
  %v1680 = vpack.c.b16 %v1342, %v1340
  %v1681 = vpack.c.b16 %v1345, %v1343
  %v1682 = vpack.c.b16 %v1346, %v1344
  %v1683 = vpack.c.b16 %v1349, %v1347
  %v1684 = vpack.c.b16 %v1350, %v1348
  %v1685 = vpack.c.b16 %v1353, %v1351
  %v1686 = vpack.c.b16 %v1354, %v1352
  %v1687 = vpack.c.b16 %v1357, %v1355
  %v1688 = vpack.c.b16 %v1358, %v1356
  %v1689 = vpack.c.b16 %v1361, %v1359
  %v1690 = vpack.c.b16 %v1362, %v1360
  %v1691 = vpack.c.b16 %v1365, %v1363
  %v1692 = vpack.c.b16 %v1366, %v1364
  %v1693 = vpack.c.b16 %v1369, %v1367
  %v1694 = vpack.c.b16 %v1370, %v1368
  %v1695 = vpack.c.b16 %v1373, %v1371
  %v1696 = vpack.c.b16 %v1374, %v1372
  %v1697 = vpack.c.b16 %v1377, %v1375
  %v1698 = vpack.c.b16 %v1378, %v1376
  %v1699 = vpack.c.b16 %v1381, %v1379
  %v1700 = vpack.c.b16 %v1382, %v1380
  %v1701 = vpack.c.b16 %v1385, %v1383
  %v1702 = vpack.c.b16 %v1386, %v1384
  %v1703 = vpack.c.b16 %v1389, %v1387
  %v1704 = vpack.c.b16 %v1390, %v1388
  %v1705 = vpack.c.b16 %v1393, %v1391
  %v1706 = vpack.c.b16 %v1394, %v1392
  %v1707 = vpack.c.b16 %v1397, %v1395
  %v1708 = vpack.c.b16 %v1398, %v1396
  %v1709 = vpack.c.b16 %v1401, %v1399
  %v1710 = vpack.c.b16 %v1402, %v1400
  %v1711 = vpack.c.b16 %v1405, %v1403
  %v1712 = vpack.c.b16 %v1406, %v1404
  %v1713 = vpack.c.b16 %v1409, %v1407
  %v1714 = vpack.c.b16 %v1410, %v1408
  %v1715 = vpack.c.b16 %v1413, %v1411
  %v1716 = vpack.c.b16 %v1414, %v1412
  %v1717 = vpack.c.b16 %v1417, %v1415
  %v1718 = vpack.c.b16 %v1418, %v1416
  %v1719 = vpack.c.b16 %v1421, %v1419
  %v1720 = vpack.c.b16 %v1422, %v1420
  %v1721 = vpack.c.b16 %v1425, %v1423
  %v1722 = vpack.c.b16 %v1426, %v1424
  %v1723 = vpack.c.b16 %v1429, %v1427
  %v1724 = vpack.c.b16 %v1430, %v1428
  %v1725 = vpack.c.b16 %v1433, %v1431
  %v1726 = vpack.c.b16 %v1434, %v1432
  %v1727 = vpack.c.b16 %v1437, %v1435
  %v1728 = vpack.c.b16 %v1438, %v1436
  %v1729 = vpack.c.b16 %v1441, %v1439
  %v1730 = vpack.c.b16 %v1442, %v1440
  %v1731 = vpack.c.b16 %v1445, %v1443
  %v1732 = vpack.c.b16 %v1446, %v1444
  %v1733 = vpack.c.b16 %v1449, %v1447
  %v1734 = vpack.c.b16 %v1450, %v1448
  %v1735 = vpack.c.b16 %v1453, %v1451
  %v1736 = vpack.c.b16 %v1454, %v1452
  %v1737 = vpack.c.b16 %v1457, %v1455
  %v1738 = vpack.c.b16 %v1458, %v1456
  %v1739 = vpack.c.b16 %v1461, %v1459
  %v1740 = vpack.c.b16 %v1462, %v1460
  %v1741 = vpack.c.b16 %v1465, %v1463
  %v1742 = vpack.c.b16 %v1466, %v1464
  %v1743 = vpack.c.b16 %v1469, %v1467
  %v1744 = vpack.c.b16 %v1470, %v1468
  %v1745 = vpack.c.b16 %v1473, %v1471
  %v1746 = vpack.c.b16 %v1474, %v1472
  %v1747 = vpack.c.b16 %v1477, %v1475
  %v1748 = vpack.c.b16 %v1478, %v1476
  %v1749 = vpack.c.b16 %v1481, %v1479
  %v1750 = vpack.c.b16 %v1482, %v1480
  %v1751 = vpack.c.b16 %v1485, %v1483
  %v1752 = vpack.c.b16 %v1486, %v1484
  %v1753 = vpack.c.b16 %v1489, %v1487
  %v1754 = vpack.c.b16 %v1490, %v1488
  %v1755 = vpack.c.b16 %v1493, %v1491
  %v1756 = vpack.c.b16 %v1494, %v1492
  %v1757 = vpack.c.b16 %v1497, %v1495
  %v1758 = vpack.c.b16 %v1498, %v1496
  %v1759 = vpack.c.b16 %v1501, %v1499
  %v1760 = vpack.c.b16 %v1502, %v1500
  %v1761 = vpack.c.b16 %v1505, %v1503
  %v1762 = vpack.c.b16 %v1506, %v1504
  %v1763 = vpack.c.b16 %v1509, %v1507
  %v1764 = vpack.c.b16 %v1510, %v1508
  %v1765 = vpack.c.b16 %v1513, %v1511
  %v1766 = vpack.c.b16 %v1514, %v1512
  %v1767 = vpack.c.b16 %v1517, %v1515
  %v1768 = vpack.c.b16 %v1518, %v1516
  %v1769 = vpack.c.b16 %v1521, %v1519
  %v1770 = vpack.c.b16 %v1522, %v1520
  %v1771 = vpack.c.b16 %v1525, %v1523
  %v1772 = vpack.c.b16 %v1526, %v1524
  %v1773 = vpack.c.b16 %v1529, %v1527
  %v1774 = vpack.c.b16 %v1530, %v1528
  %v1775 = vpack.c.b16 %v1533, %v1531
  %v1776 = vpack.c.b16 %v1534, %v1532
  %v1777 = vpack.c.b16 %v1537, %v1535
  %v1778 = vpack.c.b16 %v1538, %v1536
  %2019 = vmatprep.subr.bf16.mxu0 %v1554
  %2020 = vmatpush1.bf16.msra.mxu0 %v1553
  %2021 = vmatprep.subr.bf16.mxu0 %v1552
  %2022 = vmatpush1.bf16.msra.mxu0 %v1551
  %2023 = vmatprep.subr.bf16.mxu0 %v1550
  %2024 = vmatpush1.bf16.msra.mxu0 %v1549
  %2025 = vmatprep.subr.bf16.mxu0 %v1548
  %2026 = vmatpush1.bf16.msra.mxu0 %v1547
  %2027 = vmatprep.subr.bf16.mxu0 %v1546
  %2028 = vmatpush1.bf16.msra.mxu0 %v1545
  %2029 = vmatprep.subr.bf16.mxu0 %v1544
  %2030 = vmatpush1.bf16.msra.mxu0 %v1543
  %2031 = vmatprep.subr.bf16.mxu0 %v1542
  %2032 = vmatpush1.bf16.msra.mxu0 %v1541
  %2033 = vmatprep.subr.bf16.mxu0 %v1540
  %2034 = vmatpush1.bf16.msra.mxu0 %v1539
  %2035 = vmatprep.subr.bf16.mxu0 %v1570
  %2036 = vmatpush2.bf16.msra.mxu0 %v1569
  %2037 = vmatprep.subr.bf16.mxu0 %v1568
  %2038 = vmatpush2.bf16.msra.mxu0 %v1567
  %2039 = vmatprep.subr.bf16.mxu0 %v1566
  %2040 = vmatpush2.bf16.msra.mxu0 %v1565
  %2041 = vmatprep.subr.bf16.mxu0 %v1564
  %2042 = vmatpush2.bf16.msra.mxu0 %v1563
  %2043 = vmatprep.subr.bf16.mxu0 %v1562
  %2044 = vmatpush2.bf16.msra.mxu0 %v1561
  %2045 = vmatprep.subr.bf16.mxu0 %v1560
  %2046 = vmatpush2.bf16.msra.mxu0 %v1559
  %2047 = vmatprep.subr.bf16.mxu0 %v1558
  %2048 = vmatpush2.bf16.msra.mxu0 %v1557
  %2049 = vmatprep.subr.bf16.mxu0 %v1556
  %2050 = vmatpush2.bf16.msra.mxu0 %v1555
  %2051 = vmatprep.mubr.bf16.mxu0 %v640
  %2052 = vmatmul.mubr.bf16.gmra.mxu0 %v639
  %v2053 = vpop.f32.mrf.mxu0
  %v2054 = vadd.f32 %v356, %v2053
  %v2055 = vpop.f32.mrf.mxu0
  %v2056 = vadd.f32 %v360, %v2055
  %v2057 = vpop.f32.mrf.mxu0
  %v2058 = vadd.f32 %v356, %v2057
  %v2059 = vpop.f32.mrf.mxu0
  %v2060 = vadd.f32 %v360, %v2059
  %2061 = vmatprep.mubr.bf16.mxu0 %v655
  %2062 = vmatmul.mubr.bf16.gmra.mxu0 %v654
  %v2063 = vpop.f32.mrf.mxu0
  %v2064 = vadd.f32 %v356, %v2063
  %v2065 = vpop.f32.mrf.mxu0
  %v2066 = vadd.f32 %v360, %v2065
  %v2067 = vpop.f32.mrf.mxu0
  %v2068 = vadd.f32 %v356, %v2067
  %v2069 = vpop.f32.mrf.mxu0
  %v2070 = vadd.f32 %v360, %v2069
  %2071 = vmatprep.mubr.bf16.mxu0 %v670
  %2072 = vmatmul.mubr.bf16.gmra.mxu0 %v669
  %v2073 = vpop.f32.mrf.mxu0
  %v2074 = vadd.f32 %v356, %v2073
  %v2075 = vpop.f32.mrf.mxu0
  %v2076 = vadd.f32 %v360, %v2075
  %v2077 = vpop.f32.mrf.mxu0
  %v2078 = vadd.f32 %v356, %v2077
  %v2079 = vpop.f32.mrf.mxu0
  %v2080 = vadd.f32 %v360, %v2079
  %2081 = vmatprep.mubr.bf16.mxu0 %v685
  %2082 = vmatmul.mubr.bf16.gmra.mxu0 %v684
  %v2083 = vpop.f32.mrf.mxu0
  %v2084 = vadd.f32 %v356, %v2083
  %v2085 = vpop.f32.mrf.mxu0
  %v2086 = vadd.f32 %v360, %v2085
  %v2087 = vpop.f32.mrf.mxu0
  %v2088 = vadd.f32 %v356, %v2087
  %v2089 = vpop.f32.mrf.mxu0
  %v2090 = vadd.f32 %v360, %v2089
  %2091 = vmatprep.mubr.bf16.mxu0 %v700
  %2092 = vmatmul.mubr.bf16.gmra.mxu0 %v699
  %v2093 = vpop.f32.mrf.mxu0
  %v2094 = vadd.f32 %v356, %v2093
  %v2095 = vpop.f32.mrf.mxu0
  %v2096 = vadd.f32 %v360, %v2095
  %v2097 = vpop.f32.mrf.mxu0
  %v2098 = vadd.f32 %v356, %v2097
  %v2099 = vpop.f32.mrf.mxu0
  %v2100 = vadd.f32 %v360, %v2099
  %2101 = vmatprep.mubr.bf16.mxu0 %v715
  %2102 = vmatmul.mubr.bf16.gmra.mxu0 %v714
  %v2103 = vpop.f32.mrf.mxu0
  %v2104 = vadd.f32 %v356, %v2103
  %v2105 = vpop.f32.mrf.mxu0
  %v2106 = vadd.f32 %v360, %v2105
  %v2107 = vpop.f32.mrf.mxu0
  %v2108 = vadd.f32 %v356, %v2107
  %v2109 = vpop.f32.mrf.mxu0
  %v2110 = vadd.f32 %v360, %v2109
  %2111 = vdwg.mxu0
  %2112 = vmatprep.subr.bf16.mxu0 %v1586
  %2113 = vmatpush1.bf16.msra.mxu0 %v1585
  %2114 = vmatprep.subr.bf16.mxu0 %v1584
  %2115 = vmatpush1.bf16.msra.mxu0 %v1583
  %2116 = vmatprep.subr.bf16.mxu0 %v1582
  %2117 = vmatpush1.bf16.msra.mxu0 %v1581
  %2118 = vmatprep.subr.bf16.mxu0 %v1580
  %2119 = vmatpush1.bf16.msra.mxu0 %v1579
  %2120 = vmatprep.subr.bf16.mxu0 %v1578
  %2121 = vmatpush1.bf16.msra.mxu0 %v1577
  %2122 = vmatprep.subr.bf16.mxu0 %v1576
  %2123 = vmatpush1.bf16.msra.mxu0 %v1575
  %2124 = vmatprep.subr.bf16.mxu0 %v1574
  %2125 = vmatpush1.bf16.msra.mxu0 %v1573
  %2126 = vmatprep.subr.bf16.mxu0 %v1572
  %2127 = vmatpush1.bf16.msra.mxu0 %v1571
  %2128 = vmatprep.subr.bf16.mxu0 %v1602
  %2129 = vmatpush2.bf16.msra.mxu0 %v1601
  %2130 = vmatprep.subr.bf16.mxu0 %v1600
  %2131 = vmatpush2.bf16.msra.mxu0 %v1599
  %2132 = vmatprep.subr.bf16.mxu0 %v1598
  %2133 = vmatpush2.bf16.msra.mxu0 %v1597
  %2134 = vmatprep.subr.bf16.mxu0 %v1596
  %2135 = vmatpush2.bf16.msra.mxu0 %v1595
  %2136 = vmatprep.subr.bf16.mxu0 %v1594
  %2137 = vmatpush2.bf16.msra.mxu0 %v1593
  %2138 = vmatprep.subr.bf16.mxu0 %v1592
  %2139 = vmatpush2.bf16.msra.mxu0 %v1591
  %2140 = vmatprep.subr.bf16.mxu0 %v1590
  %2141 = vmatpush2.bf16.msra.mxu0 %v1589
  %2142 = vmatprep.subr.bf16.mxu0 %v1588
  %2143 = vmatpush2.bf16.msra.mxu0 %v1587
  %2144 = vmatprep.mubr.bf16.mxu0 %v642
  %2145 = vmatmul.mubr.bf16.gmra.mxu0 %v641
  %v2146 = vpop.f32.mrf.mxu0
  %v2147 = vadd.f32 %v2054, %v2146
  %v2148 = vpop.f32.mrf.mxu0
  %v2149 = vadd.f32 %v2056, %v2148
  %v2150 = vpop.f32.mrf.mxu0
  %v2151 = vadd.f32 %v2058, %v2150
  %v2152 = vpop.f32.mrf.mxu0
  %v2153 = vadd.f32 %v2060, %v2152
  %2154 = vmatprep.mubr.bf16.mxu0 %v657
  %2155 = vmatmul.mubr.bf16.gmra.mxu0 %v656
  %v2156 = vpop.f32.mrf.mxu0
  %v2157 = vadd.f32 %v2064, %v2156
  %v2158 = vpop.f32.mrf.mxu0
  %v2159 = vadd.f32 %v2066, %v2158
  %v2160 = vpop.f32.mrf.mxu0
  %v2161 = vadd.f32 %v2068, %v2160
  %v2162 = vpop.f32.mrf.mxu0
  %v2163 = vadd.f32 %v2070, %v2162
  %2164 = vmatprep.mubr.bf16.mxu0 %v672
  %2165 = vmatmul.mubr.bf16.gmra.mxu0 %v671
  %v2166 = vpop.f32.mrf.mxu0
  %v2167 = vadd.f32 %v2074, %v2166
  %v2168 = vpop.f32.mrf.mxu0
  %v2169 = vadd.f32 %v2076, %v2168
  %v2170 = vpop.f32.mrf.mxu0
  %v2171 = vadd.f32 %v2078, %v2170
  %v2172 = vpop.f32.mrf.mxu0
  %v2173 = vadd.f32 %v2080, %v2172
  %2174 = vmatprep.mubr.bf16.mxu0 %v687
  %2175 = vmatmul.mubr.bf16.gmra.mxu0 %v686
  %v2176 = vpop.f32.mrf.mxu0
  %v2177 = vadd.f32 %v2084, %v2176
  %v2178 = vpop.f32.mrf.mxu0
  %v2179 = vadd.f32 %v2086, %v2178
  %v2180 = vpop.f32.mrf.mxu0
  %v2181 = vadd.f32 %v2088, %v2180
  %v2182 = vpop.f32.mrf.mxu0
  %v2183 = vadd.f32 %v2090, %v2182
  %2184 = vmatprep.mubr.bf16.mxu0 %v702
  %2185 = vmatmul.mubr.bf16.gmra.mxu0 %v701
  %v2186 = vpop.f32.mrf.mxu0
  %v2187 = vadd.f32 %v2094, %v2186
  %v2188 = vpop.f32.mrf.mxu0
  %v2189 = vadd.f32 %v2096, %v2188
  %v2190 = vpop.f32.mrf.mxu0
  %v2191 = vadd.f32 %v2098, %v2190
  %v2192 = vpop.f32.mrf.mxu0
  %v2193 = vadd.f32 %v2100, %v2192
  %2194 = vmatprep.mubr.bf16.mxu0 %v717
  %2195 = vmatmul.mubr.bf16.gmra.mxu0 %v716
  %v2196 = vpop.f32.mrf.mxu0
  %v2197 = vadd.f32 %v2104, %v2196
  %v2198 = vpop.f32.mrf.mxu0
  %v2199 = vadd.f32 %v2106, %v2198
  %v2200 = vpop.f32.mrf.mxu0
  %v2201 = vadd.f32 %v2108, %v2200
  %v2202 = vpop.f32.mrf.mxu0
  %v2203 = vadd.f32 %v2110, %v2202
  %2204 = vdwg.mxu0
  %2205 = vmatprep.subr.bf16.mxu0 %v1618
  %2206 = vmatpush1.bf16.msra.mxu0 %v1617
  %2207 = vmatprep.subr.bf16.mxu0 %v1616
  %2208 = vmatpush1.bf16.msra.mxu0 %v1615
  %2209 = vmatprep.subr.bf16.mxu0 %v1614
  %2210 = vmatpush1.bf16.msra.mxu0 %v1613
  %2211 = vmatprep.subr.bf16.mxu0 %v1612
  %2212 = vmatpush1.bf16.msra.mxu0 %v1611
  %2213 = vmatprep.subr.bf16.mxu0 %v1610
  %2214 = vmatpush1.bf16.msra.mxu0 %v1609
  %2215 = vmatprep.subr.bf16.mxu0 %v1608
  %2216 = vmatpush1.bf16.msra.mxu0 %v1607
  %2217 = vmatprep.subr.bf16.mxu0 %v1606
  %2218 = vmatpush1.bf16.msra.mxu0 %v1605
  %2219 = vmatprep.subr.bf16.mxu0 %v1604
  %2220 = vmatpush1.bf16.msra.mxu0 %v1603
  %2221 = vmatprep.subr.bf16.mxu0 %v1634
  %2222 = vmatpush2.bf16.msra.mxu0 %v1633
  %2223 = vmatprep.subr.bf16.mxu0 %v1632
  %2224 = vmatpush2.bf16.msra.mxu0 %v1631
  %2225 = vmatprep.subr.bf16.mxu0 %v1630
  %2226 = vmatpush2.bf16.msra.mxu0 %v1629
  %2227 = vmatprep.subr.bf16.mxu0 %v1628
  %2228 = vmatpush2.bf16.msra.mxu0 %v1627
  %2229 = vmatprep.subr.bf16.mxu0 %v1626
  %2230 = vmatpush2.bf16.msra.mxu0 %v1625
  %2231 = vmatprep.subr.bf16.mxu0 %v1624
  %2232 = vmatpush2.bf16.msra.mxu0 %v1623
  %2233 = vmatprep.subr.bf16.mxu0 %v1622
  %2234 = vmatpush2.bf16.msra.mxu0 %v1621
  %2235 = vmatprep.subr.bf16.mxu0 %v1620
  %2236 = vmatpush2.bf16.msra.mxu0 %v1619
  %2237 = vmatprep.mubr.bf16.mxu0 %v644
  %2238 = vmatmul.mubr.bf16.gmra.mxu0 %v643
  %v2239 = vpop.f32.mrf.mxu0
  %v2240 = vadd.f32 %v2147, %v2239
  %v2241 = vpop.f32.mrf.mxu0
  %v2242 = vadd.f32 %v2149, %v2241
  %v2243 = vpop.f32.mrf.mxu0
  %v2244 = vadd.f32 %v2151, %v2243
  %v2245 = vpop.f32.mrf.mxu0
  %v2246 = vadd.f32 %v2153, %v2245
  %2247 = vmatprep.mubr.bf16.mxu0 %v659
  %2248 = vmatmul.mubr.bf16.gmra.mxu0 %v658
  %v2249 = vpop.f32.mrf.mxu0
  %v2250 = vadd.f32 %v2157, %v2249
  %v2251 = vpop.f32.mrf.mxu0
  %v2252 = vadd.f32 %v2159, %v2251
  %v2253 = vpop.f32.mrf.mxu0
  %v2254 = vadd.f32 %v2161, %v2253
  %v2255 = vpop.f32.mrf.mxu0
  %v2256 = vadd.f32 %v2163, %v2255
  %2257 = vmatprep.mubr.bf16.mxu0 %v674
  %2258 = vmatmul.mubr.bf16.gmra.mxu0 %v673
  %v2259 = vpop.f32.mrf.mxu0
  %v2260 = vadd.f32 %v2167, %v2259
  %v2261 = vpop.f32.mrf.mxu0
  %v2262 = vadd.f32 %v2169, %v2261
  %v2263 = vpop.f32.mrf.mxu0
  %v2264 = vadd.f32 %v2171, %v2263
  %v2265 = vpop.f32.mrf.mxu0
  %v2266 = vadd.f32 %v2173, %v2265
  %2267 = vmatprep.mubr.bf16.mxu0 %v689
  %2268 = vmatmul.mubr.bf16.gmra.mxu0 %v688
  %v2269 = vpop.f32.mrf.mxu0
  %v2270 = vadd.f32 %v2177, %v2269
  %v2271 = vpop.f32.mrf.mxu0
  %v2272 = vadd.f32 %v2179, %v2271
  %v2273 = vpop.f32.mrf.mxu0
  %v2274 = vadd.f32 %v2181, %v2273
  %v2275 = vpop.f32.mrf.mxu0
  %v2276 = vadd.f32 %v2183, %v2275
  %2277 = vmatprep.mubr.bf16.mxu0 %v704
  %2278 = vmatmul.mubr.bf16.gmra.mxu0 %v703
  %v2279 = vpop.f32.mrf.mxu0
  %v2280 = vadd.f32 %v2187, %v2279
  %v2281 = vpop.f32.mrf.mxu0
  %v2282 = vadd.f32 %v2189, %v2281
  %v2283 = vpop.f32.mrf.mxu0
  %v2284 = vadd.f32 %v2191, %v2283
  %v2285 = vpop.f32.mrf.mxu0
  %v2286 = vadd.f32 %v2193, %v2285
  %2287 = vmatprep.mubr.bf16.mxu0 %v719
  %2288 = vmatmul.mubr.bf16.gmra.mxu0 %v718
  %v2289 = vpop.f32.mrf.mxu0
  %v2290 = vadd.f32 %v2197, %v2289
  %v2291 = vpop.f32.mrf.mxu0
  %v2292 = vadd.f32 %v2199, %v2291
  %v2293 = vpop.f32.mrf.mxu0
  %v2294 = vadd.f32 %v2201, %v2293
  %v2295 = vpop.f32.mrf.mxu0
  %v2296 = vadd.f32 %v2203, %v2295
  %2297 = vdwg.mxu0
  %2298 = vmatprep.subr.bf16.mxu0 %v1650
  %2299 = vmatpush1.bf16.msra.mxu0 %v1649
  %2300 = vmatprep.subr.bf16.mxu0 %v1648
  %2301 = vmatpush1.bf16.msra.mxu0 %v1647
  %2302 = vmatprep.subr.bf16.mxu0 %v1646
  %2303 = vmatpush1.bf16.msra.mxu0 %v1645
  %2304 = vmatprep.subr.bf16.mxu0 %v1644
  %2305 = vmatpush1.bf16.msra.mxu0 %v1643
  %2306 = vmatprep.subr.bf16.mxu0 %v1642
  %2307 = vmatpush1.bf16.msra.mxu0 %v1641
  %2308 = vmatprep.subr.bf16.mxu0 %v1640
  %2309 = vmatpush1.bf16.msra.mxu0 %v1639
  %2310 = vmatprep.subr.bf16.mxu0 %v1638
  %2311 = vmatpush1.bf16.msra.mxu0 %v1637
  %2312 = vmatprep.subr.bf16.mxu0 %v1636
  %2313 = vmatpush1.bf16.msra.mxu0 %v1635
  %2314 = vmatprep.subr.bf16.mxu0 %v1666
  %2315 = vmatpush2.bf16.msra.mxu0 %v1665
  %2316 = vmatprep.subr.bf16.mxu0 %v1664
  %2317 = vmatpush2.bf16.msra.mxu0 %v1663
  %2318 = vmatprep.subr.bf16.mxu0 %v1662
  %2319 = vmatpush2.bf16.msra.mxu0 %v1661
  %2320 = vmatprep.subr.bf16.mxu0 %v1660
  %2321 = vmatpush2.bf16.msra.mxu0 %v1659
  %2322 = vmatprep.subr.bf16.mxu0 %v1658
  %2323 = vmatpush2.bf16.msra.mxu0 %v1657
  %2324 = vmatprep.subr.bf16.mxu0 %v1656
  %2325 = vmatpush2.bf16.msra.mxu0 %v1655
  %2326 = vmatprep.subr.bf16.mxu0 %v1654
  %2327 = vmatpush2.bf16.msra.mxu0 %v1653
  %2328 = vmatprep.subr.bf16.mxu0 %v1652
  %2329 = vmatpush2.bf16.msra.mxu0 %v1651
  %2330 = vmatprep.mubr.bf16.mxu0 %v646
  %2331 = vmatmul.mubr.bf16.gmra.mxu0 %v645
  %v2332 = vpop.f32.mrf.mxu0
  %v2333 = vadd.f32 %v2240, %v2332
  %v2334 = vpop.f32.mrf.mxu0
  %v2335 = vadd.f32 %v2242, %v2334
  %v2336 = vpop.f32.mrf.mxu0
  %v2337 = vadd.f32 %v2244, %v2336
  %v2338 = vpop.f32.mrf.mxu0
  %v2339 = vadd.f32 %v2246, %v2338
  %2340 = vmatprep.mubr.bf16.mxu0 %v661
  %2341 = vmatmul.mubr.bf16.gmra.mxu0 %v660
  %v2342 = vpop.f32.mrf.mxu0
  %v2343 = vadd.f32 %v2250, %v2342
  %v2344 = vpop.f32.mrf.mxu0
  %v2345 = vadd.f32 %v2252, %v2344
  %v2346 = vpop.f32.mrf.mxu0
  %v2347 = vadd.f32 %v2254, %v2346
  %v2348 = vpop.f32.mrf.mxu0
  %v2349 = vadd.f32 %v2256, %v2348
  %2350 = vmatprep.mubr.bf16.mxu0 %v676
  %2351 = vmatmul.mubr.bf16.gmra.mxu0 %v675
  %v2352 = vpop.f32.mrf.mxu0
  %v2353 = vadd.f32 %v2260, %v2352
  %v2354 = vpop.f32.mrf.mxu0
  %v2355 = vadd.f32 %v2262, %v2354
  %v2356 = vpop.f32.mrf.mxu0
  %v2357 = vadd.f32 %v2264, %v2356
  %v2358 = vpop.f32.mrf.mxu0
  %v2359 = vadd.f32 %v2266, %v2358
  %2360 = vmatprep.mubr.bf16.mxu0 %v691
  %2361 = vmatmul.mubr.bf16.gmra.mxu0 %v690
  %v2362 = vpop.f32.mrf.mxu0
  %v2363 = vadd.f32 %v2270, %v2362
  %v2364 = vpop.f32.mrf.mxu0
  %v2365 = vadd.f32 %v2272, %v2364
  %v2366 = vpop.f32.mrf.mxu0
  %v2367 = vadd.f32 %v2274, %v2366
  %v2368 = vpop.f32.mrf.mxu0
  %v2369 = vadd.f32 %v2276, %v2368
  %2370 = vmatprep.mubr.bf16.mxu0 %v706
  %2371 = vmatmul.mubr.bf16.gmra.mxu0 %v705
  %v2372 = vpop.f32.mrf.mxu0
  %v2373 = vadd.f32 %v2280, %v2372
  %v2374 = vpop.f32.mrf.mxu0
  %v2375 = vadd.f32 %v2282, %v2374
  %v2376 = vpop.f32.mrf.mxu0
  %v2377 = vadd.f32 %v2284, %v2376
  %v2378 = vpop.f32.mrf.mxu0
  %v2379 = vadd.f32 %v2286, %v2378
  %2380 = vmatprep.mubr.bf16.mxu0 %v721
  %2381 = vmatmul.mubr.bf16.gmra.mxu0 %v720
  %v2382 = vpop.f32.mrf.mxu0
  %v2383 = vadd.f32 %v2290, %v2382
  %v2384 = vpop.f32.mrf.mxu0
  %v2385 = vadd.f32 %v2292, %v2384
  %v2386 = vpop.f32.mrf.mxu0
  %v2387 = vadd.f32 %v2294, %v2386
  %v2388 = vpop.f32.mrf.mxu0
  %v2389 = vadd.f32 %v2296, %v2388
  %2390 = vdwg.mxu0
  %2391 = vmatprep.subr.bf16.mxu0 %v1682
  %2392 = vmatpush1.bf16.msra.mxu0 %v1681
  %2393 = vmatprep.subr.bf16.mxu0 %v1680
  %2394 = vmatpush1.bf16.msra.mxu0 %v1679
  %2395 = vmatprep.subr.bf16.mxu0 %v1678
  %2396 = vmatpush1.bf16.msra.mxu0 %v1677
  %2397 = vmatprep.subr.bf16.mxu0 %v1676
  %2398 = vmatpush1.bf16.msra.mxu0 %v1675
  %2399 = vmatprep.subr.bf16.mxu0 %v1674
  %2400 = vmatpush1.bf16.msra.mxu0 %v1673
  %2401 = vmatprep.subr.bf16.mxu0 %v1672
  %2402 = vmatpush1.bf16.msra.mxu0 %v1671
  %2403 = vmatprep.subr.bf16.mxu0 %v1670
  %2404 = vmatpush1.bf16.msra.mxu0 %v1669
  %2405 = vmatprep.subr.bf16.mxu0 %v1668
  %2406 = vmatpush1.bf16.msra.mxu0 %v1667
  %2407 = vmatprep.subr.bf16.mxu0 %v1698
  %2408 = vmatpush2.bf16.msra.mxu0 %v1697
  %2409 = vmatprep.subr.bf16.mxu0 %v1696
  %2410 = vmatpush2.bf16.msra.mxu0 %v1695
  %2411 = vmatprep.subr.bf16.mxu0 %v1694
  %2412 = vmatpush2.bf16.msra.mxu0 %v1693
  %2413 = vmatprep.subr.bf16.mxu0 %v1692
  %2414 = vmatpush2.bf16.msra.mxu0 %v1691
  %2415 = vmatprep.subr.bf16.mxu0 %v1690
  %2416 = vmatpush2.bf16.msra.mxu0 %v1689
  %2417 = vmatprep.subr.bf16.mxu0 %v1688
  %2418 = vmatpush2.bf16.msra.mxu0 %v1687
  %2419 = vmatprep.subr.bf16.mxu0 %v1686
  %2420 = vmatpush2.bf16.msra.mxu0 %v1685
  %2421 = vmatprep.subr.bf16.mxu0 %v1684
  %2422 = vmatpush2.bf16.msra.mxu0 %v1683
  %2423 = vmatprep.mubr.bf16.mxu0 %v648
  %2424 = vmatmul.mubr.bf16.gmra.mxu0 %v647
  %v2425 = vpop.f32.mrf.mxu0
  %v2426 = vadd.f32 %v2333, %v2425
  %v2427 = vpop.f32.mrf.mxu0
  %v2428 = vadd.f32 %v2335, %v2427
  %v2429 = vpop.f32.mrf.mxu0
  %v2430 = vadd.f32 %v2337, %v2429
  %v2431 = vpop.f32.mrf.mxu0
  %v2432 = vadd.f32 %v2339, %v2431
  %2433 = vmatprep.mubr.bf16.mxu0 %v663
  %2434 = vmatmul.mubr.bf16.gmra.mxu0 %v662
  %v2435 = vpop.f32.mrf.mxu0
  %v2436 = vadd.f32 %v2343, %v2435
  %v2437 = vpop.f32.mrf.mxu0
  %v2438 = vadd.f32 %v2345, %v2437
  %v2439 = vpop.f32.mrf.mxu0
  %v2440 = vadd.f32 %v2347, %v2439
  %v2441 = vpop.f32.mrf.mxu0
  %v2442 = vadd.f32 %v2349, %v2441
  %2443 = vmatprep.mubr.bf16.mxu0 %v678
  %2444 = vmatmul.mubr.bf16.gmra.mxu0 %v677
  %v2445 = vpop.f32.mrf.mxu0
  %v2446 = vadd.f32 %v2353, %v2445
  %v2447 = vpop.f32.mrf.mxu0
  %v2448 = vadd.f32 %v2355, %v2447
  %v2449 = vpop.f32.mrf.mxu0
  %v2450 = vadd.f32 %v2357, %v2449
  %v2451 = vpop.f32.mrf.mxu0
  %v2452 = vadd.f32 %v2359, %v2451
  %2453 = vmatprep.mubr.bf16.mxu0 %v693
  %2454 = vmatmul.mubr.bf16.gmra.mxu0 %v692
  %v2455 = vpop.f32.mrf.mxu0
  %v2456 = vadd.f32 %v2363, %v2455
  %v2457 = vpop.f32.mrf.mxu0
  %v2458 = vadd.f32 %v2365, %v2457
  %v2459 = vpop.f32.mrf.mxu0
  %v2460 = vadd.f32 %v2367, %v2459
  %v2461 = vpop.f32.mrf.mxu0
  %v2462 = vadd.f32 %v2369, %v2461
  %2463 = vmatprep.mubr.bf16.mxu0 %v708
  %2464 = vmatmul.mubr.bf16.gmra.mxu0 %v707
  %v2465 = vpop.f32.mrf.mxu0
  %v2466 = vadd.f32 %v2373, %v2465
  %v2467 = vpop.f32.mrf.mxu0
  %v2468 = vadd.f32 %v2375, %v2467
  %v2469 = vpop.f32.mrf.mxu0
  %v2470 = vadd.f32 %v2377, %v2469
  %v2471 = vpop.f32.mrf.mxu0
  %v2472 = vadd.f32 %v2379, %v2471
  %2473 = vmatprep.mubr.bf16.mxu0 %v723
  %2474 = vmatmul.mubr.bf16.gmra.mxu0 %v722
  %v2475 = vpop.f32.mrf.mxu0
  %v2476 = vadd.f32 %v2383, %v2475
  %v2477 = vpop.f32.mrf.mxu0
  %v2478 = vadd.f32 %v2385, %v2477
  %v2479 = vpop.f32.mrf.mxu0
  %v2480 = vadd.f32 %v2387, %v2479
  %v2481 = vpop.f32.mrf.mxu0
  %v2482 = vadd.f32 %v2389, %v2481
  %2483 = vdwg.mxu0
  %2484 = vmatprep.subr.bf16.mxu0 %v1714
  %2485 = vmatpush1.bf16.msra.mxu0 %v1713
  %2486 = vmatprep.subr.bf16.mxu0 %v1712
  %2487 = vmatpush1.bf16.msra.mxu0 %v1711
  %2488 = vmatprep.subr.bf16.mxu0 %v1710
  %2489 = vmatpush1.bf16.msra.mxu0 %v1709
  %2490 = vmatprep.subr.bf16.mxu0 %v1708
  %2491 = vmatpush1.bf16.msra.mxu0 %v1707
  %2492 = vmatprep.subr.bf16.mxu0 %v1706
  %2493 = vmatpush1.bf16.msra.mxu0 %v1705
  %2494 = vmatprep.subr.bf16.mxu0 %v1704
  %2495 = vmatpush1.bf16.msra.mxu0 %v1703
  %2496 = vmatprep.subr.bf16.mxu0 %v1702
  %2497 = vmatpush1.bf16.msra.mxu0 %v1701
  %2498 = vmatprep.subr.bf16.mxu0 %v1700
  %2499 = vmatpush1.bf16.msra.mxu0 %v1699
  %2500 = vmatprep.subr.bf16.mxu0 %v1730
  %2501 = vmatpush2.bf16.msra.mxu0 %v1729
  %2502 = vmatprep.subr.bf16.mxu0 %v1728
  %2503 = vmatpush2.bf16.msra.mxu0 %v1727
  %2504 = vmatprep.subr.bf16.mxu0 %v1726
  %2505 = vmatpush2.bf16.msra.mxu0 %v1725
  %2506 = vmatprep.subr.bf16.mxu0 %v1724
  %2507 = vmatpush2.bf16.msra.mxu0 %v1723
  %2508 = vmatprep.subr.bf16.mxu0 %v1722
  %2509 = vmatpush2.bf16.msra.mxu0 %v1721
  %2510 = vmatprep.subr.bf16.mxu0 %v1720
  %2511 = vmatpush2.bf16.msra.mxu0 %v1719
  %2512 = vmatprep.subr.bf16.mxu0 %v1718
  %2513 = vmatpush2.bf16.msra.mxu0 %v1717
  %2514 = vmatprep.subr.bf16.mxu0 %v1716
  %2515 = vmatpush2.bf16.msra.mxu0 %v1715
  %2516 = vmatprep.mubr.bf16.mxu0 %v650
  %2517 = vmatmul.mubr.bf16.gmra.mxu0 %v649
  %v2518 = vpop.f32.mrf.mxu0
  %v2519 = vadd.f32 %v2426, %v2518
  %v2520 = vpop.f32.mrf.mxu0
  %v2521 = vadd.f32 %v2428, %v2520
  %v2522 = vpop.f32.mrf.mxu0
  %v2523 = vadd.f32 %v2430, %v2522
  %v2524 = vpop.f32.mrf.mxu0
  %v2525 = vadd.f32 %v2432, %v2524
  %2526 = vmatprep.mubr.bf16.mxu0 %v665
  %2527 = vmatmul.mubr.bf16.gmra.mxu0 %v664
  %v2528 = vpop.f32.mrf.mxu0
  %v2529 = vadd.f32 %v2436, %v2528
  %v2530 = vpop.f32.mrf.mxu0
  %v2531 = vadd.f32 %v2438, %v2530
  %v2532 = vpop.f32.mrf.mxu0
  %v2533 = vadd.f32 %v2440, %v2532
  %v2534 = vpop.f32.mrf.mxu0
  %v2535 = vadd.f32 %v2442, %v2534
  %2536 = vmatprep.mubr.bf16.mxu0 %v680
  %2537 = vmatmul.mubr.bf16.gmra.mxu0 %v679
  %v2538 = vpop.f32.mrf.mxu0
  %v2539 = vadd.f32 %v2446, %v2538
  %v2540 = vpop.f32.mrf.mxu0
  %v2541 = vadd.f32 %v2448, %v2540
  %v2542 = vpop.f32.mrf.mxu0
  %v2543 = vadd.f32 %v2450, %v2542
  %v2544 = vpop.f32.mrf.mxu0
  %v2545 = vadd.f32 %v2452, %v2544
  %2546 = vmatprep.mubr.bf16.mxu0 %v695
  %2547 = vmatmul.mubr.bf16.gmra.mxu0 %v694
  %v2548 = vpop.f32.mrf.mxu0
  %v2549 = vadd.f32 %v2456, %v2548
  %v2550 = vpop.f32.mrf.mxu0
  %v2551 = vadd.f32 %v2458, %v2550
  %v2552 = vpop.f32.mrf.mxu0
  %v2553 = vadd.f32 %v2460, %v2552
  %v2554 = vpop.f32.mrf.mxu0
  %v2555 = vadd.f32 %v2462, %v2554
  %2556 = vmatprep.mubr.bf16.mxu0 %v710
  %2557 = vmatmul.mubr.bf16.gmra.mxu0 %v709
  %v2558 = vpop.f32.mrf.mxu0
  %v2559 = vadd.f32 %v2466, %v2558
  %v2560 = vpop.f32.mrf.mxu0
  %v2561 = vadd.f32 %v2468, %v2560
  %v2562 = vpop.f32.mrf.mxu0
  %v2563 = vadd.f32 %v2470, %v2562
  %v2564 = vpop.f32.mrf.mxu0
  %v2565 = vadd.f32 %v2472, %v2564
  %2566 = vmatprep.mubr.bf16.mxu0 %v725
  %2567 = vmatmul.mubr.bf16.gmra.mxu0 %v724
  %v2568 = vpop.f32.mrf.mxu0
  %v2569 = vadd.f32 %v2476, %v2568
  %v2570 = vpop.f32.mrf.mxu0
  %v2571 = vadd.f32 %v2478, %v2570
  %v2572 = vpop.f32.mrf.mxu0
  %v2573 = vadd.f32 %v2480, %v2572
  %v2574 = vpop.f32.mrf.mxu0
  %v2575 = vadd.f32 %v2482, %v2574
  %2576 = vdwg.mxu0
  %2577 = vmatprep.subr.bf16.mxu0 %v1746
  %2578 = vmatpush1.bf16.msra.mxu0 %v1745
  %2579 = vmatprep.subr.bf16.mxu0 %v1744
  %2580 = vmatpush1.bf16.msra.mxu0 %v1743
  %2581 = vmatprep.subr.bf16.mxu0 %v1742
  %2582 = vmatpush1.bf16.msra.mxu0 %v1741
  %2583 = vmatprep.subr.bf16.mxu0 %v1740
  %2584 = vmatpush1.bf16.msra.mxu0 %v1739
  %2585 = vmatprep.subr.bf16.mxu0 %v1738
  %2586 = vmatpush1.bf16.msra.mxu0 %v1737
  %2587 = vmatprep.subr.bf16.mxu0 %v1736
  %2588 = vmatpush1.bf16.msra.mxu0 %v1735
  %2589 = vmatprep.subr.bf16.mxu0 %v1734
  %2590 = vmatpush1.bf16.msra.mxu0 %v1733
  %2591 = vmatprep.subr.bf16.mxu0 %v1732
  %2592 = vmatpush1.bf16.msra.mxu0 %v1731
  %2593 = vmatprep.subr.bf16.mxu0 %v1762
  %2594 = vmatpush2.bf16.msra.mxu0 %v1761
  %2595 = vmatprep.subr.bf16.mxu0 %v1760
  %2596 = vmatpush2.bf16.msra.mxu0 %v1759
  %2597 = vmatprep.subr.bf16.mxu0 %v1758
  %2598 = vmatpush2.bf16.msra.mxu0 %v1757
  %2599 = vmatprep.subr.bf16.mxu0 %v1756
  %2600 = vmatpush2.bf16.msra.mxu0 %v1755
  %2601 = vmatprep.subr.bf16.mxu0 %v1754
  %2602 = vmatpush2.bf16.msra.mxu0 %v1753
  %2603 = vmatprep.subr.bf16.mxu0 %v1752
  %2604 = vmatpush2.bf16.msra.mxu0 %v1751
  %2605 = vmatprep.subr.bf16.mxu0 %v1750
  %2606 = vmatpush2.bf16.msra.mxu0 %v1749
  %2607 = vmatprep.subr.bf16.mxu0 %v1748
  %2608 = vmatpush2.bf16.msra.mxu0 %v1747
  %2609 = vmatprep.mubr.bf16.mxu0 %v652
  %2610 = vmatmul.mubr.bf16.gmra.mxu0 %v651
  %v2611 = vpop.f32.mrf.mxu0
  %v2612 = vadd.f32 %v2519, %v2611
  %v2613 = vpop.f32.mrf.mxu0
  %v2614 = vadd.f32 %v2521, %v2613
  %v2615 = vpop.f32.mrf.mxu0
  %v2616 = vadd.f32 %v2523, %v2615
  %v2617 = vpop.f32.mrf.mxu0
  %v2618 = vadd.f32 %v2525, %v2617
  %2619 = vmatprep.mubr.bf16.mxu0 %v667
  %2620 = vmatmul.mubr.bf16.gmra.mxu0 %v666
  %v2621 = vpop.f32.mrf.mxu0
  %v2622 = vadd.f32 %v2529, %v2621
  %v2623 = vpop.f32.mrf.mxu0
  %v2624 = vadd.f32 %v2531, %v2623
  %v2625 = vpop.f32.mrf.mxu0
  %v2626 = vadd.f32 %v2533, %v2625
  %v2627 = vpop.f32.mrf.mxu0
  %v2628 = vadd.f32 %v2535, %v2627
  %2629 = vmatprep.mubr.bf16.mxu0 %v682
  %2630 = vmatmul.mubr.bf16.gmra.mxu0 %v681
  %v2631 = vpop.f32.mrf.mxu0
  %v2632 = vadd.f32 %v2539, %v2631
  %v2633 = vpop.f32.mrf.mxu0
  %v2634 = vadd.f32 %v2541, %v2633
  %v2635 = vpop.f32.mrf.mxu0
  %v2636 = vadd.f32 %v2543, %v2635
  %v2637 = vpop.f32.mrf.mxu0
  %v2638 = vadd.f32 %v2545, %v2637
  %2639 = vmatprep.mubr.bf16.mxu0 %v697
  %2640 = vmatmul.mubr.bf16.gmra.mxu0 %v696
  %v2641 = vpop.f32.mrf.mxu0
  %v2642 = vadd.f32 %v2549, %v2641
  %v2643 = vpop.f32.mrf.mxu0
  %v2644 = vadd.f32 %v2551, %v2643
  %v2645 = vpop.f32.mrf.mxu0
  %v2646 = vadd.f32 %v2553, %v2645
  %v2647 = vpop.f32.mrf.mxu0
  %v2648 = vadd.f32 %v2555, %v2647
  %2649 = vmatprep.mubr.bf16.mxu0 %v712
  %2650 = vmatmul.mubr.bf16.gmra.mxu0 %v711
  %v2651 = vpop.f32.mrf.mxu0
  %v2652 = vadd.f32 %v2559, %v2651
  %v2653 = vpop.f32.mrf.mxu0
  %v2654 = vadd.f32 %v2561, %v2653
  %v2655 = vpop.f32.mrf.mxu0
  %v2656 = vadd.f32 %v2563, %v2655
  %v2657 = vpop.f32.mrf.mxu0
  %v2658 = vadd.f32 %v2565, %v2657
  %2659 = vmatprep.mubr.bf16.mxu0 %v727
  %2660 = vmatmul.mubr.bf16.gmra.mxu0 %v726
  %v2661 = vpop.f32.mrf.mxu0
  %v2662 = vadd.f32 %v2569, %v2661
  %v2663 = vpop.f32.mrf.mxu0
  %v2664 = vadd.f32 %v2571, %v2663
  %v2665 = vpop.f32.mrf.mxu0
  %v2666 = vadd.f32 %v2573, %v2665
  %v2667 = vpop.f32.mrf.mxu0
  %v2668 = vadd.f32 %v2575, %v2667
  %2669 = vdwg.mxu0
  %2670 = vmatprep.subr.bf16.mxu0 %v1778
  %2671 = vmatpush1.bf16.msra.mxu0 %v1777
  %2672 = vmatprep.subr.bf16.mxu0 %v1776
  %2673 = vmatpush1.bf16.msra.mxu0 %v1775
  %2674 = vmatprep.subr.bf16.mxu0 %v1774
  %2675 = vmatpush1.bf16.msra.mxu0 %v1773
  %2676 = vmatprep.subr.bf16.mxu0 %v1772
  %2677 = vmatpush1.bf16.msra.mxu0 %v1771
  %2678 = vmatprep.subr.bf16.mxu0 %v1770
  %2679 = vmatpush1.bf16.msra.mxu0 %v1769
  %2680 = vmatprep.subr.bf16.mxu0 %v1768
  %2681 = vmatpush1.bf16.msra.mxu0 %v1767
  %2682 = vmatprep.subr.bf16.mxu0 %v1766
  %2683 = vmatpush1.bf16.msra.mxu0 %v1765
  %2684 = vmatprep.subr.bf16.mxu0 %v1764
  %2685 = vmatpush1.bf16.msra.mxu0 %v1763
  %2686 = vmatprep.subr.bf16.mxu0 0
  %2687 = vmatpush2.bf16.msra.mxu0 0
  %2688 = vmatprep.subr.bf16.mxu0 0
  %2689 = vmatpush2.bf16.msra.mxu0 0
  %2690 = vmatprep.subr.bf16.mxu0 0
  %2691 = vmatpush2.bf16.msra.mxu0 0
  %2692 = vmatprep.subr.bf16.mxu0 0
  %2693 = vmatpush2.bf16.msra.mxu0 0
  %2694 = vmatprep.subr.bf16.mxu0 0
  %2695 = vmatpush2.bf16.msra.mxu0 0
  %2696 = vmatprep.subr.bf16.mxu0 0
  %2697 = vmatpush2.bf16.msra.mxu0 0
  %2698 = vmatprep.subr.bf16.mxu0 0
  %2699 = vmatpush2.bf16.msra.mxu0 0
  %2700 = vmatprep.subr.bf16.mxu0 0
  %2701 = vmatpush2.bf16.msra.mxu0 0
  %2702 = vmatprep.mubr.bf16.mxu0 0
  %2703 = vmatmul.mubr.bf16.gmra.mxu0 %v653
  %v2704 = vpop.f32.mrf.mxu0
  %v2705 = vadd.f32 %v2612, %v2704
  %v2706 = vpop.f32.mrf.mxu0
  %v2707 = vadd.f32 %v2614, %v2706
  %v2708 = vpop.f32.mrf.mxu0
  %v2709 = vadd.f32 %v2616, %v2708
  %v2710 = vpop.f32.mrf.mxu0
  %v2711 = vadd.f32 %v2618, %v2710
  %2712 = vmatprep.mubr.bf16.mxu0 0
  %2713 = vmatmul.mubr.bf16.gmra.mxu0 %v668
  %v2714 = vpop.f32.mrf.mxu0
  %v2715 = vadd.f32 %v2622, %v2714
  %v2716 = vpop.f32.mrf.mxu0
  %v2717 = vadd.f32 %v2624, %v2716
  %v2718 = vpop.f32.mrf.mxu0
  %v2719 = vadd.f32 %v2626, %v2718
  %v2720 = vpop.f32.mrf.mxu0
  %v2721 = vadd.f32 %v2628, %v2720
  %2722 = vmatprep.mubr.bf16.mxu0 0
  %2723 = vmatmul.mubr.bf16.gmra.mxu0 %v683
  %v2724 = vpop.f32.mrf.mxu0
  %v2725 = vadd.f32 %v2632, %v2724
  %v2726 = vpop.f32.mrf.mxu0
  %v2727 = vadd.f32 %v2634, %v2726
  %v2728 = vpop.f32.mrf.mxu0
  %v2729 = vadd.f32 %v2636, %v2728
  %v2730 = vpop.f32.mrf.mxu0
  %v2731 = vadd.f32 %v2638, %v2730
  %2732 = vmatprep.mubr.bf16.mxu0 0
  %2733 = vmatmul.mubr.bf16.gmra.mxu0 %v698
  %v2734 = vpop.f32.mrf.mxu0
  %v2735 = vadd.f32 %v2642, %v2734
  %v2736 = vpop.f32.mrf.mxu0
  %v2737 = vadd.f32 %v2644, %v2736
  %v2738 = vpop.f32.mrf.mxu0
  %v2739 = vadd.f32 %v2646, %v2738
  %v2740 = vpop.f32.mrf.mxu0
  %v2741 = vadd.f32 %v2648, %v2740
  %2742 = vmatprep.mubr.bf16.mxu0 0
  %2743 = vmatmul.mubr.bf16.gmra.mxu0 %v713
  %v2744 = vpop.f32.mrf.mxu0
  %v2745 = vadd.f32 %v2652, %v2744
  %v2746 = vpop.f32.mrf.mxu0
  %v2747 = vadd.f32 %v2654, %v2746
  %v2748 = vpop.f32.mrf.mxu0
  %v2749 = vadd.f32 %v2656, %v2748
  %v2750 = vpop.f32.mrf.mxu0
  %v2751 = vadd.f32 %v2658, %v2750
  %2752 = vmatprep.mubr.bf16.mxu0 0
  %2753 = vmatmul.mubr.bf16.gmra.mxu0 %v728
  %v2754 = vpop.f32.mrf.mxu0
  %v2755 = vadd.f32 %v2662, %v2754
  %v2756 = vpop.f32.mrf.mxu0
  %v2757 = vadd.f32 %v2664, %v2756
  %v2758 = vpop.f32.mrf.mxu0
  %v2759 = vadd.f32 %v2666, %v2758
  %v2760 = vpop.f32.mrf.mxu0
  %v2761 = vadd.f32 %v2668, %v2760
  %2762 = vdwg.mxu0
  %v2763 = vmax.f32 %v2705, 0.0
  %v2764 = vmax.f32 %v2707, 0.0
  %v2765 = vmax.f32 %v2709, 0.0
  %v2766 = vmax.f32 %v2711, 0.0
  %v2767 = vmax.f32 %v2715, 0.0
  %v2768 = vmax.f32 %v2717, 0.0
  %v2769 = vmax.f32 %v2719, 0.0
  %v2770 = vmax.f32 %v2721, 0.0
  %v2771 = vmax.f32 %v2725, 0.0
  %v2772 = vmax.f32 %v2727, 0.0
  %v2773 = vmax.f32 %v2729, 0.0
  %v2774 = vmax.f32 %v2731, 0.0
  %v2775 = vmax.f32 %v2735, 0.0
  %v2776 = vmax.f32 %v2737, 0.0
  %v2777 = vmax.f32 %v2739, 0.0
  %v2778 = vmax.f32 %v2741, 0.0
  %v2779 = vmax.f32 %v2745, 0.0
  %v2780 = vmax.f32 %v2747, 0.0
  %v2781 = vmax.f32 %v2749, 0.0
  %v2782 = vmax.f32 %v2751, 0.0
  %v2783 = vmax.f32 %v2755, 0.0
  %v2784 = vmax.f32 %v2757, 0.0
  %v2785 = vmax.f32 %v2759, 0.0
  %v2786 = vmax.f32 %v2761, 0.0
  %v2787 = vpack.c.bf16 %v2765, %v2763
  %v2788 = vpack.c.bf16 %v2766, %v2764
  %v2789 = vpack.c.bf16 %v2769, %v2767
  %v2790 = vpack.c.bf16 %v2770, %v2768
  %v2791 = vpack.c.bf16 %v2773, %v2771
  %v2792 = vpack.c.bf16 %v2774, %v2772
  %v2793 = vpack.c.bf16 %v2777, %v2775
  %v2794 = vpack.c.bf16 %v2778, %v2776
  %v2795 = vpack.c.bf16 %v2781, %v2779
  %v2796 = vpack.c.bf16 %v2782, %v2780
  %v2797 = vpack.c.bf16 %v2785, %v2783
  %v2798 = vpack.c.bf16 %v2786, %v2784
  %v2811 = vunpack.c.l.b16 %v2787
  %v2812 = vunpack.c.l.b16 %v2788
  %v2813 = vunpack.c.h.b16 %v2787
  %v2814 = vunpack.c.h.b16 %v2788
  %v2815 = vunpack.c.l.b16 %v2789
  %v2816 = vunpack.c.l.b16 %v2790
  %v2817 = vunpack.c.h.b16 %v2789
  %v2818 = vunpack.c.h.b16 %v2790
  %v2819 = vunpack.c.l.b16 %v2791
  %v2820 = vunpack.c.l.b16 %v2792
  %v2821 = vunpack.c.h.b16 %v2791
  %v2822 = vunpack.c.h.b16 %v2792
  %v2823 = vunpack.c.l.b16 %v2793
  %v2824 = vunpack.c.l.b16 %v2794
  %v2825 = vunpack.c.h.b16 %v2793
  %v2826 = vunpack.c.h.b16 %v2794
  %v2827 = vunpack.c.l.b16 %v2795
  %v2828 = vunpack.c.l.b16 %v2796
  %v2829 = vunpack.c.h.b16 %v2795
  %v2830 = vunpack.c.h.b16 %v2796
  %v2831 = vunpack.c.l.b16 %v2797
  %v2832 = vunpack.c.l.b16 %v2798
  %v2833 = vunpack.c.h.b16 %v2797
  %v2834 = vunpack.c.h.b16 %v2798
  %v2835 = vpack.c.b16 %v2812, %v2811
  %v2836 = vpack.c.b16 %v2814, %v2813
  %v2837 = vpack.c.b16 %v2816, %v2815
  %v2838 = vpack.c.b16 %v2818, %v2817
  %v2839 = vpack.c.b16 %v2820, %v2819
  %v2840 = vpack.c.b16 %v2822, %v2821
  %v2841 = vpack.c.b16 %v2824, %v2823
  %v2842 = vpack.c.b16 %v2826, %v2825
  %v2843 = vpack.c.b16 %v2828, %v2827
  %v2844 = vpack.c.b16 %v2830, %v2829
  %v2845 = vpack.c.b16 %v2832, %v2831
  %v2846 = vpack.c.b16 %v2834, %v2833
  %2859 = vst [vmem:[%s3] sm:$0xff] %v2835
  %2860 = vst [vmem:[%s3 + $0x8] sm:$0xff] %v2836
  %2861 = vst [vmem:[%s3 + $0x10] sm:$0xff] %v2837
  %2862 = vst [vmem:[%s3 + $0x18] sm:$0xff] %v2838
  %2863 = vst [vmem:[%s3 + $0x20] sm:$0xff] %v2839
  %2864 = vst [vmem:[%s3 + $0x28] sm:$0xff] %v2840
  %2865 = vst [vmem:[%s3 + $0x30] sm:$0xff] %v2841
  %2866 = vst [vmem:[%s3 + $0x38] sm:$0xff] %v2842
  %2867 = vst [vmem:[%s3 + $0x40] sm:$0xff] %v2843
  %2868 = vst [vmem:[%s3 + $0x48] sm:$0xff] %v2844
  %2869 = vst [vmem:[%s3 + $0x50] sm:$0xff] %v2845
  %2870 = vst [vmem:[%s3 + $0x58] sm:$0xff] %v2846
  // Predicated region
  $region14: #{forward.9} parent=0 // pred_check
    _
  $region15: #{forward.9} parent=0 // pred_check_branch
    %2872 = sbr.rel (0) target = $region17
  $region16: #{forward.9} parent=0 // pred_region
    _
  $region17: #{forward.9} parent=0 // pred_fallthru
    _
  // Predicated region
  $region18: #{forward.9} parent=0 // pred_check
    _
  $region19: #{forward.9} parent=0 // pred_check_branch
    %2874 = sbr.rel (0) target = $region21
  $region20: #{forward.9} parent=0 // pred_region
    _
  $region21: #{forward.9} parent=0 // pred_fallthru
    _

// kernel: forward.10
$region0: #{forward.10}
  #allocation0 [shape = 'u32[]', space=smem, size = 0x4, offset = 0x4, fixed_abs, tag = 'smem constant byte address 0x4 - core index']
  #allocation1 [shape = 'u32[144,128]{1,0:T(1,128)}', space=vmem, size = 0x12000, scoped, tag = 'internal scratch']
  %s0 = inlined_call_operand.vmem [shape: bf16[16,1792], index: 0, kind: input, shape index: {}]
  %s1 = inlined_call_operand.vmem [shape: bf16[1792,256], index: 1, kind: input, shape index: {}]
  %s2 = inlined_call_operand.vmem [shape: f32[1,256], index: 2, kind: input, shape index: {}]
  %s3 = inlined_call_operand.vmem [shape: bf16[16,256], index: 3, kind: output, shape index: {}]
  %s4 = sld [smem:[#allocation0]]
  $region22: #{forward.10} parent=0
    _
  %s6 = ssub.s32 1, %s4
  %s7 = scalar_select 0, %s6, %s4
  // Predicated region
  $region2: #{forward.10} parent=0 // pred_check
    _
  $region3: #{forward.10} parent=0 // pred_check_branch
    %9 = sbr.rel (0) target = $region5
  $region4: #{forward.10} parent=0 // pred_region
    _
  $region5: #{forward.10} parent=0 // pred_fallthru
    _
  // Predicated region
  $region6: #{forward.10} parent=0 // pred_check
    _
  $region7: #{forward.10} parent=0 // pred_check_branch
    %11 = sbr.rel (0) target = $region9
  $region8: #{forward.10} parent=0 // pred_region
    _
  $region9: #{forward.10} parent=0 // pred_fallthru
    _
  // Predicated region
  $region10: #{forward.10} parent=0 // pred_check
    _
  $region11: #{forward.10} parent=0 // pred_check_branch
    %13 = sbr.rel (0) target = $region13
  $region12: #{forward.10} parent=0 // pred_region
    _
  $region13: #{forward.10} parent=0 // pred_fallthru
    _
  %v14 = vld [vmem:[%s0] sm:$0xff]
  %v15 = vld [vmem:[%s0 + $0x8] sm:$0xff]
  %v16 = vld [vmem:[%s0 + $0x10] sm:$0xff]
  %v17 = vld [vmem:[%s0 + $0x18] sm:$0xff]
  %v18 = vld [vmem:[%s0 + $0x20] sm:$0xff]
  %v19 = vld [vmem:[%s0 + $0x28] sm:$0xff]
  %v20 = vld [vmem:[%s0 + $0x30] sm:$0xff]
  %v21 = vld [vmem:[%s0 + $0x38] sm:$0xff]
  %v22 = vld [vmem:[%s0 + $0x40] sm:$0xff]
  %v23 = vld [vmem:[%s0 + $0x48] sm:$0xff]
  %v24 = vld [vmem:[%s0 + $0x50] sm:$0xff]
  %v25 = vld [vmem:[%s0 + $0x58] sm:$0xff]
  %v26 = vld [vmem:[%s0 + $0x60] sm:$0xff]
  %v27 = vld [vmem:[%s0 + $0x68] sm:$0xff]
  %v28 = vld [vmem:[%s1] sm:$0xff]
  %v29 = vld [vmem:[%s1 + $0x8] sm:$0xff]
  %v30 = vld [vmem:[%s1 + $0x10] sm:$0xff]
  %v31 = vld [vmem:[%s1 + $0x18] sm:$0xff]
  %v32 = vld [vmem:[%s1 + $0x20] sm:$0xff]
  %v33 = vld [vmem:[%s1 + $0x28] sm:$0xff]
  %v34 = vld [vmem:[%s1 + $0x30] sm:$0xff]
  %v35 = vld [vmem:[%s1 + $0x38] sm:$0xff]
  %v36 = vld [vmem:[%s1 + $0x40] sm:$0xff]
  %v37 = vld [vmem:[%s1 + $0x48] sm:$0xff]
  %v38 = vld [vmem:[%s1 + $0x50] sm:$0xff]
  %v39 = vld [vmem:[%s1 + $0x58] sm:$0xff]
  %v40 = vld [vmem:[%s1 + $0x60] sm:$0xff]
  %v41 = vld [vmem:[%s1 + $0x68] sm:$0xff]
  %v42 = vld [vmem:[%s1 + $0x70] sm:$0xff]
  %v43 = vld [vmem:[%s1 + $0x78] sm:$0xff]
  %v44 = vld [vmem:[%s1 + $0x80] sm:$0xff]
  %v45 = vld [vmem:[%s1 + $0x88] sm:$0xff]
  %v46 = vld [vmem:[%s1 + $0x90] sm:$0xff]
  %v47 = vld [vmem:[%s1 + $0x98] sm:$0xff]
  %v48 = vld [vmem:[%s1 + $0xa0] sm:$0xff]
  %v49 = vld [vmem:[%s1 + $0xa8] sm:$0xff]
  %v50 = vld [vmem:[%s1 + $0xb0] sm:$0xff]
  %v51 = vld [vmem:[%s1 + $0xb8] sm:$0xff]
  %v52 = vld [vmem:[%s1 + $0xc0] sm:$0xff]
  %v53 = vld [vmem:[%s1 + $0xc8] sm:$0xff]
  %v54 = vld [vmem:[%s1 + $0xd0] sm:$0xff]
  %v55 = vld [vmem:[%s1 + $0xd8] sm:$0xff]
  %v56 = vld [vmem:[%s1 + $0xe0] sm:$0xff]
  %v57 = vld [vmem:[%s1 + $0xe8] sm:$0xff]
  %v58 = vld [vmem:[%s1 + $0xf0] sm:$0xff]
  %v59 = vld [vmem:[%s1 + $0xf8] sm:$0xff]
  %v60 = vld [vmem:[%s1 + $0x100] sm:$0xff]
  %v61 = vld [vmem:[%s1 + $0x108] sm:$0xff]
  %v62 = vld [vmem:[%s1 + $0x110] sm:$0xff]
  %v63 = vld [vmem:[%s1 + $0x118] sm:$0xff]
  %v64 = vld [vmem:[%s1 + $0x120] sm:$0xff]
  %v65 = vld [vmem:[%s1 + $0x128] sm:$0xff]
  %v66 = vld [vmem:[%s1 + $0x130] sm:$0xff]
  %v67 = vld [vmem:[%s1 + $0x138] sm:$0xff]
  %v68 = vld [vmem:[%s1 + $0x140] sm:$0xff]
  %v69 = vld [vmem:[%s1 + $0x148] sm:$0xff]
  %v70 = vld [vmem:[%s1 + $0x150] sm:$0xff]
  %v71 = vld [vmem:[%s1 + $0x158] sm:$0xff]
  %v72 = vld [vmem:[%s1 + $0x160] sm:$0xff]
  %v73 = vld [vmem:[%s1 + $0x168] sm:$0xff]
  %v74 = vld [vmem:[%s1 + $0x170] sm:$0xff]
  %v75 = vld [vmem:[%s1 + $0x178] sm:$0xff]
  %v76 = vld [vmem:[%s1 + $0x180] sm:$0xff]
  %v77 = vld [vmem:[%s1 + $0x188] sm:$0xff]
  %v78 = vld [vmem:[%s1 + $0x190] sm:$0xff]
  %v79 = vld [vmem:[%s1 + $0x198] sm:$0xff]
  %v80 = vld [vmem:[%s1 + $0x1a0] sm:$0xff]
  %v81 = vld [vmem:[%s1 + $0x1a8] sm:$0xff]
  %v82 = vld [vmem:[%s1 + $0x1b0] sm:$0xff]
  %v83 = vld [vmem:[%s1 + $0x1b8] sm:$0xff]
  %v84 = vld [vmem:[%s1 + $0x1c0] sm:$0xff]
  %v85 = vld [vmem:[%s1 + $0x1c8] sm:$0xff]
  %v86 = vld [vmem:[%s1 + $0x1d0] sm:$0xff]
  %v87 = vld [vmem:[%s1 + $0x1d8] sm:$0xff]
  %v88 = vld [vmem:[%s1 + $0x1e0] sm:$0xff]
  %v89 = vld [vmem:[%s1 + $0x1e8] sm:$0xff]
  %v90 = vld [vmem:[%s1 + $0x1f0] sm:$0xff]
  %v91 = vld [vmem:[%s1 + $0x1f8] sm:$0xff]
  %v92 = vld [vmem:[%s1 + $0x200] sm:$0xff]
  %v93 = vld [vmem:[%s1 + $0x208] sm:$0xff]
  %v94 = vld [vmem:[%s1 + $0x210] sm:$0xff]
  %v95 = vld [vmem:[%s1 + $0x218] sm:$0xff]
  %v96 = vld [vmem:[%s1 + $0x220] sm:$0xff]
  %v97 = vld [vmem:[%s1 + $0x228] sm:$0xff]
  %v98 = vld [vmem:[%s1 + $0x230] sm:$0xff]
  %v99 = vld [vmem:[%s1 + $0x238] sm:$0xff]
  %v100 = vld [vmem:[%s1 + $0x240] sm:$0xff]
  %v101 = vld [vmem:[%s1 + $0x248] sm:$0xff]
  %v102 = vld [vmem:[%s1 + $0x250] sm:$0xff]
  %v103 = vld [vmem:[%s1 + $0x258] sm:$0xff]
  %v104 = vld [vmem:[%s1 + $0x260] sm:$0xff]
  %v105 = vld [vmem:[%s1 + $0x268] sm:$0xff]
  %v106 = vld [vmem:[%s1 + $0x270] sm:$0xff]
  %v107 = vld [vmem:[%s1 + $0x278] sm:$0xff]
  %v108 = vld [vmem:[%s1 + $0x280] sm:$0xff]
  %v109 = vld [vmem:[%s1 + $0x288] sm:$0xff]
  %v110 = vld [vmem:[%s1 + $0x290] sm:$0xff]
  %v111 = vld [vmem:[%s1 + $0x298] sm:$0xff]
  %v112 = vld [vmem:[%s1 + $0x2a0] sm:$0xff]
  %v113 = vld [vmem:[%s1 + $0x2a8] sm:$0xff]
  %v114 = vld [vmem:[%s1 + $0x2b0] sm:$0xff]
  %v115 = vld [vmem:[%s1 + $0x2b8] sm:$0xff]
  %v116 = vld [vmem:[%s1 + $0x2c0] sm:$0xff]
  %v117 = vld [vmem:[%s1 + $0x2c8] sm:$0xff]
  %v118 = vld [vmem:[%s1 + $0x2d0] sm:$0xff]
  %v119 = vld [vmem:[%s1 + $0x2d8] sm:$0xff]
  %v120 = vld [vmem:[%s1 + $0x2e0] sm:$0xff]
  %v121 = vld [vmem:[%s1 + $0x2e8] sm:$0xff]
  %v122 = vld [vmem:[%s1 + $0x2f0] sm:$0xff]
  %v123 = vld [vmem:[%s1 + $0x2f8] sm:$0xff]
  %v124 = vld [vmem:[%s1 + $0x300] sm:$0xff]
  %v125 = vld [vmem:[%s1 + $0x308] sm:$0xff]
  %v126 = vld [vmem:[%s1 + $0x310] sm:$0xff]
  %v127 = vld [vmem:[%s1 + $0x318] sm:$0xff]
  %v128 = vld [vmem:[%s1 + $0x320] sm:$0xff]
  %v129 = vld [vmem:[%s1 + $0x328] sm:$0xff]
  %v130 = vld [vmem:[%s1 + $0x330] sm:$0xff]
  %v131 = vld [vmem:[%s1 + $0x338] sm:$0xff]
  %v132 = vld [vmem:[%s1 + $0x340] sm:$0xff]
  %v133 = vld [vmem:[%s1 + $0x348] sm:$0xff]
  %v134 = vld [vmem:[%s1 + $0x350] sm:$0xff]
  %v135 = vld [vmem:[%s1 + $0x358] sm:$0xff]
  %v136 = vld [vmem:[%s1 + $0x360] sm:$0xff]
  %v137 = vld [vmem:[%s1 + $0x368] sm:$0xff]
  %v138 = vld [vmem:[%s1 + $0x370] sm:$0xff]
  %v139 = vld [vmem:[%s1 + $0x378] sm:$0xff]
  %v140 = vld [vmem:[%s1 + $0x380] sm:$0xff]
  %v141 = vld [vmem:[%s1 + $0x388] sm:$0xff]
  %v142 = vld [vmem:[%s1 + $0x390] sm:$0xff]
  %v143 = vld [vmem:[%s1 + $0x398] sm:$0xff]
  %v144 = vld [vmem:[%s1 + $0x3a0] sm:$0xff]
  %v145 = vld [vmem:[%s1 + $0x3a8] sm:$0xff]
  %v146 = vld [vmem:[%s1 + $0x3b0] sm:$0xff]
  %v147 = vld [vmem:[%s1 + $0x3b8] sm:$0xff]
  %v148 = vld [vmem:[%s1 + $0x3c0] sm:$0xff]
  %v149 = vld [vmem:[%s1 + $0x3c8] sm:$0xff]
  %v150 = vld [vmem:[%s1 + $0x3d0] sm:$0xff]
  %v151 = vld [vmem:[%s1 + $0x3d8] sm:$0xff]
  %v152 = vld [vmem:[%s1 + $0x3e0] sm:$0xff]
  %v153 = vld [vmem:[%s1 + $0x3e8] sm:$0xff]
  %v154 = vld [vmem:[%s1 + $0x3f0] sm:$0xff]
  %v155 = vld [vmem:[%s1 + $0x3f8] sm:$0xff]
  %v156 = vld [vmem:[%s1 + $0x400] sm:$0xff]
  %v157 = vld [vmem:[%s1 + $0x408] sm:$0xff]
  %v158 = vld [vmem:[%s1 + $0x410] sm:$0xff]
  %v159 = vld [vmem:[%s1 + $0x418] sm:$0xff]
  %v160 = vld [vmem:[%s1 + $0x420] sm:$0xff]
  %v161 = vld [vmem:[%s1 + $0x428] sm:$0xff]
  %v162 = vld [vmem:[%s1 + $0x430] sm:$0xff]
  %v163 = vld [vmem:[%s1 + $0x438] sm:$0xff]
  %v164 = vld [vmem:[%s1 + $0x440] sm:$0xff]
  %v165 = vld [vmem:[%s1 + $0x448] sm:$0xff]
  %v166 = vld [vmem:[%s1 + $0x450] sm:$0xff]
  %v167 = vld [vmem:[%s1 + $0x458] sm:$0xff]
  %v168 = vld [vmem:[%s1 + $0x460] sm:$0xff]
  %v169 = vld [vmem:[%s1 + $0x468] sm:$0xff]
  %v170 = vld [vmem:[%s1 + $0x470] sm:$0xff]
  %v171 = vld [vmem:[%s1 + $0x478] sm:$0xff]
  %v172 = vld [vmem:[%s1 + $0x480] sm:$0xff]
  %v173 = vld [vmem:[%s1 + $0x488] sm:$0xff]
  %v174 = vld [vmem:[%s1 + $0x490] sm:$0xff]
  %v175 = vld [vmem:[%s1 + $0x498] sm:$0xff]
  %v176 = vld [vmem:[%s1 + $0x4a0] sm:$0xff]
  %v177 = vld [vmem:[%s1 + $0x4a8] sm:$0xff]
  %v178 = vld [vmem:[%s1 + $0x4b0] sm:$0xff]
  %v179 = vld [vmem:[%s1 + $0x4b8] sm:$0xff]
  %v180 = vld [vmem:[%s1 + $0x4c0] sm:$0xff]
  %v181 = vld [vmem:[%s1 + $0x4c8] sm:$0xff]
  %v182 = vld [vmem:[%s1 + $0x4d0] sm:$0xff]
  %v183 = vld [vmem:[%s1 + $0x4d8] sm:$0xff]
  %v184 = vld [vmem:[%s1 + $0x4e0] sm:$0xff]
  %v185 = vld [vmem:[%s1 + $0x4e8] sm:$0xff]
  %v186 = vld [vmem:[%s1 + $0x4f0] sm:$0xff]
  %v187 = vld [vmem:[%s1 + $0x4f8] sm:$0xff]
  %v188 = vld [vmem:[%s1 + $0x500] sm:$0xff]
  %v189 = vld [vmem:[%s1 + $0x508] sm:$0xff]
  %v190 = vld [vmem:[%s1 + $0x510] sm:$0xff]
  %v191 = vld [vmem:[%s1 + $0x518] sm:$0xff]
  %v192 = vld [vmem:[%s1 + $0x520] sm:$0xff]
  %v193 = vld [vmem:[%s1 + $0x528] sm:$0xff]
  %v194 = vld [vmem:[%s1 + $0x530] sm:$0xff]
  %v195 = vld [vmem:[%s1 + $0x538] sm:$0xff]
  %v196 = vld [vmem:[%s1 + $0x540] sm:$0xff]
  %v197 = vld [vmem:[%s1 + $0x548] sm:$0xff]
  %v198 = vld [vmem:[%s1 + $0x550] sm:$0xff]
  %v199 = vld [vmem:[%s1 + $0x558] sm:$0xff]
  %v200 = vld [vmem:[%s1 + $0x560] sm:$0xff]
  %v201 = vld [vmem:[%s1 + $0x568] sm:$0xff]
  %v202 = vld [vmem:[%s1 + $0x570] sm:$0xff]
  %v203 = vld [vmem:[%s1 + $0x578] sm:$0xff]
  %v204 = vld [vmem:[%s1 + $0x580] sm:$0xff]
  %v205 = vld [vmem:[%s1 + $0x588] sm:$0xff]
  %v206 = vld [vmem:[%s1 + $0x590] sm:$0xff]
  %v207 = vld [vmem:[%s1 + $0x598] sm:$0xff]
  %v208 = vld [vmem:[%s1 + $0x5a0] sm:$0xff]
  %v209 = vld [vmem:[%s1 + $0x5a8] sm:$0xff]
  %v210 = vld [vmem:[%s1 + $0x5b0] sm:$0xff]
  %v211 = vld [vmem:[%s1 + $0x5b8] sm:$0xff]
  %v212 = vld [vmem:[%s1 + $0x5c0] sm:$0xff]
  %v213 = vld [vmem:[%s1 + $0x5c8] sm:$0xff]
  %v214 = vld [vmem:[%s1 + $0x5d0] sm:$0xff]
  %v215 = vld [vmem:[%s1 + $0x5d8] sm:$0xff]
  %v216 = vld [vmem:[%s1 + $0x5e0] sm:$0xff]
  %v217 = vld [vmem:[%s1 + $0x5e8] sm:$0xff]
  %v218 = vld [vmem:[%s1 + $0x5f0] sm:$0xff]
  %v219 = vld [vmem:[%s1 + $0x5f8] sm:$0xff]
  %v220 = vld [vmem:[%s1 + $0x600] sm:$0xff]
  %v221 = vld [vmem:[%s1 + $0x608] sm:$0xff]
  %v222 = vld [vmem:[%s1 + $0x610] sm:$0xff]
  %v223 = vld [vmem:[%s1 + $0x618] sm:$0xff]
  %v224 = vld [vmem:[%s1 + $0x620] sm:$0xff]
  %v225 = vld [vmem:[%s1 + $0x628] sm:$0xff]
  %v226 = vld [vmem:[%s1 + $0x630] sm:$0xff]
  %v227 = vld [vmem:[%s1 + $0x638] sm:$0xff]
  %v228 = vld [vmem:[%s1 + $0x640] sm:$0xff]
  %v229 = vld [vmem:[%s1 + $0x648] sm:$0xff]
  %v230 = vld [vmem:[%s1 + $0x650] sm:$0xff]
  %v231 = vld [vmem:[%s1 + $0x658] sm:$0xff]
  %v232 = vld [vmem:[%s1 + $0x660] sm:$0xff]
  %v233 = vld [vmem:[%s1 + $0x668] sm:$0xff]
  %v234 = vld [vmem:[%s1 + $0x670] sm:$0xff]
  %v235 = vld [vmem:[%s1 + $0x678] sm:$0xff]
  %v236 = vld [vmem:[%s1 + $0x680] sm:$0xff]
  %v237 = vld [vmem:[%s1 + $0x688] sm:$0xff]
  %v238 = vld [vmem:[%s1 + $0x690] sm:$0xff]
  %v239 = vld [vmem:[%s1 + $0x698] sm:$0xff]
  %v240 = vld [vmem:[%s1 + $0x6a0] sm:$0xff]
  %v241 = vld [vmem:[%s1 + $0x6a8] sm:$0xff]
  %v242 = vld [vmem:[%s1 + $0x6b0] sm:$0xff]
  %v243 = vld [vmem:[%s1 + $0x6b8] sm:$0xff]
  %v244 = vld [vmem:[%s1 + $0x6c0] sm:$0xff]
  %v245 = vld [vmem:[%s1 + $0x6c8] sm:$0xff]
  %v246 = vld [vmem:[%s1 + $0x6d0] sm:$0xff]
  %v247 = vld [vmem:[%s1 + $0x6d8] sm:$0xff]
  %v248 = vld [vmem:[%s1 + $0x6e0] sm:$0xff]
  %v249 = vld [vmem:[%s1 + $0x6e8] sm:$0xff]
  %v250 = vld [vmem:[%s1 + $0x6f0] sm:$0xff]
  %v251 = vld [vmem:[%s1 + $0x6f8] sm:$0xff]
  %v252 = vld [vmem:[%s2] sm:$0x3]
  %v254 = vlaneseq
  %v255 = vshrl.u32 %v254, 7
  %v256 = vsub.s32 0, %v255
  %v257 = vrot.slane %v252, %v256
  %v258 = vlaneseq
  %v259 = vshrl.u32 %v258, 7
  %v260 = vsub.s32 1, %v259
  %v261 = vrot.slane %v252, %v260
  %v278 = vunpack.c.l.b16 %v14
  %v279 = vunpack.c.h.b16 %v14
  %v280 = vunpack.c.l.b16 %v15
  %v281 = vunpack.c.h.b16 %v15
  %v282 = vunpack.c.l.b16 %v16
  %v283 = vunpack.c.h.b16 %v16
  %v284 = vunpack.c.l.b16 %v17
  %v285 = vunpack.c.h.b16 %v17
  %v286 = vunpack.c.l.b16 %v18
  %v287 = vunpack.c.h.b16 %v18
  %v288 = vunpack.c.l.b16 %v19
  %v289 = vunpack.c.h.b16 %v19
  %v290 = vunpack.c.l.b16 %v20
  %v291 = vunpack.c.h.b16 %v20
  %v292 = vunpack.c.l.b16 %v21
  %v293 = vunpack.c.h.b16 %v21
  %v294 = vunpack.c.l.b16 %v22
  %v295 = vunpack.c.h.b16 %v22
  %v296 = vunpack.c.l.b16 %v23
  %v297 = vunpack.c.h.b16 %v23
  %v298 = vunpack.c.l.b16 %v24
  %v299 = vunpack.c.h.b16 %v24
  %v300 = vunpack.c.l.b16 %v25
  %v301 = vunpack.c.h.b16 %v25
  %v302 = vunpack.c.l.b16 %v26
  %v303 = vunpack.c.h.b16 %v26
  %v304 = vunpack.c.l.b16 %v27
  %v305 = vunpack.c.h.b16 %v27
  %v306 = vpack.c.b16 %v292, %v278
  %v307 = vpack.c.b16 %v293, %v279
  %v308 = vpack.c.b16 %v294, %v280
  %v309 = vpack.c.b16 %v295, %v281
  %v310 = vpack.c.b16 %v296, %v282
  %v311 = vpack.c.b16 %v297, %v283
  %v312 = vpack.c.b16 %v298, %v284
  %v313 = vpack.c.b16 %v299, %v285
  %v314 = vpack.c.b16 %v300, %v286
  %v315 = vpack.c.b16 %v301, %v287
  %v316 = vpack.c.b16 %v302, %v288
  %v317 = vpack.c.b16 %v303, %v289
  %v318 = vpack.c.b16 %v304, %v290
  %v319 = vpack.c.b16 %v305, %v291
  %v558 = vunpack.c.l.b16 %v28
  %v559 = vunpack.c.h.b16 %v28
  %v560 = vunpack.c.l.b16 %v29
  %v561 = vunpack.c.h.b16 %v29
  %v562 = vunpack.c.l.b16 %v30
  %v563 = vunpack.c.h.b16 %v30
  %v564 = vunpack.c.l.b16 %v31
  %v565 = vunpack.c.h.b16 %v31
  %v566 = vunpack.c.l.b16 %v32
  %v567 = vunpack.c.h.b16 %v32
  %v568 = vunpack.c.l.b16 %v33
  %v569 = vunpack.c.h.b16 %v33
  %v570 = vunpack.c.l.b16 %v34
  %v571 = vunpack.c.h.b16 %v34
  %v572 = vunpack.c.l.b16 %v35
  %v573 = vunpack.c.h.b16 %v35
  %v574 = vunpack.c.l.b16 %v36
  %v575 = vunpack.c.h.b16 %v36
  %v576 = vunpack.c.l.b16 %v37
  %v577 = vunpack.c.h.b16 %v37
  %v578 = vunpack.c.l.b16 %v38
  %v579 = vunpack.c.h.b16 %v38
  %v580 = vunpack.c.l.b16 %v39
  %v581 = vunpack.c.h.b16 %v39
  %v582 = vunpack.c.l.b16 %v40
  %v583 = vunpack.c.h.b16 %v40
  %v584 = vunpack.c.l.b16 %v41
  %v585 = vunpack.c.h.b16 %v41
  %v586 = vunpack.c.l.b16 %v42
  %v587 = vunpack.c.h.b16 %v42
  %v588 = vunpack.c.l.b16 %v43
  %v589 = vunpack.c.h.b16 %v43
  %v590 = vunpack.c.l.b16 %v44
  %v591 = vunpack.c.h.b16 %v44
  %v592 = vunpack.c.l.b16 %v45
  %v593 = vunpack.c.h.b16 %v45
  %v594 = vunpack.c.l.b16 %v46
  %v595 = vunpack.c.h.b16 %v46
  %v596 = vunpack.c.l.b16 %v47
  %v597 = vunpack.c.h.b16 %v47
  %v598 = vunpack.c.l.b16 %v48
  %v599 = vunpack.c.h.b16 %v48
  %v600 = vunpack.c.l.b16 %v49
  %v601 = vunpack.c.h.b16 %v49
  %v602 = vunpack.c.l.b16 %v50
  %v603 = vunpack.c.h.b16 %v50
  %v604 = vunpack.c.l.b16 %v51
  %v605 = vunpack.c.h.b16 %v51
  %v606 = vunpack.c.l.b16 %v52
  %v607 = vunpack.c.h.b16 %v52
  %v608 = vunpack.c.l.b16 %v53
  %v609 = vunpack.c.h.b16 %v53
  %v610 = vunpack.c.l.b16 %v54
  %v611 = vunpack.c.h.b16 %v54
  %v612 = vunpack.c.l.b16 %v55
  %v613 = vunpack.c.h.b16 %v55
  %v614 = vunpack.c.l.b16 %v56
  %v615 = vunpack.c.h.b16 %v56
  %v616 = vunpack.c.l.b16 %v57
  %v617 = vunpack.c.h.b16 %v57
  %v618 = vunpack.c.l.b16 %v58
  %v619 = vunpack.c.h.b16 %v58
  %v620 = vunpack.c.l.b16 %v59
  %v621 = vunpack.c.h.b16 %v59
  %v622 = vunpack.c.l.b16 %v60
  %v623 = vunpack.c.h.b16 %v60
  %v624 = vunpack.c.l.b16 %v61
  %v625 = vunpack.c.h.b16 %v61
  %v626 = vunpack.c.l.b16 %v62
  %v627 = vunpack.c.h.b16 %v62
  %v628 = vunpack.c.l.b16 %v63
  %v629 = vunpack.c.h.b16 %v63
  %v630 = vunpack.c.l.b16 %v64
  %v631 = vunpack.c.h.b16 %v64
  %v632 = vunpack.c.l.b16 %v65
  %v633 = vunpack.c.h.b16 %v65
  %v634 = vunpack.c.l.b16 %v66
  %v635 = vunpack.c.h.b16 %v66
  %v636 = vunpack.c.l.b16 %v67
  %v637 = vunpack.c.h.b16 %v67
  %v638 = vunpack.c.l.b16 %v68
  %v639 = vunpack.c.h.b16 %v68
  %v640 = vunpack.c.l.b16 %v69
  %v641 = vunpack.c.h.b16 %v69
  %v642 = vunpack.c.l.b16 %v70
  %v643 = vunpack.c.h.b16 %v70
  %v644 = vunpack.c.l.b16 %v71
  %v645 = vunpack.c.h.b16 %v71
  %v646 = vunpack.c.l.b16 %v72
  %v647 = vunpack.c.h.b16 %v72
  %v648 = vunpack.c.l.b16 %v73
  %v649 = vunpack.c.h.b16 %v73
  %v650 = vunpack.c.l.b16 %v74
  %v651 = vunpack.c.h.b16 %v74
  %v652 = vunpack.c.l.b16 %v75
  %v653 = vunpack.c.h.b16 %v75
  %v654 = vunpack.c.l.b16 %v76
  %v655 = vunpack.c.h.b16 %v76
  %v656 = vunpack.c.l.b16 %v77
  %v657 = vunpack.c.h.b16 %v77
  %v658 = vunpack.c.l.b16 %v78
  %v659 = vunpack.c.h.b16 %v78
  %v660 = vunpack.c.l.b16 %v79
  %v661 = vunpack.c.h.b16 %v79
  %v662 = vunpack.c.l.b16 %v80
  %v663 = vunpack.c.h.b16 %v80
  %v664 = vunpack.c.l.b16 %v81
  %v665 = vunpack.c.h.b16 %v81
  %v666 = vunpack.c.l.b16 %v82
  %v667 = vunpack.c.h.b16 %v82
  %v668 = vunpack.c.l.b16 %v83
  %v669 = vunpack.c.h.b16 %v83
  %v670 = vunpack.c.l.b16 %v84
  %v671 = vunpack.c.h.b16 %v84
  %v672 = vunpack.c.l.b16 %v85
  %v673 = vunpack.c.h.b16 %v85
  %v674 = vunpack.c.l.b16 %v86
  %v675 = vunpack.c.h.b16 %v86
  %v676 = vunpack.c.l.b16 %v87
  %v677 = vunpack.c.h.b16 %v87
  %v678 = vunpack.c.l.b16 %v88
  %v679 = vunpack.c.h.b16 %v88
  %v680 = vunpack.c.l.b16 %v89
  %v681 = vunpack.c.h.b16 %v89
  %v682 = vunpack.c.l.b16 %v90
  %v683 = vunpack.c.h.b16 %v90
  %v684 = vunpack.c.l.b16 %v91
  %v685 = vunpack.c.h.b16 %v91
  %v686 = vunpack.c.l.b16 %v92
  %v687 = vunpack.c.h.b16 %v92
  %v688 = vunpack.c.l.b16 %v93
  %v689 = vunpack.c.h.b16 %v93
  %v690 = vunpack.c.l.b16 %v94
  %v691 = vunpack.c.h.b16 %v94
  %v692 = vunpack.c.l.b16 %v95
  %v693 = vunpack.c.h.b16 %v95
  %v694 = vunpack.c.l.b16 %v96
  %v695 = vunpack.c.h.b16 %v96
  %v696 = vunpack.c.l.b16 %v97
  %v697 = vunpack.c.h.b16 %v97
  %v698 = vunpack.c.l.b16 %v98
  %v699 = vunpack.c.h.b16 %v98
  %v700 = vunpack.c.l.b16 %v99
  %v701 = vunpack.c.h.b16 %v99
  %v702 = vunpack.c.l.b16 %v100
  %v703 = vunpack.c.h.b16 %v100
  %v704 = vunpack.c.l.b16 %v101
  %v705 = vunpack.c.h.b16 %v101
  %v706 = vunpack.c.l.b16 %v102
  %v707 = vunpack.c.h.b16 %v102
  %v708 = vunpack.c.l.b16 %v103
  %v709 = vunpack.c.h.b16 %v103
  %v710 = vunpack.c.l.b16 %v104
  %v711 = vunpack.c.h.b16 %v104
  %v712 = vunpack.c.l.b16 %v105
  %v713 = vunpack.c.h.b16 %v105
  %v714 = vunpack.c.l.b16 %v106
  %v715 = vunpack.c.h.b16 %v106
  %v716 = vunpack.c.l.b16 %v107
  %v717 = vunpack.c.h.b16 %v107
  %v718 = vunpack.c.l.b16 %v108
  %v719 = vunpack.c.h.b16 %v108
  %v720 = vunpack.c.l.b16 %v109
  %v721 = vunpack.c.h.b16 %v109
  %v722 = vunpack.c.l.b16 %v110
  %v723 = vunpack.c.h.b16 %v110
  %v724 = vunpack.c.l.b16 %v111
  %v725 = vunpack.c.h.b16 %v111
  %v726 = vunpack.c.l.b16 %v112
  %v727 = vunpack.c.h.b16 %v112
  %v728 = vunpack.c.l.b16 %v113
  %v729 = vunpack.c.h.b16 %v113
  %v730 = vunpack.c.l.b16 %v114
  %v731 = vunpack.c.h.b16 %v114
  %v732 = vunpack.c.l.b16 %v115
  %v733 = vunpack.c.h.b16 %v115
  %v734 = vunpack.c.l.b16 %v116
  %v735 = vunpack.c.h.b16 %v116
  %v736 = vunpack.c.l.b16 %v117
  %v737 = vunpack.c.h.b16 %v117
  %v738 = vunpack.c.l.b16 %v118
  %v739 = vunpack.c.h.b16 %v118
  %v740 = vunpack.c.l.b16 %v119
  %v741 = vunpack.c.h.b16 %v119
  %v742 = vunpack.c.l.b16 %v120
  %v743 = vunpack.c.h.b16 %v120
  %v744 = vunpack.c.l.b16 %v121
  %v745 = vunpack.c.h.b16 %v121
  %v746 = vunpack.c.l.b16 %v122
  %v747 = vunpack.c.h.b16 %v122
  %v748 = vunpack.c.l.b16 %v123
  %v749 = vunpack.c.h.b16 %v123
  %v750 = vunpack.c.l.b16 %v124
  %v751 = vunpack.c.h.b16 %v124
  %v752 = vunpack.c.l.b16 %v125
  %v753 = vunpack.c.h.b16 %v125
  %v754 = vunpack.c.l.b16 %v126
  %v755 = vunpack.c.h.b16 %v126
  %v756 = vunpack.c.l.b16 %v127
  %v757 = vunpack.c.h.b16 %v127
  %v758 = vunpack.c.l.b16 %v128
  %v759 = vunpack.c.h.b16 %v128
  %v760 = vunpack.c.l.b16 %v129
  %v761 = vunpack.c.h.b16 %v129
  %v762 = vunpack.c.l.b16 %v130
  %v763 = vunpack.c.h.b16 %v130
  %v764 = vunpack.c.l.b16 %v131
  %v765 = vunpack.c.h.b16 %v131
  %v766 = vunpack.c.l.b16 %v132
  %v767 = vunpack.c.h.b16 %v132
  %v768 = vunpack.c.l.b16 %v133
  %v769 = vunpack.c.h.b16 %v133
  %v770 = vunpack.c.l.b16 %v134
  %v771 = vunpack.c.h.b16 %v134
  %v772 = vunpack.c.l.b16 %v135
  %v773 = vunpack.c.h.b16 %v135
  %v774 = vunpack.c.l.b16 %v136
  %v775 = vunpack.c.h.b16 %v136
  %v776 = vunpack.c.l.b16 %v137
  %v777 = vunpack.c.h.b16 %v137
  %v778 = vunpack.c.l.b16 %v138
  %v779 = vunpack.c.h.b16 %v138
  %v780 = vunpack.c.l.b16 %v139
  %v781 = vunpack.c.h.b16 %v139
  %v782 = vunpack.c.l.b16 %v140
  %v783 = vunpack.c.h.b16 %v140
  %v784 = vunpack.c.l.b16 %v141
  %v785 = vunpack.c.h.b16 %v141
  %v786 = vunpack.c.l.b16 %v142
  %v787 = vunpack.c.h.b16 %v142
  %v788 = vunpack.c.l.b16 %v143
  %v789 = vunpack.c.h.b16 %v143
  %v790 = vunpack.c.l.b16 %v144
  %v791 = vunpack.c.h.b16 %v144
  %v792 = vunpack.c.l.b16 %v145
  %v793 = vunpack.c.h.b16 %v145
  %v794 = vunpack.c.l.b16 %v146
  %v795 = vunpack.c.h.b16 %v146
  %v796 = vunpack.c.l.b16 %v147
  %v797 = vunpack.c.h.b16 %v147
  %v798 = vunpack.c.l.b16 %v148
  %v799 = vunpack.c.h.b16 %v148
  %v800 = vunpack.c.l.b16 %v149
  %v801 = vunpack.c.h.b16 %v149
  %v802 = vunpack.c.l.b16 %v150
  %v803 = vunpack.c.h.b16 %v150
  %v804 = vunpack.c.l.b16 %v151
  %v805 = vunpack.c.h.b16 %v151
  %v806 = vunpack.c.l.b16 %v152
  %v807 = vunpack.c.h.b16 %v152
  %v808 = vunpack.c.l.b16 %v153
  %v809 = vunpack.c.h.b16 %v153
  %v810 = vunpack.c.l.b16 %v154
  %v811 = vunpack.c.h.b16 %v154
  %v812 = vunpack.c.l.b16 %v155
  %v813 = vunpack.c.h.b16 %v155
  %v814 = vunpack.c.l.b16 %v156
  %v815 = vunpack.c.h.b16 %v156
  %v816 = vunpack.c.l.b16 %v157
  %v817 = vunpack.c.h.b16 %v157
  %v818 = vunpack.c.l.b16 %v158
  %v819 = vunpack.c.h.b16 %v158
  %v820 = vunpack.c.l.b16 %v159
  %v821 = vunpack.c.h.b16 %v159
  %v822 = vunpack.c.l.b16 %v160
  %v823 = vunpack.c.h.b16 %v160
  %v824 = vunpack.c.l.b16 %v161
  %v825 = vunpack.c.h.b16 %v161
  %v826 = vunpack.c.l.b16 %v162
  %v827 = vunpack.c.h.b16 %v162
  %v828 = vunpack.c.l.b16 %v163
  %v829 = vunpack.c.h.b16 %v163
  %v830 = vunpack.c.l.b16 %v164
  %v831 = vunpack.c.h.b16 %v164
  %v832 = vunpack.c.l.b16 %v165
  %v833 = vunpack.c.h.b16 %v165
  %v834 = vunpack.c.l.b16 %v166
  %v835 = vunpack.c.h.b16 %v166
  %v836 = vunpack.c.l.b16 %v167
  %v837 = vunpack.c.h.b16 %v167
  %v838 = vunpack.c.l.b16 %v168
  %v839 = vunpack.c.h.b16 %v168
  %v840 = vunpack.c.l.b16 %v169
  %v841 = vunpack.c.h.b16 %v169
  %v842 = vunpack.c.l.b16 %v170
  %v843 = vunpack.c.h.b16 %v170
  %v844 = vunpack.c.l.b16 %v171
  %v845 = vunpack.c.h.b16 %v171
  %v846 = vunpack.c.l.b16 %v172
  %v847 = vunpack.c.h.b16 %v172
  %v848 = vunpack.c.l.b16 %v173
  %v849 = vunpack.c.h.b16 %v173
  %v850 = vunpack.c.l.b16 %v174
  %v851 = vunpack.c.h.b16 %v174
  %v852 = vunpack.c.l.b16 %v175
  %v853 = vunpack.c.h.b16 %v175
  %v854 = vunpack.c.l.b16 %v176
  %v855 = vunpack.c.h.b16 %v176
  %v856 = vunpack.c.l.b16 %v177
  %v857 = vunpack.c.h.b16 %v177
  %v858 = vunpack.c.l.b16 %v178
  %v859 = vunpack.c.h.b16 %v178
  %v860 = vunpack.c.l.b16 %v179
  %v861 = vunpack.c.h.b16 %v179
  %v862 = vunpack.c.l.b16 %v180
  %v863 = vunpack.c.h.b16 %v180
  %v864 = vunpack.c.l.b16 %v181
  %v865 = vunpack.c.h.b16 %v181
  %v866 = vunpack.c.l.b16 %v182
  %v867 = vunpack.c.h.b16 %v182
  %v868 = vunpack.c.l.b16 %v183
  %v869 = vunpack.c.h.b16 %v183
  %v870 = vunpack.c.l.b16 %v184
  %v871 = vunpack.c.h.b16 %v184
  %v872 = vunpack.c.l.b16 %v185
  %v873 = vunpack.c.h.b16 %v185
  %v874 = vunpack.c.l.b16 %v186
  %v875 = vunpack.c.h.b16 %v186
  %v876 = vunpack.c.l.b16 %v187
  %v877 = vunpack.c.h.b16 %v187
  %v878 = vunpack.c.l.b16 %v188
  %v879 = vunpack.c.h.b16 %v188
  %v880 = vunpack.c.l.b16 %v189
  %v881 = vunpack.c.h.b16 %v189
  %v882 = vunpack.c.l.b16 %v190
  %v883 = vunpack.c.h.b16 %v190
  %v884 = vunpack.c.l.b16 %v191
  %v885 = vunpack.c.h.b16 %v191
  %v886 = vunpack.c.l.b16 %v192
  %v887 = vunpack.c.h.b16 %v192
  %v888 = vunpack.c.l.b16 %v193
  %v889 = vunpack.c.h.b16 %v193
  %v890 = vunpack.c.l.b16 %v194
  %v891 = vunpack.c.h.b16 %v194
  %v892 = vunpack.c.l.b16 %v195
  %v893 = vunpack.c.h.b16 %v195
  %v894 = vunpack.c.l.b16 %v196
  %v895 = vunpack.c.h.b16 %v196
  %v896 = vunpack.c.l.b16 %v197
  %v897 = vunpack.c.h.b16 %v197
  %v898 = vunpack.c.l.b16 %v198
  %v899 = vunpack.c.h.b16 %v198
  %v900 = vunpack.c.l.b16 %v199
  %v901 = vunpack.c.h.b16 %v199
  %v902 = vunpack.c.l.b16 %v200
  %v903 = vunpack.c.h.b16 %v200
  %v904 = vunpack.c.l.b16 %v201
  %v905 = vunpack.c.h.b16 %v201
  %v906 = vunpack.c.l.b16 %v202
  %v907 = vunpack.c.h.b16 %v202
  %v908 = vunpack.c.l.b16 %v203
  %v909 = vunpack.c.h.b16 %v203
  %v910 = vunpack.c.l.b16 %v204
  %v911 = vunpack.c.h.b16 %v204
  %v912 = vunpack.c.l.b16 %v205
  %v913 = vunpack.c.h.b16 %v205
  %v914 = vunpack.c.l.b16 %v206
  %v915 = vunpack.c.h.b16 %v206
  %v916 = vunpack.c.l.b16 %v207
  %v917 = vunpack.c.h.b16 %v207
  %v918 = vunpack.c.l.b16 %v208
  %v919 = vunpack.c.h.b16 %v208
  %v920 = vunpack.c.l.b16 %v209
  %v921 = vunpack.c.h.b16 %v209
  %v922 = vunpack.c.l.b16 %v210
  %v923 = vunpack.c.h.b16 %v210
  %v924 = vunpack.c.l.b16 %v211
  %v925 = vunpack.c.h.b16 %v211
  %v926 = vunpack.c.l.b16 %v212
  %v927 = vunpack.c.h.b16 %v212
  %v928 = vunpack.c.l.b16 %v213
  %v929 = vunpack.c.h.b16 %v213
  %v930 = vunpack.c.l.b16 %v214
  %v931 = vunpack.c.h.b16 %v214
  %v932 = vunpack.c.l.b16 %v215
  %v933 = vunpack.c.h.b16 %v215
  %v934 = vunpack.c.l.b16 %v216
  %v935 = vunpack.c.h.b16 %v216
  %v936 = vunpack.c.l.b16 %v217
  %v937 = vunpack.c.h.b16 %v217
  %v938 = vunpack.c.l.b16 %v218
  %v939 = vunpack.c.h.b16 %v218
  %v940 = vunpack.c.l.b16 %v219
  %v941 = vunpack.c.h.b16 %v219
  %v942 = vunpack.c.l.b16 %v220
  %v943 = vunpack.c.h.b16 %v220
  %v944 = vunpack.c.l.b16 %v221
  %v945 = vunpack.c.h.b16 %v221
  %v946 = vunpack.c.l.b16 %v222
  %v947 = vunpack.c.h.b16 %v222
  %v948 = vunpack.c.l.b16 %v223
  %v949 = vunpack.c.h.b16 %v223
  %v950 = vunpack.c.l.b16 %v224
  %v951 = vunpack.c.h.b16 %v224
  %v952 = vunpack.c.l.b16 %v225
  %v953 = vunpack.c.h.b16 %v225
  %v954 = vunpack.c.l.b16 %v226
  %v955 = vunpack.c.h.b16 %v226
  %v956 = vunpack.c.l.b16 %v227
  %v957 = vunpack.c.h.b16 %v227
  %v958 = vunpack.c.l.b16 %v228
  %v959 = vunpack.c.h.b16 %v228
  %v960 = vunpack.c.l.b16 %v229
  %v961 = vunpack.c.h.b16 %v229
  %v962 = vunpack.c.l.b16 %v230
  %v963 = vunpack.c.h.b16 %v230
  %v964 = vunpack.c.l.b16 %v231
  %v965 = vunpack.c.h.b16 %v231
  %v966 = vunpack.c.l.b16 %v232
  %v967 = vunpack.c.h.b16 %v232
  %v968 = vunpack.c.l.b16 %v233
  %v969 = vunpack.c.h.b16 %v233
  %v970 = vunpack.c.l.b16 %v234
  %v971 = vunpack.c.h.b16 %v234
  %v972 = vunpack.c.l.b16 %v235
  %v973 = vunpack.c.h.b16 %v235
  %v974 = vunpack.c.l.b16 %v236
  %v975 = vunpack.c.h.b16 %v236
  %v976 = vunpack.c.l.b16 %v237
  %v977 = vunpack.c.h.b16 %v237
  %v978 = vunpack.c.l.b16 %v238
  %v979 = vunpack.c.h.b16 %v238
  %v980 = vunpack.c.l.b16 %v239
  %v981 = vunpack.c.h.b16 %v239
  %v982 = vunpack.c.l.b16 %v240
  %v983 = vunpack.c.h.b16 %v240
  %v984 = vunpack.c.l.b16 %v241
  %v985 = vunpack.c.h.b16 %v241
  %v986 = vunpack.c.l.b16 %v242
  %v987 = vunpack.c.h.b16 %v242
  %v988 = vunpack.c.l.b16 %v243
  %v989 = vunpack.c.h.b16 %v243
  %v990 = vunpack.c.l.b16 %v244
  %v991 = vunpack.c.h.b16 %v244
  %v992 = vunpack.c.l.b16 %v245
  %v993 = vunpack.c.h.b16 %v245
  %v994 = vunpack.c.l.b16 %v246
  %v995 = vunpack.c.h.b16 %v246
  %v996 = vunpack.c.l.b16 %v247
  %v997 = vunpack.c.h.b16 %v247
  %v998 = vunpack.c.l.b16 %v248
  %v999 = vunpack.c.h.b16 %v248
  %v1000 = vunpack.c.l.b16 %v249
  %v1001 = vunpack.c.h.b16 %v249
  %v1002 = vunpack.c.l.b16 %v250
  %v1003 = vunpack.c.h.b16 %v250
  %v1004 = vunpack.c.l.b16 %v251
  %v1005 = vunpack.c.h.b16 %v251
  %v1006 = vpack.c.b16 %v560, %v558
  %v1007 = vpack.c.b16 %v561, %v559
  %v1008 = vpack.c.b16 %v564, %v562
  %v1009 = vpack.c.b16 %v565, %v563
  %v1010 = vpack.c.b16 %v568, %v566
  %v1011 = vpack.c.b16 %v569, %v567
  %v1012 = vpack.c.b16 %v572, %v570
  %v1013 = vpack.c.b16 %v573, %v571
  %v1014 = vpack.c.b16 %v576, %v574
  %v1015 = vpack.c.b16 %v577, %v575
  %v1016 = vpack.c.b16 %v580, %v578
  %v1017 = vpack.c.b16 %v581, %v579
  %v1018 = vpack.c.b16 %v584, %v582
  %v1019 = vpack.c.b16 %v585, %v583
  %v1020 = vpack.c.b16 %v588, %v586
  %v1021 = vpack.c.b16 %v589, %v587
  %v1022 = vpack.c.b16 %v592, %v590
  %v1023 = vpack.c.b16 %v593, %v591
  %v1024 = vpack.c.b16 %v596, %v594
  %v1025 = vpack.c.b16 %v597, %v595
  %v1026 = vpack.c.b16 %v600, %v598
  %v1027 = vpack.c.b16 %v601, %v599
  %v1028 = vpack.c.b16 %v604, %v602
  %v1029 = vpack.c.b16 %v605, %v603
  %v1030 = vpack.c.b16 %v608, %v606
  %v1031 = vpack.c.b16 %v609, %v607
  %v1032 = vpack.c.b16 %v612, %v610
  %v1033 = vpack.c.b16 %v613, %v611
  %v1034 = vpack.c.b16 %v616, %v614
  %v1035 = vpack.c.b16 %v617, %v615
  %v1036 = vpack.c.b16 %v620, %v618
  %v1037 = vpack.c.b16 %v621, %v619
  %v1038 = vpack.c.b16 %v624, %v622
  %v1039 = vpack.c.b16 %v625, %v623
  %v1040 = vpack.c.b16 %v628, %v626
  %v1041 = vpack.c.b16 %v629, %v627
  %v1042 = vpack.c.b16 %v632, %v630
  %v1043 = vpack.c.b16 %v633, %v631
  %v1044 = vpack.c.b16 %v636, %v634
  %v1045 = vpack.c.b16 %v637, %v635
  %v1046 = vpack.c.b16 %v640, %v638
  %v1047 = vpack.c.b16 %v641, %v639
  %v1048 = vpack.c.b16 %v644, %v642
  %v1049 = vpack.c.b16 %v645, %v643
  %v1050 = vpack.c.b16 %v648, %v646
  %v1051 = vpack.c.b16 %v649, %v647
  %v1052 = vpack.c.b16 %v652, %v650
  %v1053 = vpack.c.b16 %v653, %v651
  %v1054 = vpack.c.b16 %v656, %v654
  %v1055 = vpack.c.b16 %v657, %v655
  %v1056 = vpack.c.b16 %v660, %v658
  %v1057 = vpack.c.b16 %v661, %v659
  %v1058 = vpack.c.b16 %v664, %v662
  %v1059 = vpack.c.b16 %v665, %v663
  %v1060 = vpack.c.b16 %v668, %v666
  %v1061 = vpack.c.b16 %v669, %v667
  %v1062 = vpack.c.b16 %v672, %v670
  %v1063 = vpack.c.b16 %v673, %v671
  %v1064 = vpack.c.b16 %v676, %v674
  %v1065 = vpack.c.b16 %v677, %v675
  %v1066 = vpack.c.b16 %v680, %v678
  %v1067 = vpack.c.b16 %v681, %v679
  %v1068 = vpack.c.b16 %v684, %v682
  %v1069 = vpack.c.b16 %v685, %v683
  %v1070 = vpack.c.b16 %v688, %v686
  %v1071 = vpack.c.b16 %v689, %v687
  %v1072 = vpack.c.b16 %v692, %v690
  %v1073 = vpack.c.b16 %v693, %v691
  %v1074 = vpack.c.b16 %v696, %v694
  %v1075 = vpack.c.b16 %v697, %v695
  %v1076 = vpack.c.b16 %v700, %v698
  %v1077 = vpack.c.b16 %v701, %v699
  %v1078 = vpack.c.b16 %v704, %v702
  %v1079 = vpack.c.b16 %v705, %v703
  %v1080 = vpack.c.b16 %v708, %v706
  %v1081 = vpack.c.b16 %v709, %v707
  %v1082 = vpack.c.b16 %v712, %v710
  %v1083 = vpack.c.b16 %v713, %v711
  %v1084 = vpack.c.b16 %v716, %v714
  %v1085 = vpack.c.b16 %v717, %v715
  %v1086 = vpack.c.b16 %v720, %v718
  %v1087 = vpack.c.b16 %v721, %v719
  %v1088 = vpack.c.b16 %v724, %v722
  %v1089 = vpack.c.b16 %v725, %v723
  %v1090 = vpack.c.b16 %v728, %v726
  %v1091 = vpack.c.b16 %v729, %v727
  %v1092 = vpack.c.b16 %v732, %v730
  %v1093 = vpack.c.b16 %v733, %v731
  %v1094 = vpack.c.b16 %v736, %v734
  %v1095 = vpack.c.b16 %v737, %v735
  %v1096 = vpack.c.b16 %v740, %v738
  %v1097 = vpack.c.b16 %v741, %v739
  %v1098 = vpack.c.b16 %v744, %v742
  %v1099 = vpack.c.b16 %v745, %v743
  %v1100 = vpack.c.b16 %v748, %v746
  %v1101 = vpack.c.b16 %v749, %v747
  %v1102 = vpack.c.b16 %v752, %v750
  %v1103 = vpack.c.b16 %v753, %v751
  %v1104 = vpack.c.b16 %v756, %v754
  %v1105 = vpack.c.b16 %v757, %v755
  %v1106 = vpack.c.b16 %v760, %v758
  %v1107 = vpack.c.b16 %v761, %v759
  %v1108 = vpack.c.b16 %v764, %v762
  %v1109 = vpack.c.b16 %v765, %v763
  %v1110 = vpack.c.b16 %v768, %v766
  %v1111 = vpack.c.b16 %v769, %v767
  %v1112 = vpack.c.b16 %v772, %v770
  %v1113 = vpack.c.b16 %v773, %v771
  %v1114 = vpack.c.b16 %v776, %v774
  %v1115 = vpack.c.b16 %v777, %v775
  %v1116 = vpack.c.b16 %v780, %v778
  %v1117 = vpack.c.b16 %v781, %v779
  %v1118 = vpack.c.b16 %v784, %v782
  %v1119 = vpack.c.b16 %v785, %v783
  %v1120 = vpack.c.b16 %v788, %v786
  %v1121 = vpack.c.b16 %v789, %v787
  %v1122 = vpack.c.b16 %v792, %v790
  %v1123 = vpack.c.b16 %v793, %v791
  %v1124 = vpack.c.b16 %v796, %v794
  %v1125 = vpack.c.b16 %v797, %v795
  %v1126 = vpack.c.b16 %v800, %v798
  %v1127 = vpack.c.b16 %v801, %v799
  %v1128 = vpack.c.b16 %v804, %v802
  %v1129 = vpack.c.b16 %v805, %v803
  %v1130 = vpack.c.b16 %v808, %v806
  %v1131 = vpack.c.b16 %v809, %v807
  %v1132 = vpack.c.b16 %v812, %v810
  %v1133 = vpack.c.b16 %v813, %v811
  %v1134 = vpack.c.b16 %v816, %v814
  %v1135 = vpack.c.b16 %v817, %v815
  %v1136 = vpack.c.b16 %v820, %v818
  %v1137 = vpack.c.b16 %v821, %v819
  %v1138 = vpack.c.b16 %v824, %v822
  %v1139 = vpack.c.b16 %v825, %v823
  %v1140 = vpack.c.b16 %v828, %v826
  %v1141 = vpack.c.b16 %v829, %v827
  %v1142 = vpack.c.b16 %v832, %v830
  %v1143 = vpack.c.b16 %v833, %v831
  %v1144 = vpack.c.b16 %v836, %v834
  %v1145 = vpack.c.b16 %v837, %v835
  %v1146 = vpack.c.b16 %v840, %v838
  %v1147 = vpack.c.b16 %v841, %v839
  %v1148 = vpack.c.b16 %v844, %v842
  %v1149 = vpack.c.b16 %v845, %v843
  %v1150 = vpack.c.b16 %v848, %v846
  %v1151 = vpack.c.b16 %v849, %v847
  %v1152 = vpack.c.b16 %v852, %v850
  %v1153 = vpack.c.b16 %v853, %v851
  %v1154 = vpack.c.b16 %v856, %v854
  %v1155 = vpack.c.b16 %v857, %v855
  %v1156 = vpack.c.b16 %v860, %v858
  %v1157 = vpack.c.b16 %v861, %v859
  %v1158 = vpack.c.b16 %v864, %v862
  %v1159 = vpack.c.b16 %v865, %v863
  %v1160 = vpack.c.b16 %v868, %v866
  %v1161 = vpack.c.b16 %v869, %v867
  %v1162 = vpack.c.b16 %v872, %v870
  %v1163 = vpack.c.b16 %v873, %v871
  %v1164 = vpack.c.b16 %v876, %v874
  %v1165 = vpack.c.b16 %v877, %v875
  %v1166 = vpack.c.b16 %v880, %v878
  %v1167 = vpack.c.b16 %v881, %v879
  %v1168 = vpack.c.b16 %v884, %v882
  %v1169 = vpack.c.b16 %v885, %v883
  %v1170 = vpack.c.b16 %v888, %v886
  %v1171 = vpack.c.b16 %v889, %v887
  %v1172 = vpack.c.b16 %v892, %v890
  %v1173 = vpack.c.b16 %v893, %v891
  %v1174 = vpack.c.b16 %v896, %v894
  %v1175 = vpack.c.b16 %v897, %v895
  %v1176 = vpack.c.b16 %v900, %v898
  %v1177 = vpack.c.b16 %v901, %v899
  %v1178 = vpack.c.b16 %v904, %v902
  %v1179 = vpack.c.b16 %v905, %v903
  %v1180 = vpack.c.b16 %v908, %v906
  %v1181 = vpack.c.b16 %v909, %v907
  %v1182 = vpack.c.b16 %v912, %v910
  %v1183 = vpack.c.b16 %v913, %v911
  %v1184 = vpack.c.b16 %v916, %v914
  %v1185 = vpack.c.b16 %v917, %v915
  %v1186 = vpack.c.b16 %v920, %v918
  %v1187 = vpack.c.b16 %v921, %v919
  %v1188 = vpack.c.b16 %v924, %v922
  %v1189 = vpack.c.b16 %v925, %v923
  %v1190 = vpack.c.b16 %v928, %v926
  %v1191 = vpack.c.b16 %v929, %v927
  %v1192 = vpack.c.b16 %v932, %v930
  %v1193 = vpack.c.b16 %v933, %v931
  %v1194 = vpack.c.b16 %v936, %v934
  %v1195 = vpack.c.b16 %v937, %v935
  %v1196 = vpack.c.b16 %v940, %v938
  %v1197 = vpack.c.b16 %v941, %v939
  %v1198 = vpack.c.b16 %v944, %v942
  %v1199 = vpack.c.b16 %v945, %v943
  %v1200 = vpack.c.b16 %v948, %v946
  %v1201 = vpack.c.b16 %v949, %v947
  %v1202 = vpack.c.b16 %v952, %v950
  %v1203 = vpack.c.b16 %v953, %v951
  %v1204 = vpack.c.b16 %v956, %v954
  %v1205 = vpack.c.b16 %v957, %v955
  %v1206 = vpack.c.b16 %v960, %v958
  %v1207 = vpack.c.b16 %v961, %v959
  %v1208 = vpack.c.b16 %v964, %v962
  %v1209 = vpack.c.b16 %v965, %v963
  %v1210 = vpack.c.b16 %v968, %v966
  %v1211 = vpack.c.b16 %v969, %v967
  %v1212 = vpack.c.b16 %v972, %v970
  %v1213 = vpack.c.b16 %v973, %v971
  %v1214 = vpack.c.b16 %v976, %v974
  %v1215 = vpack.c.b16 %v977, %v975
  %v1216 = vpack.c.b16 %v980, %v978
  %v1217 = vpack.c.b16 %v981, %v979
  %v1218 = vpack.c.b16 %v984, %v982
  %v1219 = vpack.c.b16 %v985, %v983
  %v1220 = vpack.c.b16 %v988, %v986
  %v1221 = vpack.c.b16 %v989, %v987
  %v1222 = vpack.c.b16 %v992, %v990
  %v1223 = vpack.c.b16 %v993, %v991
  %v1224 = vpack.c.b16 %v996, %v994
  %v1225 = vpack.c.b16 %v997, %v995
  %v1226 = vpack.c.b16 %v1000, %v998
  %v1227 = vpack.c.b16 %v1001, %v999
  %v1228 = vpack.c.b16 %v1004, %v1002
  %v1229 = vpack.c.b16 %v1005, %v1003
  %1454 = vmatprep.subr.bf16.mxu0 %v1021
  %1455 = vmatpush1.bf16.msra.mxu0 %v1020
  %1456 = vmatprep.subr.bf16.mxu0 %v1019
  %1457 = vmatpush1.bf16.msra.mxu0 %v1018
  %1458 = vmatprep.subr.bf16.mxu0 %v1017
  %1459 = vmatpush1.bf16.msra.mxu0 %v1016
  %1460 = vmatprep.subr.bf16.mxu0 %v1015
  %1461 = vmatpush1.bf16.msra.mxu0 %v1014
  %1462 = vmatprep.subr.bf16.mxu0 %v1013
  %1463 = vmatpush1.bf16.msra.mxu0 %v1012
  %1464 = vmatprep.subr.bf16.mxu0 %v1011
  %1465 = vmatpush1.bf16.msra.mxu0 %v1010
  %1466 = vmatprep.subr.bf16.mxu0 %v1009
  %1467 = vmatpush1.bf16.msra.mxu0 %v1008
  %1468 = vmatprep.subr.bf16.mxu0 %v1007
  %1469 = vmatpush1.bf16.msra.mxu0 %v1006
  %1470 = vmatprep.subr.bf16.mxu0 %v1037
  %1471 = vmatpush2.bf16.msra.mxu0 %v1036
  %1472 = vmatprep.subr.bf16.mxu0 %v1035
  %1473 = vmatpush2.bf16.msra.mxu0 %v1034
  %1474 = vmatprep.subr.bf16.mxu0 %v1033
  %1475 = vmatpush2.bf16.msra.mxu0 %v1032
  %1476 = vmatprep.subr.bf16.mxu0 %v1031
  %1477 = vmatpush2.bf16.msra.mxu0 %v1030
  %1478 = vmatprep.subr.bf16.mxu0 %v1029
  %1479 = vmatpush2.bf16.msra.mxu0 %v1028
  %1480 = vmatprep.subr.bf16.mxu0 %v1027
  %1481 = vmatpush2.bf16.msra.mxu0 %v1026
  %1482 = vmatprep.subr.bf16.mxu0 %v1025
  %1483 = vmatpush2.bf16.msra.mxu0 %v1024
  %1484 = vmatprep.subr.bf16.mxu0 %v1023
  %1485 = vmatpush2.bf16.msra.mxu0 %v1022
  %1486 = vmatprep.mubr.bf16.mxu0 %v307
  %1487 = vmatmul.mubr.bf16.gmra.mxu0 %v306
  %v1488 = vpop.f32.mrf.mxu0
  %v1489 = vadd.f32 %v257, %v1488
  %v1490 = vpop.f32.mrf.mxu0
  %v1491 = vadd.f32 %v261, %v1490
  %v1492 = vpop.f32.mrf.mxu0
  %v1493 = vadd.f32 %v257, %v1492
  %v1494 = vpop.f32.mrf.mxu0
  %v1495 = vadd.f32 %v261, %v1494
  %1496 = vdwg.mxu0
  %1497 = vmatprep.subr.bf16.mxu0 %v1053
  %1498 = vmatpush1.bf16.msra.mxu0 %v1052
  %1499 = vmatprep.subr.bf16.mxu0 %v1051
  %1500 = vmatpush1.bf16.msra.mxu0 %v1050
  %1501 = vmatprep.subr.bf16.mxu0 %v1049
  %1502 = vmatpush1.bf16.msra.mxu0 %v1048
  %1503 = vmatprep.subr.bf16.mxu0 %v1047
  %1504 = vmatpush1.bf16.msra.mxu0 %v1046
  %1505 = vmatprep.subr.bf16.mxu0 %v1045
  %1506 = vmatpush1.bf16.msra.mxu0 %v1044
  %1507 = vmatprep.subr.bf16.mxu0 %v1043
  %1508 = vmatpush1.bf16.msra.mxu0 %v1042
  %1509 = vmatprep.subr.bf16.mxu0 %v1041
  %1510 = vmatpush1.bf16.msra.mxu0 %v1040
  %1511 = vmatprep.subr.bf16.mxu0 %v1039
  %1512 = vmatpush1.bf16.msra.mxu0 %v1038
  %1513 = vmatprep.subr.bf16.mxu0 %v1069
  %1514 = vmatpush2.bf16.msra.mxu0 %v1068
  %1515 = vmatprep.subr.bf16.mxu0 %v1067
  %1516 = vmatpush2.bf16.msra.mxu0 %v1066
  %1517 = vmatprep.subr.bf16.mxu0 %v1065
  %1518 = vmatpush2.bf16.msra.mxu0 %v1064
  %1519 = vmatprep.subr.bf16.mxu0 %v1063
  %1520 = vmatpush2.bf16.msra.mxu0 %v1062
  %1521 = vmatprep.subr.bf16.mxu0 %v1061
  %1522 = vmatpush2.bf16.msra.mxu0 %v1060
  %1523 = vmatprep.subr.bf16.mxu0 %v1059
  %1524 = vmatpush2.bf16.msra.mxu0 %v1058
  %1525 = vmatprep.subr.bf16.mxu0 %v1057
  %1526 = vmatpush2.bf16.msra.mxu0 %v1056
  %1527 = vmatprep.subr.bf16.mxu0 %v1055
  %1528 = vmatpush2.bf16.msra.mxu0 %v1054
  %1529 = vmatprep.mubr.bf16.mxu0 %v309
  %1530 = vmatmul.mubr.bf16.gmra.mxu0 %v308
  %v1531 = vpop.f32.mrf.mxu0
  %v1532 = vadd.f32 %v1489, %v1531
  %v1533 = vpop.f32.mrf.mxu0
  %v1534 = vadd.f32 %v1491, %v1533
  %v1535 = vpop.f32.mrf.mxu0
  %v1536 = vadd.f32 %v1493, %v1535
  %v1537 = vpop.f32.mrf.mxu0
  %v1538 = vadd.f32 %v1495, %v1537
  %1539 = vdwg.mxu0
  %1540 = vmatprep.subr.bf16.mxu0 %v1085
  %1541 = vmatpush1.bf16.msra.mxu0 %v1084
  %1542 = vmatprep.subr.bf16.mxu0 %v1083
  %1543 = vmatpush1.bf16.msra.mxu0 %v1082
  %1544 = vmatprep.subr.bf16.mxu0 %v1081
  %1545 = vmatpush1.bf16.msra.mxu0 %v1080
  %1546 = vmatprep.subr.bf16.mxu0 %v1079
  %1547 = vmatpush1.bf16.msra.mxu0 %v1078
  %1548 = vmatprep.subr.bf16.mxu0 %v1077
  %1549 = vmatpush1.bf16.msra.mxu0 %v1076
  %1550 = vmatprep.subr.bf16.mxu0 %v1075
  %1551 = vmatpush1.bf16.msra.mxu0 %v1074
  %1552 = vmatprep.subr.bf16.mxu0 %v1073
  %1553 = vmatpush1.bf16.msra.mxu0 %v1072
  %1554 = vmatprep.subr.bf16.mxu0 %v1071
  %1555 = vmatpush1.bf16.msra.mxu0 %v1070
  %1556 = vmatprep.subr.bf16.mxu0 %v1101
  %1557 = vmatpush2.bf16.msra.mxu0 %v1100
  %1558 = vmatprep.subr.bf16.mxu0 %v1099
  %1559 = vmatpush2.bf16.msra.mxu0 %v1098
  %1560 = vmatprep.subr.bf16.mxu0 %v1097
  %1561 = vmatpush2.bf16.msra.mxu0 %v1096
  %1562 = vmatprep.subr.bf16.mxu0 %v1095
  %1563 = vmatpush2.bf16.msra.mxu0 %v1094
  %1564 = vmatprep.subr.bf16.mxu0 %v1093
  %1565 = vmatpush2.bf16.msra.mxu0 %v1092
  %1566 = vmatprep.subr.bf16.mxu0 %v1091
  %1567 = vmatpush2.bf16.msra.mxu0 %v1090
  %1568 = vmatprep.subr.bf16.mxu0 %v1089
  %1569 = vmatpush2.bf16.msra.mxu0 %v1088
  %1570 = vmatprep.subr.bf16.mxu0 %v1087
  %1571 = vmatpush2.bf16.msra.mxu0 %v1086
  %1572 = vmatprep.mubr.bf16.mxu0 %v311
  %1573 = vmatmul.mubr.bf16.gmra.mxu0 %v310
  %v1574 = vpop.f32.mrf.mxu0
  %v1575 = vadd.f32 %v1532, %v1574
  %v1576 = vpop.f32.mrf.mxu0
  %v1577 = vadd.f32 %v1534, %v1576
  %v1578 = vpop.f32.mrf.mxu0
  %v1579 = vadd.f32 %v1536, %v1578
  %v1580 = vpop.f32.mrf.mxu0
  %v1581 = vadd.f32 %v1538, %v1580
  %1582 = vdwg.mxu0
  %1583 = vmatprep.subr.bf16.mxu0 %v1117
  %1584 = vmatpush1.bf16.msra.mxu0 %v1116
  %1585 = vmatprep.subr.bf16.mxu0 %v1115
  %1586 = vmatpush1.bf16.msra.mxu0 %v1114
  %1587 = vmatprep.subr.bf16.mxu0 %v1113
  %1588 = vmatpush1.bf16.msra.mxu0 %v1112
  %1589 = vmatprep.subr.bf16.mxu0 %v1111
  %1590 = vmatpush1.bf16.msra.mxu0 %v1110
  %1591 = vmatprep.subr.bf16.mxu0 %v1109
  %1592 = vmatpush1.bf16.msra.mxu0 %v1108
  %1593 = vmatprep.subr.bf16.mxu0 %v1107
  %1594 = vmatpush1.bf16.msra.mxu0 %v1106
  %1595 = vmatprep.subr.bf16.mxu0 %v1105
  %1596 = vmatpush1.bf16.msra.mxu0 %v1104
  %1597 = vmatprep.subr.bf16.mxu0 %v1103
  %1598 = vmatpush1.bf16.msra.mxu0 %v1102
  %1599 = vmatprep.subr.bf16.mxu0 %v1133
  %1600 = vmatpush2.bf16.msra.mxu0 %v1132
  %1601 = vmatprep.subr.bf16.mxu0 %v1131
  %1602 = vmatpush2.bf16.msra.mxu0 %v1130
  %1603 = vmatprep.subr.bf16.mxu0 %v1129
  %1604 = vmatpush2.bf16.msra.mxu0 %v1128
  %1605 = vmatprep.subr.bf16.mxu0 %v1127
  %1606 = vmatpush2.bf16.msra.mxu0 %v1126
  %1607 = vmatprep.subr.bf16.mxu0 %v1125
  %1608 = vmatpush2.bf16.msra.mxu0 %v1124
  %1609 = vmatprep.subr.bf16.mxu0 %v1123
  %1610 = vmatpush2.bf16.msra.mxu0 %v1122
  %1611 = vmatprep.subr.bf16.mxu0 %v1121
  %1612 = vmatpush2.bf16.msra.mxu0 %v1120
  %1613 = vmatprep.subr.bf16.mxu0 %v1119
  %1614 = vmatpush2.bf16.msra.mxu0 %v1118
  %1615 = vmatprep.mubr.bf16.mxu0 %v313
  %1616 = vmatmul.mubr.bf16.gmra.mxu0 %v312
  %v1617 = vpop.f32.mrf.mxu0
  %v1618 = vadd.f32 %v1575, %v1617
  %v1619 = vpop.f32.mrf.mxu0
  %v1620 = vadd.f32 %v1577, %v1619
  %v1621 = vpop.f32.mrf.mxu0
  %v1622 = vadd.f32 %v1579, %v1621
  %v1623 = vpop.f32.mrf.mxu0
  %v1624 = vadd.f32 %v1581, %v1623
  %1625 = vdwg.mxu0
  %1626 = vmatprep.subr.bf16.mxu0 %v1149
  %1627 = vmatpush1.bf16.msra.mxu0 %v1148
  %1628 = vmatprep.subr.bf16.mxu0 %v1147
  %1629 = vmatpush1.bf16.msra.mxu0 %v1146
  %1630 = vmatprep.subr.bf16.mxu0 %v1145
  %1631 = vmatpush1.bf16.msra.mxu0 %v1144
  %1632 = vmatprep.subr.bf16.mxu0 %v1143
  %1633 = vmatpush1.bf16.msra.mxu0 %v1142
  %1634 = vmatprep.subr.bf16.mxu0 %v1141
  %1635 = vmatpush1.bf16.msra.mxu0 %v1140
  %1636 = vmatprep.subr.bf16.mxu0 %v1139
  %1637 = vmatpush1.bf16.msra.mxu0 %v1138
  %1638 = vmatprep.subr.bf16.mxu0 %v1137
  %1639 = vmatpush1.bf16.msra.mxu0 %v1136
  %1640 = vmatprep.subr.bf16.mxu0 %v1135
  %1641 = vmatpush1.bf16.msra.mxu0 %v1134
  %1642 = vmatprep.subr.bf16.mxu0 %v1165
  %1643 = vmatpush2.bf16.msra.mxu0 %v1164
  %1644 = vmatprep.subr.bf16.mxu0 %v1163
  %1645 = vmatpush2.bf16.msra.mxu0 %v1162
  %1646 = vmatprep.subr.bf16.mxu0 %v1161
  %1647 = vmatpush2.bf16.msra.mxu0 %v1160
  %1648 = vmatprep.subr.bf16.mxu0 %v1159
  %1649 = vmatpush2.bf16.msra.mxu0 %v1158
  %1650 = vmatprep.subr.bf16.mxu0 %v1157
  %1651 = vmatpush2.bf16.msra.mxu0 %v1156
  %1652 = vmatprep.subr.bf16.mxu0 %v1155
  %1653 = vmatpush2.bf16.msra.mxu0 %v1154
  %1654 = vmatprep.subr.bf16.mxu0 %v1153
  %1655 = vmatpush2.bf16.msra.mxu0 %v1152
  %1656 = vmatprep.subr.bf16.mxu0 %v1151
  %1657 = vmatpush2.bf16.msra.mxu0 %v1150
  %1658 = vmatprep.mubr.bf16.mxu0 %v315
  %1659 = vmatmul.mubr.bf16.gmra.mxu0 %v314
  %v1660 = vpop.f32.mrf.mxu0
  %v1661 = vadd.f32 %v1618, %v1660
  %v1662 = vpop.f32.mrf.mxu0
  %v1663 = vadd.f32 %v1620, %v1662
  %v1664 = vpop.f32.mrf.mxu0
  %v1665 = vadd.f32 %v1622, %v1664
  %v1666 = vpop.f32.mrf.mxu0
  %v1667 = vadd.f32 %v1624, %v1666
  %1668 = vdwg.mxu0
  %1669 = vmatprep.subr.bf16.mxu0 %v1181
  %1670 = vmatpush1.bf16.msra.mxu0 %v1180
  %1671 = vmatprep.subr.bf16.mxu0 %v1179
  %1672 = vmatpush1.bf16.msra.mxu0 %v1178
  %1673 = vmatprep.subr.bf16.mxu0 %v1177
  %1674 = vmatpush1.bf16.msra.mxu0 %v1176
  %1675 = vmatprep.subr.bf16.mxu0 %v1175
  %1676 = vmatpush1.bf16.msra.mxu0 %v1174
  %1677 = vmatprep.subr.bf16.mxu0 %v1173
  %1678 = vmatpush1.bf16.msra.mxu0 %v1172
  %1679 = vmatprep.subr.bf16.mxu0 %v1171
  %1680 = vmatpush1.bf16.msra.mxu0 %v1170
  %1681 = vmatprep.subr.bf16.mxu0 %v1169
  %1682 = vmatpush1.bf16.msra.mxu0 %v1168
  %1683 = vmatprep.subr.bf16.mxu0 %v1167
  %1684 = vmatpush1.bf16.msra.mxu0 %v1166
  %1685 = vmatprep.subr.bf16.mxu0 %v1197
  %1686 = vmatpush2.bf16.msra.mxu0 %v1196
  %1687 = vmatprep.subr.bf16.mxu0 %v1195
  %1688 = vmatpush2.bf16.msra.mxu0 %v1194
  %1689 = vmatprep.subr.bf16.mxu0 %v1193
  %1690 = vmatpush2.bf16.msra.mxu0 %v1192
  %1691 = vmatprep.subr.bf16.mxu0 %v1191
  %1692 = vmatpush2.bf16.msra.mxu0 %v1190
  %1693 = vmatprep.subr.bf16.mxu0 %v1189
  %1694 = vmatpush2.bf16.msra.mxu0 %v1188
  %1695 = vmatprep.subr.bf16.mxu0 %v1187
  %1696 = vmatpush2.bf16.msra.mxu0 %v1186
  %1697 = vmatprep.subr.bf16.mxu0 %v1185
  %1698 = vmatpush2.bf16.msra.mxu0 %v1184
  %1699 = vmatprep.subr.bf16.mxu0 %v1183
  %1700 = vmatpush2.bf16.msra.mxu0 %v1182
  %1701 = vmatprep.mubr.bf16.mxu0 %v317
  %1702 = vmatmul.mubr.bf16.gmra.mxu0 %v316
  %v1703 = vpop.f32.mrf.mxu0
  %v1704 = vadd.f32 %v1661, %v1703
  %v1705 = vpop.f32.mrf.mxu0
  %v1706 = vadd.f32 %v1663, %v1705
  %v1707 = vpop.f32.mrf.mxu0
  %v1708 = vadd.f32 %v1665, %v1707
  %v1709 = vpop.f32.mrf.mxu0
  %v1710 = vadd.f32 %v1667, %v1709
  %1711 = vdwg.mxu0
  %1712 = vmatprep.subr.bf16.mxu0 %v1213
  %1713 = vmatpush1.bf16.msra.mxu0 %v1212
  %1714 = vmatprep.subr.bf16.mxu0 %v1211
  %1715 = vmatpush1.bf16.msra.mxu0 %v1210
  %1716 = vmatprep.subr.bf16.mxu0 %v1209
  %1717 = vmatpush1.bf16.msra.mxu0 %v1208
  %1718 = vmatprep.subr.bf16.mxu0 %v1207
  %1719 = vmatpush1.bf16.msra.mxu0 %v1206
  %1720 = vmatprep.subr.bf16.mxu0 %v1205
  %1721 = vmatpush1.bf16.msra.mxu0 %v1204
  %1722 = vmatprep.subr.bf16.mxu0 %v1203
  %1723 = vmatpush1.bf16.msra.mxu0 %v1202
  %1724 = vmatprep.subr.bf16.mxu0 %v1201
  %1725 = vmatpush1.bf16.msra.mxu0 %v1200
  %1726 = vmatprep.subr.bf16.mxu0 %v1199
  %1727 = vmatpush1.bf16.msra.mxu0 %v1198
  %1728 = vmatprep.subr.bf16.mxu0 %v1229
  %1729 = vmatpush2.bf16.msra.mxu0 %v1228
  %1730 = vmatprep.subr.bf16.mxu0 %v1227
  %1731 = vmatpush2.bf16.msra.mxu0 %v1226
  %1732 = vmatprep.subr.bf16.mxu0 %v1225
  %1733 = vmatpush2.bf16.msra.mxu0 %v1224
  %1734 = vmatprep.subr.bf16.mxu0 %v1223
  %1735 = vmatpush2.bf16.msra.mxu0 %v1222
  %1736 = vmatprep.subr.bf16.mxu0 %v1221
  %1737 = vmatpush2.bf16.msra.mxu0 %v1220
  %1738 = vmatprep.subr.bf16.mxu0 %v1219
  %1739 = vmatpush2.bf16.msra.mxu0 %v1218
  %1740 = vmatprep.subr.bf16.mxu0 %v1217
  %1741 = vmatpush2.bf16.msra.mxu0 %v1216
  %1742 = vmatprep.subr.bf16.mxu0 %v1215
  %1743 = vmatpush2.bf16.msra.mxu0 %v1214
  %1744 = vmatprep.mubr.bf16.mxu0 %v319
  %1745 = vmatmul.mubr.bf16.gmra.mxu0 %v318
  %v1746 = vpop.f32.mrf.mxu0
  %v1747 = vadd.f32 %v1704, %v1746
  %v1748 = vpop.f32.mrf.mxu0
  %v1749 = vadd.f32 %v1706, %v1748
  %v1750 = vpop.f32.mrf.mxu0
  %v1751 = vadd.f32 %v1708, %v1750
  %v1752 = vpop.f32.mrf.mxu0
  %v1753 = vadd.f32 %v1710, %v1752
  %1754 = vdwg.mxu0
  %v1755 = vpack.c.bf16 %v1751, %v1747
  %v1756 = vpack.c.bf16 %v1753, %v1749
  %v1759 = vunpack.c.l.b16 %v1755
  %v1760 = vunpack.c.l.b16 %v1756
  %v1761 = vunpack.c.h.b16 %v1755
  %v1762 = vunpack.c.h.b16 %v1756
  %v1763 = vpack.c.b16 %v1760, %v1759
  %v1764 = vpack.c.b16 %v1762, %v1761
  %1767 = vst [vmem:[%s3] sm:$0xff] %v1763
  %1768 = vst [vmem:[%s3 + $0x8] sm:$0xff] %v1764
  // Predicated region
  $region14: #{forward.10} parent=0 // pred_check
    _
  $region15: #{forward.10} parent=0 // pred_check_branch
    %1770 = sbr.rel (0) target = $region17
  $region16: #{forward.10} parent=0 // pred_region
    _
  $region17: #{forward.10} parent=0 // pred_fallthru
    _
  // Predicated region
  $region18: #{forward.10} parent=0 // pred_check
    _
  $region19: #{forward.10} parent=0 // pred_check_branch
    %1772 = sbr.rel (0) target = $region21
  $region20: #{forward.10} parent=0 // pred_region
    _
  $region21: #{forward.10} parent=0 // pred_fallthru
    _

// kernel: forward.11
$region0: #{forward.11}
  #allocation0 [shape = 'u32[]', space=smem, size = 0x4, offset = 0x4, fixed_abs, tag = 'smem constant byte address 0x4 - core index']
  #allocation1 [shape = 'u32[144,128]{1,0:T(1,128)}', space=vmem, size = 0x12000, scoped, tag = 'internal scratch']
  %s0 = inlined_call_operand.vmem [shape: bf16[16,512], index: 0, kind: input, shape index: {}]
  %s1 = inlined_call_operand.vmem [shape: bf16[512,64], index: 1, kind: input, shape index: {}]
  %s2 = inlined_call_operand.vmem [shape: f32[1,64], index: 2, kind: input, shape index: {}]
  %s3 = inlined_call_operand.vmem [shape: bf16[64,128], index: 3, kind: input, shape index: {}]
  %s4 = inlined_call_operand.vmem [shape: f32[1,128], index: 4, kind: input, shape index: {}]
  %s5 = inlined_call_operand.vmem [shape: f32[16,128], index: 5, kind: output, shape index: {}]
  %s6 = sld [smem:[#allocation0]]
  $region30: #{forward.11} parent=0
    _
  %s8 = ssub.s32 1, %s6
  %s9 = scalar_select 0, %s8, %s6
  // Predicated region
  $region2: #{forward.11} parent=0 // pred_check
    _
  $region3: #{forward.11} parent=0 // pred_check_branch
    %11 = sbr.rel (0) target = $region5
  $region4: #{forward.11} parent=0 // pred_region
    _
  $region5: #{forward.11} parent=0 // pred_fallthru
    _
  // Predicated region
  $region6: #{forward.11} parent=0 // pred_check
    _
  $region7: #{forward.11} parent=0 // pred_check_branch
    %13 = sbr.rel (0) target = $region9
  $region8: #{forward.11} parent=0 // pred_region
    _
  $region9: #{forward.11} parent=0 // pred_fallthru
    _
  // Predicated region
  $region10: #{forward.11} parent=0 // pred_check
    _
  $region11: #{forward.11} parent=0 // pred_check_branch
    %15 = sbr.rel (0) target = $region13
  $region12: #{forward.11} parent=0 // pred_region
    _
  $region13: #{forward.11} parent=0 // pred_fallthru
    _
  // Predicated region
  $region14: #{forward.11} parent=0 // pred_check
    _
  $region15: #{forward.11} parent=0 // pred_check_branch
    %17 = sbr.rel (0) target = $region17
  $region16: #{forward.11} parent=0 // pred_region
    _
  $region17: #{forward.11} parent=0 // pred_fallthru
    _
  // Predicated region
  $region18: #{forward.11} parent=0 // pred_check
    _
  $region19: #{forward.11} parent=0 // pred_check_branch
    %19 = sbr.rel (0) target = $region21
  $region20: #{forward.11} parent=0 // pred_region
    _
  $region21: #{forward.11} parent=0 // pred_fallthru
    _
  %v21 = vld [vmem:[%s0] sm:$0xff]
  %v22 = vld [vmem:[%s0 + $0x8] sm:$0xff]
  %v23 = vld [vmem:[%s0 + $0x10] sm:$0xff]
  %v24 = vld [vmem:[%s0 + $0x18] sm:$0xff]
  %v25 = vld [vmem:[%s1] sm:$0xf]
  %v26 = vld [vmem:[%s1 + $0x4] sm:$0xf]
  %v27 = vld [vmem:[%s1 + $0x8] sm:$0xf]
  %v28 = vld [vmem:[%s1 + $0xc] sm:$0xf]
  %v29 = vld [vmem:[%s1 + $0x10] sm:$0xf]
  %v30 = vld [vmem:[%s1 + $0x14] sm:$0xf]
  %v31 = vld [vmem:[%s1 + $0x18] sm:$0xf]
  %v32 = vld [vmem:[%s1 + $0x1c] sm:$0xf]
  %v33 = vld [vmem:[%s1 + $0x20] sm:$0xf]
  %v34 = vld [vmem:[%s1 + $0x24] sm:$0xf]
  %v35 = vld [vmem:[%s1 + $0x28] sm:$0xf]
  %v36 = vld [vmem:[%s1 + $0x2c] sm:$0xf]
  %v37 = vld [vmem:[%s1 + $0x30] sm:$0xf]
  %v38 = vld [vmem:[%s1 + $0x34] sm:$0xf]
  %v39 = vld [vmem:[%s1 + $0x38] sm:$0xf]
  %v40 = vld [vmem:[%s1 + $0x3c] sm:$0xf]
  %v41 = vld [vmem:[%s1 + $0x40] sm:$0xf]
  %v42 = vld [vmem:[%s1 + $0x44] sm:$0xf]
  %v43 = vld [vmem:[%s1 + $0x48] sm:$0xf]
  %v44 = vld [vmem:[%s1 + $0x4c] sm:$0xf]
  %v45 = vld [vmem:[%s1 + $0x50] sm:$0xf]
  %v46 = vld [vmem:[%s1 + $0x54] sm:$0xf]
  %v47 = vld [vmem:[%s1 + $0x58] sm:$0xf]
  %v48 = vld [vmem:[%s1 + $0x5c] sm:$0xf]
  %v49 = vld [vmem:[%s1 + $0x60] sm:$0xf]
  %v50 = vld [vmem:[%s1 + $0x64] sm:$0xf]
  %v51 = vld [vmem:[%s1 + $0x68] sm:$0xf]
  %v52 = vld [vmem:[%s1 + $0x6c] sm:$0xf]
  %v53 = vld [vmem:[%s1 + $0x70] sm:$0xf]
  %v54 = vld [vmem:[%s1 + $0x74] sm:$0xf]
  %v55 = vld [vmem:[%s1 + $0x78] sm:$0xf]
  %v56 = vld [vmem:[%s1 + $0x7c] sm:$0xf]
  %v57 = vld [vmem:[%s1 + $0x80] sm:$0xf]
  %v58 = vld [vmem:[%s1 + $0x84] sm:$0xf]
  %v59 = vld [vmem:[%s1 + $0x88] sm:$0xf]
  %v60 = vld [vmem:[%s1 + $0x8c] sm:$0xf]
  %v61 = vld [vmem:[%s1 + $0x90] sm:$0xf]
  %v62 = vld [vmem:[%s1 + $0x94] sm:$0xf]
  %v63 = vld [vmem:[%s1 + $0x98] sm:$0xf]
  %v64 = vld [vmem:[%s1 + $0x9c] sm:$0xf]
  %v65 = vld [vmem:[%s1 + $0xa0] sm:$0xf]
  %v66 = vld [vmem:[%s1 + $0xa4] sm:$0xf]
  %v67 = vld [vmem:[%s1 + $0xa8] sm:$0xf]
  %v68 = vld [vmem:[%s1 + $0xac] sm:$0xf]
  %v69 = vld [vmem:[%s1 + $0xb0] sm:$0xf]
  %v70 = vld [vmem:[%s1 + $0xb4] sm:$0xf]
  %v71 = vld [vmem:[%s1 + $0xb8] sm:$0xf]
  %v72 = vld [vmem:[%s1 + $0xbc] sm:$0xf]
  %v73 = vld [vmem:[%s1 + $0xc0] sm:$0xf]
  %v74 = vld [vmem:[%s1 + $0xc4] sm:$0xf]
  %v75 = vld [vmem:[%s1 + $0xc8] sm:$0xf]
  %v76 = vld [vmem:[%s1 + $0xcc] sm:$0xf]
  %v77 = vld [vmem:[%s1 + $0xd0] sm:$0xf]
  %v78 = vld [vmem:[%s1 + $0xd4] sm:$0xf]
  %v79 = vld [vmem:[%s1 + $0xd8] sm:$0xf]
  %v80 = vld [vmem:[%s1 + $0xdc] sm:$0xf]
  %v81 = vld [vmem:[%s1 + $0xe0] sm:$0xf]
  %v82 = vld [vmem:[%s1 + $0xe4] sm:$0xf]
  %v83 = vld [vmem:[%s1 + $0xe8] sm:$0xf]
  %v84 = vld [vmem:[%s1 + $0xec] sm:$0xf]
  %v85 = vld [vmem:[%s1 + $0xf0] sm:$0xf]
  %v86 = vld [vmem:[%s1 + $0xf4] sm:$0xf]
  %v87 = vld [vmem:[%s1 + $0xf8] sm:$0xf]
  %v88 = vld [vmem:[%s1 + $0xfc] sm:$0xf]
  %v89 = vld [vmem:[%s2] sm:$0x1]
  %v91 = vlaneseq
  %v92 = vshrl.u32 %v91, 7
  %v93 = vsub.s32 0, %v92
  %v94 = vrot.slane %v89, %v93
  %v100 = vunpack.c.l.b16 %v21
  %v101 = vunpack.c.h.b16 %v21
  %v102 = vunpack.c.l.b16 %v22
  %v103 = vunpack.c.h.b16 %v22
  %v104 = vunpack.c.l.b16 %v23
  %v105 = vunpack.c.h.b16 %v23
  %v106 = vunpack.c.l.b16 %v24
  %v107 = vunpack.c.h.b16 %v24
  %v108 = vpack.c.b16 %v104, %v100
  %v109 = vpack.c.b16 %v105, %v101
  %v110 = vpack.c.b16 %v106, %v102
  %v111 = vpack.c.b16 %v107, %v103
  %v180 = vunpack.c.l.b16 %v25
  %v181 = vunpack.c.l.b16 %v26
  %v182 = vunpack.c.l.b16 %v27
  %v183 = vunpack.c.l.b16 %v28
  %v184 = vunpack.c.l.b16 %v29
  %v185 = vunpack.c.l.b16 %v30
  %v186 = vunpack.c.l.b16 %v31
  %v187 = vunpack.c.l.b16 %v32
  %v188 = vunpack.c.l.b16 %v33
  %v189 = vunpack.c.l.b16 %v34
  %v190 = vunpack.c.l.b16 %v35
  %v191 = vunpack.c.l.b16 %v36
  %v192 = vunpack.c.l.b16 %v37
  %v193 = vunpack.c.l.b16 %v38
  %v194 = vunpack.c.l.b16 %v39
  %v195 = vunpack.c.l.b16 %v40
  %v196 = vunpack.c.l.b16 %v41
  %v197 = vunpack.c.l.b16 %v42
  %v198 = vunpack.c.l.b16 %v43
  %v199 = vunpack.c.l.b16 %v44
  %v200 = vunpack.c.l.b16 %v45
  %v201 = vunpack.c.l.b16 %v46
  %v202 = vunpack.c.l.b16 %v47
  %v203 = vunpack.c.l.b16 %v48
  %v204 = vunpack.c.l.b16 %v49
  %v205 = vunpack.c.l.b16 %v50
  %v206 = vunpack.c.l.b16 %v51
  %v207 = vunpack.c.l.b16 %v52
  %v208 = vunpack.c.l.b16 %v53
  %v209 = vunpack.c.l.b16 %v54
  %v210 = vunpack.c.l.b16 %v55
  %v211 = vunpack.c.l.b16 %v56
  %v212 = vunpack.c.l.b16 %v57
  %v213 = vunpack.c.l.b16 %v58
  %v214 = vunpack.c.l.b16 %v59
  %v215 = vunpack.c.l.b16 %v60
  %v216 = vunpack.c.l.b16 %v61
  %v217 = vunpack.c.l.b16 %v62
  %v218 = vunpack.c.l.b16 %v63
  %v219 = vunpack.c.l.b16 %v64
  %v220 = vunpack.c.l.b16 %v65
  %v221 = vunpack.c.l.b16 %v66
  %v222 = vunpack.c.l.b16 %v67
  %v223 = vunpack.c.l.b16 %v68
  %v224 = vunpack.c.l.b16 %v69
  %v225 = vunpack.c.l.b16 %v70
  %v226 = vunpack.c.l.b16 %v71
  %v227 = vunpack.c.l.b16 %v72
  %v228 = vunpack.c.l.b16 %v73
  %v229 = vunpack.c.l.b16 %v74
  %v230 = vunpack.c.l.b16 %v75
  %v231 = vunpack.c.l.b16 %v76
  %v232 = vunpack.c.l.b16 %v77
  %v233 = vunpack.c.l.b16 %v78
  %v234 = vunpack.c.l.b16 %v79
  %v235 = vunpack.c.l.b16 %v80
  %v236 = vunpack.c.l.b16 %v81
  %v237 = vunpack.c.l.b16 %v82
  %v238 = vunpack.c.l.b16 %v83
  %v239 = vunpack.c.l.b16 %v84
  %v240 = vunpack.c.l.b16 %v85
  %v241 = vunpack.c.l.b16 %v86
  %v242 = vunpack.c.l.b16 %v87
  %v243 = vunpack.c.l.b16 %v88
  %v244 = vpack.c.b16 %v181, %v180
  %v245 = vpack.c.b16 %v183, %v182
  %v246 = vpack.c.b16 %v185, %v184
  %v247 = vpack.c.b16 %v187, %v186
  %v248 = vpack.c.b16 %v189, %v188
  %v249 = vpack.c.b16 %v191, %v190
  %v250 = vpack.c.b16 %v193, %v192
  %v251 = vpack.c.b16 %v195, %v194
  %v252 = vpack.c.b16 %v197, %v196
  %v253 = vpack.c.b16 %v199, %v198
  %v254 = vpack.c.b16 %v201, %v200
  %v255 = vpack.c.b16 %v203, %v202
  %v256 = vpack.c.b16 %v205, %v204
  %v257 = vpack.c.b16 %v207, %v206
  %v258 = vpack.c.b16 %v209, %v208
  %v259 = vpack.c.b16 %v211, %v210
  %v260 = vpack.c.b16 %v213, %v212
  %v261 = vpack.c.b16 %v215, %v214
  %v262 = vpack.c.b16 %v217, %v216
  %v263 = vpack.c.b16 %v219, %v218
  %v264 = vpack.c.b16 %v221, %v220
  %v265 = vpack.c.b16 %v223, %v222
  %v266 = vpack.c.b16 %v225, %v224
  %v267 = vpack.c.b16 %v227, %v226
  %v268 = vpack.c.b16 %v229, %v228
  %v269 = vpack.c.b16 %v231, %v230
  %v270 = vpack.c.b16 %v233, %v232
  %v271 = vpack.c.b16 %v235, %v234
  %v272 = vpack.c.b16 %v237, %v236
  %v273 = vpack.c.b16 %v239, %v238
  %v274 = vpack.c.b16 %v241, %v240
  %v275 = vpack.c.b16 %v243, %v242
  %308 = vmatprep.subr.bf16.mxu0 0
  %309 = vmatpush1.bf16.msra.mxu0 %v251
  %310 = vmatprep.subr.bf16.mxu0 0
  %311 = vmatpush1.bf16.msra.mxu0 %v250
  %312 = vmatprep.subr.bf16.mxu0 0
  %313 = vmatpush1.bf16.msra.mxu0 %v249
  %314 = vmatprep.subr.bf16.mxu0 0
  %315 = vmatpush1.bf16.msra.mxu0 %v248
  %316 = vmatprep.subr.bf16.mxu0 0
  %317 = vmatpush1.bf16.msra.mxu0 %v247
  %318 = vmatprep.subr.bf16.mxu0 0
  %319 = vmatpush1.bf16.msra.mxu0 %v246
  %320 = vmatprep.subr.bf16.mxu0 0
  %321 = vmatpush1.bf16.msra.mxu0 %v245
  %322 = vmatprep.subr.bf16.mxu0 0
  %323 = vmatpush1.bf16.msra.mxu0 %v244
  %324 = vmatprep.subr.bf16.mxu0 0
  %325 = vmatpush2.bf16.msra.mxu0 %v259
  %326 = vmatprep.subr.bf16.mxu0 0
  %327 = vmatpush2.bf16.msra.mxu0 %v258
  %328 = vmatprep.subr.bf16.mxu0 0
  %329 = vmatpush2.bf16.msra.mxu0 %v257
  %330 = vmatprep.subr.bf16.mxu0 0
  %331 = vmatpush2.bf16.msra.mxu0 %v256
  %332 = vmatprep.subr.bf16.mxu0 0
  %333 = vmatpush2.bf16.msra.mxu0 %v255
  %334 = vmatprep.subr.bf16.mxu0 0
  %335 = vmatpush2.bf16.msra.mxu0 %v254
  %336 = vmatprep.subr.bf16.mxu0 0
  %337 = vmatpush2.bf16.msra.mxu0 %v253
  %338 = vmatprep.subr.bf16.mxu0 0
  %339 = vmatpush2.bf16.msra.mxu0 %v252
  %340 = vmatprep.mubr.bf16.mxu0 %v109
  %341 = vmatmul.mubr.bf16.gmra.mxu0 %v108
  %v342 = vpop.f32.mrf.mxu0
  %v343 = vadd.f32 %v94, %v342
  %v344 = vpop.f32.mrf.mxu0
  %v345 = vpop.f32.mrf.mxu0
  %v346 = vadd.f32 %v94, %v345
  %v347 = vpop.f32.mrf.mxu0
  %348 = vdwg.mxu0
  %349 = vmatprep.subr.bf16.mxu0 0
  %350 = vmatpush1.bf16.msra.mxu0 %v267
  %351 = vmatprep.subr.bf16.mxu0 0
  %352 = vmatpush1.bf16.msra.mxu0 %v266
  %353 = vmatprep.subr.bf16.mxu0 0
  %354 = vmatpush1.bf16.msra.mxu0 %v265
  %355 = vmatprep.subr.bf16.mxu0 0
  %356 = vmatpush1.bf16.msra.mxu0 %v264
  %357 = vmatprep.subr.bf16.mxu0 0
  %358 = vmatpush1.bf16.msra.mxu0 %v263
  %359 = vmatprep.subr.bf16.mxu0 0
  %360 = vmatpush1.bf16.msra.mxu0 %v262
  %361 = vmatprep.subr.bf16.mxu0 0
  %362 = vmatpush1.bf16.msra.mxu0 %v261
  %363 = vmatprep.subr.bf16.mxu0 0
  %364 = vmatpush1.bf16.msra.mxu0 %v260
  %365 = vmatprep.subr.bf16.mxu0 0
  %366 = vmatpush2.bf16.msra.mxu0 %v275
  %367 = vmatprep.subr.bf16.mxu0 0
  %368 = vmatpush2.bf16.msra.mxu0 %v274
  %369 = vmatprep.subr.bf16.mxu0 0
  %370 = vmatpush2.bf16.msra.mxu0 %v273
  %371 = vmatprep.subr.bf16.mxu0 0
  %372 = vmatpush2.bf16.msra.mxu0 %v272
  %373 = vmatprep.subr.bf16.mxu0 0
  %374 = vmatpush2.bf16.msra.mxu0 %v271
  %375 = vmatprep.subr.bf16.mxu0 0
  %376 = vmatpush2.bf16.msra.mxu0 %v270
  %377 = vmatprep.subr.bf16.mxu0 0
  %378 = vmatpush2.bf16.msra.mxu0 %v269
  %379 = vmatprep.subr.bf16.mxu0 0
  %380 = vmatpush2.bf16.msra.mxu0 %v268
  %381 = vmatprep.mubr.bf16.mxu0 %v111
  %382 = vmatmul.mubr.bf16.gmra.mxu0 %v110
  %v383 = vpop.f32.mrf.mxu0
  %v384 = vadd.f32 %v343, %v383
  %v385 = vpop.f32.mrf.mxu0
  %v386 = vpop.f32.mrf.mxu0
  %v387 = vadd.f32 %v346, %v386
  %v388 = vpop.f32.mrf.mxu0
  %389 = vdwg.mxu0
  %v390 = vmax.f32 %v384, 0.0
  %v391 = vmax.f32 %v387, 0.0
  %v392 = vpack.c.bf16 %v391, %v390
  %v393 = vld [vmem:[%s3] sm:$0xf]
  %v394 = vld [vmem:[%s3 + $0x4] sm:$0xf]
  %v395 = vld [vmem:[%s3 + $0x8] sm:$0xf]
  %v396 = vld [vmem:[%s3 + $0xc] sm:$0xf]
  %v397 = vld [vmem:[%s3 + $0x10] sm:$0xf]
  %v398 = vld [vmem:[%s3 + $0x14] sm:$0xf]
  %v399 = vld [vmem:[%s3 + $0x18] sm:$0xf]
  %v400 = vld [vmem:[%s3 + $0x1c] sm:$0xf]
  %v401 = vld [vmem:[%s4] sm:$0x1]
  %v403 = vlaneseq
  %v404 = vshrl.u32 %v403, 7
  %v405 = vsub.s32 0, %v404
  %v406 = vrot.slane %v401, %v405
  %v416 = vunpack.c.l.b16 %v393
  %v417 = vunpack.c.l.b16 %v394
  %v418 = vunpack.c.l.b16 %v395
  %v419 = vunpack.c.l.b16 %v396
  %v420 = vunpack.c.l.b16 %v397
  %v421 = vunpack.c.l.b16 %v398
  %v422 = vunpack.c.l.b16 %v399
  %v423 = vunpack.c.l.b16 %v400
  %v424 = vpack.c.b16 %v417, %v416
  %v425 = vpack.c.b16 %v419, %v418
  %v426 = vpack.c.b16 %v421, %v420
  %v427 = vpack.c.b16 %v423, %v422
  %vm432 = vcmask 523264
  %v434 = vsel %vm432, %v392, 0
  %436 = vmatprep.subr.bf16.mxu0 0
  %437 = vmatpush1.bf16.msra.mxu0 0
  %438 = vmatprep.subr.bf16.mxu0 0
  %439 = vmatpush1.bf16.msra.mxu0 0
  %440 = vmatprep.subr.bf16.mxu0 0
  %441 = vmatpush1.bf16.msra.mxu0 0
  %442 = vmatprep.subr.bf16.mxu0 0
  %443 = vmatpush1.bf16.msra.mxu0 0
  %444 = vmatprep.subr.bf16.mxu0 0
  %445 = vmatpush1.bf16.msra.mxu0 %v427
  %446 = vmatprep.subr.bf16.mxu0 0
  %447 = vmatpush1.bf16.msra.mxu0 %v426
  %448 = vmatprep.subr.bf16.mxu0 0
  %449 = vmatpush1.bf16.msra.mxu0 %v425
  %450 = vmatprep.subr.bf16.mxu0 0
  %451 = vmatpush1.bf16.msra.mxu0 %v424
  %452 = vmatprep.subr.bf16.mxu0 0
  %453 = vmatpush2.bf16.msra.mxu0 0
  %454 = vmatprep.subr.bf16.mxu0 0
  %455 = vmatpush2.bf16.msra.mxu0 0
  %456 = vmatprep.subr.bf16.mxu0 0
  %457 = vmatpush2.bf16.msra.mxu0 0
  %458 = vmatprep.subr.bf16.mxu0 0
  %459 = vmatpush2.bf16.msra.mxu0 0
  %460 = vmatprep.subr.bf16.mxu0 0
  %461 = vmatpush2.bf16.msra.mxu0 0
  %462 = vmatprep.subr.bf16.mxu0 0
  %463 = vmatpush2.bf16.msra.mxu0 0
  %464 = vmatprep.subr.bf16.mxu0 0
  %465 = vmatpush2.bf16.msra.mxu0 0
  %466 = vmatprep.subr.bf16.mxu0 0
  %467 = vmatpush2.bf16.msra.mxu0 0
  %468 = vmatprep.mubr.bf16.mxu0 0
  %469 = vmatmul.mubr.bf16.gmra.mxu0 %v434
  %v470 = vpop.f32.mrf.mxu0
  %v471 = vadd.f32 %v406, %v470
  %v472 = vpop.f32.mrf.mxu0
  %v473 = vpop.f32.mrf.mxu0
  %v474 = vadd.f32 %v406, %v473
  %v475 = vpop.f32.mrf.mxu0
  %476 = vdwg.mxu0
  %v477 = vmax.f32 %v471, 0.0
  %v478 = vmax.f32 %v474, 0.0
  %479 = vst [vmem:[%s5] sm:$0xff] %v477
  %480 = vst [vmem:[%s5 + $0x8] sm:$0xff] %v478
  // Predicated region
  $region22: #{forward.11} parent=0 // pred_check
    _
  $region23: #{forward.11} parent=0 // pred_check_branch
    %482 = sbr.rel (0) target = $region25
  $region24: #{forward.11} parent=0 // pred_region
    _
  $region25: #{forward.11} parent=0 // pred_fallthru
    _
  // Predicated region
  $region26: #{forward.11} parent=0 // pred_check
    _
  $region27: #{forward.11} parent=0 // pred_check_branch
    %484 = sbr.rel (0) target = $region29
  $region28: #{forward.11} parent=0 // pred_region
    _
  $region29: #{forward.11} parent=0 // pred_fallthru
    _

// kernel: forward.6
$region0: #{forward.6}
  #allocation0 [shape = 'u32[]', space=smem, size = 0x4, offset = 0x4, fixed_abs, tag = 'smem constant byte address 0x4 - core index']
  #allocation1 [shape = 'u32[144,128]{1,0:T(1,128)}', space=vmem, size = 0x12000, scoped, tag = 'internal scratch']
  %s0 = inlined_call_operand.vmem [shape: bf16[16,2560], index: 0, kind: input, shape index: {}]
  %s1 = inlined_call_operand.vmem [shape: bf16[2560,256], index: 1, kind: input, shape index: {}]
  %s2 = inlined_call_operand.vmem [shape: f32[1,256], index: 2, kind: input, shape index: {}]
  %s3 = inlined_call_operand.vmem [shape: bf16[16,256], index: 3, kind: output, shape index: {}]
  %s4 = sld [smem:[#allocation0]]
  $region22: #{forward.6} parent=0
    _
  %s6 = ssub.s32 1, %s4
  %s7 = scalar_select 0, %s6, %s4
  // Predicated region
  $region2: #{forward.6} parent=0 // pred_check
    _
  $region3: #{forward.6} parent=0 // pred_check_branch
    %9 = sbr.rel (0) target = $region5
  $region4: #{forward.6} parent=0 // pred_region
    _
  $region5: #{forward.6} parent=0 // pred_fallthru
    _
  // Predicated region
  $region6: #{forward.6} parent=0 // pred_check
    _
  $region7: #{forward.6} parent=0 // pred_check_branch
    %11 = sbr.rel (0) target = $region9
  $region8: #{forward.6} parent=0 // pred_region
    _
  $region9: #{forward.6} parent=0 // pred_fallthru
    _
  // Predicated region
  $region10: #{forward.6} parent=0 // pred_check
    _
  $region11: #{forward.6} parent=0 // pred_check_branch
    %13 = sbr.rel (0) target = $region13
  $region12: #{forward.6} parent=0 // pred_region
    _
  $region13: #{forward.6} parent=0 // pred_fallthru
    _
  %v14 = vld [vmem:[%s0] sm:$0xff]
  %v15 = vld [vmem:[%s0 + $0x8] sm:$0xff]
  %v16 = vld [vmem:[%s0 + $0x10] sm:$0xff]
  %v17 = vld [vmem:[%s0 + $0x18] sm:$0xff]
  %v18 = vld [vmem:[%s0 + $0x20] sm:$0xff]
  %v19 = vld [vmem:[%s0 + $0x28] sm:$0xff]
  %v20 = vld [vmem:[%s0 + $0x30] sm:$0xff]
  %v21 = vld [vmem:[%s0 + $0x38] sm:$0xff]
  %v22 = vld [vmem:[%s0 + $0x40] sm:$0xff]
  %v23 = vld [vmem:[%s0 + $0x48] sm:$0xff]
  %v24 = vld [vmem:[%s0 + $0x50] sm:$0xff]
  %v25 = vld [vmem:[%s0 + $0x58] sm:$0xff]
  %v26 = vld [vmem:[%s0 + $0x60] sm:$0xff]
  %v27 = vld [vmem:[%s0 + $0x68] sm:$0xff]
  %v28 = vld [vmem:[%s0 + $0x70] sm:$0xff]
  %v29 = vld [vmem:[%s0 + $0x78] sm:$0xff]
  %v30 = vld [vmem:[%s0 + $0x80] sm:$0xff]
  %v31 = vld [vmem:[%s0 + $0x88] sm:$0xff]
  %v32 = vld [vmem:[%s0 + $0x90] sm:$0xff]
  %v33 = vld [vmem:[%s0 + $0x98] sm:$0xff]
  %v34 = vld [vmem:[%s1] sm:$0xff]
  %v35 = vld [vmem:[%s1 + $0x8] sm:$0xff]
  %v36 = vld [vmem:[%s1 + $0x10] sm:$0xff]
  %v37 = vld [vmem:[%s1 + $0x18] sm:$0xff]
  %v38 = vld [vmem:[%s1 + $0x20] sm:$0xff]
  %v39 = vld [vmem:[%s1 + $0x28] sm:$0xff]
  %v40 = vld [vmem:[%s1 + $0x30] sm:$0xff]
  %v41 = vld [vmem:[%s1 + $0x38] sm:$0xff]
  %v42 = vld [vmem:[%s1 + $0x40] sm:$0xff]
  %v43 = vld [vmem:[%s1 + $0x48] sm:$0xff]
  %v44 = vld [vmem:[%s1 + $0x50] sm:$0xff]
  %v45 = vld [vmem:[%s1 + $0x58] sm:$0xff]
  %v46 = vld [vmem:[%s1 + $0x60] sm:$0xff]
  %v47 = vld [vmem:[%s1 + $0x68] sm:$0xff]
  %v48 = vld [vmem:[%s1 + $0x70] sm:$0xff]
  %v49 = vld [vmem:[%s1 + $0x78] sm:$0xff]
  %v50 = vld [vmem:[%s1 + $0x80] sm:$0xff]
  %v51 = vld [vmem:[%s1 + $0x88] sm:$0xff]
  %v52 = vld [vmem:[%s1 + $0x90] sm:$0xff]
  %v53 = vld [vmem:[%s1 + $0x98] sm:$0xff]
  %v54 = vld [vmem:[%s1 + $0xa0] sm:$0xff]
  %v55 = vld [vmem:[%s1 + $0xa8] sm:$0xff]
  %v56 = vld [vmem:[%s1 + $0xb0] sm:$0xff]
  %v57 = vld [vmem:[%s1 + $0xb8] sm:$0xff]
  %v58 = vld [vmem:[%s1 + $0xc0] sm:$0xff]
  %v59 = vld [vmem:[%s1 + $0xc8] sm:$0xff]
  %v60 = vld [vmem:[%s1 + $0xd0] sm:$0xff]
  %v61 = vld [vmem:[%s1 + $0xd8] sm:$0xff]
  %v62 = vld [vmem:[%s1 + $0xe0] sm:$0xff]
  %v63 = vld [vmem:[%s1 + $0xe8] sm:$0xff]
  %v64 = vld [vmem:[%s1 + $0xf0] sm:$0xff]
  %v65 = vld [vmem:[%s1 + $0xf8] sm:$0xff]
  %v66 = vld [vmem:[%s1 + $0x100] sm:$0xff]
  %v67 = vld [vmem:[%s1 + $0x108] sm:$0xff]
  %v68 = vld [vmem:[%s1 + $0x110] sm:$0xff]
  %v69 = vld [vmem:[%s1 + $0x118] sm:$0xff]
  %v70 = vld [vmem:[%s1 + $0x120] sm:$0xff]
  %v71 = vld [vmem:[%s1 + $0x128] sm:$0xff]
  %v72 = vld [vmem:[%s1 + $0x130] sm:$0xff]
  %v73 = vld [vmem:[%s1 + $0x138] sm:$0xff]
  %v74 = vld [vmem:[%s1 + $0x140] sm:$0xff]
  %v75 = vld [vmem:[%s1 + $0x148] sm:$0xff]
  %v76 = vld [vmem:[%s1 + $0x150] sm:$0xff]
  %v77 = vld [vmem:[%s1 + $0x158] sm:$0xff]
  %v78 = vld [vmem:[%s1 + $0x160] sm:$0xff]
  %v79 = vld [vmem:[%s1 + $0x168] sm:$0xff]
  %v80 = vld [vmem:[%s1 + $0x170] sm:$0xff]
  %v81 = vld [vmem:[%s1 + $0x178] sm:$0xff]
  %v82 = vld [vmem:[%s1 + $0x180] sm:$0xff]
  %v83 = vld [vmem:[%s1 + $0x188] sm:$0xff]
  %v84 = vld [vmem:[%s1 + $0x190] sm:$0xff]
  %v85 = vld [vmem:[%s1 + $0x198] sm:$0xff]
  %v86 = vld [vmem:[%s1 + $0x1a0] sm:$0xff]
  %v87 = vld [vmem:[%s1 + $0x1a8] sm:$0xff]
  %v88 = vld [vmem:[%s1 + $0x1b0] sm:$0xff]
  %v89 = vld [vmem:[%s1 + $0x1b8] sm:$0xff]
  %v90 = vld [vmem:[%s1 + $0x1c0] sm:$0xff]
  %v91 = vld [vmem:[%s1 + $0x1c8] sm:$0xff]
  %v92 = vld [vmem:[%s1 + $0x1d0] sm:$0xff]
  %v93 = vld [vmem:[%s1 + $0x1d8] sm:$0xff]
  %v94 = vld [vmem:[%s1 + $0x1e0] sm:$0xff]
  %v95 = vld [vmem:[%s1 + $0x1e8] sm:$0xff]
  %v96 = vld [vmem:[%s1 + $0x1f0] sm:$0xff]
  %v97 = vld [vmem:[%s1 + $0x1f8] sm:$0xff]
  %v98 = vld [vmem:[%s1 + $0x200] sm:$0xff]
  %v99 = vld [vmem:[%s1 + $0x208] sm:$0xff]
  %v100 = vld [vmem:[%s1 + $0x210] sm:$0xff]
  %v101 = vld [vmem:[%s1 + $0x218] sm:$0xff]
  %v102 = vld [vmem:[%s1 + $0x220] sm:$0xff]
  %v103 = vld [vmem:[%s1 + $0x228] sm:$0xff]
  %v104 = vld [vmem:[%s1 + $0x230] sm:$0xff]
  %v105 = vld [vmem:[%s1 + $0x238] sm:$0xff]
  %v106 = vld [vmem:[%s1 + $0x240] sm:$0xff]
  %v107 = vld [vmem:[%s1 + $0x248] sm:$0xff]
  %v108 = vld [vmem:[%s1 + $0x250] sm:$0xff]
  %v109 = vld [vmem:[%s1 + $0x258] sm:$0xff]
  %v110 = vld [vmem:[%s1 + $0x260] sm:$0xff]
  %v111 = vld [vmem:[%s1 + $0x268] sm:$0xff]
  %v112 = vld [vmem:[%s1 + $0x270] sm:$0xff]
  %v113 = vld [vmem:[%s1 + $0x278] sm:$0xff]
  %v114 = vld [vmem:[%s1 + $0x280] sm:$0xff]
  %v115 = vld [vmem:[%s1 + $0x288] sm:$0xff]
  %v116 = vld [vmem:[%s1 + $0x290] sm:$0xff]
  %v117 = vld [vmem:[%s1 + $0x298] sm:$0xff]
  %v118 = vld [vmem:[%s1 + $0x2a0] sm:$0xff]
  %v119 = vld [vmem:[%s1 + $0x2a8] sm:$0xff]
  %v120 = vld [vmem:[%s1 + $0x2b0] sm:$0xff]
  %v121 = vld [vmem:[%s1 + $0x2b8] sm:$0xff]
  %v122 = vld [vmem:[%s1 + $0x2c0] sm:$0xff]
  %v123 = vld [vmem:[%s1 + $0x2c8] sm:$0xff]
  %v124 = vld [vmem:[%s1 + $0x2d0] sm:$0xff]
  %v125 = vld [vmem:[%s1 + $0x2d8] sm:$0xff]
  %v126 = vld [vmem:[%s1 + $0x2e0] sm:$0xff]
  %v127 = vld [vmem:[%s1 + $0x2e8] sm:$0xff]
  %v128 = vld [vmem:[%s1 + $0x2f0] sm:$0xff]
  %v129 = vld [vmem:[%s1 + $0x2f8] sm:$0xff]
  %v130 = vld [vmem:[%s1 + $0x300] sm:$0xff]
  %v131 = vld [vmem:[%s1 + $0x308] sm:$0xff]
  %v132 = vld [vmem:[%s1 + $0x310] sm:$0xff]
  %v133 = vld [vmem:[%s1 + $0x318] sm:$0xff]
  %v134 = vld [vmem:[%s1 + $0x320] sm:$0xff]
  %v135 = vld [vmem:[%s1 + $0x328] sm:$0xff]
  %v136 = vld [vmem:[%s1 + $0x330] sm:$0xff]
  %v137 = vld [vmem:[%s1 + $0x338] sm:$0xff]
  %v138 = vld [vmem:[%s1 + $0x340] sm:$0xff]
  %v139 = vld [vmem:[%s1 + $0x348] sm:$0xff]
  %v140 = vld [vmem:[%s1 + $0x350] sm:$0xff]
  %v141 = vld [vmem:[%s1 + $0x358] sm:$0xff]
  %v142 = vld [vmem:[%s1 + $0x360] sm:$0xff]
  %v143 = vld [vmem:[%s1 + $0x368] sm:$0xff]
  %v144 = vld [vmem:[%s1 + $0x370] sm:$0xff]
  %v145 = vld [vmem:[%s1 + $0x378] sm:$0xff]
  %v146 = vld [vmem:[%s1 + $0x380] sm:$0xff]
  %v147 = vld [vmem:[%s1 + $0x388] sm:$0xff]
  %v148 = vld [vmem:[%s1 + $0x390] sm:$0xff]
  %v149 = vld [vmem:[%s1 + $0x398] sm:$0xff]
  %v150 = vld [vmem:[%s1 + $0x3a0] sm:$0xff]
  %v151 = vld [vmem:[%s1 + $0x3a8] sm:$0xff]
  %v152 = vld [vmem:[%s1 + $0x3b0] sm:$0xff]
  %v153 = vld [vmem:[%s1 + $0x3b8] sm:$0xff]
  %v154 = vld [vmem:[%s1 + $0x3c0] sm:$0xff]
  %v155 = vld [vmem:[%s1 + $0x3c8] sm:$0xff]
  %v156 = vld [vmem:[%s1 + $0x3d0] sm:$0xff]
  %v157 = vld [vmem:[%s1 + $0x3d8] sm:$0xff]
  %v158 = vld [vmem:[%s1 + $0x3e0] sm:$0xff]
  %v159 = vld [vmem:[%s1 + $0x3e8] sm:$0xff]
  %v160 = vld [vmem:[%s1 + $0x3f0] sm:$0xff]
  %v161 = vld [vmem:[%s1 + $0x3f8] sm:$0xff]
  %v162 = vld [vmem:[%s1 + $0x400] sm:$0xff]
  %v163 = vld [vmem:[%s1 + $0x408] sm:$0xff]
  %v164 = vld [vmem:[%s1 + $0x410] sm:$0xff]
  %v165 = vld [vmem:[%s1 + $0x418] sm:$0xff]
  %v166 = vld [vmem:[%s1 + $0x420] sm:$0xff]
  %v167 = vld [vmem:[%s1 + $0x428] sm:$0xff]
  %v168 = vld [vmem:[%s1 + $0x430] sm:$0xff]
  %v169 = vld [vmem:[%s1 + $0x438] sm:$0xff]
  %v170 = vld [vmem:[%s1 + $0x440] sm:$0xff]
  %v171 = vld [vmem:[%s1 + $0x448] sm:$0xff]
  %v172 = vld [vmem:[%s1 + $0x450] sm:$0xff]
  %v173 = vld [vmem:[%s1 + $0x458] sm:$0xff]
  %v174 = vld [vmem:[%s1 + $0x460] sm:$0xff]
  %v175 = vld [vmem:[%s1 + $0x468] sm:$0xff]
  %v176 = vld [vmem:[%s1 + $0x470] sm:$0xff]
  %v177 = vld [vmem:[%s1 + $0x478] sm:$0xff]
  %v178 = vld [vmem:[%s1 + $0x480] sm:$0xff]
  %v179 = vld [vmem:[%s1 + $0x488] sm:$0xff]
  %v180 = vld [vmem:[%s1 + $0x490] sm:$0xff]
  %v181 = vld [vmem:[%s1 + $0x498] sm:$0xff]
  %v182 = vld [vmem:[%s1 + $0x4a0] sm:$0xff]
  %v183 = vld [vmem:[%s1 + $0x4a8] sm:$0xff]
  %v184 = vld [vmem:[%s1 + $0x4b0] sm:$0xff]
  %v185 = vld [vmem:[%s1 + $0x4b8] sm:$0xff]
  %v186 = vld [vmem:[%s1 + $0x4c0] sm:$0xff]
  %v187 = vld [vmem:[%s1 + $0x4c8] sm:$0xff]
  %v188 = vld [vmem:[%s1 + $0x4d0] sm:$0xff]
  %v189 = vld [vmem:[%s1 + $0x4d8] sm:$0xff]
  %v190 = vld [vmem:[%s1 + $0x4e0] sm:$0xff]
  %v191 = vld [vmem:[%s1 + $0x4e8] sm:$0xff]
  %v192 = vld [vmem:[%s1 + $0x4f0] sm:$0xff]
  %v193 = vld [vmem:[%s1 + $0x4f8] sm:$0xff]
  %v194 = vld [vmem:[%s1 + $0x500] sm:$0xff]
  %v195 = vld [vmem:[%s1 + $0x508] sm:$0xff]
  %v196 = vld [vmem:[%s1 + $0x510] sm:$0xff]
  %v197 = vld [vmem:[%s1 + $0x518] sm:$0xff]
  %v198 = vld [vmem:[%s1 + $0x520] sm:$0xff]
  %v199 = vld [vmem:[%s1 + $0x528] sm:$0xff]
  %v200 = vld [vmem:[%s1 + $0x530] sm:$0xff]
  %v201 = vld [vmem:[%s1 + $0x538] sm:$0xff]
  %v202 = vld [vmem:[%s1 + $0x540] sm:$0xff]
  %v203 = vld [vmem:[%s1 + $0x548] sm:$0xff]
  %v204 = vld [vmem:[%s1 + $0x550] sm:$0xff]
  %v205 = vld [vmem:[%s1 + $0x558] sm:$0xff]
  %v206 = vld [vmem:[%s1 + $0x560] sm:$0xff]
  %v207 = vld [vmem:[%s1 + $0x568] sm:$0xff]
  %v208 = vld [vmem:[%s1 + $0x570] sm:$0xff]
  %v209 = vld [vmem:[%s1 + $0x578] sm:$0xff]
  %v210 = vld [vmem:[%s1 + $0x580] sm:$0xff]
  %v211 = vld [vmem:[%s1 + $0x588] sm:$0xff]
  %v212 = vld [vmem:[%s1 + $0x590] sm:$0xff]
  %v213 = vld [vmem:[%s1 + $0x598] sm:$0xff]
  %v214 = vld [vmem:[%s1 + $0x5a0] sm:$0xff]
  %v215 = vld [vmem:[%s1 + $0x5a8] sm:$0xff]
  %v216 = vld [vmem:[%s1 + $0x5b0] sm:$0xff]
  %v217 = vld [vmem:[%s1 + $0x5b8] sm:$0xff]
  %v218 = vld [vmem:[%s1 + $0x5c0] sm:$0xff]
  %v219 = vld [vmem:[%s1 + $0x5c8] sm:$0xff]
  %v220 = vld [vmem:[%s1 + $0x5d0] sm:$0xff]
  %v221 = vld [vmem:[%s1 + $0x5d8] sm:$0xff]
  %v222 = vld [vmem:[%s1 + $0x5e0] sm:$0xff]
  %v223 = vld [vmem:[%s1 + $0x5e8] sm:$0xff]
  %v224 = vld [vmem:[%s1 + $0x5f0] sm:$0xff]
  %v225 = vld [vmem:[%s1 + $0x5f8] sm:$0xff]
  %v226 = vld [vmem:[%s1 + $0x600] sm:$0xff]
  %v227 = vld [vmem:[%s1 + $0x608] sm:$0xff]
  %v228 = vld [vmem:[%s1 + $0x610] sm:$0xff]
  %v229 = vld [vmem:[%s1 + $0x618] sm:$0xff]
  %v230 = vld [vmem:[%s1 + $0x620] sm:$0xff]
  %v231 = vld [vmem:[%s1 + $0x628] sm:$0xff]
  %v232 = vld [vmem:[%s1 + $0x630] sm:$0xff]
  %v233 = vld [vmem:[%s1 + $0x638] sm:$0xff]
  %v234 = vld [vmem:[%s1 + $0x640] sm:$0xff]
  %v235 = vld [vmem:[%s1 + $0x648] sm:$0xff]
  %v236 = vld [vmem:[%s1 + $0x650] sm:$0xff]
  %v237 = vld [vmem:[%s1 + $0x658] sm:$0xff]
  %v238 = vld [vmem:[%s1 + $0x660] sm:$0xff]
  %v239 = vld [vmem:[%s1 + $0x668] sm:$0xff]
  %v240 = vld [vmem:[%s1 + $0x670] sm:$0xff]
  %v241 = vld [vmem:[%s1 + $0x678] sm:$0xff]
  %v242 = vld [vmem:[%s1 + $0x680] sm:$0xff]
  %v243 = vld [vmem:[%s1 + $0x688] sm:$0xff]
  %v244 = vld [vmem:[%s1 + $0x690] sm:$0xff]
  %v245 = vld [vmem:[%s1 + $0x698] sm:$0xff]
  %v246 = vld [vmem:[%s1 + $0x6a0] sm:$0xff]
  %v247 = vld [vmem:[%s1 + $0x6a8] sm:$0xff]
  %v248 = vld [vmem:[%s1 + $0x6b0] sm:$0xff]
  %v249 = vld [vmem:[%s1 + $0x6b8] sm:$0xff]
  %v250 = vld [vmem:[%s1 + $0x6c0] sm:$0xff]
  %v251 = vld [vmem:[%s1 + $0x6c8] sm:$0xff]
  %v252 = vld [vmem:[%s1 + $0x6d0] sm:$0xff]
  %v253 = vld [vmem:[%s1 + $0x6d8] sm:$0xff]
  %v254 = vld [vmem:[%s1 + $0x6e0] sm:$0xff]
  %v255 = vld [vmem:[%s1 + $0x6e8] sm:$0xff]
  %v256 = vld [vmem:[%s1 + $0x6f0] sm:$0xff]
  %v257 = vld [vmem:[%s1 + $0x6f8] sm:$0xff]
  %v258 = vld [vmem:[%s1 + $0x700] sm:$0xff]
  %v259 = vld [vmem:[%s1 + $0x708] sm:$0xff]
  %v260 = vld [vmem:[%s1 + $0x710] sm:$0xff]
  %v261 = vld [vmem:[%s1 + $0x718] sm:$0xff]
  %v262 = vld [vmem:[%s1 + $0x720] sm:$0xff]
  %v263 = vld [vmem:[%s1 + $0x728] sm:$0xff]
  %v264 = vld [vmem:[%s1 + $0x730] sm:$0xff]
  %v265 = vld [vmem:[%s1 + $0x738] sm:$0xff]
  %v266 = vld [vmem:[%s1 + $0x740] sm:$0xff]
  %v267 = vld [vmem:[%s1 + $0x748] sm:$0xff]
  %v268 = vld [vmem:[%s1 + $0x750] sm:$0xff]
  %v269 = vld [vmem:[%s1 + $0x758] sm:$0xff]
  %v270 = vld [vmem:[%s1 + $0x760] sm:$0xff]
  %v271 = vld [vmem:[%s1 + $0x768] sm:$0xff]
  %v272 = vld [vmem:[%s1 + $0x770] sm:$0xff]
  %v273 = vld [vmem:[%s1 + $0x778] sm:$0xff]
  %v274 = vld [vmem:[%s1 + $0x780] sm:$0xff]
  %v275 = vld [vmem:[%s1 + $0x788] sm:$0xff]
  %v276 = vld [vmem:[%s1 + $0x790] sm:$0xff]
  %v277 = vld [vmem:[%s1 + $0x798] sm:$0xff]
  %v278 = vld [vmem:[%s1 + $0x7a0] sm:$0xff]
  %v279 = vld [vmem:[%s1 + $0x7a8] sm:$0xff]
  %v280 = vld [vmem:[%s1 + $0x7b0] sm:$0xff]
  %v281 = vld [vmem:[%s1 + $0x7b8] sm:$0xff]
  %v282 = vld [vmem:[%s1 + $0x7c0] sm:$0xff]
  %v283 = vld [vmem:[%s1 + $0x7c8] sm:$0xff]
  %v284 = vld [vmem:[%s1 + $0x7d0] sm:$0xff]
  %v285 = vld [vmem:[%s1 + $0x7d8] sm:$0xff]
  %v286 = vld [vmem:[%s1 + $0x7e0] sm:$0xff]
  %v287 = vld [vmem:[%s1 + $0x7e8] sm:$0xff]
  %v288 = vld [vmem:[%s1 + $0x7f0] sm:$0xff]
  %v289 = vld [vmem:[%s1 + $0x7f8] sm:$0xff]
  %v290 = vld [vmem:[%s1 + $0x800] sm:$0xff]
  %v291 = vld [vmem:[%s1 + $0x808] sm:$0xff]
  %v292 = vld [vmem:[%s1 + $0x810] sm:$0xff]
  %v293 = vld [vmem:[%s1 + $0x818] sm:$0xff]
  %v294 = vld [vmem:[%s1 + $0x820] sm:$0xff]
  %v295 = vld [vmem:[%s1 + $0x828] sm:$0xff]
  %v296 = vld [vmem:[%s1 + $0x830] sm:$0xff]
  %v297 = vld [vmem:[%s1 + $0x838] sm:$0xff]
  %v298 = vld [vmem:[%s1 + $0x840] sm:$0xff]
  %v299 = vld [vmem:[%s1 + $0x848] sm:$0xff]
  %v300 = vld [vmem:[%s1 + $0x850] sm:$0xff]
  %v301 = vld [vmem:[%s1 + $0x858] sm:$0xff]
  %v302 = vld [vmem:[%s1 + $0x860] sm:$0xff]
  %v303 = vld [vmem:[%s1 + $0x868] sm:$0xff]
  %v304 = vld [vmem:[%s1 + $0x870] sm:$0xff]
  %v305 = vld [vmem:[%s1 + $0x878] sm:$0xff]
  %v306 = vld [vmem:[%s1 + $0x880] sm:$0xff]
  %v307 = vld [vmem:[%s1 + $0x888] sm:$0xff]
  %v308 = vld [vmem:[%s1 + $0x890] sm:$0xff]
  %v309 = vld [vmem:[%s1 + $0x898] sm:$0xff]
  %v310 = vld [vmem:[%s1 + $0x8a0] sm:$0xff]
  %v311 = vld [vmem:[%s1 + $0x8a8] sm:$0xff]
  %v312 = vld [vmem:[%s1 + $0x8b0] sm:$0xff]
  %v313 = vld [vmem:[%s1 + $0x8b8] sm:$0xff]
  %v314 = vld [vmem:[%s1 + $0x8c0] sm:$0xff]
  %v315 = vld [vmem:[%s1 + $0x8c8] sm:$0xff]
  %v316 = vld [vmem:[%s1 + $0x8d0] sm:$0xff]
  %v317 = vld [vmem:[%s1 + $0x8d8] sm:$0xff]
  %v318 = vld [vmem:[%s1 + $0x8e0] sm:$0xff]
  %v319 = vld [vmem:[%s1 + $0x8e8] sm:$0xff]
  %v320 = vld [vmem:[%s1 + $0x8f0] sm:$0xff]
  %v321 = vld [vmem:[%s1 + $0x8f8] sm:$0xff]
  %v322 = vld [vmem:[%s1 + $0x900] sm:$0xff]
  %v323 = vld [vmem:[%s1 + $0x908] sm:$0xff]
  %v324 = vld [vmem:[%s1 + $0x910] sm:$0xff]
  %v325 = vld [vmem:[%s1 + $0x918] sm:$0xff]
  %v326 = vld [vmem:[%s1 + $0x920] sm:$0xff]
  %v327 = vld [vmem:[%s1 + $0x928] sm:$0xff]
  %v328 = vld [vmem:[%s1 + $0x930] sm:$0xff]
  %v329 = vld [vmem:[%s1 + $0x938] sm:$0xff]
  %v330 = vld [vmem:[%s1 + $0x940] sm:$0xff]
  %v331 = vld [vmem:[%s1 + $0x948] sm:$0xff]
  %v332 = vld [vmem:[%s1 + $0x950] sm:$0xff]
  %v333 = vld [vmem:[%s1 + $0x958] sm:$0xff]
  %v334 = vld [vmem:[%s1 + $0x960] sm:$0xff]
  %v335 = vld [vmem:[%s1 + $0x968] sm:$0xff]
  %v336 = vld [vmem:[%s1 + $0x970] sm:$0xff]
  %v337 = vld [vmem:[%s1 + $0x978] sm:$0xff]
  %v338 = vld [vmem:[%s1 + $0x980] sm:$0xff]
  %v339 = vld [vmem:[%s1 + $0x988] sm:$0xff]
  %v340 = vld [vmem:[%s1 + $0x990] sm:$0xff]
  %v341 = vld [vmem:[%s1 + $0x998] sm:$0xff]
  %v342 = vld [vmem:[%s1 + $0x9a0] sm:$0xff]
  %v343 = vld [vmem:[%s1 + $0x9a8] sm:$0xff]
  %v344 = vld [vmem:[%s1 + $0x9b0] sm:$0xff]
  %v345 = vld [vmem:[%s1 + $0x9b8] sm:$0xff]
  %v346 = vld [vmem:[%s1 + $0x9c0] sm:$0xff]
  %v347 = vld [vmem:[%s1 + $0x9c8] sm:$0xff]
  %v348 = vld [vmem:[%s1 + $0x9d0] sm:$0xff]
  %v349 = vld [vmem:[%s1 + $0x9d8] sm:$0xff]
  %v350 = vld [vmem:[%s1 + $0x9e0] sm:$0xff]
  %v351 = vld [vmem:[%s1 + $0x9e8] sm:$0xff]
  %v352 = vld [vmem:[%s1 + $0x9f0] sm:$0xff]
  %v353 = vld [vmem:[%s1 + $0x9f8] sm:$0xff]
  %v354 = vld [vmem:[%s2] sm:$0x3]
  %v356 = vlaneseq
  %v357 = vshrl.u32 %v356, 7
  %v358 = vsub.s32 0, %v357
  %v359 = vrot.slane %v354, %v358
  %v360 = vlaneseq
  %v361 = vshrl.u32 %v360, 7
  %v362 = vsub.s32 1, %v361
  %v363 = vrot.slane %v354, %v362
  %v386 = vunpack.c.l.b16 %v14
  %v387 = vunpack.c.h.b16 %v14
  %v388 = vunpack.c.l.b16 %v15
  %v389 = vunpack.c.h.b16 %v15
  %v390 = vunpack.c.l.b16 %v16
  %v391 = vunpack.c.h.b16 %v16
  %v392 = vunpack.c.l.b16 %v17
  %v393 = vunpack.c.h.b16 %v17
  %v394 = vunpack.c.l.b16 %v18
  %v395 = vunpack.c.h.b16 %v18
  %v396 = vunpack.c.l.b16 %v19
  %v397 = vunpack.c.h.b16 %v19
  %v398 = vunpack.c.l.b16 %v20
  %v399 = vunpack.c.h.b16 %v20
  %v400 = vunpack.c.l.b16 %v21
  %v401 = vunpack.c.h.b16 %v21
  %v402 = vunpack.c.l.b16 %v22
  %v403 = vunpack.c.h.b16 %v22
  %v404 = vunpack.c.l.b16 %v23
  %v405 = vunpack.c.h.b16 %v23
  %v406 = vunpack.c.l.b16 %v24
  %v407 = vunpack.c.h.b16 %v24
  %v408 = vunpack.c.l.b16 %v25
  %v409 = vunpack.c.h.b16 %v25
  %v410 = vunpack.c.l.b16 %v26
  %v411 = vunpack.c.h.b16 %v26
  %v412 = vunpack.c.l.b16 %v27
  %v413 = vunpack.c.h.b16 %v27
  %v414 = vunpack.c.l.b16 %v28
  %v415 = vunpack.c.h.b16 %v28
  %v416 = vunpack.c.l.b16 %v29
  %v417 = vunpack.c.h.b16 %v29
  %v418 = vunpack.c.l.b16 %v30
  %v419 = vunpack.c.h.b16 %v30
  %v420 = vunpack.c.l.b16 %v31
  %v421 = vunpack.c.h.b16 %v31
  %v422 = vunpack.c.l.b16 %v32
  %v423 = vunpack.c.h.b16 %v32
  %v424 = vunpack.c.l.b16 %v33
  %v425 = vunpack.c.h.b16 %v33
  %v426 = vpack.c.b16 %v406, %v386
  %v427 = vpack.c.b16 %v407, %v387
  %v428 = vpack.c.b16 %v408, %v388
  %v429 = vpack.c.b16 %v409, %v389
  %v430 = vpack.c.b16 %v410, %v390
  %v431 = vpack.c.b16 %v411, %v391
  %v432 = vpack.c.b16 %v412, %v392
  %v433 = vpack.c.b16 %v413, %v393
  %v434 = vpack.c.b16 %v414, %v394
  %v435 = vpack.c.b16 %v415, %v395
  %v436 = vpack.c.b16 %v416, %v396
  %v437 = vpack.c.b16 %v417, %v397
  %v438 = vpack.c.b16 %v418, %v398
  %v439 = vpack.c.b16 %v419, %v399
  %v440 = vpack.c.b16 %v420, %v400
  %v441 = vpack.c.b16 %v421, %v401
  %v442 = vpack.c.b16 %v422, %v402
  %v443 = vpack.c.b16 %v423, %v403
  %v444 = vpack.c.b16 %v424, %v404
  %v445 = vpack.c.b16 %v425, %v405
  %v786 = vunpack.c.l.b16 %v34
  %v787 = vunpack.c.h.b16 %v34
  %v788 = vunpack.c.l.b16 %v35
  %v789 = vunpack.c.h.b16 %v35
  %v790 = vunpack.c.l.b16 %v36
  %v791 = vunpack.c.h.b16 %v36
  %v792 = vunpack.c.l.b16 %v37
  %v793 = vunpack.c.h.b16 %v37
  %v794 = vunpack.c.l.b16 %v38
  %v795 = vunpack.c.h.b16 %v38
  %v796 = vunpack.c.l.b16 %v39
  %v797 = vunpack.c.h.b16 %v39
  %v798 = vunpack.c.l.b16 %v40
  %v799 = vunpack.c.h.b16 %v40
  %v800 = vunpack.c.l.b16 %v41
  %v801 = vunpack.c.h.b16 %v41
  %v802 = vunpack.c.l.b16 %v42
  %v803 = vunpack.c.h.b16 %v42
  %v804 = vunpack.c.l.b16 %v43
  %v805 = vunpack.c.h.b16 %v43
  %v806 = vunpack.c.l.b16 %v44
  %v807 = vunpack.c.h.b16 %v44
  %v808 = vunpack.c.l.b16 %v45
  %v809 = vunpack.c.h.b16 %v45
  %v810 = vunpack.c.l.b16 %v46
  %v811 = vunpack.c.h.b16 %v46
  %v812 = vunpack.c.l.b16 %v47
  %v813 = vunpack.c.h.b16 %v47
  %v814 = vunpack.c.l.b16 %v48
  %v815 = vunpack.c.h.b16 %v48
  %v816 = vunpack.c.l.b16 %v49
  %v817 = vunpack.c.h.b16 %v49
  %v818 = vunpack.c.l.b16 %v50
  %v819 = vunpack.c.h.b16 %v50
  %v820 = vunpack.c.l.b16 %v51
  %v821 = vunpack.c.h.b16 %v51
  %v822 = vunpack.c.l.b16 %v52
  %v823 = vunpack.c.h.b16 %v52
  %v824 = vunpack.c.l.b16 %v53
  %v825 = vunpack.c.h.b16 %v53
  %v826 = vunpack.c.l.b16 %v54
  %v827 = vunpack.c.h.b16 %v54
  %v828 = vunpack.c.l.b16 %v55
  %v829 = vunpack.c.h.b16 %v55
  %v830 = vunpack.c.l.b16 %v56
  %v831 = vunpack.c.h.b16 %v56
  %v832 = vunpack.c.l.b16 %v57
  %v833 = vunpack.c.h.b16 %v57
  %v834 = vunpack.c.l.b16 %v58
  %v835 = vunpack.c.h.b16 %v58
  %v836 = vunpack.c.l.b16 %v59
  %v837 = vunpack.c.h.b16 %v59
  %v838 = vunpack.c.l.b16 %v60
  %v839 = vunpack.c.h.b16 %v60
  %v840 = vunpack.c.l.b16 %v61
  %v841 = vunpack.c.h.b16 %v61
  %v842 = vunpack.c.l.b16 %v62
  %v843 = vunpack.c.h.b16 %v62
  %v844 = vunpack.c.l.b16 %v63
  %v845 = vunpack.c.h.b16 %v63
  %v846 = vunpack.c.l.b16 %v64
  %v847 = vunpack.c.h.b16 %v64
  %v848 = vunpack.c.l.b16 %v65
  %v849 = vunpack.c.h.b16 %v65
  %v850 = vunpack.c.l.b16 %v66
  %v851 = vunpack.c.h.b16 %v66
  %v852 = vunpack.c.l.b16 %v67
  %v853 = vunpack.c.h.b16 %v67
  %v854 = vunpack.c.l.b16 %v68
  %v855 = vunpack.c.h.b16 %v68
  %v856 = vunpack.c.l.b16 %v69
  %v857 = vunpack.c.h.b16 %v69
  %v858 = vunpack.c.l.b16 %v70
  %v859 = vunpack.c.h.b16 %v70
  %v860 = vunpack.c.l.b16 %v71
  %v861 = vunpack.c.h.b16 %v71
  %v862 = vunpack.c.l.b16 %v72
  %v863 = vunpack.c.h.b16 %v72
  %v864 = vunpack.c.l.b16 %v73
  %v865 = vunpack.c.h.b16 %v73
  %v866 = vunpack.c.l.b16 %v74
  %v867 = vunpack.c.h.b16 %v74
  %v868 = vunpack.c.l.b16 %v75
  %v869 = vunpack.c.h.b16 %v75
  %v870 = vunpack.c.l.b16 %v76
  %v871 = vunpack.c.h.b16 %v76
  %v872 = vunpack.c.l.b16 %v77
  %v873 = vunpack.c.h.b16 %v77
  %v874 = vunpack.c.l.b16 %v78
  %v875 = vunpack.c.h.b16 %v78
  %v876 = vunpack.c.l.b16 %v79
  %v877 = vunpack.c.h.b16 %v79
  %v878 = vunpack.c.l.b16 %v80
  %v879 = vunpack.c.h.b16 %v80
  %v880 = vunpack.c.l.b16 %v81
  %v881 = vunpack.c.h.b16 %v81
  %v882 = vunpack.c.l.b16 %v82
  %v883 = vunpack.c.h.b16 %v82
  %v884 = vunpack.c.l.b16 %v83
  %v885 = vunpack.c.h.b16 %v83
  %v886 = vunpack.c.l.b16 %v84
  %v887 = vunpack.c.h.b16 %v84
  %v888 = vunpack.c.l.b16 %v85
  %v889 = vunpack.c.h.b16 %v85
  %v890 = vunpack.c.l.b16 %v86
  %v891 = vunpack.c.h.b16 %v86
  %v892 = vunpack.c.l.b16 %v87
  %v893 = vunpack.c.h.b16 %v87
  %v894 = vunpack.c.l.b16 %v88
  %v895 = vunpack.c.h.b16 %v88
  %v896 = vunpack.c.l.b16 %v89
  %v897 = vunpack.c.h.b16 %v89
  %v898 = vunpack.c.l.b16 %v90
  %v899 = vunpack.c.h.b16 %v90
  %v900 = vunpack.c.l.b16 %v91
  %v901 = vunpack.c.h.b16 %v91
  %v902 = vunpack.c.l.b16 %v92
  %v903 = vunpack.c.h.b16 %v92
  %v904 = vunpack.c.l.b16 %v93
  %v905 = vunpack.c.h.b16 %v93
  %v906 = vunpack.c.l.b16 %v94
  %v907 = vunpack.c.h.b16 %v94
  %v908 = vunpack.c.l.b16 %v95
  %v909 = vunpack.c.h.b16 %v95
  %v910 = vunpack.c.l.b16 %v96
  %v911 = vunpack.c.h.b16 %v96
  %v912 = vunpack.c.l.b16 %v97
  %v913 = vunpack.c.h.b16 %v97
  %v914 = vunpack.c.l.b16 %v98
  %v915 = vunpack.c.h.b16 %v98
  %v916 = vunpack.c.l.b16 %v99
  %v917 = vunpack.c.h.b16 %v99
  %v918 = vunpack.c.l.b16 %v100
  %v919 = vunpack.c.h.b16 %v100
  %v920 = vunpack.c.l.b16 %v101
  %v921 = vunpack.c.h.b16 %v101
  %v922 = vunpack.c.l.b16 %v102
  %v923 = vunpack.c.h.b16 %v102
  %v924 = vunpack.c.l.b16 %v103
  %v925 = vunpack.c.h.b16 %v103
  %v926 = vunpack.c.l.b16 %v104
  %v927 = vunpack.c.h.b16 %v104
  %v928 = vunpack.c.l.b16 %v105
  %v929 = vunpack.c.h.b16 %v105
  %v930 = vunpack.c.l.b16 %v106
  %v931 = vunpack.c.h.b16 %v106
  %v932 = vunpack.c.l.b16 %v107
  %v933 = vunpack.c.h.b16 %v107
  %v934 = vunpack.c.l.b16 %v108
  %v935 = vunpack.c.h.b16 %v108
  %v936 = vunpack.c.l.b16 %v109
  %v937 = vunpack.c.h.b16 %v109
  %v938 = vunpack.c.l.b16 %v110
  %v939 = vunpack.c.h.b16 %v110
  %v940 = vunpack.c.l.b16 %v111
  %v941 = vunpack.c.h.b16 %v111
  %v942 = vunpack.c.l.b16 %v112
  %v943 = vunpack.c.h.b16 %v112
  %v944 = vunpack.c.l.b16 %v113
  %v945 = vunpack.c.h.b16 %v113
  %v946 = vunpack.c.l.b16 %v114
  %v947 = vunpack.c.h.b16 %v114
  %v948 = vunpack.c.l.b16 %v115
  %v949 = vunpack.c.h.b16 %v115
  %v950 = vunpack.c.l.b16 %v116
  %v951 = vunpack.c.h.b16 %v116
  %v952 = vunpack.c.l.b16 %v117
  %v953 = vunpack.c.h.b16 %v117
  %v954 = vunpack.c.l.b16 %v118
  %v955 = vunpack.c.h.b16 %v118
  %v956 = vunpack.c.l.b16 %v119
  %v957 = vunpack.c.h.b16 %v119
  %v958 = vunpack.c.l.b16 %v120
  %v959 = vunpack.c.h.b16 %v120
  %v960 = vunpack.c.l.b16 %v121
  %v961 = vunpack.c.h.b16 %v121
  %v962 = vunpack.c.l.b16 %v122
  %v963 = vunpack.c.h.b16 %v122
  %v964 = vunpack.c.l.b16 %v123
  %v965 = vunpack.c.h.b16 %v123
  %v966 = vunpack.c.l.b16 %v124
  %v967 = vunpack.c.h.b16 %v124
  %v968 = vunpack.c.l.b16 %v125
  %v969 = vunpack.c.h.b16 %v125
  %v970 = vunpack.c.l.b16 %v126
  %v971 = vunpack.c.h.b16 %v126
  %v972 = vunpack.c.l.b16 %v127
  %v973 = vunpack.c.h.b16 %v127
  %v974 = vunpack.c.l.b16 %v128
  %v975 = vunpack.c.h.b16 %v128
  %v976 = vunpack.c.l.b16 %v129
  %v977 = vunpack.c.h.b16 %v129
  %v978 = vunpack.c.l.b16 %v130
  %v979 = vunpack.c.h.b16 %v130
  %v980 = vunpack.c.l.b16 %v131
  %v981 = vunpack.c.h.b16 %v131
  %v982 = vunpack.c.l.b16 %v132
  %v983 = vunpack.c.h.b16 %v132
  %v984 = vunpack.c.l.b16 %v133
  %v985 = vunpack.c.h.b16 %v133
  %v986 = vunpack.c.l.b16 %v134
  %v987 = vunpack.c.h.b16 %v134
  %v988 = vunpack.c.l.b16 %v135
  %v989 = vunpack.c.h.b16 %v135
  %v990 = vunpack.c.l.b16 %v136
  %v991 = vunpack.c.h.b16 %v136
  %v992 = vunpack.c.l.b16 %v137
  %v993 = vunpack.c.h.b16 %v137
  %v994 = vunpack.c.l.b16 %v138
  %v995 = vunpack.c.h.b16 %v138
  %v996 = vunpack.c.l.b16 %v139
  %v997 = vunpack.c.h.b16 %v139
  %v998 = vunpack.c.l.b16 %v140
  %v999 = vunpack.c.h.b16 %v140
  %v1000 = vunpack.c.l.b16 %v141
  %v1001 = vunpack.c.h.b16 %v141
  %v1002 = vunpack.c.l.b16 %v142
  %v1003 = vunpack.c.h.b16 %v142
  %v1004 = vunpack.c.l.b16 %v143
  %v1005 = vunpack.c.h.b16 %v143
  %v1006 = vunpack.c.l.b16 %v144
  %v1007 = vunpack.c.h.b16 %v144
  %v1008 = vunpack.c.l.b16 %v145
  %v1009 = vunpack.c.h.b16 %v145
  %v1010 = vunpack.c.l.b16 %v146
  %v1011 = vunpack.c.h.b16 %v146
  %v1012 = vunpack.c.l.b16 %v147
  %v1013 = vunpack.c.h.b16 %v147
  %v1014 = vunpack.c.l.b16 %v148
  %v1015 = vunpack.c.h.b16 %v148
  %v1016 = vunpack.c.l.b16 %v149
  %v1017 = vunpack.c.h.b16 %v149
  %v1018 = vunpack.c.l.b16 %v150
  %v1019 = vunpack.c.h.b16 %v150
  %v1020 = vunpack.c.l.b16 %v151
  %v1021 = vunpack.c.h.b16 %v151
  %v1022 = vunpack.c.l.b16 %v152
  %v1023 = vunpack.c.h.b16 %v152
  %v1024 = vunpack.c.l.b16 %v153
  %v1025 = vunpack.c.h.b16 %v153
  %v1026 = vunpack.c.l.b16 %v154
  %v1027 = vunpack.c.h.b16 %v154
  %v1028 = vunpack.c.l.b16 %v155
  %v1029 = vunpack.c.h.b16 %v155
  %v1030 = vunpack.c.l.b16 %v156
  %v1031 = vunpack.c.h.b16 %v156
  %v1032 = vunpack.c.l.b16 %v157
  %v1033 = vunpack.c.h.b16 %v157
  %v1034 = vunpack.c.l.b16 %v158
  %v1035 = vunpack.c.h.b16 %v158
  %v1036 = vunpack.c.l.b16 %v159
  %v1037 = vunpack.c.h.b16 %v159
  %v1038 = vunpack.c.l.b16 %v160
  %v1039 = vunpack.c.h.b16 %v160
  %v1040 = vunpack.c.l.b16 %v161
  %v1041 = vunpack.c.h.b16 %v161
  %v1042 = vunpack.c.l.b16 %v162
  %v1043 = vunpack.c.h.b16 %v162
  %v1044 = vunpack.c.l.b16 %v163
  %v1045 = vunpack.c.h.b16 %v163
  %v1046 = vunpack.c.l.b16 %v164
  %v1047 = vunpack.c.h.b16 %v164
  %v1048 = vunpack.c.l.b16 %v165
  %v1049 = vunpack.c.h.b16 %v165
  %v1050 = vunpack.c.l.b16 %v166
  %v1051 = vunpack.c.h.b16 %v166
  %v1052 = vunpack.c.l.b16 %v167
  %v1053 = vunpack.c.h.b16 %v167
  %v1054 = vunpack.c.l.b16 %v168
  %v1055 = vunpack.c.h.b16 %v168
  %v1056 = vunpack.c.l.b16 %v169
  %v1057 = vunpack.c.h.b16 %v169
  %v1058 = vunpack.c.l.b16 %v170
  %v1059 = vunpack.c.h.b16 %v170
  %v1060 = vunpack.c.l.b16 %v171
  %v1061 = vunpack.c.h.b16 %v171
  %v1062 = vunpack.c.l.b16 %v172
  %v1063 = vunpack.c.h.b16 %v172
  %v1064 = vunpack.c.l.b16 %v173
  %v1065 = vunpack.c.h.b16 %v173
  %v1066 = vunpack.c.l.b16 %v174
  %v1067 = vunpack.c.h.b16 %v174
  %v1068 = vunpack.c.l.b16 %v175
  %v1069 = vunpack.c.h.b16 %v175
  %v1070 = vunpack.c.l.b16 %v176
  %v1071 = vunpack.c.h.b16 %v176
  %v1072 = vunpack.c.l.b16 %v177
  %v1073 = vunpack.c.h.b16 %v177
  %v1074 = vunpack.c.l.b16 %v178
  %v1075 = vunpack.c.h.b16 %v178
  %v1076 = vunpack.c.l.b16 %v179
  %v1077 = vunpack.c.h.b16 %v179
  %v1078 = vunpack.c.l.b16 %v180
  %v1079 = vunpack.c.h.b16 %v180
  %v1080 = vunpack.c.l.b16 %v181
  %v1081 = vunpack.c.h.b16 %v181
  %v1082 = vunpack.c.l.b16 %v182
  %v1083 = vunpack.c.h.b16 %v182
  %v1084 = vunpack.c.l.b16 %v183
  %v1085 = vunpack.c.h.b16 %v183
  %v1086 = vunpack.c.l.b16 %v184
  %v1087 = vunpack.c.h.b16 %v184
  %v1088 = vunpack.c.l.b16 %v185
  %v1089 = vunpack.c.h.b16 %v185
  %v1090 = vunpack.c.l.b16 %v186
  %v1091 = vunpack.c.h.b16 %v186
  %v1092 = vunpack.c.l.b16 %v187
  %v1093 = vunpack.c.h.b16 %v187
  %v1094 = vunpack.c.l.b16 %v188
  %v1095 = vunpack.c.h.b16 %v188
  %v1096 = vunpack.c.l.b16 %v189
  %v1097 = vunpack.c.h.b16 %v189
  %v1098 = vunpack.c.l.b16 %v190
  %v1099 = vunpack.c.h.b16 %v190
  %v1100 = vunpack.c.l.b16 %v191
  %v1101 = vunpack.c.h.b16 %v191
  %v1102 = vunpack.c.l.b16 %v192
  %v1103 = vunpack.c.h.b16 %v192
  %v1104 = vunpack.c.l.b16 %v193
  %v1105 = vunpack.c.h.b16 %v193
  %v1106 = vunpack.c.l.b16 %v194
  %v1107 = vunpack.c.h.b16 %v194
  %v1108 = vunpack.c.l.b16 %v195
  %v1109 = vunpack.c.h.b16 %v195
  %v1110 = vunpack.c.l.b16 %v196
  %v1111 = vunpack.c.h.b16 %v196
  %v1112 = vunpack.c.l.b16 %v197
  %v1113 = vunpack.c.h.b16 %v197
  %v1114 = vunpack.c.l.b16 %v198
  %v1115 = vunpack.c.h.b16 %v198
  %v1116 = vunpack.c.l.b16 %v199
  %v1117 = vunpack.c.h.b16 %v199
  %v1118 = vunpack.c.l.b16 %v200
  %v1119 = vunpack.c.h.b16 %v200
  %v1120 = vunpack.c.l.b16 %v201
  %v1121 = vunpack.c.h.b16 %v201
  %v1122 = vunpack.c.l.b16 %v202
  %v1123 = vunpack.c.h.b16 %v202
  %v1124 = vunpack.c.l.b16 %v203
  %v1125 = vunpack.c.h.b16 %v203
  %v1126 = vunpack.c.l.b16 %v204
  %v1127 = vunpack.c.h.b16 %v204
  %v1128 = vunpack.c.l.b16 %v205
  %v1129 = vunpack.c.h.b16 %v205
  %v1130 = vunpack.c.l.b16 %v206
  %v1131 = vunpack.c.h.b16 %v206
  %v1132 = vunpack.c.l.b16 %v207
  %v1133 = vunpack.c.h.b16 %v207
  %v1134 = vunpack.c.l.b16 %v208
  %v1135 = vunpack.c.h.b16 %v208
  %v1136 = vunpack.c.l.b16 %v209
  %v1137 = vunpack.c.h.b16 %v209
  %v1138 = vunpack.c.l.b16 %v210
  %v1139 = vunpack.c.h.b16 %v210
  %v1140 = vunpack.c.l.b16 %v211
  %v1141 = vunpack.c.h.b16 %v211
  %v1142 = vunpack.c.l.b16 %v212
  %v1143 = vunpack.c.h.b16 %v212
  %v1144 = vunpack.c.l.b16 %v213
  %v1145 = vunpack.c.h.b16 %v213
  %v1146 = vunpack.c.l.b16 %v214
  %v1147 = vunpack.c.h.b16 %v214
  %v1148 = vunpack.c.l.b16 %v215
  %v1149 = vunpack.c.h.b16 %v215
  %v1150 = vunpack.c.l.b16 %v216
  %v1151 = vunpack.c.h.b16 %v216
  %v1152 = vunpack.c.l.b16 %v217
  %v1153 = vunpack.c.h.b16 %v217
  %v1154 = vunpack.c.l.b16 %v218
  %v1155 = vunpack.c.h.b16 %v218
  %v1156 = vunpack.c.l.b16 %v219
  %v1157 = vunpack.c.h.b16 %v219
  %v1158 = vunpack.c.l.b16 %v220
  %v1159 = vunpack.c.h.b16 %v220
  %v1160 = vunpack.c.l.b16 %v221
  %v1161 = vunpack.c.h.b16 %v221
  %v1162 = vunpack.c.l.b16 %v222
  %v1163 = vunpack.c.h.b16 %v222
  %v1164 = vunpack.c.l.b16 %v223
  %v1165 = vunpack.c.h.b16 %v223
  %v1166 = vunpack.c.l.b16 %v224
  %v1167 = vunpack.c.h.b16 %v224
  %v1168 = vunpack.c.l.b16 %v225
  %v1169 = vunpack.c.h.b16 %v225
  %v1170 = vunpack.c.l.b16 %v226
  %v1171 = vunpack.c.h.b16 %v226
  %v1172 = vunpack.c.l.b16 %v227
  %v1173 = vunpack.c.h.b16 %v227
  %v1174 = vunpack.c.l.b16 %v228
  %v1175 = vunpack.c.h.b16 %v228
  %v1176 = vunpack.c.l.b16 %v229
  %v1177 = vunpack.c.h.b16 %v229
  %v1178 = vunpack.c.l.b16 %v230
  %v1179 = vunpack.c.h.b16 %v230
  %v1180 = vunpack.c.l.b16 %v231
  %v1181 = vunpack.c.h.b16 %v231
  %v1182 = vunpack.c.l.b16 %v232
  %v1183 = vunpack.c.h.b16 %v232
  %v1184 = vunpack.c.l.b16 %v233
  %v1185 = vunpack.c.h.b16 %v233
  %v1186 = vunpack.c.l.b16 %v234
  %v1187 = vunpack.c.h.b16 %v234
  %v1188 = vunpack.c.l.b16 %v235
  %v1189 = vunpack.c.h.b16 %v235
  %v1190 = vunpack.c.l.b16 %v236
  %v1191 = vunpack.c.h.b16 %v236
  %v1192 = vunpack.c.l.b16 %v237
  %v1193 = vunpack.c.h.b16 %v237
  %v1194 = vunpack.c.l.b16 %v238
  %v1195 = vunpack.c.h.b16 %v238
  %v1196 = vunpack.c.l.b16 %v239
  %v1197 = vunpack.c.h.b16 %v239
  %v1198 = vunpack.c.l.b16 %v240
  %v1199 = vunpack.c.h.b16 %v240
  %v1200 = vunpack.c.l.b16 %v241
  %v1201 = vunpack.c.h.b16 %v241
  %v1202 = vunpack.c.l.b16 %v242
  %v1203 = vunpack.c.h.b16 %v242
  %v1204 = vunpack.c.l.b16 %v243
  %v1205 = vunpack.c.h.b16 %v243
  %v1206 = vunpack.c.l.b16 %v244
  %v1207 = vunpack.c.h.b16 %v244
  %v1208 = vunpack.c.l.b16 %v245
  %v1209 = vunpack.c.h.b16 %v245
  %v1210 = vunpack.c.l.b16 %v246
  %v1211 = vunpack.c.h.b16 %v246
  %v1212 = vunpack.c.l.b16 %v247
  %v1213 = vunpack.c.h.b16 %v247
  %v1214 = vunpack.c.l.b16 %v248
  %v1215 = vunpack.c.h.b16 %v248
  %v1216 = vunpack.c.l.b16 %v249
  %v1217 = vunpack.c.h.b16 %v249
  %v1218 = vunpack.c.l.b16 %v250
  %v1219 = vunpack.c.h.b16 %v250
  %v1220 = vunpack.c.l.b16 %v251
  %v1221 = vunpack.c.h.b16 %v251
  %v1222 = vunpack.c.l.b16 %v252
  %v1223 = vunpack.c.h.b16 %v252
  %v1224 = vunpack.c.l.b16 %v253
  %v1225 = vunpack.c.h.b16 %v253
  %v1226 = vunpack.c.l.b16 %v254
  %v1227 = vunpack.c.h.b16 %v254
  %v1228 = vunpack.c.l.b16 %v255
  %v1229 = vunpack.c.h.b16 %v255
  %v1230 = vunpack.c.l.b16 %v256
  %v1231 = vunpack.c.h.b16 %v256
  %v1232 = vunpack.c.l.b16 %v257
  %v1233 = vunpack.c.h.b16 %v257
  %v1234 = vunpack.c.l.b16 %v258
  %v1235 = vunpack.c.h.b16 %v258
  %v1236 = vunpack.c.l.b16 %v259
  %v1237 = vunpack.c.h.b16 %v259
  %v1238 = vunpack.c.l.b16 %v260
  %v1239 = vunpack.c.h.b16 %v260
  %v1240 = vunpack.c.l.b16 %v261
  %v1241 = vunpack.c.h.b16 %v261
  %v1242 = vunpack.c.l.b16 %v262
  %v1243 = vunpack.c.h.b16 %v262
  %v1244 = vunpack.c.l.b16 %v263
  %v1245 = vunpack.c.h.b16 %v263
  %v1246 = vunpack.c.l.b16 %v264
  %v1247 = vunpack.c.h.b16 %v264
  %v1248 = vunpack.c.l.b16 %v265
  %v1249 = vunpack.c.h.b16 %v265
  %v1250 = vunpack.c.l.b16 %v266
  %v1251 = vunpack.c.h.b16 %v266
  %v1252 = vunpack.c.l.b16 %v267
  %v1253 = vunpack.c.h.b16 %v267
  %v1254 = vunpack.c.l.b16 %v268
  %v1255 = vunpack.c.h.b16 %v268
  %v1256 = vunpack.c.l.b16 %v269
  %v1257 = vunpack.c.h.b16 %v269
  %v1258 = vunpack.c.l.b16 %v270
  %v1259 = vunpack.c.h.b16 %v270
  %v1260 = vunpack.c.l.b16 %v271
  %v1261 = vunpack.c.h.b16 %v271
  %v1262 = vunpack.c.l.b16 %v272
  %v1263 = vunpack.c.h.b16 %v272
  %v1264 = vunpack.c.l.b16 %v273
  %v1265 = vunpack.c.h.b16 %v273
  %v1266 = vunpack.c.l.b16 %v274
  %v1267 = vunpack.c.h.b16 %v274
  %v1268 = vunpack.c.l.b16 %v275
  %v1269 = vunpack.c.h.b16 %v275
  %v1270 = vunpack.c.l.b16 %v276
  %v1271 = vunpack.c.h.b16 %v276
  %v1272 = vunpack.c.l.b16 %v277
  %v1273 = vunpack.c.h.b16 %v277
  %v1274 = vunpack.c.l.b16 %v278
  %v1275 = vunpack.c.h.b16 %v278
  %v1276 = vunpack.c.l.b16 %v279
  %v1277 = vunpack.c.h.b16 %v279
  %v1278 = vunpack.c.l.b16 %v280
  %v1279 = vunpack.c.h.b16 %v280
  %v1280 = vunpack.c.l.b16 %v281
  %v1281 = vunpack.c.h.b16 %v281
  %v1282 = vunpack.c.l.b16 %v282
  %v1283 = vunpack.c.h.b16 %v282
  %v1284 = vunpack.c.l.b16 %v283
  %v1285 = vunpack.c.h.b16 %v283
  %v1286 = vunpack.c.l.b16 %v284
  %v1287 = vunpack.c.h.b16 %v284
  %v1288 = vunpack.c.l.b16 %v285
  %v1289 = vunpack.c.h.b16 %v285
  %v1290 = vunpack.c.l.b16 %v286
  %v1291 = vunpack.c.h.b16 %v286
  %v1292 = vunpack.c.l.b16 %v287
  %v1293 = vunpack.c.h.b16 %v287
  %v1294 = vunpack.c.l.b16 %v288
  %v1295 = vunpack.c.h.b16 %v288
  %v1296 = vunpack.c.l.b16 %v289
  %v1297 = vunpack.c.h.b16 %v289
  %v1298 = vunpack.c.l.b16 %v290
  %v1299 = vunpack.c.h.b16 %v290
  %v1300 = vunpack.c.l.b16 %v291
  %v1301 = vunpack.c.h.b16 %v291
  %v1302 = vunpack.c.l.b16 %v292
  %v1303 = vunpack.c.h.b16 %v292
  %v1304 = vunpack.c.l.b16 %v293
  %v1305 = vunpack.c.h.b16 %v293
  %v1306 = vunpack.c.l.b16 %v294
  %v1307 = vunpack.c.h.b16 %v294
  %v1308 = vunpack.c.l.b16 %v295
  %v1309 = vunpack.c.h.b16 %v295
  %v1310 = vunpack.c.l.b16 %v296
  %v1311 = vunpack.c.h.b16 %v296
  %v1312 = vunpack.c.l.b16 %v297
  %v1313 = vunpack.c.h.b16 %v297
  %v1314 = vunpack.c.l.b16 %v298
  %v1315 = vunpack.c.h.b16 %v298
  %v1316 = vunpack.c.l.b16 %v299
  %v1317 = vunpack.c.h.b16 %v299
  %v1318 = vunpack.c.l.b16 %v300
  %v1319 = vunpack.c.h.b16 %v300
  %v1320 = vunpack.c.l.b16 %v301
  %v1321 = vunpack.c.h.b16 %v301
  %v1322 = vunpack.c.l.b16 %v302
  %v1323 = vunpack.c.h.b16 %v302
  %v1324 = vunpack.c.l.b16 %v303
  %v1325 = vunpack.c.h.b16 %v303
  %v1326 = vunpack.c.l.b16 %v304
  %v1327 = vunpack.c.h.b16 %v304
  %v1328 = vunpack.c.l.b16 %v305
  %v1329 = vunpack.c.h.b16 %v305
  %v1330 = vunpack.c.l.b16 %v306
  %v1331 = vunpack.c.h.b16 %v306
  %v1332 = vunpack.c.l.b16 %v307
  %v1333 = vunpack.c.h.b16 %v307
  %v1334 = vunpack.c.l.b16 %v308
  %v1335 = vunpack.c.h.b16 %v308
  %v1336 = vunpack.c.l.b16 %v309
  %v1337 = vunpack.c.h.b16 %v309
  %v1338 = vunpack.c.l.b16 %v310
  %v1339 = vunpack.c.h.b16 %v310
  %v1340 = vunpack.c.l.b16 %v311
  %v1341 = vunpack.c.h.b16 %v311
  %v1342 = vunpack.c.l.b16 %v312
  %v1343 = vunpack.c.h.b16 %v312
  %v1344 = vunpack.c.l.b16 %v313
  %v1345 = vunpack.c.h.b16 %v313
  %v1346 = vunpack.c.l.b16 %v314
  %v1347 = vunpack.c.h.b16 %v314
  %v1348 = vunpack.c.l.b16 %v315
  %v1349 = vunpack.c.h.b16 %v315
  %v1350 = vunpack.c.l.b16 %v316
  %v1351 = vunpack.c.h.b16 %v316
  %v1352 = vunpack.c.l.b16 %v317
  %v1353 = vunpack.c.h.b16 %v317
  %v1354 = vunpack.c.l.b16 %v318
  %v1355 = vunpack.c.h.b16 %v318
  %v1356 = vunpack.c.l.b16 %v319
  %v1357 = vunpack.c.h.b16 %v319
  %v1358 = vunpack.c.l.b16 %v320
  %v1359 = vunpack.c.h.b16 %v320
  %v1360 = vunpack.c.l.b16 %v321
  %v1361 = vunpack.c.h.b16 %v321
  %v1362 = vunpack.c.l.b16 %v322
  %v1363 = vunpack.c.h.b16 %v322
  %v1364 = vunpack.c.l.b16 %v323
  %v1365 = vunpack.c.h.b16 %v323
  %v1366 = vunpack.c.l.b16 %v324
  %v1367 = vunpack.c.h.b16 %v324
  %v1368 = vunpack.c.l.b16 %v325
  %v1369 = vunpack.c.h.b16 %v325
  %v1370 = vunpack.c.l.b16 %v326
  %v1371 = vunpack.c.h.b16 %v326
  %v1372 = vunpack.c.l.b16 %v327
  %v1373 = vunpack.c.h.b16 %v327
  %v1374 = vunpack.c.l.b16 %v328
  %v1375 = vunpack.c.h.b16 %v328
  %v1376 = vunpack.c.l.b16 %v329
  %v1377 = vunpack.c.h.b16 %v329
  %v1378 = vunpack.c.l.b16 %v330
  %v1379 = vunpack.c.h.b16 %v330
  %v1380 = vunpack.c.l.b16 %v331
  %v1381 = vunpack.c.h.b16 %v331
  %v1382 = vunpack.c.l.b16 %v332
  %v1383 = vunpack.c.h.b16 %v332
  %v1384 = vunpack.c.l.b16 %v333
  %v1385 = vunpack.c.h.b16 %v333
  %v1386 = vunpack.c.l.b16 %v334
  %v1387 = vunpack.c.h.b16 %v334
  %v1388 = vunpack.c.l.b16 %v335
  %v1389 = vunpack.c.h.b16 %v335
  %v1390 = vunpack.c.l.b16 %v336
  %v1391 = vunpack.c.h.b16 %v336
  %v1392 = vunpack.c.l.b16 %v337
  %v1393 = vunpack.c.h.b16 %v337
  %v1394 = vunpack.c.l.b16 %v338
  %v1395 = vunpack.c.h.b16 %v338
  %v1396 = vunpack.c.l.b16 %v339
  %v1397 = vunpack.c.h.b16 %v339
  %v1398 = vunpack.c.l.b16 %v340
  %v1399 = vunpack.c.h.b16 %v340
  %v1400 = vunpack.c.l.b16 %v341
  %v1401 = vunpack.c.h.b16 %v341
  %v1402 = vunpack.c.l.b16 %v342
  %v1403 = vunpack.c.h.b16 %v342
  %v1404 = vunpack.c.l.b16 %v343
  %v1405 = vunpack.c.h.b16 %v343
  %v1406 = vunpack.c.l.b16 %v344
  %v1407 = vunpack.c.h.b16 %v344
  %v1408 = vunpack.c.l.b16 %v345
  %v1409 = vunpack.c.h.b16 %v345
  %v1410 = vunpack.c.l.b16 %v346
  %v1411 = vunpack.c.h.b16 %v346
  %v1412 = vunpack.c.l.b16 %v347
  %v1413 = vunpack.c.h.b16 %v347
  %v1414 = vunpack.c.l.b16 %v348
  %v1415 = vunpack.c.h.b16 %v348
  %v1416 = vunpack.c.l.b16 %v349
  %v1417 = vunpack.c.h.b16 %v349
  %v1418 = vunpack.c.l.b16 %v350
  %v1419 = vunpack.c.h.b16 %v350
  %v1420 = vunpack.c.l.b16 %v351
  %v1421 = vunpack.c.h.b16 %v351
  %v1422 = vunpack.c.l.b16 %v352
  %v1423 = vunpack.c.h.b16 %v352
  %v1424 = vunpack.c.l.b16 %v353
  %v1425 = vunpack.c.h.b16 %v353
  %v1426 = vpack.c.b16 %v788, %v786
  %v1427 = vpack.c.b16 %v789, %v787
  %v1428 = vpack.c.b16 %v792, %v790
  %v1429 = vpack.c.b16 %v793, %v791
  %v1430 = vpack.c.b16 %v796, %v794
  %v1431 = vpack.c.b16 %v797, %v795
  %v1432 = vpack.c.b16 %v800, %v798
  %v1433 = vpack.c.b16 %v801, %v799
  %v1434 = vpack.c.b16 %v804, %v802
  %v1435 = vpack.c.b16 %v805, %v803
  %v1436 = vpack.c.b16 %v808, %v806
  %v1437 = vpack.c.b16 %v809, %v807
  %v1438 = vpack.c.b16 %v812, %v810
  %v1439 = vpack.c.b16 %v813, %v811
  %v1440 = vpack.c.b16 %v816, %v814
  %v1441 = vpack.c.b16 %v817, %v815
  %v1442 = vpack.c.b16 %v820, %v818
  %v1443 = vpack.c.b16 %v821, %v819
  %v1444 = vpack.c.b16 %v824, %v822
  %v1445 = vpack.c.b16 %v825, %v823
  %v1446 = vpack.c.b16 %v828, %v826
  %v1447 = vpack.c.b16 %v829, %v827
  %v1448 = vpack.c.b16 %v832, %v830
  %v1449 = vpack.c.b16 %v833, %v831
  %v1450 = vpack.c.b16 %v836, %v834
  %v1451 = vpack.c.b16 %v837, %v835
  %v1452 = vpack.c.b16 %v840, %v838
  %v1453 = vpack.c.b16 %v841, %v839
  %v1454 = vpack.c.b16 %v844, %v842
  %v1455 = vpack.c.b16 %v845, %v843
  %v1456 = vpack.c.b16 %v848, %v846
  %v1457 = vpack.c.b16 %v849, %v847
  %v1458 = vpack.c.b16 %v852, %v850
  %v1459 = vpack.c.b16 %v853, %v851
  %v1460 = vpack.c.b16 %v856, %v854
  %v1461 = vpack.c.b16 %v857, %v855
  %v1462 = vpack.c.b16 %v860, %v858
  %v1463 = vpack.c.b16 %v861, %v859
  %v1464 = vpack.c.b16 %v864, %v862
  %v1465 = vpack.c.b16 %v865, %v863
  %v1466 = vpack.c.b16 %v868, %v866
  %v1467 = vpack.c.b16 %v869, %v867
  %v1468 = vpack.c.b16 %v872, %v870
  %v1469 = vpack.c.b16 %v873, %v871
  %v1470 = vpack.c.b16 %v876, %v874
  %v1471 = vpack.c.b16 %v877, %v875
  %v1472 = vpack.c.b16 %v880, %v878
  %v1473 = vpack.c.b16 %v881, %v879
  %v1474 = vpack.c.b16 %v884, %v882
  %v1475 = vpack.c.b16 %v885, %v883
  %v1476 = vpack.c.b16 %v888, %v886
  %v1477 = vpack.c.b16 %v889, %v887
  %v1478 = vpack.c.b16 %v892, %v890
  %v1479 = vpack.c.b16 %v893, %v891
  %v1480 = vpack.c.b16 %v896, %v894
  %v1481 = vpack.c.b16 %v897, %v895
  %v1482 = vpack.c.b16 %v900, %v898
  %v1483 = vpack.c.b16 %v901, %v899
  %v1484 = vpack.c.b16 %v904, %v902
  %v1485 = vpack.c.b16 %v905, %v903
  %v1486 = vpack.c.b16 %v908, %v906
  %v1487 = vpack.c.b16 %v909, %v907
  %v1488 = vpack.c.b16 %v912, %v910
  %v1489 = vpack.c.b16 %v913, %v911
  %v1490 = vpack.c.b16 %v916, %v914
  %v1491 = vpack.c.b16 %v917, %v915
  %v1492 = vpack.c.b16 %v920, %v918
  %v1493 = vpack.c.b16 %v921, %v919
  %v1494 = vpack.c.b16 %v924, %v922
  %v1495 = vpack.c.b16 %v925, %v923
  %v1496 = vpack.c.b16 %v928, %v926
  %v1497 = vpack.c.b16 %v929, %v927
  %v1498 = vpack.c.b16 %v932, %v930
  %v1499 = vpack.c.b16 %v933, %v931
  %v1500 = vpack.c.b16 %v936, %v934
  %v1501 = vpack.c.b16 %v937, %v935
  %v1502 = vpack.c.b16 %v940, %v938
  %v1503 = vpack.c.b16 %v941, %v939
  %v1504 = vpack.c.b16 %v944, %v942
  %v1505 = vpack.c.b16 %v945, %v943
  %v1506 = vpack.c.b16 %v948, %v946
  %v1507 = vpack.c.b16 %v949, %v947
  %v1508 = vpack.c.b16 %v952, %v950
  %v1509 = vpack.c.b16 %v953, %v951
  %v1510 = vpack.c.b16 %v956, %v954
  %v1511 = vpack.c.b16 %v957, %v955
  %v1512 = vpack.c.b16 %v960, %v958
  %v1513 = vpack.c.b16 %v961, %v959
  %v1514 = vpack.c.b16 %v964, %v962
  %v1515 = vpack.c.b16 %v965, %v963
  %v1516 = vpack.c.b16 %v968, %v966
  %v1517 = vpack.c.b16 %v969, %v967
  %v1518 = vpack.c.b16 %v972, %v970
  %v1519 = vpack.c.b16 %v973, %v971
  %v1520 = vpack.c.b16 %v976, %v974
  %v1521 = vpack.c.b16 %v977, %v975
  %v1522 = vpack.c.b16 %v980, %v978
  %v1523 = vpack.c.b16 %v981, %v979
  %v1524 = vpack.c.b16 %v984, %v982
  %v1525 = vpack.c.b16 %v985, %v983
  %v1526 = vpack.c.b16 %v988, %v986
  %v1527 = vpack.c.b16 %v989, %v987
  %v1528 = vpack.c.b16 %v992, %v990
  %v1529 = vpack.c.b16 %v993, %v991
  %v1530 = vpack.c.b16 %v996, %v994
  %v1531 = vpack.c.b16 %v997, %v995
  %v1532 = vpack.c.b16 %v1000, %v998
  %v1533 = vpack.c.b16 %v1001, %v999
  %v1534 = vpack.c.b16 %v1004, %v1002
  %v1535 = vpack.c.b16 %v1005, %v1003
  %v1536 = vpack.c.b16 %v1008, %v1006
  %v1537 = vpack.c.b16 %v1009, %v1007
  %v1538 = vpack.c.b16 %v1012, %v1010
  %v1539 = vpack.c.b16 %v1013, %v1011
  %v1540 = vpack.c.b16 %v1016, %v1014
  %v1541 = vpack.c.b16 %v1017, %v1015
  %v1542 = vpack.c.b16 %v1020, %v1018
  %v1543 = vpack.c.b16 %v1021, %v1019
  %v1544 = vpack.c.b16 %v1024, %v1022
  %v1545 = vpack.c.b16 %v1025, %v1023
  %v1546 = vpack.c.b16 %v1028, %v1026
  %v1547 = vpack.c.b16 %v1029, %v1027
  %v1548 = vpack.c.b16 %v1032, %v1030
  %v1549 = vpack.c.b16 %v1033, %v1031
  %v1550 = vpack.c.b16 %v1036, %v1034
  %v1551 = vpack.c.b16 %v1037, %v1035
  %v1552 = vpack.c.b16 %v1040, %v1038
  %v1553 = vpack.c.b16 %v1041, %v1039
  %v1554 = vpack.c.b16 %v1044, %v1042
  %v1555 = vpack.c.b16 %v1045, %v1043
  %v1556 = vpack.c.b16 %v1048, %v1046
  %v1557 = vpack.c.b16 %v1049, %v1047
  %v1558 = vpack.c.b16 %v1052, %v1050
  %v1559 = vpack.c.b16 %v1053, %v1051
  %v1560 = vpack.c.b16 %v1056, %v1054
  %v1561 = vpack.c.b16 %v1057, %v1055
  %v1562 = vpack.c.b16 %v1060, %v1058
  %v1563 = vpack.c.b16 %v1061, %v1059
  %v1564 = vpack.c.b16 %v1064, %v1062
  %v1565 = vpack.c.b16 %v1065, %v1063
  %v1566 = vpack.c.b16 %v1068, %v1066
  %v1567 = vpack.c.b16 %v1069, %v1067
  %v1568 = vpack.c.b16 %v1072, %v1070
  %v1569 = vpack.c.b16 %v1073, %v1071
  %v1570 = vpack.c.b16 %v1076, %v1074
  %v1571 = vpack.c.b16 %v1077, %v1075
  %v1572 = vpack.c.b16 %v1080, %v1078
  %v1573 = vpack.c.b16 %v1081, %v1079
  %v1574 = vpack.c.b16 %v1084, %v1082
  %v1575 = vpack.c.b16 %v1085, %v1083
  %v1576 = vpack.c.b16 %v1088, %v1086
  %v1577 = vpack.c.b16 %v1089, %v1087
  %v1578 = vpack.c.b16 %v1092, %v1090
  %v1579 = vpack.c.b16 %v1093, %v1091
  %v1580 = vpack.c.b16 %v1096, %v1094
  %v1581 = vpack.c.b16 %v1097, %v1095
  %v1582 = vpack.c.b16 %v1100, %v1098
  %v1583 = vpack.c.b16 %v1101, %v1099
  %v1584 = vpack.c.b16 %v1104, %v1102
  %v1585 = vpack.c.b16 %v1105, %v1103
  %v1586 = vpack.c.b16 %v1108, %v1106
  %v1587 = vpack.c.b16 %v1109, %v1107
  %v1588 = vpack.c.b16 %v1112, %v1110
  %v1589 = vpack.c.b16 %v1113, %v1111
  %v1590 = vpack.c.b16 %v1116, %v1114
  %v1591 = vpack.c.b16 %v1117, %v1115
  %v1592 = vpack.c.b16 %v1120, %v1118
  %v1593 = vpack.c.b16 %v1121, %v1119
  %v1594 = vpack.c.b16 %v1124, %v1122
  %v1595 = vpack.c.b16 %v1125, %v1123
  %v1596 = vpack.c.b16 %v1128, %v1126
  %v1597 = vpack.c.b16 %v1129, %v1127
  %v1598 = vpack.c.b16 %v1132, %v1130
  %v1599 = vpack.c.b16 %v1133, %v1131
  %v1600 = vpack.c.b16 %v1136, %v1134
  %v1601 = vpack.c.b16 %v1137, %v1135
  %v1602 = vpack.c.b16 %v1140, %v1138
  %v1603 = vpack.c.b16 %v1141, %v1139
  %v1604 = vpack.c.b16 %v1144, %v1142
  %v1605 = vpack.c.b16 %v1145, %v1143
  %v1606 = vpack.c.b16 %v1148, %v1146
  %v1607 = vpack.c.b16 %v1149, %v1147
  %v1608 = vpack.c.b16 %v1152, %v1150
  %v1609 = vpack.c.b16 %v1153, %v1151
  %v1610 = vpack.c.b16 %v1156, %v1154
  %v1611 = vpack.c.b16 %v1157, %v1155
  %v1612 = vpack.c.b16 %v1160, %v1158
  %v1613 = vpack.c.b16 %v1161, %v1159
  %v1614 = vpack.c.b16 %v1164, %v1162
  %v1615 = vpack.c.b16 %v1165, %v1163
  %v1616 = vpack.c.b16 %v1168, %v1166
  %v1617 = vpack.c.b16 %v1169, %v1167
  %v1618 = vpack.c.b16 %v1172, %v1170
  %v1619 = vpack.c.b16 %v1173, %v1171
  %v1620 = vpack.c.b16 %v1176, %v1174
  %v1621 = vpack.c.b16 %v1177, %v1175
  %v1622 = vpack.c.b16 %v1180, %v1178
  %v1623 = vpack.c.b16 %v1181, %v1179
  %v1624 = vpack.c.b16 %v1184, %v1182
  %v1625 = vpack.c.b16 %v1185, %v1183
  %v1626 = vpack.c.b16 %v1188, %v1186
  %v1627 = vpack.c.b16 %v1189, %v1187
  %v1628 = vpack.c.b16 %v1192, %v1190
  %v1629 = vpack.c.b16 %v1193, %v1191
  %v1630 = vpack.c.b16 %v1196, %v1194
  %v1631 = vpack.c.b16 %v1197, %v1195
  %v1632 = vpack.c.b16 %v1200, %v1198
  %v1633 = vpack.c.b16 %v1201, %v1199
  %v1634 = vpack.c.b16 %v1204, %v1202
  %v1635 = vpack.c.b16 %v1205, %v1203
  %v1636 = vpack.c.b16 %v1208, %v1206
  %v1637 = vpack.c.b16 %v1209, %v1207
  %v1638 = vpack.c.b16 %v1212, %v1210
  %v1639 = vpack.c.b16 %v1213, %v1211
  %v1640 = vpack.c.b16 %v1216, %v1214
  %v1641 = vpack.c.b16 %v1217, %v1215
  %v1642 = vpack.c.b16 %v1220, %v1218
  %v1643 = vpack.c.b16 %v1221, %v1219
  %v1644 = vpack.c.b16 %v1224, %v1222
  %v1645 = vpack.c.b16 %v1225, %v1223
  %v1646 = vpack.c.b16 %v1228, %v1226
  %v1647 = vpack.c.b16 %v1229, %v1227
  %v1648 = vpack.c.b16 %v1232, %v1230
  %v1649 = vpack.c.b16 %v1233, %v1231
  %v1650 = vpack.c.b16 %v1236, %v1234
  %v1651 = vpack.c.b16 %v1237, %v1235
  %v1652 = vpack.c.b16 %v1240, %v1238
  %v1653 = vpack.c.b16 %v1241, %v1239
  %v1654 = vpack.c.b16 %v1244, %v1242
  %v1655 = vpack.c.b16 %v1245, %v1243
  %v1656 = vpack.c.b16 %v1248, %v1246
  %v1657 = vpack.c.b16 %v1249, %v1247
  %v1658 = vpack.c.b16 %v1252, %v1250
  %v1659 = vpack.c.b16 %v1253, %v1251
  %v1660 = vpack.c.b16 %v1256, %v1254
  %v1661 = vpack.c.b16 %v1257, %v1255
  %v1662 = vpack.c.b16 %v1260, %v1258
  %v1663 = vpack.c.b16 %v1261, %v1259
  %v1664 = vpack.c.b16 %v1264, %v1262
  %v1665 = vpack.c.b16 %v1265, %v1263
  %v1666 = vpack.c.b16 %v1268, %v1266
  %v1667 = vpack.c.b16 %v1269, %v1267
  %v1668 = vpack.c.b16 %v1272, %v1270
  %v1669 = vpack.c.b16 %v1273, %v1271
  %v1670 = vpack.c.b16 %v1276, %v1274
  %v1671 = vpack.c.b16 %v1277, %v1275
  %v1672 = vpack.c.b16 %v1280, %v1278
  %v1673 = vpack.c.b16 %v1281, %v1279
  %v1674 = vpack.c.b16 %v1284, %v1282
  %v1675 = vpack.c.b16 %v1285, %v1283
  %v1676 = vpack.c.b16 %v1288, %v1286
  %v1677 = vpack.c.b16 %v1289, %v1287
  %v1678 = vpack.c.b16 %v1292, %v1290
  %v1679 = vpack.c.b16 %v1293, %v1291
  %v1680 = vpack.c.b16 %v1296, %v1294
  %v1681 = vpack.c.b16 %v1297, %v1295
  %v1682 = vpack.c.b16 %v1300, %v1298
  %v1683 = vpack.c.b16 %v1301, %v1299
  %v1684 = vpack.c.b16 %v1304, %v1302
  %v1685 = vpack.c.b16 %v1305, %v1303
  %v1686 = vpack.c.b16 %v1308, %v1306
  %v1687 = vpack.c.b16 %v1309, %v1307
  %v1688 = vpack.c.b16 %v1312, %v1310
  %v1689 = vpack.c.b16 %v1313, %v1311
  %v1690 = vpack.c.b16 %v1316, %v1314
  %v1691 = vpack.c.b16 %v1317, %v1315
  %v1692 = vpack.c.b16 %v1320, %v1318
  %v1693 = vpack.c.b16 %v1321, %v1319
  %v1694 = vpack.c.b16 %v1324, %v1322
  %v1695 = vpack.c.b16 %v1325, %v1323
  %v1696 = vpack.c.b16 %v1328, %v1326
  %v1697 = vpack.c.b16 %v1329, %v1327
  %v1698 = vpack.c.b16 %v1332, %v1330
  %v1699 = vpack.c.b16 %v1333, %v1331
  %v1700 = vpack.c.b16 %v1336, %v1334
  %v1701 = vpack.c.b16 %v1337, %v1335
  %v1702 = vpack.c.b16 %v1340, %v1338
  %v1703 = vpack.c.b16 %v1341, %v1339
  %v1704 = vpack.c.b16 %v1344, %v1342
  %v1705 = vpack.c.b16 %v1345, %v1343
  %v1706 = vpack.c.b16 %v1348, %v1346
  %v1707 = vpack.c.b16 %v1349, %v1347
  %v1708 = vpack.c.b16 %v1352, %v1350
  %v1709 = vpack.c.b16 %v1353, %v1351
  %v1710 = vpack.c.b16 %v1356, %v1354
  %v1711 = vpack.c.b16 %v1357, %v1355
  %v1712 = vpack.c.b16 %v1360, %v1358
  %v1713 = vpack.c.b16 %v1361, %v1359
  %v1714 = vpack.c.b16 %v1364, %v1362
  %v1715 = vpack.c.b16 %v1365, %v1363
  %v1716 = vpack.c.b16 %v1368, %v1366
  %v1717 = vpack.c.b16 %v1369, %v1367
  %v1718 = vpack.c.b16 %v1372, %v1370
  %v1719 = vpack.c.b16 %v1373, %v1371
  %v1720 = vpack.c.b16 %v1376, %v1374
  %v1721 = vpack.c.b16 %v1377, %v1375
  %v1722 = vpack.c.b16 %v1380, %v1378
  %v1723 = vpack.c.b16 %v1381, %v1379
  %v1724 = vpack.c.b16 %v1384, %v1382
  %v1725 = vpack.c.b16 %v1385, %v1383
  %v1726 = vpack.c.b16 %v1388, %v1386
  %v1727 = vpack.c.b16 %v1389, %v1387
  %v1728 = vpack.c.b16 %v1392, %v1390
  %v1729 = vpack.c.b16 %v1393, %v1391
  %v1730 = vpack.c.b16 %v1396, %v1394
  %v1731 = vpack.c.b16 %v1397, %v1395
  %v1732 = vpack.c.b16 %v1400, %v1398
  %v1733 = vpack.c.b16 %v1401, %v1399
  %v1734 = vpack.c.b16 %v1404, %v1402
  %v1735 = vpack.c.b16 %v1405, %v1403
  %v1736 = vpack.c.b16 %v1408, %v1406
  %v1737 = vpack.c.b16 %v1409, %v1407
  %v1738 = vpack.c.b16 %v1412, %v1410
  %v1739 = vpack.c.b16 %v1413, %v1411
  %v1740 = vpack.c.b16 %v1416, %v1414
  %v1741 = vpack.c.b16 %v1417, %v1415
  %v1742 = vpack.c.b16 %v1420, %v1418
  %v1743 = vpack.c.b16 %v1421, %v1419
  %v1744 = vpack.c.b16 %v1424, %v1422
  %v1745 = vpack.c.b16 %v1425, %v1423
  %2066 = vmatprep.subr.bf16.mxu0 %v1441
  %2067 = vmatpush1.bf16.msra.mxu0 %v1440
  %2068 = vmatprep.subr.bf16.mxu0 %v1439
  %2069 = vmatpush1.bf16.msra.mxu0 %v1438
  %2070 = vmatprep.subr.bf16.mxu0 %v1437
  %2071 = vmatpush1.bf16.msra.mxu0 %v1436
  %2072 = vmatprep.subr.bf16.mxu0 %v1435
  %2073 = vmatpush1.bf16.msra.mxu0 %v1434
  %2074 = vmatprep.subr.bf16.mxu0 %v1433
  %2075 = vmatpush1.bf16.msra.mxu0 %v1432
  %2076 = vmatprep.subr.bf16.mxu0 %v1431
  %2077 = vmatpush1.bf16.msra.mxu0 %v1430
  %2078 = vmatprep.subr.bf16.mxu0 %v1429
  %2079 = vmatpush1.bf16.msra.mxu0 %v1428
  %2080 = vmatprep.subr.bf16.mxu0 %v1427
  %2081 = vmatpush1.bf16.msra.mxu0 %v1426
  %2082 = vmatprep.subr.bf16.mxu0 %v1457
  %2083 = vmatpush2.bf16.msra.mxu0 %v1456
  %2084 = vmatprep.subr.bf16.mxu0 %v1455
  %2085 = vmatpush2.bf16.msra.mxu0 %v1454
  %2086 = vmatprep.subr.bf16.mxu0 %v1453
  %2087 = vmatpush2.bf16.msra.mxu0 %v1452
  %2088 = vmatprep.subr.bf16.mxu0 %v1451
  %2089 = vmatpush2.bf16.msra.mxu0 %v1450
  %2090 = vmatprep.subr.bf16.mxu0 %v1449
  %2091 = vmatpush2.bf16.msra.mxu0 %v1448
  %2092 = vmatprep.subr.bf16.mxu0 %v1447
  %2093 = vmatpush2.bf16.msra.mxu0 %v1446
  %2094 = vmatprep.subr.bf16.mxu0 %v1445
  %2095 = vmatpush2.bf16.msra.mxu0 %v1444
  %2096 = vmatprep.subr.bf16.mxu0 %v1443
  %2097 = vmatpush2.bf16.msra.mxu0 %v1442
  %2098 = vmatprep.mubr.bf16.mxu0 %v427
  %2099 = vmatmul.mubr.bf16.gmra.mxu0 %v426
  %v2100 = vpop.f32.mrf.mxu0
  %v2101 = vadd.f32 %v359, %v2100
  %v2102 = vpop.f32.mrf.mxu0
  %v2103 = vadd.f32 %v363, %v2102
  %v2104 = vpop.f32.mrf.mxu0
  %v2105 = vadd.f32 %v359, %v2104
  %v2106 = vpop.f32.mrf.mxu0
  %v2107 = vadd.f32 %v363, %v2106
  %2108 = vdwg.mxu0
  %2109 = vmatprep.subr.bf16.mxu0 %v1473
  %2110 = vmatpush1.bf16.msra.mxu0 %v1472
  %2111 = vmatprep.subr.bf16.mxu0 %v1471
  %2112 = vmatpush1.bf16.msra.mxu0 %v1470
  %2113 = vmatprep.subr.bf16.mxu0 %v1469
  %2114 = vmatpush1.bf16.msra.mxu0 %v1468
  %2115 = vmatprep.subr.bf16.mxu0 %v1467
  %2116 = vmatpush1.bf16.msra.mxu0 %v1466
  %2117 = vmatprep.subr.bf16.mxu0 %v1465
  %2118 = vmatpush1.bf16.msra.mxu0 %v1464
  %2119 = vmatprep.subr.bf16.mxu0 %v1463
  %2120 = vmatpush1.bf16.msra.mxu0 %v1462
  %2121 = vmatprep.subr.bf16.mxu0 %v1461
  %2122 = vmatpush1.bf16.msra.mxu0 %v1460
  %2123 = vmatprep.subr.bf16.mxu0 %v1459
  %2124 = vmatpush1.bf16.msra.mxu0 %v1458
  %2125 = vmatprep.subr.bf16.mxu0 %v1489
  %2126 = vmatpush2.bf16.msra.mxu0 %v1488
  %2127 = vmatprep.subr.bf16.mxu0 %v1487
  %2128 = vmatpush2.bf16.msra.mxu0 %v1486
  %2129 = vmatprep.subr.bf16.mxu0 %v1485
  %2130 = vmatpush2.bf16.msra.mxu0 %v1484
  %2131 = vmatprep.subr.bf16.mxu0 %v1483
  %2132 = vmatpush2.bf16.msra.mxu0 %v1482
  %2133 = vmatprep.subr.bf16.mxu0 %v1481
  %2134 = vmatpush2.bf16.msra.mxu0 %v1480
  %2135 = vmatprep.subr.bf16.mxu0 %v1479
  %2136 = vmatpush2.bf16.msra.mxu0 %v1478
  %2137 = vmatprep.subr.bf16.mxu0 %v1477
  %2138 = vmatpush2.bf16.msra.mxu0 %v1476
  %2139 = vmatprep.subr.bf16.mxu0 %v1475
  %2140 = vmatpush2.bf16.msra.mxu0 %v1474
  %2141 = vmatprep.mubr.bf16.mxu0 %v429
  %2142 = vmatmul.mubr.bf16.gmra.mxu0 %v428
  %v2143 = vpop.f32.mrf.mxu0
  %v2144 = vadd.f32 %v2101, %v2143
  %v2145 = vpop.f32.mrf.mxu0
  %v2146 = vadd.f32 %v2103, %v2145
  %v2147 = vpop.f32.mrf.mxu0
  %v2148 = vadd.f32 %v2105, %v2147
  %v2149 = vpop.f32.mrf.mxu0
  %v2150 = vadd.f32 %v2107, %v2149
  %2151 = vdwg.mxu0
  %2152 = vmatprep.subr.bf16.mxu0 %v1505
  %2153 = vmatpush1.bf16.msra.mxu0 %v1504
  %2154 = vmatprep.subr.bf16.mxu0 %v1503
  %2155 = vmatpush1.bf16.msra.mxu0 %v1502
  %2156 = vmatprep.subr.bf16.mxu0 %v1501
  %2157 = vmatpush1.bf16.msra.mxu0 %v1500
  %2158 = vmatprep.subr.bf16.mxu0 %v1499
  %2159 = vmatpush1.bf16.msra.mxu0 %v1498
  %2160 = vmatprep.subr.bf16.mxu0 %v1497
  %2161 = vmatpush1.bf16.msra.mxu0 %v1496
  %2162 = vmatprep.subr.bf16.mxu0 %v1495
  %2163 = vmatpush1.bf16.msra.mxu0 %v1494
  %2164 = vmatprep.subr.bf16.mxu0 %v1493
  %2165 = vmatpush1.bf16.msra.mxu0 %v1492
  %2166 = vmatprep.subr.bf16.mxu0 %v1491
  %2167 = vmatpush1.bf16.msra.mxu0 %v1490
  %2168 = vmatprep.subr.bf16.mxu0 %v1521
  %2169 = vmatpush2.bf16.msra.mxu0 %v1520
  %2170 = vmatprep.subr.bf16.mxu0 %v1519
  %2171 = vmatpush2.bf16.msra.mxu0 %v1518
  %2172 = vmatprep.subr.bf16.mxu0 %v1517
  %2173 = vmatpush2.bf16.msra.mxu0 %v1516
  %2174 = vmatprep.subr.bf16.mxu0 %v1515
  %2175 = vmatpush2.bf16.msra.mxu0 %v1514
  %2176 = vmatprep.subr.bf16.mxu0 %v1513
  %2177 = vmatpush2.bf16.msra.mxu0 %v1512
  %2178 = vmatprep.subr.bf16.mxu0 %v1511
  %2179 = vmatpush2.bf16.msra.mxu0 %v1510
  %2180 = vmatprep.subr.bf16.mxu0 %v1509
  %2181 = vmatpush2.bf16.msra.mxu0 %v1508
  %2182 = vmatprep.subr.bf16.mxu0 %v1507
  %2183 = vmatpush2.bf16.msra.mxu0 %v1506
  %2184 = vmatprep.mubr.bf16.mxu0 %v431
  %2185 = vmatmul.mubr.bf16.gmra.mxu0 %v430
  %v2186 = vpop.f32.mrf.mxu0
  %v2187 = vadd.f32 %v2144, %v2186
  %v2188 = vpop.f32.mrf.mxu0
  %v2189 = vadd.f32 %v2146, %v2188
  %v2190 = vpop.f32.mrf.mxu0
  %v2191 = vadd.f32 %v2148, %v2190
  %v2192 = vpop.f32.mrf.mxu0
  %v2193 = vadd.f32 %v2150, %v2192
  %2194 = vdwg.mxu0
  %2195 = vmatprep.subr.bf16.mxu0 %v1537
  %2196 = vmatpush1.bf16.msra.mxu0 %v1536
  %2197 = vmatprep.subr.bf16.mxu0 %v1535
  %2198 = vmatpush1.bf16.msra.mxu0 %v1534
  %2199 = vmatprep.subr.bf16.mxu0 %v1533
  %2200 = vmatpush1.bf16.msra.mxu0 %v1532
  %2201 = vmatprep.subr.bf16.mxu0 %v1531
  %2202 = vmatpush1.bf16.msra.mxu0 %v1530
  %2203 = vmatprep.subr.bf16.mxu0 %v1529
  %2204 = vmatpush1.bf16.msra.mxu0 %v1528
  %2205 = vmatprep.subr.bf16.mxu0 %v1527
  %2206 = vmatpush1.bf16.msra.mxu0 %v1526
  %2207 = vmatprep.subr.bf16.mxu0 %v1525
  %2208 = vmatpush1.bf16.msra.mxu0 %v1524
  %2209 = vmatprep.subr.bf16.mxu0 %v1523
  %2210 = vmatpush1.bf16.msra.mxu0 %v1522
  %2211 = vmatprep.subr.bf16.mxu0 %v1553
  %2212 = vmatpush2.bf16.msra.mxu0 %v1552
  %2213 = vmatprep.subr.bf16.mxu0 %v1551
  %2214 = vmatpush2.bf16.msra.mxu0 %v1550
  %2215 = vmatprep.subr.bf16.mxu0 %v1549
  %2216 = vmatpush2.bf16.msra.mxu0 %v1548
  %2217 = vmatprep.subr.bf16.mxu0 %v1547
  %2218 = vmatpush2.bf16.msra.mxu0 %v1546
  %2219 = vmatprep.subr.bf16.mxu0 %v1545
  %2220 = vmatpush2.bf16.msra.mxu0 %v1544
  %2221 = vmatprep.subr.bf16.mxu0 %v1543
  %2222 = vmatpush2.bf16.msra.mxu0 %v1542
  %2223 = vmatprep.subr.bf16.mxu0 %v1541
  %2224 = vmatpush2.bf16.msra.mxu0 %v1540
  %2225 = vmatprep.subr.bf16.mxu0 %v1539
  %2226 = vmatpush2.bf16.msra.mxu0 %v1538
  %2227 = vmatprep.mubr.bf16.mxu0 %v433
  %2228 = vmatmul.mubr.bf16.gmra.mxu0 %v432
  %v2229 = vpop.f32.mrf.mxu0
  %v2230 = vadd.f32 %v2187, %v2229
  %v2231 = vpop.f32.mrf.mxu0
  %v2232 = vadd.f32 %v2189, %v2231
  %v2233 = vpop.f32.mrf.mxu0
  %v2234 = vadd.f32 %v2191, %v2233
  %v2235 = vpop.f32.mrf.mxu0
  %v2236 = vadd.f32 %v2193, %v2235
  %2237 = vdwg.mxu0
  %2238 = vmatprep.subr.bf16.mxu0 %v1569
  %2239 = vmatpush1.bf16.msra.mxu0 %v1568
  %2240 = vmatprep.subr.bf16.mxu0 %v1567
  %2241 = vmatpush1.bf16.msra.mxu0 %v1566
  %2242 = vmatprep.subr.bf16.mxu0 %v1565
  %2243 = vmatpush1.bf16.msra.mxu0 %v1564
  %2244 = vmatprep.subr.bf16.mxu0 %v1563
  %2245 = vmatpush1.bf16.msra.mxu0 %v1562
  %2246 = vmatprep.subr.bf16.mxu0 %v1561
  %2247 = vmatpush1.bf16.msra.mxu0 %v1560
  %2248 = vmatprep.subr.bf16.mxu0 %v1559
  %2249 = vmatpush1.bf16.msra.mxu0 %v1558
  %2250 = vmatprep.subr.bf16.mxu0 %v1557
  %2251 = vmatpush1.bf16.msra.mxu0 %v1556
  %2252 = vmatprep.subr.bf16.mxu0 %v1555
  %2253 = vmatpush1.bf16.msra.mxu0 %v1554
  %2254 = vmatprep.subr.bf16.mxu0 %v1585
  %2255 = vmatpush2.bf16.msra.mxu0 %v1584
  %2256 = vmatprep.subr.bf16.mxu0 %v1583
  %2257 = vmatpush2.bf16.msra.mxu0 %v1582
  %2258 = vmatprep.subr.bf16.mxu0 %v1581
  %2259 = vmatpush2.bf16.msra.mxu0 %v1580
  %2260 = vmatprep.subr.bf16.mxu0 %v1579
  %2261 = vmatpush2.bf16.msra.mxu0 %v1578
  %2262 = vmatprep.subr.bf16.mxu0 %v1577
  %2263 = vmatpush2.bf16.msra.mxu0 %v1576
  %2264 = vmatprep.subr.bf16.mxu0 %v1575
  %2265 = vmatpush2.bf16.msra.mxu0 %v1574
  %2266 = vmatprep.subr.bf16.mxu0 %v1573
  %2267 = vmatpush2.bf16.msra.mxu0 %v1572
  %2268 = vmatprep.subr.bf16.mxu0 %v1571
  %2269 = vmatpush2.bf16.msra.mxu0 %v1570
  %2270 = vmatprep.mubr.bf16.mxu0 %v435
  %2271 = vmatmul.mubr.bf16.gmra.mxu0 %v434
  %v2272 = vpop.f32.mrf.mxu0
  %v2273 = vadd.f32 %v2230, %v2272
  %v2274 = vpop.f32.mrf.mxu0
  %v2275 = vadd.f32 %v2232, %v2274
  %v2276 = vpop.f32.mrf.mxu0
  %v2277 = vadd.f32 %v2234, %v2276
  %v2278 = vpop.f32.mrf.mxu0
  %v2279 = vadd.f32 %v2236, %v2278
  %2280 = vdwg.mxu0
  %2281 = vmatprep.subr.bf16.mxu0 %v1601
  %2282 = vmatpush1.bf16.msra.mxu0 %v1600
  %2283 = vmatprep.subr.bf16.mxu0 %v1599
  %2284 = vmatpush1.bf16.msra.mxu0 %v1598
  %2285 = vmatprep.subr.bf16.mxu0 %v1597
  %2286 = vmatpush1.bf16.msra.mxu0 %v1596
  %2287 = vmatprep.subr.bf16.mxu0 %v1595
  %2288 = vmatpush1.bf16.msra.mxu0 %v1594
  %2289 = vmatprep.subr.bf16.mxu0 %v1593
  %2290 = vmatpush1.bf16.msra.mxu0 %v1592
  %2291 = vmatprep.subr.bf16.mxu0 %v1591
  %2292 = vmatpush1.bf16.msra.mxu0 %v1590
  %2293 = vmatprep.subr.bf16.mxu0 %v1589
  %2294 = vmatpush1.bf16.msra.mxu0 %v1588
  %2295 = vmatprep.subr.bf16.mxu0 %v1587
  %2296 = vmatpush1.bf16.msra.mxu0 %v1586
  %2297 = vmatprep.subr.bf16.mxu0 %v1617
  %2298 = vmatpush2.bf16.msra.mxu0 %v1616
  %2299 = vmatprep.subr.bf16.mxu0 %v1615
  %2300 = vmatpush2.bf16.msra.mxu0 %v1614
  %2301 = vmatprep.subr.bf16.mxu0 %v1613
  %2302 = vmatpush2.bf16.msra.mxu0 %v1612
  %2303 = vmatprep.subr.bf16.mxu0 %v1611
  %2304 = vmatpush2.bf16.msra.mxu0 %v1610
  %2305 = vmatprep.subr.bf16.mxu0 %v1609
  %2306 = vmatpush2.bf16.msra.mxu0 %v1608
  %2307 = vmatprep.subr.bf16.mxu0 %v1607
  %2308 = vmatpush2.bf16.msra.mxu0 %v1606
  %2309 = vmatprep.subr.bf16.mxu0 %v1605
  %2310 = vmatpush2.bf16.msra.mxu0 %v1604
  %2311 = vmatprep.subr.bf16.mxu0 %v1603
  %2312 = vmatpush2.bf16.msra.mxu0 %v1602
  %2313 = vmatprep.mubr.bf16.mxu0 %v437
  %2314 = vmatmul.mubr.bf16.gmra.mxu0 %v436
  %v2315 = vpop.f32.mrf.mxu0
  %v2316 = vadd.f32 %v2273, %v2315
  %v2317 = vpop.f32.mrf.mxu0
  %v2318 = vadd.f32 %v2275, %v2317
  %v2319 = vpop.f32.mrf.mxu0
  %v2320 = vadd.f32 %v2277, %v2319
  %v2321 = vpop.f32.mrf.mxu0
  %v2322 = vadd.f32 %v2279, %v2321
  %2323 = vdwg.mxu0
  %2324 = vmatprep.subr.bf16.mxu0 %v1633
  %2325 = vmatpush1.bf16.msra.mxu0 %v1632
  %2326 = vmatprep.subr.bf16.mxu0 %v1631
  %2327 = vmatpush1.bf16.msra.mxu0 %v1630
  %2328 = vmatprep.subr.bf16.mxu0 %v1629
  %2329 = vmatpush1.bf16.msra.mxu0 %v1628
  %2330 = vmatprep.subr.bf16.mxu0 %v1627
  %2331 = vmatpush1.bf16.msra.mxu0 %v1626
  %2332 = vmatprep.subr.bf16.mxu0 %v1625
  %2333 = vmatpush1.bf16.msra.mxu0 %v1624
  %2334 = vmatprep.subr.bf16.mxu0 %v1623
  %2335 = vmatpush1.bf16.msra.mxu0 %v1622
  %2336 = vmatprep.subr.bf16.mxu0 %v1621
  %2337 = vmatpush1.bf16.msra.mxu0 %v1620
  %2338 = vmatprep.subr.bf16.mxu0 %v1619
  %2339 = vmatpush1.bf16.msra.mxu0 %v1618
  %2340 = vmatprep.subr.bf16.mxu0 %v1649
  %2341 = vmatpush2.bf16.msra.mxu0 %v1648
  %2342 = vmatprep.subr.bf16.mxu0 %v1647
  %2343 = vmatpush2.bf16.msra.mxu0 %v1646
  %2344 = vmatprep.subr.bf16.mxu0 %v1645
  %2345 = vmatpush2.bf16.msra.mxu0 %v1644
  %2346 = vmatprep.subr.bf16.mxu0 %v1643
  %2347 = vmatpush2.bf16.msra.mxu0 %v1642
  %2348 = vmatprep.subr.bf16.mxu0 %v1641
  %2349 = vmatpush2.bf16.msra.mxu0 %v1640
  %2350 = vmatprep.subr.bf16.mxu0 %v1639
  %2351 = vmatpush2.bf16.msra.mxu0 %v1638
  %2352 = vmatprep.subr.bf16.mxu0 %v1637
  %2353 = vmatpush2.bf16.msra.mxu0 %v1636
  %2354 = vmatprep.subr.bf16.mxu0 %v1635
  %2355 = vmatpush2.bf16.msra.mxu0 %v1634
  %2356 = vmatprep.mubr.bf16.mxu0 %v439
  %2357 = vmatmul.mubr.bf16.gmra.mxu0 %v438
  %v2358 = vpop.f32.mrf.mxu0
  %v2359 = vadd.f32 %v2316, %v2358
  %v2360 = vpop.f32.mrf.mxu0
  %v2361 = vadd.f32 %v2318, %v2360
  %v2362 = vpop.f32.mrf.mxu0
  %v2363 = vadd.f32 %v2320, %v2362
  %v2364 = vpop.f32.mrf.mxu0
  %v2365 = vadd.f32 %v2322, %v2364
  %2366 = vdwg.mxu0
  %2367 = vmatprep.subr.bf16.mxu0 %v1665
  %2368 = vmatpush1.bf16.msra.mxu0 %v1664
  %2369 = vmatprep.subr.bf16.mxu0 %v1663
  %2370 = vmatpush1.bf16.msra.mxu0 %v1662
  %2371 = vmatprep.subr.bf16.mxu0 %v1661
  %2372 = vmatpush1.bf16.msra.mxu0 %v1660
  %2373 = vmatprep.subr.bf16.mxu0 %v1659
  %2374 = vmatpush1.bf16.msra.mxu0 %v1658
  %2375 = vmatprep.subr.bf16.mxu0 %v1657
  %2376 = vmatpush1.bf16.msra.mxu0 %v1656
  %2377 = vmatprep.subr.bf16.mxu0 %v1655
  %2378 = vmatpush1.bf16.msra.mxu0 %v1654
  %2379 = vmatprep.subr.bf16.mxu0 %v1653
  %2380 = vmatpush1.bf16.msra.mxu0 %v1652
  %2381 = vmatprep.subr.bf16.mxu0 %v1651
  %2382 = vmatpush1.bf16.msra.mxu0 %v1650
  %2383 = vmatprep.subr.bf16.mxu0 %v1681
  %2384 = vmatpush2.bf16.msra.mxu0 %v1680
  %2385 = vmatprep.subr.bf16.mxu0 %v1679
  %2386 = vmatpush2.bf16.msra.mxu0 %v1678
  %2387 = vmatprep.subr.bf16.mxu0 %v1677
  %2388 = vmatpush2.bf16.msra.mxu0 %v1676
  %2389 = vmatprep.subr.bf16.mxu0 %v1675
  %2390 = vmatpush2.bf16.msra.mxu0 %v1674
  %2391 = vmatprep.subr.bf16.mxu0 %v1673
  %2392 = vmatpush2.bf16.msra.mxu0 %v1672
  %2393 = vmatprep.subr.bf16.mxu0 %v1671
  %2394 = vmatpush2.bf16.msra.mxu0 %v1670
  %2395 = vmatprep.subr.bf16.mxu0 %v1669
  %2396 = vmatpush2.bf16.msra.mxu0 %v1668
  %2397 = vmatprep.subr.bf16.mxu0 %v1667
  %2398 = vmatpush2.bf16.msra.mxu0 %v1666
  %2399 = vmatprep.mubr.bf16.mxu0 %v441
  %2400 = vmatmul.mubr.bf16.gmra.mxu0 %v440
  %v2401 = vpop.f32.mrf.mxu0
  %v2402 = vadd.f32 %v2359, %v2401
  %v2403 = vpop.f32.mrf.mxu0
  %v2404 = vadd.f32 %v2361, %v2403
  %v2405 = vpop.f32.mrf.mxu0
  %v2406 = vadd.f32 %v2363, %v2405
  %v2407 = vpop.f32.mrf.mxu0
  %v2408 = vadd.f32 %v2365, %v2407
  %2409 = vdwg.mxu0
  %2410 = vmatprep.subr.bf16.mxu0 %v1697
  %2411 = vmatpush1.bf16.msra.mxu0 %v1696
  %2412 = vmatprep.subr.bf16.mxu0 %v1695
  %2413 = vmatpush1.bf16.msra.mxu0 %v1694
  %2414 = vmatprep.subr.bf16.mxu0 %v1693
  %2415 = vmatpush1.bf16.msra.mxu0 %v1692
  %2416 = vmatprep.subr.bf16.mxu0 %v1691
  %2417 = vmatpush1.bf16.msra.mxu0 %v1690
  %2418 = vmatprep.subr.bf16.mxu0 %v1689
  %2419 = vmatpush1.bf16.msra.mxu0 %v1688
  %2420 = vmatprep.subr.bf16.mxu0 %v1687
  %2421 = vmatpush1.bf16.msra.mxu0 %v1686
  %2422 = vmatprep.subr.bf16.mxu0 %v1685
  %2423 = vmatpush1.bf16.msra.mxu0 %v1684
  %2424 = vmatprep.subr.bf16.mxu0 %v1683
  %2425 = vmatpush1.bf16.msra.mxu0 %v1682
  %2426 = vmatprep.subr.bf16.mxu0 %v1713
  %2427 = vmatpush2.bf16.msra.mxu0 %v1712
  %2428 = vmatprep.subr.bf16.mxu0 %v1711
  %2429 = vmatpush2.bf16.msra.mxu0 %v1710
  %2430 = vmatprep.subr.bf16.mxu0 %v1709
  %2431 = vmatpush2.bf16.msra.mxu0 %v1708
  %2432 = vmatprep.subr.bf16.mxu0 %v1707
  %2433 = vmatpush2.bf16.msra.mxu0 %v1706
  %2434 = vmatprep.subr.bf16.mxu0 %v1705
  %2435 = vmatpush2.bf16.msra.mxu0 %v1704
  %2436 = vmatprep.subr.bf16.mxu0 %v1703
  %2437 = vmatpush2.bf16.msra.mxu0 %v1702
  %2438 = vmatprep.subr.bf16.mxu0 %v1701
  %2439 = vmatpush2.bf16.msra.mxu0 %v1700
  %2440 = vmatprep.subr.bf16.mxu0 %v1699
  %2441 = vmatpush2.bf16.msra.mxu0 %v1698
  %2442 = vmatprep.mubr.bf16.mxu0 %v443
  %2443 = vmatmul.mubr.bf16.gmra.mxu0 %v442
  %v2444 = vpop.f32.mrf.mxu0
  %v2445 = vadd.f32 %v2402, %v2444
  %v2446 = vpop.f32.mrf.mxu0
  %v2447 = vadd.f32 %v2404, %v2446
  %v2448 = vpop.f32.mrf.mxu0
  %v2449 = vadd.f32 %v2406, %v2448
  %v2450 = vpop.f32.mrf.mxu0
  %v2451 = vadd.f32 %v2408, %v2450
  %2452 = vdwg.mxu0
  %2453 = vmatprep.subr.bf16.mxu0 %v1729
  %2454 = vmatpush1.bf16.msra.mxu0 %v1728
  %2455 = vmatprep.subr.bf16.mxu0 %v1727
  %2456 = vmatpush1.bf16.msra.mxu0 %v1726
  %2457 = vmatprep.subr.bf16.mxu0 %v1725
  %2458 = vmatpush1.bf16.msra.mxu0 %v1724
  %2459 = vmatprep.subr.bf16.mxu0 %v1723
  %2460 = vmatpush1.bf16.msra.mxu0 %v1722
  %2461 = vmatprep.subr.bf16.mxu0 %v1721
  %2462 = vmatpush1.bf16.msra.mxu0 %v1720
  %2463 = vmatprep.subr.bf16.mxu0 %v1719
  %2464 = vmatpush1.bf16.msra.mxu0 %v1718
  %2465 = vmatprep.subr.bf16.mxu0 %v1717
  %2466 = vmatpush1.bf16.msra.mxu0 %v1716
  %2467 = vmatprep.subr.bf16.mxu0 %v1715
  %2468 = vmatpush1.bf16.msra.mxu0 %v1714
  %2469 = vmatprep.subr.bf16.mxu0 %v1745
  %2470 = vmatpush2.bf16.msra.mxu0 %v1744
  %2471 = vmatprep.subr.bf16.mxu0 %v1743
  %2472 = vmatpush2.bf16.msra.mxu0 %v1742
  %2473 = vmatprep.subr.bf16.mxu0 %v1741
  %2474 = vmatpush2.bf16.msra.mxu0 %v1740
  %2475 = vmatprep.subr.bf16.mxu0 %v1739
  %2476 = vmatpush2.bf16.msra.mxu0 %v1738
  %2477 = vmatprep.subr.bf16.mxu0 %v1737
  %2478 = vmatpush2.bf16.msra.mxu0 %v1736
  %2479 = vmatprep.subr.bf16.mxu0 %v1735
  %2480 = vmatpush2.bf16.msra.mxu0 %v1734
  %2481 = vmatprep.subr.bf16.mxu0 %v1733
  %2482 = vmatpush2.bf16.msra.mxu0 %v1732
  %2483 = vmatprep.subr.bf16.mxu0 %v1731
  %2484 = vmatpush2.bf16.msra.mxu0 %v1730
  %2485 = vmatprep.mubr.bf16.mxu0 %v445
  %2486 = vmatmul.mubr.bf16.gmra.mxu0 %v444
  %v2487 = vpop.f32.mrf.mxu0
  %v2488 = vadd.f32 %v2445, %v2487
  %v2489 = vpop.f32.mrf.mxu0
  %v2490 = vadd.f32 %v2447, %v2489
  %v2491 = vpop.f32.mrf.mxu0
  %v2492 = vadd.f32 %v2449, %v2491
  %v2493 = vpop.f32.mrf.mxu0
  %v2494 = vadd.f32 %v2451, %v2493
  %2495 = vdwg.mxu0
  %v2496 = vmax.f32 %v2488, 0.0
  %v2497 = vmax.f32 %v2490, 0.0
  %v2498 = vmax.f32 %v2492, 0.0
  %v2499 = vmax.f32 %v2494, 0.0
  %v2500 = vpack.c.bf16 %v2498, %v2496
  %v2501 = vpack.c.bf16 %v2499, %v2497
  %v2504 = vunpack.c.l.b16 %v2500
  %v2505 = vunpack.c.l.b16 %v2501
  %v2506 = vunpack.c.h.b16 %v2500
  %v2507 = vunpack.c.h.b16 %v2501
  %v2508 = vpack.c.b16 %v2505, %v2504
  %v2509 = vpack.c.b16 %v2507, %v2506
  %2512 = vst [vmem:[%s3] sm:$0xff] %v2508
  %2513 = vst [vmem:[%s3 + $0x8] sm:$0xff] %v2509
  // Predicated region
  $region14: #{forward.6} parent=0 // pred_check
    _
  $region15: #{forward.6} parent=0 // pred_check_branch
    %2515 = sbr.rel (0) target = $region17
  $region16: #{forward.6} parent=0 // pred_region
    _
  $region17: #{forward.6} parent=0 // pred_fallthru
    _
  // Predicated region
  $region18: #{forward.6} parent=0 // pred_check
    _
  $region19: #{forward.6} parent=0 // pred_check_branch
    %2517 = sbr.rel (0) target = $region21
  $region20: #{forward.6} parent=0 // pred_region
    _
  $region21: #{forward.6} parent=0 // pred_fallthru
    _

</llo_original>
